<compile_context>
chip_gen: v7x
topology: tpu7x:2x2x1
jax: 0.10.0
libtpu: 0.0.40
codegen_flags: <defaults>
</compile_context>

<pallas_src>
import math

import jax
import jax.numpy as jnp
from jax.experimental import pallas as pl
from jax.experimental.pallas import tpu as pltpu

EPS = 1e-6
# Below this contraction width the MXU is nowhere near the bottleneck; keep
# matmul weights exact f32.  At real ConvNeXt widths (>=96) they go bf16.
_BF16_MIN_K = 64

# Abramowitz & Stegun 7.1.26 erf approximation (|err| < 1.5e-7): exact GELU
# without relying on an erf lowering inside Mosaic (only abs/exp/where/div).
_ERF_P = 0.3275911
_ERF_A1, _ERF_A2, _ERF_A3, _ERF_A4, _ERF_A5 = (
    0.254829592, -0.284496736, 1.421413741, -1.453152027, 1.061405429)
_INV_SQRT2 = 0.7071067811865476


# ----------------------------------------------------------------------------
# In-kernel helpers
# ----------------------------------------------------------------------------
def _erf(x):
    a = jnp.abs(x)
    t = 1.0 / (1.0 + _ERF_P * a)
    poly = t * (_ERF_A1 + t * (_ERF_A2 + t * (_ERF_A3 + t * (_ERF_A4 + t * _ERF_A5))))
    e = 1.0 - poly * jnp.exp(-a * a)
    return jnp.where(x < 0.0, -e, e)


def _gelu(x):
    """Exact (erf) GELU, matching PyTorch nn.GELU() defaults."""
    return 0.5 * x * (1.0 + _erf(x * _INV_SQRT2))


def _mm(a, w):
    """MXU matmul, f32 accumulation; weights may be pre-cast to bf16 on host."""
    if w.dtype == jnp.bfloat16:
        a = a.astype(jnp.bfloat16)
    return jnp.dot(a, w, preferred_element_type=jnp.float32)


def _ln(x, w, b):
    """Channel LayerNorm over the last (lane) axis; rsqrt runs on the EUP."""
    u = jnp.mean(x, axis=-1, keepdims=True)
    s = jnp.mean(jnp.square(x - u), axis=-1, keepdims=True)
    return w * ((x - u) * jax.lax.rsqrt(s + EPS)) + b


# ----------------------------------------------------------------------------
# Fused per-stage kernel: stem/downsample (b==0) -> Block b -> head (b==last)
# ----------------------------------------------------------------------------
def _make_stage_kernel(is_first, has_head, k, cin, cout, ho, wo):
    n_front = 2 if is_first else 3
    n_in = 1 + n_front + 5 + (2 if has_head else 0)
    kc = k * cin
    p = ho * wo

    def kernel(*refs):
        xp_ref = refs[0]
        front = refs[1:1 + n_front]
        (dww_ref, bvec_ref, pw1w_ref, pw1b_ref,
         pw2w_ref) = refs[1 + n_front:1 + n_front + 5]
        head = refs[1 + n_front + 5:n_in] if has_head else None
        out_ref = refs[n_in]
        act_ref = refs[n_in + 1]      # (ho, wo, cout)       activation carry
        pad_ref = refs[n_in + 2]      # (ho+6, wo+6, cout)   dwconv halo

        b = pl.program_id(1)
        nblk = pl.num_programs(1)

        @pl.when(b == 0)
        def _front():
            # Zero only the 3-wide halo frame, once per (batch, stage); every
            # block overwrites the interior, so no full-buffer zero per block.
            pad_ref[0:3, :, :] = jnp.zeros((3, wo + 6, cout), jnp.float32)
            pad_ref[ho + 3:ho + 6, :, :] = jnp.zeros((3, wo + 6, cout), jnp.float32)
            pad_ref[:, 0:3, :] = jnp.zeros((ho + 6, 3, cout), jnp.float32)
            pad_ref[:, wo + 3:wo + 6, :] = jnp.zeros((ho + 6, 3, cout), jnp.float32)

            xp = xp_ref[...]                               # (ho, k, wo, k*cin)
            acc = jnp.zeros((p, cout), jnp.float32)
            if is_first:
                # Stem: 4x4/s4 conv as k per-tap MXU matmuls accumulated in
                # f32 (no lane-axis concat of taps), fused with channel LN.
                wt_ref, fvec_ref = front
                fvec = fvec_ref[...]                       # (3, cout)
                for a in range(k):
                    acc = acc + _mm(xp[:, a].reshape(p, kc), wt_ref[a])
                y = acc + fvec[0:1, :]
                act = _ln(y, fvec[1:2, :], fvec[2:3, :])
            else:
                # DownSampling(norm_first): per-pixel LN on each tap (== LN
                # before the strided conv), k*k per-tap matmuls accumulated.
                wt_ref, lnvec_ref, convb_ref = front
                lnv = lnvec_ref[...]                       # (2, cin)
                for a in range(k):
                    tap = xp[:, a].reshape(p, kc)
                    for bb in range(k):
                        t = _ln(tap[:, bb * cin:(bb + 1) * cin],
                                lnv[0:1, :], lnv[1:2, :])
                        acc = acc + _mm(t, wt_ref[a * k + bb])
                act = acc + convb_ref[...]
            act_ref[...] = act.reshape(ho, wo, cout)

        # ---- ConvNeXt Block b: dwconv7x7 -> LN -> pw1 -> GELU -> pw2 -> +res
        x = act_ref[...]                                   # (ho, wo, cout)
        pad_ref[3:3 + ho, 3:3 + wo, :] = x
        dww = dww_ref[...]                                 # (49, cout)
        bvec = bvec_ref[...]                               # (5, cout)
        acc = jnp.zeros((ho, wo, cout), jnp.float32)
        for kh in range(7):
            # kh shifts slice the ref along a MAJOR axis (cheap view); the 7
            # kw shifts are in-register slices of the loaded row band.
            xh = pad_ref[kh:kh + ho, :, :]                 # (ho, wo+6, cout)
            for kw in range(7):
                r = kh * 7 + kw
                acc = acc + xh[:, kw:kw + wo, :] * dww[r:r + 1, :]
        y = (acc + bvec[0:1, :]).reshape(p, cout)
        yn = _ln(y, bvec[1:2, :], bvec[2:3, :])
        t = _mm(yn, pw1w_ref[...]) + pw1b_ref[...]
        t = _gelu(t)
        t = _mm(t, pw2w_ref[...]) + bvec[3:4, :]
        out = x.reshape(p, cout) + bvec[4:5, :] * t
        act_ref[...] = out.reshape(ho, wo, cout)

        @pl.when(b == nblk - 1)
        def _tail():
            if has_head:
                hw_ref, hb_ref = head
                pooled = jnp.sum(out, axis=0, keepdims=True) * (1.0 / p)
                out_ref[...] = (_mm(pooled, hw_ref[...]) + hb_ref[...]
                                ).reshape(out_ref.shape)
            else:
                out_ref[...] = out.reshape(out_ref.shape)

    return kernel, n_in


# ----------------------------------------------------------------------------
# Parameters (shapes exactly as the PyTorch module's __init__; deterministic)
# ----------------------------------------------------------------------------
def init_convnext_params(key, in_chans=3, num_classes=10, depths=(1, 1),
                         dims=(2, 4), layer_scale_init_value=1e-6):
    keys = iter(jax.random.split(key, 64))

    def nrm(shape, scale=0.1):
        return scale * jax.random.normal(next(keys), shape, dtype=jnp.float32)

    params = {
        "stem": dict(
            conv_w=nrm((dims[0], in_chans, 4, 4)),        # OIHW like nn.Conv2d
            conv_b=nrm((dims[0],)),
            ln_w=1.0 + nrm((dims[0],)),
            ln_b=nrm((dims[0],)),
        ),
        "down": [],
        "stages": [],
        "head": dict(
            w=nrm((num_classes, dims[-1])),               # (out, in) like nn.Linear
            b=nrm((num_classes,)),
        ),
    }
    for i in range(len(dims) - 1):
        params["down"].append(dict(
            ln_w=1.0 + nrm((dims[i],)),
            ln_b=nrm((dims[i],)),
            conv_w=nrm((dims[i + 1], dims[i], 2, 2)),
            conv_b=nrm((dims[i + 1],)),
        ))
    for i, dim in enumerate(dims):
        blocks = []
        for _ in range(depths[i]):
            blocks.append(dict(
                dw_w=nrm((dim, 1, 7, 7)),                 # depthwise, groups=dim
                dw_b=nrm((dim,)),
                ln_w=1.0 + nrm((dim,)),
                ln_b=nrm((dim,)),
                pw1_w=nrm((4 * dim, dim, 1, 1)),
                pw1_b=nrm((4 * dim,)),
                pw2_w=nrm((dim, 4 * dim, 1, 1)),
                pw2_b=nrm((dim,)),
                gamma=layer_scale_init_value * jnp.ones((dim,), jnp.float32),
            ))
        params["stages"].append(blocks)
    return params


# ----------------------------------------------------------------------------
# Pallas-backed forward (host side: only free reshapes + weight re-layouts)
# ----------------------------------------------------------------------------
def _maybe_bf16(w):
    return w.astype(jnp.bfloat16) if w.shape[-2] >= _BF16_MIN_K else w


def _row(v):
    return v.reshape(1, -1)


def _const_spec(a):
    z = (0,) * a.ndim
    return pl.BlockSpec(a.shape, lambda nb, b, _z=z: _z)


def _block_spec(a):
    z = (0,) * (a.ndim - 1)
    return pl.BlockSpec((None,) + a.shape[1:], lambda nb, b, _z=z: (b,) + _z)


def convnext_forward(x_nchw, params):
    """ConvNeXt forward.  Input NCHW (PyTorch convention); one launch per stage."""
    x = jnp.transpose(x_nchw, (0, 2, 3, 1)).astype(jnp.float32)   # -> NHWC
    n_stages = len(params["stages"])
    for i in range(n_stages):
        n, h, w, cin = x.shape
        blocks = params["stages"][i]
        nblk = len(blocks)
        has_head = i == n_stages - 1

        if i == 0:
            st = params["stem"]
            k = st["conv_w"].shape[-1]                                 # 4
            cout = st["conv_w"].shape[0]
            wt = jnp.transpose(st["conv_w"], (2, 3, 1, 0)).reshape(k, k * cin, cout)
            fvec = jnp.stack([st["conv_b"], st["ln_w"], st["ln_b"]])   # (3, cout)
            front = [_maybe_bf16(wt), fvec]
        else:
            d = params["down"][i - 1]
            k = d["conv_w"].shape[-1]                                  # 2
            cout = d["conv_w"].shape[0]
            wt = jnp.transpose(d["conv_w"], (2, 3, 1, 0)).reshape(k * k, cin, cout)
            lnvec = jnp.stack([d["ln_w"], d["ln_b"]])                  # (2, cin)
            front = [_maybe_bf16(wt), lnvec, _row(d["conv_b"])]
        ho, wo = h // k, w // k
        xp = x.reshape(n, ho, k, wo, k * cin)              # free row-major reshape

        # Stacked, block-indexed weights for this stage (double-buffered by Pallas).
        dww = jnp.stack([jnp.transpose(p_["dw_w"][:, 0], (1, 2, 0)).reshape(49, cout)
                         for p_ in blocks])                            # (nblk, 49, C)
        bvec = jnp.stack([jnp.stack([p_["dw_b"], p_["ln_w"], p_["ln_b"],
                                     p_["pw2_b"], p_["gamma"]])
                          for p_ in blocks])                           # (nblk, 5, C)
        pw1w = _maybe_bf16(jnp.stack([jnp.transpose(p_["pw1_w"][:, :, 0, 0])
                                      for p_ in blocks]))              # (nblk, C, 4C)
        pw1b = jnp.stack([_row(p_["pw1_b"]) for p_ in blocks])         # (nblk, 1, 4C)
        pw2w = _maybe_bf16(jnp.stack([jnp.transpose(p_["pw2_w"][:, :, 0, 0])
                                      for p_ in blocks]))              # (nblk, 4C, C)
        blk_args = [dww, bvec, pw1w, pw1b, pw2w]

        head_args = []
        if has_head:
            hd = params["head"]
            head_args = [_maybe_bf16(jnp.transpose(hd["w"])), _row(hd["b"])]
            ncls = hd["w"].shape[0]
            out_shape = jax.ShapeDtypeStruct((n, 1, ncls), jnp.float32)
            out_spec = pl.BlockSpec((1, 1, ncls), lambda nb, b: (nb, 0, 0))
        else:
            out_shape = jax.ShapeDtypeStruct((n, ho, wo, cout), jnp.float32)
            out_spec = pl.BlockSpec((1, ho, wo, cout), lambda nb, b: (nb, 0, 0, 0))

        args = [xp] + front + blk_args + head_args
        in_specs = ([pl.BlockSpec((None, ho, k, wo, k * cin),
                                  lambda nb, b: (nb, 0, 0, 0, 0))]
                    + [_const_spec(a) for a in front]
                    + [_block_spec(a) for a in blk_args]
                    + [_const_spec(a) for a in head_args])

        scratch_shapes = [pltpu.VMEM((ho, wo, cout), jnp.float32),          # act carry
                          pltpu.VMEM((ho + 6, wo + 6, cout), jnp.float32)]  # dw halo

        kernel, n_in = _make_stage_kernel(i == 0, has_head, k, cin, cout, ho, wo)
        assert n_in == len(args)

        # Scoped-VMEM budget: working set (x2 double-buffering) + headroom,
        # capped below the smallest physical VMEM (64 MiB on v7x).
        arg_bytes = sum(int(a.size) * a.dtype.itemsize for a in args)
        out_bytes = 4 * math.prod(out_shape.shape)
        scratch_bytes = 4 * (ho * wo * cout + (ho + 6) * (wo + 6) * cout)
        vmem_limit = int(min(max(2 * (arg_bytes + out_bytes) + scratch_bytes
                                 + (8 << 20), 16 << 20), 48 << 20))

        x = pl.pallas_call(
            kernel,
            out_shape=out_shape,
            grid_spec=pltpu.PrefetchScalarGridSpec(
                num_scalar_prefetch=0,
                grid=(n, nblk),
                in_specs=in_specs,
                out_specs=out_spec,
                scratch_shapes=scratch_shapes),
            compiler_params=pltpu.CompilerParams(
                dimension_semantics=("parallel", "arbitrary"),
                vmem_limit_bytes=vmem_limit),
        )(*args)
    return x.reshape(x.shape[0], -1)


# ----------------------------------------------------------------------------
# Pure-JAX reference (mirrors the PyTorch module, NCHW) for verification
# ----------------------------------------------------------------------------
def _ref_ln_ch(x, w, b):
    u = jnp.mean(x, axis=1, keepdims=True)
    s = jnp.mean((x - u) ** 2, axis=1, keepdims=True)
    xn = (x - u) / jnp.sqrt(s + EPS)
    return w[None, :, None, None] * xn + b[None, :, None, None]


def _ref_conv(x, w, b, stride, padding, groups=1):
    y = jax.lax.conv_general_dilated(
        x, w, window_strides=(stride, stride),
        padding=((padding, padding), (padding, padding)),
        dimension_numbers=("NCHW", "OIHW", "NCHW"),
        feature_group_count=groups)
    return y + b[None, :, None, None]


def ref_forward(x, params):
    for i, blocks in enumerate(params["stages"]):
        if i == 0:
            st = params["stem"]
            x = _ref_ln_ch(_ref_conv(x, st["conv_w"], st["conv_b"], 4, 0),
                           st["ln_w"], st["ln_b"])
        else:
            d = params["down"][i - 1]
            x = _ref_conv(_ref_ln_ch(x, d["ln_w"], d["ln_b"]),
                          d["conv_w"], d["conv_b"], 2, 0)
        for p in blocks:
            inp = x
            y = _ref_conv(x, p["dw_w"], p["dw_b"], 1, 3, groups=x.shape[1])
            y = _ref_ln_ch(y, p["ln_w"], p["ln_b"])
            y = _ref_conv(y, p["pw1_w"], p["pw1_b"], 1, 0)
            y = jax.nn.gelu(y, approximate=False)
            y = _ref_conv(y, p["pw2_w"], p["pw2_b"], 1, 0)
            x = inp + p["gamma"][None, :, None, None] * y
    x = jnp.mean(x, axis=(2, 3))
    return x @ params["head"]["w"].T + params["head"]["b"]


if __name__ == "__main__":
    key = jax.random.PRNGKey(0)
    kx, kp = jax.random.split(key)
    x = jax.random.normal(kx, (2, 3, 16, 16), dtype=jnp.float32)   # NCHW like PyTorch
    params = init_convnext_params(kp)

    fwd = jax.jit(convnext_forward)
    out = jax.block_until_ready(fwd(x, params))
    ref = jax.block_until_ready(ref_forward(x, params))

    assert out.shape == (2, 10), out.shape
    assert jnp.allclose(out, ref, atol=2e-3, rtol=2e-3), (out, ref)
    print("KERNEL_OK")
</pallas_src>

<mosaic_0001>
module attributes {stable_mosaic.version = 11 : i64} {
  func.func @kernel(%arg0: i32, %arg1: i32, %arg2: memref<1x4x4x4x12xf32, #tpu.memory_space<vmem>>, %arg3: memref<4x12x2xf32, #tpu.memory_space<vmem>>, %arg4: memref<3x2xf32, #tpu.memory_space<vmem>>, %arg5: memref<1x49x2xf32, #tpu.memory_space<vmem>>, %arg6: memref<1x5x2xf32, #tpu.memory_space<vmem>>, %arg7: memref<1x2x8xf32, #tpu.memory_space<vmem>>, %arg8: memref<1x1x8xf32, #tpu.memory_space<vmem>>, %arg9: memref<1x8x2xf32, #tpu.memory_space<vmem>>, %arg10: memref<1x4x4x2xf32, #tpu.memory_space<vmem>>, %arg11: memref<4x4x2xf32, #tpu.memory_space<vmem>>, %arg12: memref<10x10x2xf32, #tpu.memory_space<vmem>>) attributes {dimension_semantics = [#tpu.dimension_semantics<parallel>, #tpu.dimension_semantics<arbitrary>], iteration_bounds = array<i64: 2, 1>, scalar_prefetch = 0 : i64, scratch_operands = 2 : i64, tpu.core_type = #tpu.core_type<tc>, window_params = [{transform_indices = @transform_0, window_bounds = array<i64: 1, 4, 4, 4, 12>}, {pipeline_mode = #tpu.pipeline_mode<synchronous>, transform_indices = @transform_1, window_bounds = array<i64: 4, 12, 2>}, {pipeline_mode = #tpu.pipeline_mode<synchronous>, transform_indices = @transform_2, window_bounds = array<i64: 3, 2>}, {transform_indices = @transform_3, window_bounds = array<i64: 1, 49, 2>}, {transform_indices = @transform_4, window_bounds = array<i64: 1, 5, 2>}, {transform_indices = @transform_5, window_bounds = array<i64: 1, 2, 8>}, {transform_indices = @transform_6, window_bounds = array<i64: 1, 1, 8>}, {transform_indices = @transform_7, window_bounds = array<i64: 1, 8, 2>}, {transform_indices = @transform_8, window_bounds = array<i64: 1, 4, 4, 2>}]} {
    %c0_i32 = arith.constant 0 : i32
    %0 = arith.cmpi eq, %arg1, %c0_i32 : i32
    %1 = arith.extui %0 : i1 to i32
    %c0_i32_0 = arith.constant 0 : i32
    %2 = arith.cmpi ne, %1, %c0_i32_0 : i32
    scf.if %2 {
      %cst_63 = arith.constant 0.000000e+00 : f32
      %403 = vector.broadcast %cst_63 : f32 to vector<3x10x2xf32>
      %c0_64 = arith.constant 0 : index
      %c0_65 = arith.constant 0 : index
      %c0_66 = arith.constant 0 : index
      %404 = vector.load %arg12[%c0_64, %c0_65, %c0_66] : memref<10x10x2xf32, #tpu.memory_space<vmem>>, vector<3x10x2xf32>
      tpu.vector_store %arg12[%c0_64, %c0_65, %c0_66], %403 {strides = array<i32>} : memref<10x10x2xf32, #tpu.memory_space<vmem>>, vector<3x10x2xf32>,
      %cst_67 = arith.constant 0.000000e+00 : f32
      %405 = vector.broadcast %cst_67 : f32 to vector<3x10x2xf32>
      %c7 = arith.constant 7 : index
      %c0_68 = arith.constant 0 : index
      %c0_69 = arith.constant 0 : index
      %406 = vector.load %arg12[%c7, %c0_68, %c0_69] : memref<10x10x2xf32, #tpu.memory_space<vmem>>, vector<3x10x2xf32>
      tpu.vector_store %arg12[%c7, %c0_68, %c0_69], %405 {strides = array<i32>} : memref<10x10x2xf32, #tpu.memory_space<vmem>>, vector<3x10x2xf32>,
      %cst_70 = arith.constant 0.000000e+00 : f32
      %407 = vector.broadcast %cst_70 : f32 to vector<10x3x2xf32>
      %c0_71 = arith.constant 0 : index
      %c0_72 = arith.constant 0 : index
      %c0_73 = arith.constant 0 : index
      %408 = vector.load %arg12[%c0_71, %c0_72, %c0_73] : memref<10x10x2xf32, #tpu.memory_space<vmem>>, vector<10x3x2xf32>
      tpu.vector_store %arg12[%c0_71, %c0_72, %c0_73], %407 {strides = array<i32>} : memref<10x10x2xf32, #tpu.memory_space<vmem>>, vector<10x3x2xf32>,
      %cst_74 = arith.constant 0.000000e+00 : f32
      %409 = vector.broadcast %cst_74 : f32 to vector<10x3x2xf32>
      %c0_75 = arith.constant 0 : index
      %c7_76 = arith.constant 7 : index
      %c0_77 = arith.constant 0 : index
      %410 = vector.load %arg12[%c0_75, %c7_76, %c0_77] : memref<10x10x2xf32, #tpu.memory_space<vmem>>, vector<10x3x2xf32>
      tpu.vector_store %arg12[%c0_75, %c7_76, %c0_77], %409 {strides = array<i32>} : memref<10x10x2xf32, #tpu.memory_space<vmem>>, vector<10x3x2xf32>,
      %c0_78 = arith.constant 0 : index
      %c0_79 = arith.constant 0 : index
      %c0_80 = arith.constant 0 : index
      %c0_81 = arith.constant 0 : index
      %c0_82 = arith.constant 0 : index
      %411 = vector.load %arg2[%c0_78, %c0_79, %c0_80, %c0_81, %c0_82] : memref<1x4x4x4x12xf32, #tpu.memory_space<vmem>>, vector<1x4x4x4x12xf32>
      %412 = vector.shape_cast %411 : vector<1x4x4x4x12xf32> to vector<4x4x4x12xf32>
      %cst_83 = arith.constant 0.000000e+00 : f32
      %413 = vector.broadcast %cst_83 : f32 to vector<16x2xf32>
      %c0_84 = arith.constant 0 : index
      %c0_85 = arith.constant 0 : index
      %414 = vector.load %arg4[%c0_84, %c0_85] : memref<3x2xf32, #tpu.memory_space<vmem>>, vector<3x2xf32>
      %415 = vector.extract_strided_slice %412 {offsets = [0, 0, 0, 0], sizes = [4, 1, 4, 12], strides = [1, 1, 1, 1]} : vector<4x4x4x12xf32> to vector<4x1x4x12xf32>
      %416 = vector.shape_cast %415 : vector<4x1x4x12xf32> to vector<4x4x12xf32>
      %417 = vector.shape_cast %416 : vector<4x4x12xf32> to vector<16x12xf32>
      %c0_86 = arith.constant 0 : index
      %c0_87 = arith.constant 0 : index
      %c0_88 = arith.constant 0 : index
      %418 = vector.load %arg3[%c0_86, %c0_87, %c0_88] : memref<4x12x2xf32, #tpu.memory_space<vmem>>, vector<1x12x2xf32>
      %419 = vector.shape_cast %418 : vector<1x12x2xf32> to vector<12x2xf32>
      %cst_89 = arith.constant dense<0.000000e+00> : vector<16x2xf32>
      %420 = tpu.matmul %417, %419, %cst_89 {dimension_numbers = #tpu.dot_dimension_numbers<[1], [0], [0], [1], [0, 0, 1, 1], [], []>} : vector<16x12xf32>, vector<12x2xf32>, vector<16x2xf32> -> vector<16x2xf32>
      %421 = arith.addf %413, %420 : vector<16x2xf32>
      %422 = vector.extract_strided_slice %412 {offsets = [0, 1, 0, 0], sizes = [4, 1, 4, 12], strides = [1, 1, 1, 1]} : vector<4x4x4x12xf32> to vector<4x1x4x12xf32>
      %423 = vector.shape_cast %422 : vector<4x1x4x12xf32> to vector<4x4x12xf32>
      %424 = vector.shape_cast %423 : vector<4x4x12xf32> to vector<16x12xf32>
      %c1_90 = arith.constant 1 : index
      %c0_91 = arith.constant 0 : index
      %c0_92 = arith.constant 0 : index
      %425 = vector.load %arg3[%c1_90, %c0_91, %c0_92] : memref<4x12x2xf32, #tpu.memory_space<vmem>>, vector<1x12x2xf32>
      %426 = vector.shape_cast %425 : vector<1x12x2xf32> to vector<12x2xf32>
      %cst_93 = arith.constant dense<0.000000e+00> : vector<16x2xf32>
      %427 = tpu.matmul %424, %426, %cst_93 {dimension_numbers = #tpu.dot_dimension_numbers<[1], [0], [0], [1], [0, 0, 1, 1], [], []>} : vector<16x12xf32>, vector<12x2xf32>, vector<16x2xf32> -> vector<16x2xf32>
      %428 = arith.addf %421, %427 : vector<16x2xf32>
      %429 = vector.extract_strided_slice %412 {offsets = [0, 2, 0, 0], sizes = [4, 1, 4, 12], strides = [1, 1, 1, 1]} : vector<4x4x4x12xf32> to vector<4x1x4x12xf32>
      %430 = vector.shape_cast %429 : vector<4x1x4x12xf32> to vector<4x4x12xf32>
      %431 = vector.shape_cast %430 : vector<4x4x12xf32> to vector<16x12xf32>
      %c2_94 = arith.constant 2 : index
      %c0_95 = arith.constant 0 : index
      %c0_96 = arith.constant 0 : index
      %432 = vector.load %arg3[%c2_94, %c0_95, %c0_96] : memref<4x12x2xf32, #tpu.memory_space<vmem>>, vector<1x12x2xf32>
      %433 = vector.shape_cast %432 : vector<1x12x2xf32> to vector<12x2xf32>
      %cst_97 = arith.constant dense<0.000000e+00> : vector<16x2xf32>
      %434 = tpu.matmul %431, %433, %cst_97 {dimension_numbers = #tpu.dot_dimension_numbers<[1], [0], [0], [1], [0, 0, 1, 1], [], []>} : vector<16x12xf32>, vector<12x2xf32>, vector<16x2xf32> -> vector<16x2xf32>
      %435 = arith.addf %428, %434 : vector<16x2xf32>
      %436 = vector.extract_strided_slice %412 {offsets = [0, 3, 0, 0], sizes = [4, 1, 4, 12], strides = [1, 1, 1, 1]} : vector<4x4x4x12xf32> to vector<4x1x4x12xf32>
      %437 = vector.shape_cast %436 : vector<4x1x4x12xf32> to vector<4x4x12xf32>
      %438 = vector.shape_cast %437 : vector<4x4x12xf32> to vector<16x12xf32>
      %c3_98 = arith.constant 3 : index
      %c0_99 = arith.constant 0 : index
      %c0_100 = arith.constant 0 : index
      %439 = vector.load %arg3[%c3_98, %c0_99, %c0_100] : memref<4x12x2xf32, #tpu.memory_space<vmem>>, vector<1x12x2xf32>
      %440 = vector.shape_cast %439 : vector<1x12x2xf32> to vector<12x2xf32>
      %cst_101 = arith.constant dense<0.000000e+00> : vector<16x2xf32>
      %441 = tpu.matmul %438, %440, %cst_101 {dimension_numbers = #tpu.dot_dimension_numbers<[1], [0], [0], [1], [0, 0, 1, 1], [], []>} : vector<16x12xf32>, vector<12x2xf32>, vector<16x2xf32> -> vector<16x2xf32>
      %442 = arith.addf %435, %441 : vector<16x2xf32>
      %443 = vector.extract_strided_slice %414 {offsets = [0, 0], sizes = [1, 2], strides = [1, 1]} : vector<3x2xf32> to vector<1x2xf32>
      %444 = vector.broadcast %443 : vector<1x2xf32> to vector<16x2xf32>
      %445 = arith.addf %442, %444 : vector<16x2xf32>
      %446 = vector.extract_strided_slice %414 {offsets = [1, 0], sizes = [1, 2], strides = [1, 1]} : vector<3x2xf32> to vector<1x2xf32>
      %447 = vector.extract_strided_slice %414 {offsets = [2, 0], sizes = [1, 2], strides = [1, 1]} : vector<3x2xf32> to vector<1x2xf32>
      %cst_102 = arith.constant dense<0.000000e+00> : vector<16xf32>
      %448 = vector.multi_reduction <add>, %445, %cst_102 [1] : vector<16x2xf32> to vector<16xf32>
      %449 = vector.shape_cast %448 : vector<16xf32> to vector<16x1xf32>
      %cst_103 = arith.constant 2.000000e+00 : f32
      %450 = vector.broadcast %cst_103 : f32 to vector<16x1xf32>
      %451 = arith.divf %449, %450 : vector<16x1xf32>
      %452 = vector.broadcast %451 : vector<16x1xf32> to vector<16x2xf32>
      %453 = arith.subf %445, %452 : vector<16x2xf32>
      %454 = arith.mulf %453, %453 : vector<16x2xf32>
      %cst_104 = arith.constant dense<0.000000e+00> : vector<16xf32>
      %455 = vector.multi_reduction <add>, %454, %cst_104 [1] : vector<16x2xf32> to vector<16xf32>
      %456 = vector.shape_cast %455 : vector<16xf32> to vector<16x1xf32>
      %cst_105 = arith.constant 2.000000e+00 : f32
      %457 = vector.broadcast %cst_105 : f32 to vector<16x1xf32>
      %458 = arith.divf %456, %457 : vector<16x1xf32>
      %459 = vector.broadcast %451 : vector<16x1xf32> to vector<16x2xf32>
      %460 = arith.subf %445, %459 : vector<16x2xf32>
      %cst_106 = arith.constant 9.99999997E-7 : f32
      %461 = vector.broadcast %cst_106 : f32 to vector<16x1xf32>
      %462 = arith.addf %458, %461 : vector<16x1xf32>
      %463 = math.rsqrt %462 : vector<16x1xf32>
      %464 = vector.broadcast %463 : vector<16x1xf32> to vector<16x2xf32>
      %465 = arith.mulf %460, %464 : vector<16x2xf32>
      %466 = vector.broadcast %446 : vector<1x2xf32> to vector<16x2xf32>
      %467 = arith.mulf %466, %465 : vector<16x2xf32>
      %468 = vector.broadcast %447 : vector<1x2xf32> to vector<16x2xf32>
      %469 = arith.addf %467, %468 : vector<16x2xf32>
      %470 = vector.shape_cast %469 : vector<16x2xf32> to vector<4x4x2xf32>
      %c0_107 = arith.constant 0 : index
      %c0_108 = arith.constant 0 : index
      %c0_109 = arith.constant 0 : index
      %471 = vector.load %arg11[%c0_107, %c0_108, %c0_109] : memref<4x4x2xf32, #tpu.memory_space<vmem>>, vector<4x4x2xf32>
      tpu.vector_store %arg11[%c0_107, %c0_108, %c0_109], %470 {strides = array<i32>} : memref<4x4x2xf32, #tpu.memory_space<vmem>>, vector<4x4x2xf32>,
    } else {
    }
    %c0 = arith.constant 0 : index
    %c0_1 = arith.constant 0 : index
    %c0_2 = arith.constant 0 : index
    %3 = vector.load %arg11[%c0, %c0_1, %c0_2] : memref<4x4x2xf32, #tpu.memory_space<vmem>>, vector<4x4x2xf32>
    %c3 = arith.constant 3 : index
    %c3_3 = arith.constant 3 : index
    %c0_4 = arith.constant 0 : index
    %4 = vector.load %arg12[%c3, %c3_3, %c0_4] : memref<10x10x2xf32, #tpu.memory_space<vmem>>, vector<4x4x2xf32>
    tpu.vector_store %arg12[%c3, %c3_3, %c0_4], %3 {strides = array<i32>} : memref<10x10x2xf32, #tpu.memory_space<vmem>>, vector<4x4x2xf32>,
    %c0_5 = arith.constant 0 : index
    %c0_6 = arith.constant 0 : index
    %c0_7 = arith.constant 0 : index
    %5 = vector.load %arg5[%c0_5, %c0_6, %c0_7] : memref<1x49x2xf32, #tpu.memory_space<vmem>>, vector<1x49x2xf32>
    %6 = vector.shape_cast %5 : vector<1x49x2xf32> to vector<49x2xf32>
    %c0_8 = arith.constant 0 : index
    %c0_9 = arith.constant 0 : index
    %c0_10 = arith.constant 0 : index
    %7 = vector.load %arg6[%c0_8, %c0_9, %c0_10] : memref<1x5x2xf32, #tpu.memory_space<vmem>>, vector<1x5x2xf32>
    %8 = vector.shape_cast %7 : vector<1x5x2xf32> to vector<5x2xf32>
    %cst = arith.constant 0.000000e+00 : f32
    %9 = vector.broadcast %cst : f32 to vector<4x4x2xf32>
    %c0_11 = arith.constant 0 : index
    %c0_12 = arith.constant 0 : index
    %c0_13 = arith.constant 0 : index
    %10 = vector.load %arg12[%c0_11, %c0_12, %c0_13] : memref<10x10x2xf32, #tpu.memory_space<vmem>>, vector<4x10x2xf32>
    %11 = vector.extract_strided_slice %10 {offsets = [0, 0, 0], sizes = [4, 4, 2], strides = [1, 1, 1]} : vector<4x10x2xf32> to vector<4x4x2xf32>
    %12 = vector.extract_strided_slice %6 {offsets = [0, 0], sizes = [1, 2], strides = [1, 1]} : vector<49x2xf32> to vector<1x2xf32>
    %13 = vector.shape_cast %12 : vector<1x2xf32> to vector<1x1x2xf32>
    %14 = vector.broadcast %13 : vector<1x1x2xf32> to vector<4x4x2xf32>
    %15 = arith.mulf %11, %14 : vector<4x4x2xf32>
    %16 = arith.addf %9, %15 : vector<4x4x2xf32>
    %17 = vector.extract_strided_slice %10 {offsets = [0, 1, 0], sizes = [4, 4, 2], strides = [1, 1, 1]} : vector<4x10x2xf32> to vector<4x4x2xf32>
    %18 = vector.extract_strided_slice %6 {offsets = [1, 0], sizes = [1, 2], strides = [1, 1]} : vector<49x2xf32> to vector<1x2xf32>
    %19 = vector.shape_cast %18 : vector<1x2xf32> to vector<1x1x2xf32>
    %20 = vector.broadcast %19 : vector<1x1x2xf32> to vector<4x4x2xf32>
    %21 = arith.mulf %17, %20 : vector<4x4x2xf32>
    %22 = arith.addf %16, %21 : vector<4x4x2xf32>
    %23 = vector.extract_strided_slice %10 {offsets = [0, 2, 0], sizes = [4, 4, 2], strides = [1, 1, 1]} : vector<4x10x2xf32> to vector<4x4x2xf32>
    %24 = vector.extract_strided_slice %6 {offsets = [2, 0], sizes = [1, 2], strides = [1, 1]} : vector<49x2xf32> to vector<1x2xf32>
    %25 = vector.shape_cast %24 : vector<1x2xf32> to vector<1x1x2xf32>
    %26 = vector.broadcast %25 : vector<1x1x2xf32> to vector<4x4x2xf32>
    %27 = arith.mulf %23, %26 : vector<4x4x2xf32>
    %28 = arith.addf %22, %27 : vector<4x4x2xf32>
    %29 = vector.extract_strided_slice %10 {offsets = [0, 3, 0], sizes = [4, 4, 2], strides = [1, 1, 1]} : vector<4x10x2xf32> to vector<4x4x2xf32>
    %30 = vector.extract_strided_slice %6 {offsets = [3, 0], sizes = [1, 2], strides = [1, 1]} : vector<49x2xf32> to vector<1x2xf32>
    %31 = vector.shape_cast %30 : vector<1x2xf32> to vector<1x1x2xf32>
    %32 = vector.broadcast %31 : vector<1x1x2xf32> to vector<4x4x2xf32>
    %33 = arith.mulf %29, %32 : vector<4x4x2xf32>
    %34 = arith.addf %28, %33 : vector<4x4x2xf32>
    %35 = vector.extract_strided_slice %10 {offsets = [0, 4, 0], sizes = [4, 4, 2], strides = [1, 1, 1]} : vector<4x10x2xf32> to vector<4x4x2xf32>
    %36 = vector.extract_strided_slice %6 {offsets = [4, 0], sizes = [1, 2], strides = [1, 1]} : vector<49x2xf32> to vector<1x2xf32>
    %37 = vector.shape_cast %36 : vector<1x2xf32> to vector<1x1x2xf32>
    %38 = vector.broadcast %37 : vector<1x1x2xf32> to vector<4x4x2xf32>
    %39 = arith.mulf %35, %38 : vector<4x4x2xf32>
    %40 = arith.addf %34, %39 : vector<4x4x2xf32>
    %41 = vector.extract_strided_slice %10 {offsets = [0, 5, 0], sizes = [4, 4, 2], strides = [1, 1, 1]} : vector<4x10x2xf32> to vector<4x4x2xf32>
    %42 = vector.extract_strided_slice %6 {offsets = [5, 0], sizes = [1, 2], strides = [1, 1]} : vector<49x2xf32> to vector<1x2xf32>
    %43 = vector.shape_cast %42 : vector<1x2xf32> to vector<1x1x2xf32>
    %44 = vector.broadcast %43 : vector<1x1x2xf32> to vector<4x4x2xf32>
    %45 = arith.mulf %41, %44 : vector<4x4x2xf32>
    %46 = arith.addf %40, %45 : vector<4x4x2xf32>
    %47 = vector.extract_strided_slice %10 {offsets = [0, 6, 0], sizes = [4, 4, 2], strides = [1, 1, 1]} : vector<4x10x2xf32> to vector<4x4x2xf32>
    %48 = vector.extract_strided_slice %6 {offsets = [6, 0], sizes = [1, 2], strides = [1, 1]} : vector<49x2xf32> to vector<1x2xf32>
    %49 = vector.shape_cast %48 : vector<1x2xf32> to vector<1x1x2xf32>
    %50 = vector.broadcast %49 : vector<1x1x2xf32> to vector<4x4x2xf32>
    %51 = arith.mulf %47, %50 : vector<4x4x2xf32>
    %52 = arith.addf %46, %51 : vector<4x4x2xf32>
    %c1 = arith.constant 1 : index
    %c0_14 = arith.constant 0 : index
    %c0_15 = arith.constant 0 : index
    %53 = vector.load %arg12[%c1, %c0_14, %c0_15] : memref<10x10x2xf32, #tpu.memory_space<vmem>>, vector<4x10x2xf32>
    %54 = vector.extract_strided_slice %53 {offsets = [0, 0, 0], sizes = [4, 4, 2], strides = [1, 1, 1]} : vector<4x10x2xf32> to vector<4x4x2xf32>
    %55 = vector.extract_strided_slice %6 {offsets = [7, 0], sizes = [1, 2], strides = [1, 1]} : vector<49x2xf32> to vector<1x2xf32>
    %56 = vector.shape_cast %55 : vector<1x2xf32> to vector<1x1x2xf32>
    %57 = vector.broadcast %56 : vector<1x1x2xf32> to vector<4x4x2xf32>
    %58 = arith.mulf %54, %57 : vector<4x4x2xf32>
    %59 = arith.addf %52, %58 : vector<4x4x2xf32>
    %60 = vector.extract_strided_slice %53 {offsets = [0, 1, 0], sizes = [4, 4, 2], strides = [1, 1, 1]} : vector<4x10x2xf32> to vector<4x4x2xf32>
    %61 = vector.extract_strided_slice %6 {offsets = [8, 0], sizes = [1, 2], strides = [1, 1]} : vector<49x2xf32> to vector<1x2xf32>
    %62 = vector.shape_cast %61 : vector<1x2xf32> to vector<1x1x2xf32>
    %63 = vector.broadcast %62 : vector<1x1x2xf32> to vector<4x4x2xf32>
    %64 = arith.mulf %60, %63 : vector<4x4x2xf32>
    %65 = arith.addf %59, %64 : vector<4x4x2xf32>
    %66 = vector.extract_strided_slice %53 {offsets = [0, 2, 0], sizes = [4, 4, 2], strides = [1, 1, 1]} : vector<4x10x2xf32> to vector<4x4x2xf32>
    %67 = vector.extract_strided_slice %6 {offsets = [9, 0], sizes = [1, 2], strides = [1, 1]} : vector<49x2xf32> to vector<1x2xf32>
    %68 = vector.shape_cast %67 : vector<1x2xf32> to vector<1x1x2xf32>
    %69 = vector.broadcast %68 : vector<1x1x2xf32> to vector<4x4x2xf32>
    %70 = arith.mulf %66, %69 : vector<4x4x2xf32>
    %71 = arith.addf %65, %70 : vector<4x4x2xf32>
    %72 = vector.extract_strided_slice %53 {offsets = [0, 3, 0], sizes = [4, 4, 2], strides = [1, 1, 1]} : vector<4x10x2xf32> to vector<4x4x2xf32>
    %73 = vector.extract_strided_slice %6 {offsets = [10, 0], sizes = [1, 2], strides = [1, 1]} : vector<49x2xf32> to vector<1x2xf32>
    %74 = vector.shape_cast %73 : vector<1x2xf32> to vector<1x1x2xf32>
    %75 = vector.broadcast %74 : vector<1x1x2xf32> to vector<4x4x2xf32>
    %76 = arith.mulf %72, %75 : vector<4x4x2xf32>
    %77 = arith.addf %71, %76 : vector<4x4x2xf32>
    %78 = vector.extract_strided_slice %53 {offsets = [0, 4, 0], sizes = [4, 4, 2], strides = [1, 1, 1]} : vector<4x10x2xf32> to vector<4x4x2xf32>
    %79 = vector.extract_strided_slice %6 {offsets = [11, 0], sizes = [1, 2], strides = [1, 1]} : vector<49x2xf32> to vector<1x2xf32>
    %80 = vector.shape_cast %79 : vector<1x2xf32> to vector<1x1x2xf32>
    %81 = vector.broadcast %80 : vector<1x1x2xf32> to vector<4x4x2xf32>
    %82 = arith.mulf %78, %81 : vector<4x4x2xf32>
    %83 = arith.addf %77, %82 : vector<4x4x2xf32>
    %84 = vector.extract_strided_slice %53 {offsets = [0, 5, 0], sizes = [4, 4, 2], strides = [1, 1, 1]} : vector<4x10x2xf32> to vector<4x4x2xf32>
    %85 = vector.extract_strided_slice %6 {offsets = [12, 0], sizes = [1, 2], strides = [1, 1]} : vector<49x2xf32> to vector<1x2xf32>
    %86 = vector.shape_cast %85 : vector<1x2xf32> to vector<1x1x2xf32>
    %87 = vector.broadcast %86 : vector<1x1x2xf32> to vector<4x4x2xf32>
    %88 = arith.mulf %84, %87 : vector<4x4x2xf32>
    %89 = arith.addf %83, %88 : vector<4x4x2xf32>
    %90 = vector.extract_strided_slice %53 {offsets = [0, 6, 0], sizes = [4, 4, 2], strides = [1, 1, 1]} : vector<4x10x2xf32> to vector<4x4x2xf32>
    %91 = vector.extract_strided_slice %6 {offsets = [13, 0], sizes = [1, 2], strides = [1, 1]} : vector<49x2xf32> to vector<1x2xf32>
    %92 = vector.shape_cast %91 : vector<1x2xf32> to vector<1x1x2xf32>
    %93 = vector.broadcast %92 : vector<1x1x2xf32> to vector<4x4x2xf32>
    %94 = arith.mulf %90, %93 : vector<4x4x2xf32>
    %95 = arith.addf %89, %94 : vector<4x4x2xf32>
    %c2 = arith.constant 2 : index
    %c0_16 = arith.constant 0 : index
    %c0_17 = arith.constant 0 : index
    %96 = vector.load %arg12[%c2, %c0_16, %c0_17] : memref<10x10x2xf32, #tpu.memory_space<vmem>>, vector<4x10x2xf32>
    %97 = vector.extract_strided_slice %96 {offsets = [0, 0, 0], sizes = [4, 4, 2], strides = [1, 1, 1]} : vector<4x10x2xf32> to vector<4x4x2xf32>
    %98 = vector.extract_strided_slice %6 {offsets = [14, 0], sizes = [1, 2], strides = [1, 1]} : vector<49x2xf32> to vector<1x2xf32>
    %99 = vector.shape_cast %98 : vector<1x2xf32> to vector<1x1x2xf32>
    %100 = vector.broadcast %99 : vector<1x1x2xf32> to vector<4x4x2xf32>
    %101 = arith.mulf %97, %100 : vector<4x4x2xf32>
    %102 = arith.addf %95, %101 : vector<4x4x2xf32>
    %103 = vector.extract_strided_slice %96 {offsets = [0, 1, 0], sizes = [4, 4, 2], strides = [1, 1, 1]} : vector<4x10x2xf32> to vector<4x4x2xf32>
    %104 = vector.extract_strided_slice %6 {offsets = [15, 0], sizes = [1, 2], strides = [1, 1]} : vector<49x2xf32> to vector<1x2xf32>
    %105 = vector.shape_cast %104 : vector<1x2xf32> to vector<1x1x2xf32>
    %106 = vector.broadcast %105 : vector<1x1x2xf32> to vector<4x4x2xf32>
    %107 = arith.mulf %103, %106 : vector<4x4x2xf32>
    %108 = arith.addf %102, %107 : vector<4x4x2xf32>
    %109 = vector.extract_strided_slice %96 {offsets = [0, 2, 0], sizes = [4, 4, 2], strides = [1, 1, 1]} : vector<4x10x2xf32> to vector<4x4x2xf32>
    %110 = vector.extract_strided_slice %6 {offsets = [16, 0], sizes = [1, 2], strides = [1, 1]} : vector<49x2xf32> to vector<1x2xf32>
    %111 = vector.shape_cast %110 : vector<1x2xf32> to vector<1x1x2xf32>
    %112 = vector.broadcast %111 : vector<1x1x2xf32> to vector<4x4x2xf32>
    %113 = arith.mulf %109, %112 : vector<4x4x2xf32>
    %114 = arith.addf %108, %113 : vector<4x4x2xf32>
    %115 = vector.extract_strided_slice %96 {offsets = [0, 3, 0], sizes = [4, 4, 2], strides = [1, 1, 1]} : vector<4x10x2xf32> to vector<4x4x2xf32>
    %116 = vector.extract_strided_slice %6 {offsets = [17, 0], sizes = [1, 2], strides = [1, 1]} : vector<49x2xf32> to vector<1x2xf32>
    %117 = vector.shape_cast %116 : vector<1x2xf32> to vector<1x1x2xf32>
    %118 = vector.broadcast %117 : vector<1x1x2xf32> to vector<4x4x2xf32>
    %119 = arith.mulf %115, %118 : vector<4x4x2xf32>
    %120 = arith.addf %114, %119 : vector<4x4x2xf32>
    %121 = vector.extract_strided_slice %96 {offsets = [0, 4, 0], sizes = [4, 4, 2], strides = [1, 1, 1]} : vector<4x10x2xf32> to vector<4x4x2xf32>
    %122 = vector.extract_strided_slice %6 {offsets = [18, 0], sizes = [1, 2], strides = [1, 1]} : vector<49x2xf32> to vector<1x2xf32>
    %123 = vector.shape_cast %122 : vector<1x2xf32> to vector<1x1x2xf32>
    %124 = vector.broadcast %123 : vector<1x1x2xf32> to vector<4x4x2xf32>
    %125 = arith.mulf %121, %124 : vector<4x4x2xf32>
    %126 = arith.addf %120, %125 : vector<4x4x2xf32>
    %127 = vector.extract_strided_slice %96 {offsets = [0, 5, 0], sizes = [4, 4, 2], strides = [1, 1, 1]} : vector<4x10x2xf32> to vector<4x4x2xf32>
    %128 = vector.extract_strided_slice %6 {offsets = [19, 0], sizes = [1, 2], strides = [1, 1]} : vector<49x2xf32> to vector<1x2xf32>
    %129 = vector.shape_cast %128 : vector<1x2xf32> to vector<1x1x2xf32>
    %130 = vector.broadcast %129 : vector<1x1x2xf32> to vector<4x4x2xf32>
    %131 = arith.mulf %127, %130 : vector<4x4x2xf32>
    %132 = arith.addf %126, %131 : vector<4x4x2xf32>
    %133 = vector.extract_strided_slice %96 {offsets = [0, 6, 0], sizes = [4, 4, 2], strides = [1, 1, 1]} : vector<4x10x2xf32> to vector<4x4x2xf32>
    %134 = vector.extract_strided_slice %6 {offsets = [20, 0], sizes = [1, 2], strides = [1, 1]} : vector<49x2xf32> to vector<1x2xf32>
    %135 = vector.shape_cast %134 : vector<1x2xf32> to vector<1x1x2xf32>
    %136 = vector.broadcast %135 : vector<1x1x2xf32> to vector<4x4x2xf32>
    %137 = arith.mulf %133, %136 : vector<4x4x2xf32>
    %138 = arith.addf %132, %137 : vector<4x4x2xf32>
    %c3_18 = arith.constant 3 : index
    %c0_19 = arith.constant 0 : index
    %c0_20 = arith.constant 0 : index
    %139 = vector.load %arg12[%c3_18, %c0_19, %c0_20] : memref<10x10x2xf32, #tpu.memory_space<vmem>>, vector<4x10x2xf32>
    %140 = vector.extract_strided_slice %139 {offsets = [0, 0, 0], sizes = [4, 4, 2], strides = [1, 1, 1]} : vector<4x10x2xf32> to vector<4x4x2xf32>
    %141 = vector.extract_strided_slice %6 {offsets = [21, 0], sizes = [1, 2], strides = [1, 1]} : vector<49x2xf32> to vector<1x2xf32>
    %142 = vector.shape_cast %141 : vector<1x2xf32> to vector<1x1x2xf32>
    %143 = vector.broadcast %142 : vector<1x1x2xf32> to vector<4x4x2xf32>
    %144 = arith.mulf %140, %143 : vector<4x4x2xf32>
    %145 = arith.addf %138, %144 : vector<4x4x2xf32>
    %146 = vector.extract_strided_slice %139 {offsets = [0, 1, 0], sizes = [4, 4, 2], strides = [1, 1, 1]} : vector<4x10x2xf32> to vector<4x4x2xf32>
    %147 = vector.extract_strided_slice %6 {offsets = [22, 0], sizes = [1, 2], strides = [1, 1]} : vector<49x2xf32> to vector<1x2xf32>
    %148 = vector.shape_cast %147 : vector<1x2xf32> to vector<1x1x2xf32>
    %149 = vector.broadcast %148 : vector<1x1x2xf32> to vector<4x4x2xf32>
    %150 = arith.mulf %146, %149 : vector<4x4x2xf32>
    %151 = arith.addf %145, %150 : vector<4x4x2xf32>
    %152 = vector.extract_strided_slice %139 {offsets = [0, 2, 0], sizes = [4, 4, 2], strides = [1, 1, 1]} : vector<4x10x2xf32> to vector<4x4x2xf32>
    %153 = vector.extract_strided_slice %6 {offsets = [23, 0], sizes = [1, 2], strides = [1, 1]} : vector<49x2xf32> to vector<1x2xf32>
    %154 = vector.shape_cast %153 : vector<1x2xf32> to vector<1x1x2xf32>
    %155 = vector.broadcast %154 : vector<1x1x2xf32> to vector<4x4x2xf32>
    %156 = arith.mulf %152, %155 : vector<4x4x2xf32>
    %157 = arith.addf %151, %156 : vector<4x4x2xf32>
    %158 = vector.extract_strided_slice %139 {offsets = [0, 3, 0], sizes = [4, 4, 2], strides = [1, 1, 1]} : vector<4x10x2xf32> to vector<4x4x2xf32>
    %159 = vector.extract_strided_slice %6 {offsets = [24, 0], sizes = [1, 2], strides = [1, 1]} : vector<49x2xf32> to vector<1x2xf32>
    %160 = vector.shape_cast %159 : vector<1x2xf32> to vector<1x1x2xf32>
    %161 = vector.broadcast %160 : vector<1x1x2xf32> to vector<4x4x2xf32>
    %162 = arith.mulf %158, %161 : vector<4x4x2xf32>
    %163 = arith.addf %157, %162 : vector<4x4x2xf32>
    %164 = vector.extract_strided_slice %139 {offsets = [0, 4, 0], sizes = [4, 4, 2], strides = [1, 1, 1]} : vector<4x10x2xf32> to vector<4x4x2xf32>
    %165 = vector.extract_strided_slice %6 {offsets = [25, 0], sizes = [1, 2], strides = [1, 1]} : vector<49x2xf32> to vector<1x2xf32>
    %166 = vector.shape_cast %165 : vector<1x2xf32> to vector<1x1x2xf32>
    %167 = vector.broadcast %166 : vector<1x1x2xf32> to vector<4x4x2xf32>
    %168 = arith.mulf %164, %167 : vector<4x4x2xf32>
    %169 = arith.addf %163, %168 : vector<4x4x2xf32>
    %170 = vector.extract_strided_slice %139 {offsets = [0, 5, 0], sizes = [4, 4, 2], strides = [1, 1, 1]} : vector<4x10x2xf32> to vector<4x4x2xf32>
    %171 = vector.extract_strided_slice %6 {offsets = [26, 0], sizes = [1, 2], strides = [1, 1]} : vector<49x2xf32> to vector<1x2xf32>
    %172 = vector.shape_cast %171 : vector<1x2xf32> to vector<1x1x2xf32>
    %173 = vector.broadcast %172 : vector<1x1x2xf32> to vector<4x4x2xf32>
    %174 = arith.mulf %170, %173 : vector<4x4x2xf32>
    %175 = arith.addf %169, %174 : vector<4x4x2xf32>
    %176 = vector.extract_strided_slice %139 {offsets = [0, 6, 0], sizes = [4, 4, 2], strides = [1, 1, 1]} : vector<4x10x2xf32> to vector<4x4x2xf32>
    %177 = vector.extract_strided_slice %6 {offsets = [27, 0], sizes = [1, 2], strides = [1, 1]} : vector<49x2xf32> to vector<1x2xf32>
    %178 = vector.shape_cast %177 : vector<1x2xf32> to vector<1x1x2xf32>
    %179 = vector.broadcast %178 : vector<1x1x2xf32> to vector<4x4x2xf32>
    %180 = arith.mulf %176, %179 : vector<4x4x2xf32>
    %181 = arith.addf %175, %180 : vector<4x4x2xf32>
    %c4 = arith.constant 4 : index
    %c0_21 = arith.constant 0 : index
    %c0_22 = arith.constant 0 : index
    %182 = vector.load %arg12[%c4, %c0_21, %c0_22] : memref<10x10x2xf32, #tpu.memory_space<vmem>>, vector<4x10x2xf32>
    %183 = vector.extract_strided_slice %182 {offsets = [0, 0, 0], sizes = [4, 4, 2], strides = [1, 1, 1]} : vector<4x10x2xf32> to vector<4x4x2xf32>
    %184 = vector.extract_strided_slice %6 {offsets = [28, 0], sizes = [1, 2], strides = [1, 1]} : vector<49x2xf32> to vector<1x2xf32>
    %185 = vector.shape_cast %184 : vector<1x2xf32> to vector<1x1x2xf32>
    %186 = vector.broadcast %185 : vector<1x1x2xf32> to vector<4x4x2xf32>
    %187 = arith.mulf %183, %186 : vector<4x4x2xf32>
    %188 = arith.addf %181, %187 : vector<4x4x2xf32>
    %189 = vector.extract_strided_slice %182 {offsets = [0, 1, 0], sizes = [4, 4, 2], strides = [1, 1, 1]} : vector<4x10x2xf32> to vector<4x4x2xf32>
    %190 = vector.extract_strided_slice %6 {offsets = [29, 0], sizes = [1, 2], strides = [1, 1]} : vector<49x2xf32> to vector<1x2xf32>
    %191 = vector.shape_cast %190 : vector<1x2xf32> to vector<1x1x2xf32>
    %192 = vector.broadcast %191 : vector<1x1x2xf32> to vector<4x4x2xf32>
    %193 = arith.mulf %189, %192 : vector<4x4x2xf32>
    %194 = arith.addf %188, %193 : vector<4x4x2xf32>
    %195 = vector.extract_strided_slice %182 {offsets = [0, 2, 0], sizes = [4, 4, 2], strides = [1, 1, 1]} : vector<4x10x2xf32> to vector<4x4x2xf32>
    %196 = vector.extract_strided_slice %6 {offsets = [30, 0], sizes = [1, 2], strides = [1, 1]} : vector<49x2xf32> to vector<1x2xf32>
    %197 = vector.shape_cast %196 : vector<1x2xf32> to vector<1x1x2xf32>
    %198 = vector.broadcast %197 : vector<1x1x2xf32> to vector<4x4x2xf32>
    %199 = arith.mulf %195, %198 : vector<4x4x2xf32>
    %200 = arith.addf %194, %199 : vector<4x4x2xf32>
    %201 = vector.extract_strided_slice %182 {offsets = [0, 3, 0], sizes = [4, 4, 2], strides = [1, 1, 1]} : vector<4x10x2xf32> to vector<4x4x2xf32>
    %202 = vector.extract_strided_slice %6 {offsets = [31, 0], sizes = [1, 2], strides = [1, 1]} : vector<49x2xf32> to vector<1x2xf32>
    %203 = vector.shape_cast %202 : vector<1x2xf32> to vector<1x1x2xf32>
    %204 = vector.broadcast %203 : vector<1x1x2xf32> to vector<4x4x2xf32>
    %205 = arith.mulf %201, %204 : vector<4x4x2xf32>
    %206 = arith.addf %200, %205 : vector<4x4x2xf32>
    %207 = vector.extract_strided_slice %182 {offsets = [0, 4, 0], sizes = [4, 4, 2], strides = [1, 1, 1]} : vector<4x10x2xf32> to vector<4x4x2xf32>
    %208 = vector.extract_strided_slice %6 {offsets = [32, 0], sizes = [1, 2], strides = [1, 1]} : vector<49x2xf32> to vector<1x2xf32>
    %209 = vector.shape_cast %208 : vector<1x2xf32> to vector<1x1x2xf32>
    %210 = vector.broadcast %209 : vector<1x1x2xf32> to vector<4x4x2xf32>
    %211 = arith.mulf %207, %210 : vector<4x4x2xf32>
    %212 = arith.addf %206, %211 : vector<4x4x2xf32>
    %213 = vector.extract_strided_slice %182 {offsets = [0, 5, 0], sizes = [4, 4, 2], strides = [1, 1, 1]} : vector<4x10x2xf32> to vector<4x4x2xf32>
    %214 = vector.extract_strided_slice %6 {offsets = [33, 0], sizes = [1, 2], strides = [1, 1]} : vector<49x2xf32> to vector<1x2xf32>
    %215 = vector.shape_cast %214 : vector<1x2xf32> to vector<1x1x2xf32>
    %216 = vector.broadcast %215 : vector<1x1x2xf32> to vector<4x4x2xf32>
    %217 = arith.mulf %213, %216 : vector<4x4x2xf32>
    %218 = arith.addf %212, %217 : vector<4x4x2xf32>
    %219 = vector.extract_strided_slice %182 {offsets = [0, 6, 0], sizes = [4, 4, 2], strides = [1, 1, 1]} : vector<4x10x2xf32> to vector<4x4x2xf32>
    %220 = vector.extract_strided_slice %6 {offsets = [34, 0], sizes = [1, 2], strides = [1, 1]} : vector<49x2xf32> to vector<1x2xf32>
    %221 = vector.shape_cast %220 : vector<1x2xf32> to vector<1x1x2xf32>
    %222 = vector.broadcast %221 : vector<1x1x2xf32> to vector<4x4x2xf32>
    %223 = arith.mulf %219, %222 : vector<4x4x2xf32>
    %224 = arith.addf %218, %223 : vector<4x4x2xf32>
    %c5 = arith.constant 5 : index
    %c0_23 = arith.constant 0 : index
    %c0_24 = arith.constant 0 : index
    %225 = vector.load %arg12[%c5, %c0_23, %c0_24] : memref<10x10x2xf32, #tpu.memory_space<vmem>>, vector<4x10x2xf32>
    %226 = vector.extract_strided_slice %225 {offsets = [0, 0, 0], sizes = [4, 4, 2], strides = [1, 1, 1]} : vector<4x10x2xf32> to vector<4x4x2xf32>
    %227 = vector.extract_strided_slice %6 {offsets = [35, 0], sizes = [1, 2], strides = [1, 1]} : vector<49x2xf32> to vector<1x2xf32>
    %228 = vector.shape_cast %227 : vector<1x2xf32> to vector<1x1x2xf32>
    %229 = vector.broadcast %228 : vector<1x1x2xf32> to vector<4x4x2xf32>
    %230 = arith.mulf %226, %229 : vector<4x4x2xf32>
    %231 = arith.addf %224, %230 : vector<4x4x2xf32>
    %232 = vector.extract_strided_slice %225 {offsets = [0, 1, 0], sizes = [4, 4, 2], strides = [1, 1, 1]} : vector<4x10x2xf32> to vector<4x4x2xf32>
    %233 = vector.extract_strided_slice %6 {offsets = [36, 0], sizes = [1, 2], strides = [1, 1]} : vector<49x2xf32> to vector<1x2xf32>
    %234 = vector.shape_cast %233 : vector<1x2xf32> to vector<1x1x2xf32>
    %235 = vector.broadcast %234 : vector<1x1x2xf32> to vector<4x4x2xf32>
    %236 = arith.mulf %232, %235 : vector<4x4x2xf32>
    %237 = arith.addf %231, %236 : vector<4x4x2xf32>
    %238 = vector.extract_strided_slice %225 {offsets = [0, 2, 0], sizes = [4, 4, 2], strides = [1, 1, 1]} : vector<4x10x2xf32> to vector<4x4x2xf32>
    %239 = vector.extract_strided_slice %6 {offsets = [37, 0], sizes = [1, 2], strides = [1, 1]} : vector<49x2xf32> to vector<1x2xf32>
    %240 = vector.shape_cast %239 : vector<1x2xf32> to vector<1x1x2xf32>
    %241 = vector.broadcast %240 : vector<1x1x2xf32> to vector<4x4x2xf32>
    %242 = arith.mulf %238, %241 : vector<4x4x2xf32>
    %243 = arith.addf %237, %242 : vector<4x4x2xf32>
    %244 = vector.extract_strided_slice %225 {offsets = [0, 3, 0], sizes = [4, 4, 2], strides = [1, 1, 1]} : vector<4x10x2xf32> to vector<4x4x2xf32>
    %245 = vector.extract_strided_slice %6 {offsets = [38, 0], sizes = [1, 2], strides = [1, 1]} : vector<49x2xf32> to vector<1x2xf32>
    %246 = vector.shape_cast %245 : vector<1x2xf32> to vector<1x1x2xf32>
    %247 = vector.broadcast %246 : vector<1x1x2xf32> to vector<4x4x2xf32>
    %248 = arith.mulf %244, %247 : vector<4x4x2xf32>
    %249 = arith.addf %243, %248 : vector<4x4x2xf32>
    %250 = vector.extract_strided_slice %225 {offsets = [0, 4, 0], sizes = [4, 4, 2], strides = [1, 1, 1]} : vector<4x10x2xf32> to vector<4x4x2xf32>
    %251 = vector.extract_strided_slice %6 {offsets = [39, 0], sizes = [1, 2], strides = [1, 1]} : vector<49x2xf32> to vector<1x2xf32>
    %252 = vector.shape_cast %251 : vector<1x2xf32> to vector<1x1x2xf32>
    %253 = vector.broadcast %252 : vector<1x1x2xf32> to vector<4x4x2xf32>
    %254 = arith.mulf %250, %253 : vector<4x4x2xf32>
    %255 = arith.addf %249, %254 : vector<4x4x2xf32>
    %256 = vector.extract_strided_slice %225 {offsets = [0, 5, 0], sizes = [4, 4, 2], strides = [1, 1, 1]} : vector<4x10x2xf32> to vector<4x4x2xf32>
    %257 = vector.extract_strided_slice %6 {offsets = [40, 0], sizes = [1, 2], strides = [1, 1]} : vector<49x2xf32> to vector<1x2xf32>
    %258 = vector.shape_cast %257 : vector<1x2xf32> to vector<1x1x2xf32>
    %259 = vector.broadcast %258 : vector<1x1x2xf32> to vector<4x4x2xf32>
    %260 = arith.mulf %256, %259 : vector<4x4x2xf32>
    %261 = arith.addf %255, %260 : vector<4x4x2xf32>
    %262 = vector.extract_strided_slice %225 {offsets = [0, 6, 0], sizes = [4, 4, 2], strides = [1, 1, 1]} : vector<4x10x2xf32> to vector<4x4x2xf32>
    %263 = vector.extract_strided_slice %6 {offsets = [41, 0], sizes = [1, 2], strides = [1, 1]} : vector<49x2xf32> to vector<1x2xf32>
    %264 = vector.shape_cast %263 : vector<1x2xf32> to vector<1x1x2xf32>
    %265 = vector.broadcast %264 : vector<1x1x2xf32> to vector<4x4x2xf32>
    %266 = arith.mulf %262, %265 : vector<4x4x2xf32>
    %267 = arith.addf %261, %266 : vector<4x4x2xf32>
    %c6 = arith.constant 6 : index
    %c0_25 = arith.constant 0 : index
    %c0_26 = arith.constant 0 : index
    %268 = vector.load %arg12[%c6, %c0_25, %c0_26] : memref<10x10x2xf32, #tpu.memory_space<vmem>>, vector<4x10x2xf32>
    %269 = vector.extract_strided_slice %268 {offsets = [0, 0, 0], sizes = [4, 4, 2], strides = [1, 1, 1]} : vector<4x10x2xf32> to vector<4x4x2xf32>
    %270 = vector.extract_strided_slice %6 {offsets = [42, 0], sizes = [1, 2], strides = [1, 1]} : vector<49x2xf32> to vector<1x2xf32>
    %271 = vector.shape_cast %270 : vector<1x2xf32> to vector<1x1x2xf32>
    %272 = vector.broadcast %271 : vector<1x1x2xf32> to vector<4x4x2xf32>
    %273 = arith.mulf %269, %272 : vector<4x4x2xf32>
    %274 = arith.addf %267, %273 : vector<4x4x2xf32>
    %275 = vector.extract_strided_slice %268 {offsets = [0, 1, 0], sizes = [4, 4, 2], strides = [1, 1, 1]} : vector<4x10x2xf32> to vector<4x4x2xf32>
    %276 = vector.extract_strided_slice %6 {offsets = [43, 0], sizes = [1, 2], strides = [1, 1]} : vector<49x2xf32> to vector<1x2xf32>
    %277 = vector.shape_cast %276 : vector<1x2xf32> to vector<1x1x2xf32>
    %278 = vector.broadcast %277 : vector<1x1x2xf32> to vector<4x4x2xf32>
    %279 = arith.mulf %275, %278 : vector<4x4x2xf32>
    %280 = arith.addf %274, %279 : vector<4x4x2xf32>
    %281 = vector.extract_strided_slice %268 {offsets = [0, 2, 0], sizes = [4, 4, 2], strides = [1, 1, 1]} : vector<4x10x2xf32> to vector<4x4x2xf32>
    %282 = vector.extract_strided_slice %6 {offsets = [44, 0], sizes = [1, 2], strides = [1, 1]} : vector<49x2xf32> to vector<1x2xf32>
    %283 = vector.shape_cast %282 : vector<1x2xf32> to vector<1x1x2xf32>
    %284 = vector.broadcast %283 : vector<1x1x2xf32> to vector<4x4x2xf32>
    %285 = arith.mulf %281, %284 : vector<4x4x2xf32>
    %286 = arith.addf %280, %285 : vector<4x4x2xf32>
    %287 = vector.extract_strided_slice %268 {offsets = [0, 3, 0], sizes = [4, 4, 2], strides = [1, 1, 1]} : vector<4x10x2xf32> to vector<4x4x2xf32>
    %288 = vector.extract_strided_slice %6 {offsets = [45, 0], sizes = [1, 2], strides = [1, 1]} : vector<49x2xf32> to vector<1x2xf32>
    %289 = vector.shape_cast %288 : vector<1x2xf32> to vector<1x1x2xf32>
    %290 = vector.broadcast %289 : vector<1x1x2xf32> to vector<4x4x2xf32>
    %291 = arith.mulf %287, %290 : vector<4x4x2xf32>
    %292 = arith.addf %286, %291 : vector<4x4x2xf32>
    %293 = vector.extract_strided_slice %268 {offsets = [0, 4, 0], sizes = [4, 4, 2], strides = [1, 1, 1]} : vector<4x10x2xf32> to vector<4x4x2xf32>
    %294 = vector.extract_strided_slice %6 {offsets = [46, 0], sizes = [1, 2], strides = [1, 1]} : vector<49x2xf32> to vector<1x2xf32>
    %295 = vector.shape_cast %294 : vector<1x2xf32> to vector<1x1x2xf32>
    %296 = vector.broadcast %295 : vector<1x1x2xf32> to vector<4x4x2xf32>
    %297 = arith.mulf %293, %296 : vector<4x4x2xf32>
    %298 = arith.addf %292, %297 : vector<4x4x2xf32>
    %299 = vector.extract_strided_slice %268 {offsets = [0, 5, 0], sizes = [4, 4, 2], strides = [1, 1, 1]} : vector<4x10x2xf32> to vector<4x4x2xf32>
    %300 = vector.extract_strided_slice %6 {offsets = [47, 0], sizes = [1, 2], strides = [1, 1]} : vector<49x2xf32> to vector<1x2xf32>
    %301 = vector.shape_cast %300 : vector<1x2xf32> to vector<1x1x2xf32>
    %302 = vector.broadcast %301 : vector<1x1x2xf32> to vector<4x4x2xf32>
    %303 = arith.mulf %299, %302 : vector<4x4x2xf32>
    %304 = arith.addf %298, %303 : vector<4x4x2xf32>
    %305 = vector.extract_strided_slice %268 {offsets = [0, 6, 0], sizes = [4, 4, 2], strides = [1, 1, 1]} : vector<4x10x2xf32> to vector<4x4x2xf32>
    %306 = vector.extract_strided_slice %6 {offsets = [48, 0], sizes = [1, 2], strides = [1, 1]} : vector<49x2xf32> to vector<1x2xf32>
    %307 = vector.shape_cast %306 : vector<1x2xf32> to vector<1x1x2xf32>
    %308 = vector.broadcast %307 : vector<1x1x2xf32> to vector<4x4x2xf32>
    %309 = arith.mulf %305, %308 : vector<4x4x2xf32>
    %310 = arith.addf %304, %309 : vector<4x4x2xf32>
    %311 = vector.extract_strided_slice %8 {offsets = [0, 0], sizes = [1, 2], strides = [1, 1]} : vector<5x2xf32> to vector<1x2xf32>
    %312 = vector.shape_cast %311 : vector<1x2xf32> to vector<1x1x2xf32>
    %313 = vector.broadcast %312 : vector<1x1x2xf32> to vector<4x4x2xf32>
    %314 = arith.addf %310, %313 : vector<4x4x2xf32>
    %315 = vector.shape_cast %314 : vector<4x4x2xf32> to vector<16x2xf32>
    %316 = vector.extract_strided_slice %8 {offsets = [1, 0], sizes = [1, 2], strides = [1, 1]} : vector<5x2xf32> to vector<1x2xf32>
    %317 = vector.extract_strided_slice %8 {offsets = [2, 0], sizes = [1, 2], strides = [1, 1]} : vector<5x2xf32> to vector<1x2xf32>
    %cst_27 = arith.constant dense<0.000000e+00> : vector<16xf32>
    %318 = vector.multi_reduction <add>, %315, %cst_27 [1] : vector<16x2xf32> to vector<16xf32>
    %319 = vector.shape_cast %318 : vector<16xf32> to vector<16x1xf32>
    %cst_28 = arith.constant 2.000000e+00 : f32
    %320 = vector.broadcast %cst_28 : f32 to vector<16x1xf32>
    %321 = arith.divf %319, %320 : vector<16x1xf32>
    %322 = vector.broadcast %321 : vector<16x1xf32> to vector<16x2xf32>
    %323 = arith.subf %315, %322 : vector<16x2xf32>
    %324 = arith.mulf %323, %323 : vector<16x2xf32>
    %cst_29 = arith.constant dense<0.000000e+00> : vector<16xf32>
    %325 = vector.multi_reduction <add>, %324, %cst_29 [1] : vector<16x2xf32> to vector<16xf32>
    %326 = vector.shape_cast %325 : vector<16xf32> to vector<16x1xf32>
    %cst_30 = arith.constant 2.000000e+00 : f32
    %327 = vector.broadcast %cst_30 : f32 to vector<16x1xf32>
    %328 = arith.divf %326, %327 : vector<16x1xf32>
    %329 = vector.broadcast %321 : vector<16x1xf32> to vector<16x2xf32>
    %330 = arith.subf %315, %329 : vector<16x2xf32>
    %cst_31 = arith.constant 9.99999997E-7 : f32
    %331 = vector.broadcast %cst_31 : f32 to vector<16x1xf32>
    %332 = arith.addf %328, %331 : vector<16x1xf32>
    %333 = math.rsqrt %332 : vector<16x1xf32>
    %334 = vector.broadcast %333 : vector<16x1xf32> to vector<16x2xf32>
    %335 = arith.mulf %330, %334 : vector<16x2xf32>
    %336 = vector.broadcast %316 : vector<1x2xf32> to vector<16x2xf32>
    %337 = arith.mulf %336, %335 : vector<16x2xf32>
    %338 = vector.broadcast %317 : vector<1x2xf32> to vector<16x2xf32>
    %339 = arith.addf %337, %338 : vector<16x2xf32>
    %c0_32 = arith.constant 0 : index
    %c0_33 = arith.constant 0 : index
    %c0_34 = arith.constant 0 : index
    %340 = vector.load %arg7[%c0_32, %c0_33, %c0_34] : memref<1x2x8xf32, #tpu.memory_space<vmem>>, vector<1x2x8xf32>
    %341 = vector.shape_cast %340 : vector<1x2x8xf32> to vector<2x8xf32>
    %cst_35 = arith.constant dense<0.000000e+00> : vector<16x8xf32>
    %342 = tpu.matmul %339, %341, %cst_35 {dimension_numbers = #tpu.dot_dimension_numbers<[1], [0], [0], [1], [0, 0, 1, 1], [], []>} : vector<16x2xf32>, vector<2x8xf32>, vector<16x8xf32> -> vector<16x8xf32>
    %c0_36 = arith.constant 0 : index
    %c0_37 = arith.constant 0 : index
    %c0_38 = arith.constant 0 : index
    %343 = vector.load %arg8[%c0_36, %c0_37, %c0_38] : memref<1x1x8xf32, #tpu.memory_space<vmem>>, vector<1x1x8xf32>
    %344 = vector.shape_cast %343 : vector<1x1x8xf32> to vector<1x8xf32>
    %345 = vector.broadcast %344 : vector<1x8xf32> to vector<16x8xf32>
    %346 = arith.addf %342, %345 : vector<16x8xf32>
    %cst_39 = arith.constant 5.000000e-01 : f32
    %347 = vector.broadcast %cst_39 : f32 to vector<16x8xf32>
    %348 = arith.mulf %347, %346 : vector<16x8xf32>
    %cst_40 = arith.constant 0.707106769 : f32
    %349 = vector.broadcast %cst_40 : f32 to vector<16x8xf32>
    %350 = arith.mulf %346, %349 : vector<16x8xf32>
    %351 = math.absf %350 : vector<16x8xf32>
    %cst_41 = arith.constant 0.327591091 : f32
    %352 = vector.broadcast %cst_41 : f32 to vector<16x8xf32>
    %353 = arith.mulf %352, %351 : vector<16x8xf32>
    %cst_42 = arith.constant 1.000000e+00 : f32
    %354 = vector.broadcast %cst_42 : f32 to vector<16x8xf32>
    %355 = arith.addf %354, %353 : vector<16x8xf32>
    %cst_43 = arith.constant 1.000000e+00 : f32
    %356 = vector.broadcast %cst_43 : f32 to vector<16x8xf32>
    %357 = arith.divf %356, %355 : vector<16x8xf32>
    %cst_44 = arith.constant 1.06140542 : f32
    %358 = vector.broadcast %cst_44 : f32 to vector<16x8xf32>
    %359 = arith.mulf %357, %358 : vector<16x8xf32>
    %cst_45 = arith.constant -1.45315206 : f32
    %360 = vector.broadcast %cst_45 : f32 to vector<16x8xf32>
    %361 = arith.addf %360, %359 : vector<16x8xf32>
    %362 = arith.mulf %357, %361 : vector<16x8xf32>
    %cst_46 = arith.constant 1.42141378 : f32
    %363 = vector.broadcast %cst_46 : f32 to vector<16x8xf32>
    %364 = arith.addf %363, %362 : vector<16x8xf32>
    %365 = arith.mulf %357, %364 : vector<16x8xf32>
    %cst_47 = arith.constant -0.284496725 : f32
    %366 = vector.broadcast %cst_47 : f32 to vector<16x8xf32>
    %367 = arith.addf %366, %365 : vector<16x8xf32>
    %368 = arith.mulf %357, %367 : vector<16x8xf32>
    %cst_48 = arith.constant 0.254829586 : f32
    %369 = vector.broadcast %cst_48 : f32 to vector<16x8xf32>
    %370 = arith.addf %369, %368 : vector<16x8xf32>
    %371 = arith.mulf %357, %370 : vector<16x8xf32>
    %cst_49 = arith.constant 0.000000e+00 : f32
    %372 = vector.broadcast %cst_49 : f32 to vector<16x8xf32>
    %373 = arith.subf %372, %351 : vector<16x8xf32>
    %374 = arith.mulf %373, %351 : vector<16x8xf32>
    %375 = math.exp %374 : vector<16x8xf32>
    %376 = arith.mulf %371, %375 : vector<16x8xf32>
    %cst_50 = arith.constant 1.000000e+00 : f32
    %377 = vector.broadcast %cst_50 : f32 to vector<16x8xf32>
    %378 = arith.subf %377, %376 : vector<16x8xf32>
    %cst_51 = arith.constant 0.000000e+00 : f32
    %379 = vector.broadcast %cst_51 : f32 to vector<16x8xf32>
    %380 = arith.cmpf olt, %350, %379 : vector<16x8xf32>
    %cst_52 = arith.constant 0.000000e+00 : f32
    %381 = vector.broadcast %cst_52 : f32 to vector<16x8xf32>
    %382 = arith.subf %381, %378 : vector<16x8xf32>
    %383 = arith.select %380, %382, %378 : vector<16x8xi1>, vector<16x8xf32>
    %cst_53 = arith.constant 1.000000e+00 : f32
    %384 = vector.broadcast %cst_53 : f32 to vector<16x8xf32>
    %385 = arith.addf %384, %383 : vector<16x8xf32>
    %386 = arith.mulf %348, %385 : vector<16x8xf32>
    %c0_54 = arith.constant 0 : index
    %c0_55 = arith.constant 0 : index
    %c0_56 = arith.constant 0 : index
    %387 = vector.load %arg9[%c0_54, %c0_55, %c0_56] : memref<1x8x2xf32, #tpu.memory_space<vmem>>, vector<1x8x2xf32>
    %388 = vector.shape_cast %387 : vector<1x8x2xf32> to vector<8x2xf32>
    %cst_57 = arith.constant dense<0.000000e+00> : vector<16x2xf32>
    %389 = tpu.matmul %386, %388, %cst_57 {dimension_numbers = #tpu.dot_dimension_numbers<[1], [0], [0], [1], [0, 0, 1, 1], [], []>} : vector<16x8xf32>, vector<8x2xf32>, vector<16x2xf32> -> vector<16x2xf32>
    %390 = vector.extract_strided_slice %8 {offsets = [3, 0], sizes = [1, 2], strides = [1, 1]} : vector<5x2xf32> to vector<1x2xf32>
    %391 = vector.broadcast %390 : vector<1x2xf32> to vector<16x2xf32>
    %392 = arith.addf %389, %391 : vector<16x2xf32>
    %393 = vector.shape_cast %3 : vector<4x4x2xf32> to vector<16x2xf32>
    %394 = vector.extract_strided_slice %8 {offsets = [4, 0], sizes = [1, 2], strides = [1, 1]} : vector<5x2xf32> to vector<1x2xf32>
    %395 = vector.broadcast %394 : vector<1x2xf32> to vector<16x2xf32>
    %396 = arith.mulf %395, %392 : vector<16x2xf32>
    %397 = arith.addf %393, %396 : vector<16x2xf32>
    %398 = vector.shape_cast %397 : vector<16x2xf32> to vector<4x4x2xf32>
    %c0_58 = arith.constant 0 : index
    %c0_59 = arith.constant 0 : index
    %c0_60 = arith.constant 0 : index
    %399 = vector.load %arg11[%c0_58, %c0_59, %c0_60] : memref<4x4x2xf32, #tpu.memory_space<vmem>>, vector<4x4x2xf32>
    tpu.vector_store %arg11[%c0_58, %c0_59, %c0_60], %398 {strides = array<i32>} : memref<4x4x2xf32, #tpu.memory_space<vmem>>, vector<4x4x2xf32>,
    %c0_i32_61 = arith.constant 0 : i32
    %400 = arith.cmpi eq, %arg1, %c0_i32_61 : i32
    %401 = arith.extui %400 : i1 to i32
    %c0_i32_62 = arith.constant 0 : i32
    %402 = arith.cmpi ne, %401, %c0_i32_62 : i32
    scf.if %402 {
      %403 = vector.shape_cast %397 : vector<16x2xf32> to vector<1x4x4x2xf32>
      %c0_63 = arith.constant 0 : index
      %c0_64 = arith.constant 0 : index
      %c0_65 = arith.constant 0 : index
      %c0_66 = arith.constant 0 : index
      %404 = vector.load %arg10[%c0_63, %c0_64, %c0_65, %c0_66] : memref<1x4x4x2xf32, #tpu.memory_space<vmem>>, vector<1x4x4x2xf32>
      tpu.vector_store %arg10[%c0_63, %c0_64, %c0_65, %c0_66], %403 {strides = array<i32>} : memref<1x4x4x2xf32, #tpu.memory_space<vmem>>, vector<1x4x4x2xf32>,
    } else {
    }
    return
  }
  func.func @transform_0(%arg0: i32, %arg1: i32) -> (i32, i32, i32, i32, i32) {
    %c0_i32 = arith.constant 0 : i32
    %c0_i32_0 = arith.constant 0 : i32
    %c0_i32_1 = arith.constant 0 : i32
    %c0_i32_2 = arith.constant 0 : i32
    %c0_i32_3 = arith.constant 0 : i32
    return %arg0, %c0_i32, %c0_i32_0, %c0_i32_1, %c0_i32_2 : i32, i32, i32, i32, i32
  }
  func.func @transform_1(%arg0: i32, %arg1: i32) -> (i32, i32, i32) {
    %c0_i32 = arith.constant 0 : i32
    %c0_i32_0 = arith.constant 0 : i32
    %c0_i32_1 = arith.constant 0 : i32
    %c0_i32_2 = arith.constant 0 : i32
    return %c0_i32, %c0_i32_0, %c0_i32_1 : i32, i32, i32
  }
  func.func @transform_2(%arg0: i32, %arg1: i32) -> (i32, i32) {
    %c0_i32 = arith.constant 0 : i32
    %c0_i32_0 = arith.constant 0 : i32
    %c0_i32_1 = arith.constant 0 : i32
    return %c0_i32, %c0_i32_0 : i32, i32
  }
  func.func @transform_3(%arg0: i32, %arg1: i32) -> (i32, i32, i32) {
    %c0_i32 = arith.constant 0 : i32
    %c0_i32_0 = arith.constant 0 : i32
    %c0_i32_1 = arith.constant 0 : i32
    return %arg1, %c0_i32, %c0_i32_0 : i32, i32, i32
  }
  func.func @transform_4(%arg0: i32, %arg1: i32) -> (i32, i32, i32) {
    %c0_i32 = arith.constant 0 : i32
    %c0_i32_0 = arith.constant 0 : i32
    %c0_i32_1 = arith.constant 0 : i32
    return %arg1, %c0_i32, %c0_i32_0 : i32, i32, i32
  }
  func.func @transform_5(%arg0: i32, %arg1: i32) -> (i32, i32, i32) {
    %c0_i32 = arith.constant 0 : i32
    %c0_i32_0 = arith.constant 0 : i32
    %c0_i32_1 = arith.constant 0 : i32
    return %arg1, %c0_i32, %c0_i32_0 : i32, i32, i32
  }
  func.func @transform_6(%arg0: i32, %arg1: i32) -> (i32, i32, i32) {
    %c0_i32 = arith.constant 0 : i32
    %c0_i32_0 = arith.constant 0 : i32
    %c0_i32_1 = arith.constant 0 : i32
    return %arg1, %c0_i32, %c0_i32_0 : i32, i32, i32
  }
  func.func @transform_7(%arg0: i32, %arg1: i32) -> (i32, i32, i32) {
    %c0_i32 = arith.constant 0 : i32
    %c0_i32_0 = arith.constant 0 : i32
    %c0_i32_1 = arith.constant 0 : i32
    return %arg1, %c0_i32, %c0_i32_0 : i32, i32, i32
  }
  func.func @transform_8(%arg0: i32, %arg1: i32) -> (i32, i32, i32, i32) {
    %c0_i32 = arith.constant 0 : i32
    %c0_i32_0 = arith.constant 0 : i32
    %c0_i32_1 = arith.constant 0 : i32
    %c0_i32_2 = arith.constant 0 : i32
    return %arg0, %c0_i32, %c0_i32_0, %c0_i32_1 : i32, i32, i32, i32
  }
}

module attributes {stable_mosaic.version = 11 : i64} {
  func.func @kernel(%arg0: i32, %arg1: i32, %arg2: memref<1x2x2x2x4xf32, #tpu.memory_space<vmem>>, %arg3: memref<4x2x4xf32, #tpu.memory_space<vmem>>, %arg4: memref<2x2xf32, #tpu.memory_space<vmem>>, %arg5: memref<1x4xf32, #tpu.memory_space<vmem>>, %arg6: memref<1x49x4xf32, #tpu.memory_space<vmem>>, %arg7: memref<1x5x4xf32, #tpu.memory_space<vmem>>, %arg8: memref<1x4x16xf32, #tpu.memory_space<vmem>>, %arg9: memref<1x1x16xf32, #tpu.memory_space<vmem>>, %arg10: memref<1x16x4xf32, #tpu.memory_space<vmem>>, %arg11: memref<4x10xf32, #tpu.memory_space<vmem>>, %arg12: memref<1x10xf32, #tpu.memory_space<vmem>>, %arg13: memref<1x1x10xf32, #tpu.memory_space<vmem>>, %arg14: memref<2x2x4xf32, #tpu.memory_space<vmem>>, %arg15: memref<8x8x4xf32, #tpu.memory_space<vmem>>) attributes {dimension_semantics = [#tpu.dimension_semantics<parallel>, #tpu.dimension_semantics<arbitrary>], iteration_bounds = array<i64: 2, 1>, scalar_prefetch = 0 : i64, scratch_operands = 2 : i64, tpu.core_type = #tpu.core_type<tc>, window_params = [{transform_indices = @transform_0, window_bounds = array<i64: 1, 2, 2, 2, 4>}, {pipeline_mode = #tpu.pipeline_mode<synchronous>, transform_indices = @transform_1, window_bounds = array<i64: 4, 2, 4>}, {pipeline_mode = #tpu.pipeline_mode<synchronous>, transform_indices = @transform_2, window_bounds = array<i64: 2, 2>}, {pipeline_mode = #tpu.pipeline_mode<synchronous>, transform_indices = @transform_3, window_bounds = array<i64: 1, 4>}, {transform_indices = @transform_4, window_bounds = array<i64: 1, 49, 4>}, {transform_indices = @transform_5, window_bounds = array<i64: 1, 5, 4>}, {transform_indices = @transform_6, window_bounds = array<i64: 1, 4, 16>}, {transform_indices = @transform_7, window_bounds = array<i64: 1, 1, 16>}, {transform_indices = @transform_8, window_bounds = array<i64: 1, 16, 4>}, {pipeline_mode = #tpu.pipeline_mode<synchronous>, transform_indices = @transform_9, window_bounds = array<i64: 4, 10>}, {pipeline_mode = #tpu.pipeline_mode<synchronous>, transform_indices = @transform_10, window_bounds = array<i64: 1, 10>}, {transform_indices = @transform_11, window_bounds = array<i64: 1, 1, 10>}]} {
    %c0_i32 = arith.constant 0 : i32
    %0 = arith.cmpi eq, %arg1, %c0_i32 : i32
    %1 = arith.extui %0 : i1 to i32
    %c0_i32_0 = arith.constant 0 : i32
    %2 = arith.cmpi ne, %1, %c0_i32_0 : i32
    scf.if %2 {
      %cst_63 = arith.constant 0.000000e+00 : f32
      %403 = vector.broadcast %cst_63 : f32 to vector<3x8x4xf32>
      %c0_64 = arith.constant 0 : index
      %c0_65 = arith.constant 0 : index
      %c0_66 = arith.constant 0 : index
      %404 = vector.load %arg15[%c0_64, %c0_65, %c0_66] : memref<8x8x4xf32, #tpu.memory_space<vmem>>, vector<3x8x4xf32>
      tpu.vector_store %arg15[%c0_64, %c0_65, %c0_66], %403 {strides = array<i32>} : memref<8x8x4xf32, #tpu.memory_space<vmem>>, vector<3x8x4xf32>,
      %cst_67 = arith.constant 0.000000e+00 : f32
      %405 = vector.broadcast %cst_67 : f32 to vector<3x8x4xf32>
      %c5_68 = arith.constant 5 : index
      %c0_69 = arith.constant 0 : index
      %c0_70 = arith.constant 0 : index
      %406 = vector.load %arg15[%c5_68, %c0_69, %c0_70] : memref<8x8x4xf32, #tpu.memory_space<vmem>>, vector<3x8x4xf32>
      tpu.vector_store %arg15[%c5_68, %c0_69, %c0_70], %405 {strides = array<i32>} : memref<8x8x4xf32, #tpu.memory_space<vmem>>, vector<3x8x4xf32>,
      %cst_71 = arith.constant 0.000000e+00 : f32
      %407 = vector.broadcast %cst_71 : f32 to vector<8x3x4xf32>
      %c0_72 = arith.constant 0 : index
      %c0_73 = arith.constant 0 : index
      %c0_74 = arith.constant 0 : index
      %408 = vector.load %arg15[%c0_72, %c0_73, %c0_74] : memref<8x8x4xf32, #tpu.memory_space<vmem>>, vector<8x3x4xf32>
      tpu.vector_store %arg15[%c0_72, %c0_73, %c0_74], %407 {strides = array<i32>} : memref<8x8x4xf32, #tpu.memory_space<vmem>>, vector<8x3x4xf32>,
      %cst_75 = arith.constant 0.000000e+00 : f32
      %409 = vector.broadcast %cst_75 : f32 to vector<8x3x4xf32>
      %c0_76 = arith.constant 0 : index
      %c5_77 = arith.constant 5 : index
      %c0_78 = arith.constant 0 : index
      %410 = vector.load %arg15[%c0_76, %c5_77, %c0_78] : memref<8x8x4xf32, #tpu.memory_space<vmem>>, vector<8x3x4xf32>
      tpu.vector_store %arg15[%c0_76, %c5_77, %c0_78], %409 {strides = array<i32>} : memref<8x8x4xf32, #tpu.memory_space<vmem>>, vector<8x3x4xf32>,
      %c0_79 = arith.constant 0 : index
      %c0_80 = arith.constant 0 : index
      %c0_81 = arith.constant 0 : index
      %c0_82 = arith.constant 0 : index
      %c0_83 = arith.constant 0 : index
      %411 = vector.load %arg2[%c0_79, %c0_80, %c0_81, %c0_82, %c0_83] : memref<1x2x2x2x4xf32, #tpu.memory_space<vmem>>, vector<1x2x2x2x4xf32>
      %412 = vector.shape_cast %411 : vector<1x2x2x2x4xf32> to vector<2x2x2x4xf32>
      %cst_84 = arith.constant 0.000000e+00 : f32
      %413 = vector.broadcast %cst_84 : f32 to vector<4x4xf32>
      %c0_85 = arith.constant 0 : index
      %c0_86 = arith.constant 0 : index
      %414 = vector.load %arg4[%c0_85, %c0_86] : memref<2x2xf32, #tpu.memory_space<vmem>>, vector<2x2xf32>
      %415 = vector.extract_strided_slice %412 {offsets = [0, 0, 0, 0], sizes = [2, 1, 2, 4], strides = [1, 1, 1, 1]} : vector<2x2x2x4xf32> to vector<2x1x2x4xf32>
      %416 = vector.shape_cast %415 : vector<2x1x2x4xf32> to vector<2x2x4xf32>
      %417 = vector.shape_cast %416 : vector<2x2x4xf32> to vector<4x4xf32>
      %418 = vector.extract_strided_slice %417 {offsets = [0, 0], sizes = [4, 2], strides = [1, 1]} : vector<4x4xf32> to vector<4x2xf32>
      %419 = vector.extract_strided_slice %414 {offsets = [0, 0], sizes = [1, 2], strides = [1, 1]} : vector<2x2xf32> to vector<1x2xf32>
      %420 = vector.extract_strided_slice %414 {offsets = [1, 0], sizes = [1, 2], strides = [1, 1]} : vector<2x2xf32> to vector<1x2xf32>
      %cst_87 = arith.constant dense<0.000000e+00> : vector<4xf32>
      %421 = vector.multi_reduction <add>, %418, %cst_87 [1] : vector<4x2xf32> to vector<4xf32>
      %422 = vector.shape_cast %421 : vector<4xf32> to vector<4x1xf32>
      %cst_88 = arith.constant 2.000000e+00 : f32
      %423 = vector.broadcast %cst_88 : f32 to vector<4x1xf32>
      %424 = arith.divf %422, %423 : vector<4x1xf32>
      %425 = vector.broadcast %424 : vector<4x1xf32> to vector<4x2xf32>
      %426 = arith.subf %418, %425 : vector<4x2xf32>
      %427 = arith.mulf %426, %426 : vector<4x2xf32>
      %cst_89 = arith.constant dense<0.000000e+00> : vector<4xf32>
      %428 = vector.multi_reduction <add>, %427, %cst_89 [1] : vector<4x2xf32> to vector<4xf32>
      %429 = vector.shape_cast %428 : vector<4xf32> to vector<4x1xf32>
      %cst_90 = arith.constant 2.000000e+00 : f32
      %430 = vector.broadcast %cst_90 : f32 to vector<4x1xf32>
      %431 = arith.divf %429, %430 : vector<4x1xf32>
      %432 = vector.broadcast %424 : vector<4x1xf32> to vector<4x2xf32>
      %433 = arith.subf %418, %432 : vector<4x2xf32>
      %cst_91 = arith.constant 9.99999997E-7 : f32
      %434 = vector.broadcast %cst_91 : f32 to vector<4x1xf32>
      %435 = arith.addf %431, %434 : vector<4x1xf32>
      %436 = math.rsqrt %435 : vector<4x1xf32>
      %437 = vector.broadcast %436 : vector<4x1xf32> to vector<4x2xf32>
      %438 = arith.mulf %433, %437 : vector<4x2xf32>
      %439 = vector.broadcast %419 : vector<1x2xf32> to vector<4x2xf32>
      %440 = arith.mulf %439, %438 : vector<4x2xf32>
      %441 = vector.broadcast %420 : vector<1x2xf32> to vector<4x2xf32>
      %442 = arith.addf %440, %441 : vector<4x2xf32>
      %c0_92 = arith.constant 0 : index
      %c0_93 = arith.constant 0 : index
      %c0_94 = arith.constant 0 : index
      %443 = vector.load %arg3[%c0_92, %c0_93, %c0_94] : memref<4x2x4xf32, #tpu.memory_space<vmem>>, vector<1x2x4xf32>
      %444 = vector.shape_cast %443 : vector<1x2x4xf32> to vector<2x4xf32>
      %cst_95 = arith.constant dense<0.000000e+00> : vector<4x4xf32>
      %445 = tpu.matmul %442, %444, %cst_95 {dimension_numbers = #tpu.dot_dimension_numbers<[1], [0], [0], [1], [0, 0, 1, 1], [], []>} : vector<4x2xf32>, vector<2x4xf32>, vector<4x4xf32> -> vector<4x4xf32>
      %446 = arith.addf %413, %445 : vector<4x4xf32>
      %447 = vector.extract_strided_slice %417 {offsets = [0, 2], sizes = [4, 2], strides = [1, 1]} : vector<4x4xf32> to vector<4x2xf32>
      %448 = vector.extract_strided_slice %414 {offsets = [0, 0], sizes = [1, 2], strides = [1, 1]} : vector<2x2xf32> to vector<1x2xf32>
      %449 = vector.extract_strided_slice %414 {offsets = [1, 0], sizes = [1, 2], strides = [1, 1]} : vector<2x2xf32> to vector<1x2xf32>
      %cst_96 = arith.constant dense<0.000000e+00> : vector<4xf32>
      %450 = vector.multi_reduction <add>, %447, %cst_96 [1] : vector<4x2xf32> to vector<4xf32>
      %451 = vector.shape_cast %450 : vector<4xf32> to vector<4x1xf32>
      %cst_97 = arith.constant 2.000000e+00 : f32
      %452 = vector.broadcast %cst_97 : f32 to vector<4x1xf32>
      %453 = arith.divf %451, %452 : vector<4x1xf32>
      %454 = vector.broadcast %453 : vector<4x1xf32> to vector<4x2xf32>
      %455 = arith.subf %447, %454 : vector<4x2xf32>
      %456 = arith.mulf %455, %455 : vector<4x2xf32>
      %cst_98 = arith.constant dense<0.000000e+00> : vector<4xf32>
      %457 = vector.multi_reduction <add>, %456, %cst_98 [1] : vector<4x2xf32> to vector<4xf32>
      %458 = vector.shape_cast %457 : vector<4xf32> to vector<4x1xf32>
      %cst_99 = arith.constant 2.000000e+00 : f32
      %459 = vector.broadcast %cst_99 : f32 to vector<4x1xf32>
      %460 = arith.divf %458, %459 : vector<4x1xf32>
      %461 = vector.broadcast %453 : vector<4x1xf32> to vector<4x2xf32>
      %462 = arith.subf %447, %461 : vector<4x2xf32>
      %cst_100 = arith.constant 9.99999997E-7 : f32
      %463 = vector.broadcast %cst_100 : f32 to vector<4x1xf32>
      %464 = arith.addf %460, %463 : vector<4x1xf32>
      %465 = math.rsqrt %464 : vector<4x1xf32>
      %466 = vector.broadcast %465 : vector<4x1xf32> to vector<4x2xf32>
      %467 = arith.mulf %462, %466 : vector<4x2xf32>
      %468 = vector.broadcast %448 : vector<1x2xf32> to vector<4x2xf32>
      %469 = arith.mulf %468, %467 : vector<4x2xf32>
      %470 = vector.broadcast %449 : vector<1x2xf32> to vector<4x2xf32>
      %471 = arith.addf %469, %470 : vector<4x2xf32>
      %c1_101 = arith.constant 1 : index
      %c0_102 = arith.constant 0 : index
      %c0_103 = arith.constant 0 : index
      %472 = vector.load %arg3[%c1_101, %c0_102, %c0_103] : memref<4x2x4xf32, #tpu.memory_space<vmem>>, vector<1x2x4xf32>
      %473 = vector.shape_cast %472 : vector<1x2x4xf32> to vector<2x4xf32>
      %cst_104 = arith.constant dense<0.000000e+00> : vector<4x4xf32>
      %474 = tpu.matmul %471, %473, %cst_104 {dimension_numbers = #tpu.dot_dimension_numbers<[1], [0], [0], [1], [0, 0, 1, 1], [], []>} : vector<4x2xf32>, vector<2x4xf32>, vector<4x4xf32> -> vector<4x4xf32>
      %475 = arith.addf %446, %474 : vector<4x4xf32>
      %476 = vector.extract_strided_slice %412 {offsets = [0, 1, 0, 0], sizes = [2, 1, 2, 4], strides = [1, 1, 1, 1]} : vector<2x2x2x4xf32> to vector<2x1x2x4xf32>
      %477 = vector.shape_cast %476 : vector<2x1x2x4xf32> to vector<2x2x4xf32>
      %478 = vector.shape_cast %477 : vector<2x2x4xf32> to vector<4x4xf32>
      %479 = vector.extract_strided_slice %478 {offsets = [0, 0], sizes = [4, 2], strides = [1, 1]} : vector<4x4xf32> to vector<4x2xf32>
      %480 = vector.extract_strided_slice %414 {offsets = [0, 0], sizes = [1, 2], strides = [1, 1]} : vector<2x2xf32> to vector<1x2xf32>
      %481 = vector.extract_strided_slice %414 {offsets = [1, 0], sizes = [1, 2], strides = [1, 1]} : vector<2x2xf32> to vector<1x2xf32>
      %cst_105 = arith.constant dense<0.000000e+00> : vector<4xf32>
      %482 = vector.multi_reduction <add>, %479, %cst_105 [1] : vector<4x2xf32> to vector<4xf32>
      %483 = vector.shape_cast %482 : vector<4xf32> to vector<4x1xf32>
      %cst_106 = arith.constant 2.000000e+00 : f32
      %484 = vector.broadcast %cst_106 : f32 to vector<4x1xf32>
      %485 = arith.divf %483, %484 : vector<4x1xf32>
      %486 = vector.broadcast %485 : vector<4x1xf32> to vector<4x2xf32>
      %487 = arith.subf %479, %486 : vector<4x2xf32>
      %488 = arith.mulf %487, %487 : vector<4x2xf32>
      %cst_107 = arith.constant dense<0.000000e+00> : vector<4xf32>
      %489 = vector.multi_reduction <add>, %488, %cst_107 [1] : vector<4x2xf32> to vector<4xf32>
      %490 = vector.shape_cast %489 : vector<4xf32> to vector<4x1xf32>
      %cst_108 = arith.constant 2.000000e+00 : f32
      %491 = vector.broadcast %cst_108 : f32 to vector<4x1xf32>
      %492 = arith.divf %490, %491 : vector<4x1xf32>
      %493 = vector.broadcast %485 : vector<4x1xf32> to vector<4x2xf32>
      %494 = arith.subf %479, %493 : vector<4x2xf32>
      %cst_109 = arith.constant 9.99999997E-7 : f32
      %495 = vector.broadcast %cst_109 : f32 to vector<4x1xf32>
      %496 = arith.addf %492, %495 : vector<4x1xf32>
      %497 = math.rsqrt %496 : vector<4x1xf32>
      %498 = vector.broadcast %497 : vector<4x1xf32> to vector<4x2xf32>
      %499 = arith.mulf %494, %498 : vector<4x2xf32>
      %500 = vector.broadcast %480 : vector<1x2xf32> to vector<4x2xf32>
      %501 = arith.mulf %500, %499 : vector<4x2xf32>
      %502 = vector.broadcast %481 : vector<1x2xf32> to vector<4x2xf32>
      %503 = arith.addf %501, %502 : vector<4x2xf32>
      %c2_110 = arith.constant 2 : index
      %c0_111 = arith.constant 0 : index
      %c0_112 = arith.constant 0 : index
      %504 = vector.load %arg3[%c2_110, %c0_111, %c0_112] : memref<4x2x4xf32, #tpu.memory_space<vmem>>, vector<1x2x4xf32>
      %505 = vector.shape_cast %504 : vector<1x2x4xf32> to vector<2x4xf32>
      %cst_113 = arith.constant dense<0.000000e+00> : vector<4x4xf32>
      %506 = tpu.matmul %503, %505, %cst_113 {dimension_numbers = #tpu.dot_dimension_numbers<[1], [0], [0], [1], [0, 0, 1, 1], [], []>} : vector<4x2xf32>, vector<2x4xf32>, vector<4x4xf32> -> vector<4x4xf32>
      %507 = arith.addf %475, %506 : vector<4x4xf32>
      %508 = vector.extract_strided_slice %478 {offsets = [0, 2], sizes = [4, 2], strides = [1, 1]} : vector<4x4xf32> to vector<4x2xf32>
      %509 = vector.extract_strided_slice %414 {offsets = [0, 0], sizes = [1, 2], strides = [1, 1]} : vector<2x2xf32> to vector<1x2xf32>
      %510 = vector.extract_strided_slice %414 {offsets = [1, 0], sizes = [1, 2], strides = [1, 1]} : vector<2x2xf32> to vector<1x2xf32>
      %cst_114 = arith.constant dense<0.000000e+00> : vector<4xf32>
      %511 = vector.multi_reduction <add>, %508, %cst_114 [1] : vector<4x2xf32> to vector<4xf32>
      %512 = vector.shape_cast %511 : vector<4xf32> to vector<4x1xf32>
      %cst_115 = arith.constant 2.000000e+00 : f32
      %513 = vector.broadcast %cst_115 : f32 to vector<4x1xf32>
      %514 = arith.divf %512, %513 : vector<4x1xf32>
      %515 = vector.broadcast %514 : vector<4x1xf32> to vector<4x2xf32>
      %516 = arith.subf %508, %515 : vector<4x2xf32>
      %517 = arith.mulf %516, %516 : vector<4x2xf32>
      %cst_116 = arith.constant dense<0.000000e+00> : vector<4xf32>
      %518 = vector.multi_reduction <add>, %517, %cst_116 [1] : vector<4x2xf32> to vector<4xf32>
      %519 = vector.shape_cast %518 : vector<4xf32> to vector<4x1xf32>
      %cst_117 = arith.constant 2.000000e+00 : f32
      %520 = vector.broadcast %cst_117 : f32 to vector<4x1xf32>
      %521 = arith.divf %519, %520 : vector<4x1xf32>
      %522 = vector.broadcast %514 : vector<4x1xf32> to vector<4x2xf32>
      %523 = arith.subf %508, %522 : vector<4x2xf32>
      %cst_118 = arith.constant 9.99999997E-7 : f32
      %524 = vector.broadcast %cst_118 : f32 to vector<4x1xf32>
      %525 = arith.addf %521, %524 : vector<4x1xf32>
      %526 = math.rsqrt %525 : vector<4x1xf32>
      %527 = vector.broadcast %526 : vector<4x1xf32> to vector<4x2xf32>
      %528 = arith.mulf %523, %527 : vector<4x2xf32>
      %529 = vector.broadcast %509 : vector<1x2xf32> to vector<4x2xf32>
      %530 = arith.mulf %529, %528 : vector<4x2xf32>
      %531 = vector.broadcast %510 : vector<1x2xf32> to vector<4x2xf32>
      %532 = arith.addf %530, %531 : vector<4x2xf32>
      %c3_119 = arith.constant 3 : index
      %c0_120 = arith.constant 0 : index
      %c0_121 = arith.constant 0 : index
      %533 = vector.load %arg3[%c3_119, %c0_120, %c0_121] : memref<4x2x4xf32, #tpu.memory_space<vmem>>, vector<1x2x4xf32>
      %534 = vector.shape_cast %533 : vector<1x2x4xf32> to vector<2x4xf32>
      %cst_122 = arith.constant dense<0.000000e+00> : vector<4x4xf32>
      %535 = tpu.matmul %532, %534, %cst_122 {dimension_numbers = #tpu.dot_dimension_numbers<[1], [0], [0], [1], [0, 0, 1, 1], [], []>} : vector<4x2xf32>, vector<2x4xf32>, vector<4x4xf32> -> vector<4x4xf32>
      %536 = arith.addf %507, %535 : vector<4x4xf32>
      %c0_123 = arith.constant 0 : index
      %c0_124 = arith.constant 0 : index
      %537 = vector.load %arg5[%c0_123, %c0_124] : memref<1x4xf32, #tpu.memory_space<vmem>>, vector<1x4xf32>
      %538 = vector.broadcast %537 : vector<1x4xf32> to vector<4x4xf32>
      %539 = arith.addf %536, %538 : vector<4x4xf32>
      %540 = vector.shape_cast %539 : vector<4x4xf32> to vector<2x2x4xf32>
      %c0_125 = arith.constant 0 : index
      %c0_126 = arith.constant 0 : index
      %c0_127 = arith.constant 0 : index
      %541 = vector.load %arg14[%c0_125, %c0_126, %c0_127] : memref<2x2x4xf32, #tpu.memory_space<vmem>>, vector<2x2x4xf32>
      tpu.vector_store %arg14[%c0_125, %c0_126, %c0_127], %540 {strides = array<i32>} : memref<2x2x4xf32, #tpu.memory_space<vmem>>, vector<2x2x4xf32>,
    } else {
    }
    %c0 = arith.constant 0 : index
    %c0_1 = arith.constant 0 : index
    %c0_2 = arith.constant 0 : index
    %3 = vector.load %arg14[%c0, %c0_1, %c0_2] : memref<2x2x4xf32, #tpu.memory_space<vmem>>, vector<2x2x4xf32>
    %c3 = arith.constant 3 : index
    %c3_3 = arith.constant 3 : index
    %c0_4 = arith.constant 0 : index
    %4 = vector.load %arg15[%c3, %c3_3, %c0_4] : memref<8x8x4xf32, #tpu.memory_space<vmem>>, vector<2x2x4xf32>
    tpu.vector_store %arg15[%c3, %c3_3, %c0_4], %3 {strides = array<i32>} : memref<8x8x4xf32, #tpu.memory_space<vmem>>, vector<2x2x4xf32>,
    %c0_5 = arith.constant 0 : index
    %c0_6 = arith.constant 0 : index
    %c0_7 = arith.constant 0 : index
    %5 = vector.load %arg6[%c0_5, %c0_6, %c0_7] : memref<1x49x4xf32, #tpu.memory_space<vmem>>, vector<1x49x4xf32>
    %6 = vector.shape_cast %5 : vector<1x49x4xf32> to vector<49x4xf32>
    %c0_8 = arith.constant 0 : index
    %c0_9 = arith.constant 0 : index
    %c0_10 = arith.constant 0 : index
    %7 = vector.load %arg7[%c0_8, %c0_9, %c0_10] : memref<1x5x4xf32, #tpu.memory_space<vmem>>, vector<1x5x4xf32>
    %8 = vector.shape_cast %7 : vector<1x5x4xf32> to vector<5x4xf32>
    %cst = arith.constant 0.000000e+00 : f32
    %9 = vector.broadcast %cst : f32 to vector<2x2x4xf32>
    %c0_11 = arith.constant 0 : index
    %c0_12 = arith.constant 0 : index
    %c0_13 = arith.constant 0 : index
    %10 = vector.load %arg15[%c0_11, %c0_12, %c0_13] : memref<8x8x4xf32, #tpu.memory_space<vmem>>, vector<2x8x4xf32>
    %11 = vector.extract_strided_slice %10 {offsets = [0, 0, 0], sizes = [2, 2, 4], strides = [1, 1, 1]} : vector<2x8x4xf32> to vector<2x2x4xf32>
    %12 = vector.extract_strided_slice %6 {offsets = [0, 0], sizes = [1, 4], strides = [1, 1]} : vector<49x4xf32> to vector<1x4xf32>
    %13 = vector.shape_cast %12 : vector<1x4xf32> to vector<1x1x4xf32>
    %14 = vector.broadcast %13 : vector<1x1x4xf32> to vector<2x2x4xf32>
    %15 = arith.mulf %11, %14 : vector<2x2x4xf32>
    %16 = arith.addf %9, %15 : vector<2x2x4xf32>
    %17 = vector.extract_strided_slice %10 {offsets = [0, 1, 0], sizes = [2, 2, 4], strides = [1, 1, 1]} : vector<2x8x4xf32> to vector<2x2x4xf32>
    %18 = vector.extract_strided_slice %6 {offsets = [1, 0], sizes = [1, 4], strides = [1, 1]} : vector<49x4xf32> to vector<1x4xf32>
    %19 = vector.shape_cast %18 : vector<1x4xf32> to vector<1x1x4xf32>
    %20 = vector.broadcast %19 : vector<1x1x4xf32> to vector<2x2x4xf32>
    %21 = arith.mulf %17, %20 : vector<2x2x4xf32>
    %22 = arith.addf %16, %21 : vector<2x2x4xf32>
    %23 = vector.extract_strided_slice %10 {offsets = [0, 2, 0], sizes = [2, 2, 4], strides = [1, 1, 1]} : vector<2x8x4xf32> to vector<2x2x4xf32>
    %24 = vector.extract_strided_slice %6 {offsets = [2, 0], sizes = [1, 4], strides = [1, 1]} : vector<49x4xf32> to vector<1x4xf32>
    %25 = vector.shape_cast %24 : vector<1x4xf32> to vector<1x1x4xf32>
    %26 = vector.broadcast %25 : vector<1x1x4xf32> to vector<2x2x4xf32>
    %27 = arith.mulf %23, %26 : vector<2x2x4xf32>
    %28 = arith.addf %22, %27 : vector<2x2x4xf32>
    %29 = vector.extract_strided_slice %10 {offsets = [0, 3, 0], sizes = [2, 2, 4], strides = [1, 1, 1]} : vector<2x8x4xf32> to vector<2x2x4xf32>
    %30 = vector.extract_strided_slice %6 {offsets = [3, 0], sizes = [1, 4], strides = [1, 1]} : vector<49x4xf32> to vector<1x4xf32>
    %31 = vector.shape_cast %30 : vector<1x4xf32> to vector<1x1x4xf32>
    %32 = vector.broadcast %31 : vector<1x1x4xf32> to vector<2x2x4xf32>
    %33 = arith.mulf %29, %32 : vector<2x2x4xf32>
    %34 = arith.addf %28, %33 : vector<2x2x4xf32>
    %35 = vector.extract_strided_slice %10 {offsets = [0, 4, 0], sizes = [2, 2, 4], strides = [1, 1, 1]} : vector<2x8x4xf32> to vector<2x2x4xf32>
    %36 = vector.extract_strided_slice %6 {offsets = [4, 0], sizes = [1, 4], strides = [1, 1]} : vector<49x4xf32> to vector<1x4xf32>
    %37 = vector.shape_cast %36 : vector<1x4xf32> to vector<1x1x4xf32>
    %38 = vector.broadcast %37 : vector<1x1x4xf32> to vector<2x2x4xf32>
    %39 = arith.mulf %35, %38 : vector<2x2x4xf32>
    %40 = arith.addf %34, %39 : vector<2x2x4xf32>
    %41 = vector.extract_strided_slice %10 {offsets = [0, 5, 0], sizes = [2, 2, 4], strides = [1, 1, 1]} : vector<2x8x4xf32> to vector<2x2x4xf32>
    %42 = vector.extract_strided_slice %6 {offsets = [5, 0], sizes = [1, 4], strides = [1, 1]} : vector<49x4xf32> to vector<1x4xf32>
    %43 = vector.shape_cast %42 : vector<1x4xf32> to vector<1x1x4xf32>
    %44 = vector.broadcast %43 : vector<1x1x4xf32> to vector<2x2x4xf32>
    %45 = arith.mulf %41, %44 : vector<2x2x4xf32>
    %46 = arith.addf %40, %45 : vector<2x2x4xf32>
    %47 = vector.extract_strided_slice %10 {offsets = [0, 6, 0], sizes = [2, 2, 4], strides = [1, 1, 1]} : vector<2x8x4xf32> to vector<2x2x4xf32>
    %48 = vector.extract_strided_slice %6 {offsets = [6, 0], sizes = [1, 4], strides = [1, 1]} : vector<49x4xf32> to vector<1x4xf32>
    %49 = vector.shape_cast %48 : vector<1x4xf32> to vector<1x1x4xf32>
    %50 = vector.broadcast %49 : vector<1x1x4xf32> to vector<2x2x4xf32>
    %51 = arith.mulf %47, %50 : vector<2x2x4xf32>
    %52 = arith.addf %46, %51 : vector<2x2x4xf32>
    %c1 = arith.constant 1 : index
    %c0_14 = arith.constant 0 : index
    %c0_15 = arith.constant 0 : index
    %53 = vector.load %arg15[%c1, %c0_14, %c0_15] : memref<8x8x4xf32, #tpu.memory_space<vmem>>, vector<2x8x4xf32>
    %54 = vector.extract_strided_slice %53 {offsets = [0, 0, 0], sizes = [2, 2, 4], strides = [1, 1, 1]} : vector<2x8x4xf32> to vector<2x2x4xf32>
    %55 = vector.extract_strided_slice %6 {offsets = [7, 0], sizes = [1, 4], strides = [1, 1]} : vector<49x4xf32> to vector<1x4xf32>
    %56 = vector.shape_cast %55 : vector<1x4xf32> to vector<1x1x4xf32>
    %57 = vector.broadcast %56 : vector<1x1x4xf32> to vector<2x2x4xf32>
    %58 = arith.mulf %54, %57 : vector<2x2x4xf32>
    %59 = arith.addf %52, %58 : vector<2x2x4xf32>
    %60 = vector.extract_strided_slice %53 {offsets = [0, 1, 0], sizes = [2, 2, 4], strides = [1, 1, 1]} : vector<2x8x4xf32> to vector<2x2x4xf32>
    %61 = vector.extract_strided_slice %6 {offsets = [8, 0], sizes = [1, 4], strides = [1, 1]} : vector<49x4xf32> to vector<1x4xf32>
    %62 = vector.shape_cast %61 : vector<1x4xf32> to vector<1x1x4xf32>
    %63 = vector.broadcast %62 : vector<1x1x4xf32> to vector<2x2x4xf32>
    %64 = arith.mulf %60, %63 : vector<2x2x4xf32>
    %65 = arith.addf %59, %64 : vector<2x2x4xf32>
    %66 = vector.extract_strided_slice %53 {offsets = [0, 2, 0], sizes = [2, 2, 4], strides = [1, 1, 1]} : vector<2x8x4xf32> to vector<2x2x4xf32>
    %67 = vector.extract_strided_slice %6 {offsets = [9, 0], sizes = [1, 4], strides = [1, 1]} : vector<49x4xf32> to vector<1x4xf32>
    %68 = vector.shape_cast %67 : vector<1x4xf32> to vector<1x1x4xf32>
    %69 = vector.broadcast %68 : vector<1x1x4xf32> to vector<2x2x4xf32>
    %70 = arith.mulf %66, %69 : vector<2x2x4xf32>
    %71 = arith.addf %65, %70 : vector<2x2x4xf32>
    %72 = vector.extract_strided_slice %53 {offsets = [0, 3, 0], sizes = [2, 2, 4], strides = [1, 1, 1]} : vector<2x8x4xf32> to vector<2x2x4xf32>
    %73 = vector.extract_strided_slice %6 {offsets = [10, 0], sizes = [1, 4], strides = [1, 1]} : vector<49x4xf32> to vector<1x4xf32>
    %74 = vector.shape_cast %73 : vector<1x4xf32> to vector<1x1x4xf32>
    %75 = vector.broadcast %74 : vector<1x1x4xf32> to vector<2x2x4xf32>
    %76 = arith.mulf %72, %75 : vector<2x2x4xf32>
    %77 = arith.addf %71, %76 : vector<2x2x4xf32>
    %78 = vector.extract_strided_slice %53 {offsets = [0, 4, 0], sizes = [2, 2, 4], strides = [1, 1, 1]} : vector<2x8x4xf32> to vector<2x2x4xf32>
    %79 = vector.extract_strided_slice %6 {offsets = [11, 0], sizes = [1, 4], strides = [1, 1]} : vector<49x4xf32> to vector<1x4xf32>
    %80 = vector.shape_cast %79 : vector<1x4xf32> to vector<1x1x4xf32>
    %81 = vector.broadcast %80 : vector<1x1x4xf32> to vector<2x2x4xf32>
    %82 = arith.mulf %78, %81 : vector<2x2x4xf32>
    %83 = arith.addf %77, %82 : vector<2x2x4xf32>
    %84 = vector.extract_strided_slice %53 {offsets = [0, 5, 0], sizes = [2, 2, 4], strides = [1, 1, 1]} : vector<2x8x4xf32> to vector<2x2x4xf32>
    %85 = vector.extract_strided_slice %6 {offsets = [12, 0], sizes = [1, 4], strides = [1, 1]} : vector<49x4xf32> to vector<1x4xf32>
    %86 = vector.shape_cast %85 : vector<1x4xf32> to vector<1x1x4xf32>
    %87 = vector.broadcast %86 : vector<1x1x4xf32> to vector<2x2x4xf32>
    %88 = arith.mulf %84, %87 : vector<2x2x4xf32>
    %89 = arith.addf %83, %88 : vector<2x2x4xf32>
    %90 = vector.extract_strided_slice %53 {offsets = [0, 6, 0], sizes = [2, 2, 4], strides = [1, 1, 1]} : vector<2x8x4xf32> to vector<2x2x4xf32>
    %91 = vector.extract_strided_slice %6 {offsets = [13, 0], sizes = [1, 4], strides = [1, 1]} : vector<49x4xf32> to vector<1x4xf32>
    %92 = vector.shape_cast %91 : vector<1x4xf32> to vector<1x1x4xf32>
    %93 = vector.broadcast %92 : vector<1x1x4xf32> to vector<2x2x4xf32>
    %94 = arith.mulf %90, %93 : vector<2x2x4xf32>
    %95 = arith.addf %89, %94 : vector<2x2x4xf32>
    %c2 = arith.constant 2 : index
    %c0_16 = arith.constant 0 : index
    %c0_17 = arith.constant 0 : index
    %96 = vector.load %arg15[%c2, %c0_16, %c0_17] : memref<8x8x4xf32, #tpu.memory_space<vmem>>, vector<2x8x4xf32>
    %97 = vector.extract_strided_slice %96 {offsets = [0, 0, 0], sizes = [2, 2, 4], strides = [1, 1, 1]} : vector<2x8x4xf32> to vector<2x2x4xf32>
    %98 = vector.extract_strided_slice %6 {offsets = [14, 0], sizes = [1, 4], strides = [1, 1]} : vector<49x4xf32> to vector<1x4xf32>
    %99 = vector.shape_cast %98 : vector<1x4xf32> to vector<1x1x4xf32>
    %100 = vector.broadcast %99 : vector<1x1x4xf32> to vector<2x2x4xf32>
    %101 = arith.mulf %97, %100 : vector<2x2x4xf32>
    %102 = arith.addf %95, %101 : vector<2x2x4xf32>
    %103 = vector.extract_strided_slice %96 {offsets = [0, 1, 0], sizes = [2, 2, 4], strides = [1, 1, 1]} : vector<2x8x4xf32> to vector<2x2x4xf32>
    %104 = vector.extract_strided_slice %6 {offsets = [15, 0], sizes = [1, 4], strides = [1, 1]} : vector<49x4xf32> to vector<1x4xf32>
    %105 = vector.shape_cast %104 : vector<1x4xf32> to vector<1x1x4xf32>
    %106 = vector.broadcast %105 : vector<1x1x4xf32> to vector<2x2x4xf32>
    %107 = arith.mulf %103, %106 : vector<2x2x4xf32>
    %108 = arith.addf %102, %107 : vector<2x2x4xf32>
    %109 = vector.extract_strided_slice %96 {offsets = [0, 2, 0], sizes = [2, 2, 4], strides = [1, 1, 1]} : vector<2x8x4xf32> to vector<2x2x4xf32>
    %110 = vector.extract_strided_slice %6 {offsets = [16, 0], sizes = [1, 4], strides = [1, 1]} : vector<49x4xf32> to vector<1x4xf32>
    %111 = vector.shape_cast %110 : vector<1x4xf32> to vector<1x1x4xf32>
    %112 = vector.broadcast %111 : vector<1x1x4xf32> to vector<2x2x4xf32>
    %113 = arith.mulf %109, %112 : vector<2x2x4xf32>
    %114 = arith.addf %108, %113 : vector<2x2x4xf32>
    %115 = vector.extract_strided_slice %96 {offsets = [0, 3, 0], sizes = [2, 2, 4], strides = [1, 1, 1]} : vector<2x8x4xf32> to vector<2x2x4xf32>
    %116 = vector.extract_strided_slice %6 {offsets = [17, 0], sizes = [1, 4], strides = [1, 1]} : vector<49x4xf32> to vector<1x4xf32>
    %117 = vector.shape_cast %116 : vector<1x4xf32> to vector<1x1x4xf32>
    %118 = vector.broadcast %117 : vector<1x1x4xf32> to vector<2x2x4xf32>
    %119 = arith.mulf %115, %118 : vector<2x2x4xf32>
    %120 = arith.addf %114, %119 : vector<2x2x4xf32>
    %121 = vector.extract_strided_slice %96 {offsets = [0, 4, 0], sizes = [2, 2, 4], strides = [1, 1, 1]} : vector<2x8x4xf32> to vector<2x2x4xf32>
    %122 = vector.extract_strided_slice %6 {offsets = [18, 0], sizes = [1, 4], strides = [1, 1]} : vector<49x4xf32> to vector<1x4xf32>
    %123 = vector.shape_cast %122 : vector<1x4xf32> to vector<1x1x4xf32>
    %124 = vector.broadcast %123 : vector<1x1x4xf32> to vector<2x2x4xf32>
    %125 = arith.mulf %121, %124 : vector<2x2x4xf32>
    %126 = arith.addf %120, %125 : vector<2x2x4xf32>
    %127 = vector.extract_strided_slice %96 {offsets = [0, 5, 0], sizes = [2, 2, 4], strides = [1, 1, 1]} : vector<2x8x4xf32> to vector<2x2x4xf32>
    %128 = vector.extract_strided_slice %6 {offsets = [19, 0], sizes = [1, 4], strides = [1, 1]} : vector<49x4xf32> to vector<1x4xf32>
    %129 = vector.shape_cast %128 : vector<1x4xf32> to vector<1x1x4xf32>
    %130 = vector.broadcast %129 : vector<1x1x4xf32> to vector<2x2x4xf32>
    %131 = arith.mulf %127, %130 : vector<2x2x4xf32>
    %132 = arith.addf %126, %131 : vector<2x2x4xf32>
    %133 = vector.extract_strided_slice %96 {offsets = [0, 6, 0], sizes = [2, 2, 4], strides = [1, 1, 1]} : vector<2x8x4xf32> to vector<2x2x4xf32>
    %134 = vector.extract_strided_slice %6 {offsets = [20, 0], sizes = [1, 4], strides = [1, 1]} : vector<49x4xf32> to vector<1x4xf32>
    %135 = vector.shape_cast %134 : vector<1x4xf32> to vector<1x1x4xf32>
    %136 = vector.broadcast %135 : vector<1x1x4xf32> to vector<2x2x4xf32>
    %137 = arith.mulf %133, %136 : vector<2x2x4xf32>
    %138 = arith.addf %132, %137 : vector<2x2x4xf32>
    %c3_18 = arith.constant 3 : index
    %c0_19 = arith.constant 0 : index
    %c0_20 = arith.constant 0 : index
    %139 = vector.load %arg15[%c3_18, %c0_19, %c0_20] : memref<8x8x4xf32, #tpu.memory_space<vmem>>, vector<2x8x4xf32>
    %140 = vector.extract_strided_slice %139 {offsets = [0, 0, 0], sizes = [2, 2, 4], strides = [1, 1, 1]} : vector<2x8x4xf32> to vector<2x2x4xf32>
    %141 = vector.extract_strided_slice %6 {offsets = [21, 0], sizes = [1, 4], strides = [1, 1]} : vector<49x4xf32> to vector<1x4xf32>
    %142 = vector.shape_cast %141 : vector<1x4xf32> to vector<1x1x4xf32>
    %143 = vector.broadcast %142 : vector<1x1x4xf32> to vector<2x2x4xf32>
    %144 = arith.mulf %140, %143 : vector<2x2x4xf32>
    %145 = arith.addf %138, %144 : vector<2x2x4xf32>
    %146 = vector.extract_strided_slice %139 {offsets = [0, 1, 0], sizes = [2, 2, 4], strides = [1, 1, 1]} : vector<2x8x4xf32> to vector<2x2x4xf32>
    %147 = vector.extract_strided_slice %6 {offsets = [22, 0], sizes = [1, 4], strides = [1, 1]} : vector<49x4xf32> to vector<1x4xf32>
    %148 = vector.shape_cast %147 : vector<1x4xf32> to vector<1x1x4xf32>
    %149 = vector.broadcast %148 : vector<1x1x4xf32> to vector<2x2x4xf32>
    %150 = arith.mulf %146, %149 : vector<2x2x4xf32>
    %151 = arith.addf %145, %150 : vector<2x2x4xf32>
    %152 = vector.extract_strided_slice %139 {offsets = [0, 2, 0], sizes = [2, 2, 4], strides = [1, 1, 1]} : vector<2x8x4xf32> to vector<2x2x4xf32>
    %153 = vector.extract_strided_slice %6 {offsets = [23, 0], sizes = [1, 4], strides = [1, 1]} : vector<49x4xf32> to vector<1x4xf32>
    %154 = vector.shape_cast %153 : vector<1x4xf32> to vector<1x1x4xf32>
    %155 = vector.broadcast %154 : vector<1x1x4xf32> to vector<2x2x4xf32>
    %156 = arith.mulf %152, %155 : vector<2x2x4xf32>
    %157 = arith.addf %151, %156 : vector<2x2x4xf32>
    %158 = vector.extract_strided_slice %139 {offsets = [0, 3, 0], sizes = [2, 2, 4], strides = [1, 1, 1]} : vector<2x8x4xf32> to vector<2x2x4xf32>
    %159 = vector.extract_strided_slice %6 {offsets = [24, 0], sizes = [1, 4], strides = [1, 1]} : vector<49x4xf32> to vector<1x4xf32>
    %160 = vector.shape_cast %159 : vector<1x4xf32> to vector<1x1x4xf32>
    %161 = vector.broadcast %160 : vector<1x1x4xf32> to vector<2x2x4xf32>
    %162 = arith.mulf %158, %161 : vector<2x2x4xf32>
    %163 = arith.addf %157, %162 : vector<2x2x4xf32>
    %164 = vector.extract_strided_slice %139 {offsets = [0, 4, 0], sizes = [2, 2, 4], strides = [1, 1, 1]} : vector<2x8x4xf32> to vector<2x2x4xf32>
    %165 = vector.extract_strided_slice %6 {offsets = [25, 0], sizes = [1, 4], strides = [1, 1]} : vector<49x4xf32> to vector<1x4xf32>
    %166 = vector.shape_cast %165 : vector<1x4xf32> to vector<1x1x4xf32>
    %167 = vector.broadcast %166 : vector<1x1x4xf32> to vector<2x2x4xf32>
    %168 = arith.mulf %164, %167 : vector<2x2x4xf32>
    %169 = arith.addf %163, %168 : vector<2x2x4xf32>
    %170 = vector.extract_strided_slice %139 {offsets = [0, 5, 0], sizes = [2, 2, 4], strides = [1, 1, 1]} : vector<2x8x4xf32> to vector<2x2x4xf32>
    %171 = vector.extract_strided_slice %6 {offsets = [26, 0], sizes = [1, 4], strides = [1, 1]} : vector<49x4xf32> to vector<1x4xf32>
    %172 = vector.shape_cast %171 : vector<1x4xf32> to vector<1x1x4xf32>
    %173 = vector.broadcast %172 : vector<1x1x4xf32> to vector<2x2x4xf32>
    %174 = arith.mulf %170, %173 : vector<2x2x4xf32>
    %175 = arith.addf %169, %174 : vector<2x2x4xf32>
    %176 = vector.extract_strided_slice %139 {offsets = [0, 6, 0], sizes = [2, 2, 4], strides = [1, 1, 1]} : vector<2x8x4xf32> to vector<2x2x4xf32>
    %177 = vector.extract_strided_slice %6 {offsets = [27, 0], sizes = [1, 4], strides = [1, 1]} : vector<49x4xf32> to vector<1x4xf32>
    %178 = vector.shape_cast %177 : vector<1x4xf32> to vector<1x1x4xf32>
    %179 = vector.broadcast %178 : vector<1x1x4xf32> to vector<2x2x4xf32>
    %180 = arith.mulf %176, %179 : vector<2x2x4xf32>
    %181 = arith.addf %175, %180 : vector<2x2x4xf32>
    %c4 = arith.constant 4 : index
    %c0_21 = arith.constant 0 : index
    %c0_22 = arith.constant 0 : index
    %182 = vector.load %arg15[%c4, %c0_21, %c0_22] : memref<8x8x4xf32, #tpu.memory_space<vmem>>, vector<2x8x4xf32>
    %183 = vector.extract_strided_slice %182 {offsets = [0, 0, 0], sizes = [2, 2, 4], strides = [1, 1, 1]} : vector<2x8x4xf32> to vector<2x2x4xf32>
    %184 = vector.extract_strided_slice %6 {offsets = [28, 0], sizes = [1, 4], strides = [1, 1]} : vector<49x4xf32> to vector<1x4xf32>
    %185 = vector.shape_cast %184 : vector<1x4xf32> to vector<1x1x4xf32>
    %186 = vector.broadcast %185 : vector<1x1x4xf32> to vector<2x2x4xf32>
    %187 = arith.mulf %183, %186 : vector<2x2x4xf32>
    %188 = arith.addf %181, %187 : vector<2x2x4xf32>
    %189 = vector.extract_strided_slice %182 {offsets = [0, 1, 0], sizes = [2, 2, 4], strides = [1, 1, 1]} : vector<2x8x4xf32> to vector<2x2x4xf32>
    %190 = vector.extract_strided_slice %6 {offsets = [29, 0], sizes = [1, 4], strides = [1, 1]} : vector<49x4xf32> to vector<1x4xf32>
    %191 = vector.shape_cast %190 : vector<1x4xf32> to vector<1x1x4xf32>
    %192 = vector.broadcast %191 : vector<1x1x4xf32> to vector<2x2x4xf32>
    %193 = arith.mulf %189, %192 : vector<2x2x4xf32>
    %194 = arith.addf %188, %193 : vector<2x2x4xf32>
    %195 = vector.extract_strided_slice %182 {offsets = [0, 2, 0], sizes = [2, 2, 4], strides = [1, 1, 1]} : vector<2x8x4xf32> to vector<2x2x4xf32>
    %196 = vector.extract_strided_slice %6 {offsets = [30, 0], sizes = [1, 4], strides = [1, 1]} : vector<49x4xf32> to vector<1x4xf32>
    %197 = vector.shape_cast %196 : vector<1x4xf32> to vector<1x1x4xf32>
    %198 = vector.broadcast %197 : vector<1x1x4xf32> to vector<2x2x4xf32>
    %199 = arith.mulf %195, %198 : vector<2x2x4xf32>
    %200 = arith.addf %194, %199 : vector<2x2x4xf32>
    %201 = vector.extract_strided_slice %182 {offsets = [0, 3, 0], sizes = [2, 2, 4], strides = [1, 1, 1]} : vector<2x8x4xf32> to vector<2x2x4xf32>
    %202 = vector.extract_strided_slice %6 {offsets = [31, 0], sizes = [1, 4], strides = [1, 1]} : vector<49x4xf32> to vector<1x4xf32>
    %203 = vector.shape_cast %202 : vector<1x4xf32> to vector<1x1x4xf32>
    %204 = vector.broadcast %203 : vector<1x1x4xf32> to vector<2x2x4xf32>
    %205 = arith.mulf %201, %204 : vector<2x2x4xf32>
    %206 = arith.addf %200, %205 : vector<2x2x4xf32>
    %207 = vector.extract_strided_slice %182 {offsets = [0, 4, 0], sizes = [2, 2, 4], strides = [1, 1, 1]} : vector<2x8x4xf32> to vector<2x2x4xf32>
    %208 = vector.extract_strided_slice %6 {offsets = [32, 0], sizes = [1, 4], strides = [1, 1]} : vector<49x4xf32> to vector<1x4xf32>
    %209 = vector.shape_cast %208 : vector<1x4xf32> to vector<1x1x4xf32>
    %210 = vector.broadcast %209 : vector<1x1x4xf32> to vector<2x2x4xf32>
    %211 = arith.mulf %207, %210 : vector<2x2x4xf32>
    %212 = arith.addf %206, %211 : vector<2x2x4xf32>
    %213 = vector.extract_strided_slice %182 {offsets = [0, 5, 0], sizes = [2, 2, 4], strides = [1, 1, 1]} : vector<2x8x4xf32> to vector<2x2x4xf32>
    %214 = vector.extract_strided_slice %6 {offsets = [33, 0], sizes = [1, 4], strides = [1, 1]} : vector<49x4xf32> to vector<1x4xf32>
    %215 = vector.shape_cast %214 : vector<1x4xf32> to vector<1x1x4xf32>
    %216 = vector.broadcast %215 : vector<1x1x4xf32> to vector<2x2x4xf32>
    %217 = arith.mulf %213, %216 : vector<2x2x4xf32>
    %218 = arith.addf %212, %217 : vector<2x2x4xf32>
    %219 = vector.extract_strided_slice %182 {offsets = [0, 6, 0], sizes = [2, 2, 4], strides = [1, 1, 1]} : vector<2x8x4xf32> to vector<2x2x4xf32>
    %220 = vector.extract_strided_slice %6 {offsets = [34, 0], sizes = [1, 4], strides = [1, 1]} : vector<49x4xf32> to vector<1x4xf32>
    %221 = vector.shape_cast %220 : vector<1x4xf32> to vector<1x1x4xf32>
    %222 = vector.broadcast %221 : vector<1x1x4xf32> to vector<2x2x4xf32>
    %223 = arith.mulf %219, %222 : vector<2x2x4xf32>
    %224 = arith.addf %218, %223 : vector<2x2x4xf32>
    %c5 = arith.constant 5 : index
    %c0_23 = arith.constant 0 : index
    %c0_24 = arith.constant 0 : index
    %225 = vector.load %arg15[%c5, %c0_23, %c0_24] : memref<8x8x4xf32, #tpu.memory_space<vmem>>, vector<2x8x4xf32>
    %226 = vector.extract_strided_slice %225 {offsets = [0, 0, 0], sizes = [2, 2, 4], strides = [1, 1, 1]} : vector<2x8x4xf32> to vector<2x2x4xf32>
    %227 = vector.extract_strided_slice %6 {offsets = [35, 0], sizes = [1, 4], strides = [1, 1]} : vector<49x4xf32> to vector<1x4xf32>
    %228 = vector.shape_cast %227 : vector<1x4xf32> to vector<1x1x4xf32>
    %229 = vector.broadcast %228 : vector<1x1x4xf32> to vector<2x2x4xf32>
    %230 = arith.mulf %226, %229 : vector<2x2x4xf32>
    %231 = arith.addf %224, %230 : vector<2x2x4xf32>
    %232 = vector.extract_strided_slice %225 {offsets = [0, 1, 0], sizes = [2, 2, 4], strides = [1, 1, 1]} : vector<2x8x4xf32> to vector<2x2x4xf32>
    %233 = vector.extract_strided_slice %6 {offsets = [36, 0], sizes = [1, 4], strides = [1, 1]} : vector<49x4xf32> to vector<1x4xf32>
    %234 = vector.shape_cast %233 : vector<1x4xf32> to vector<1x1x4xf32>
    %235 = vector.broadcast %234 : vector<1x1x4xf32> to vector<2x2x4xf32>
    %236 = arith.mulf %232, %235 : vector<2x2x4xf32>
    %237 = arith.addf %231, %236 : vector<2x2x4xf32>
    %238 = vector.extract_strided_slice %225 {offsets = [0, 2, 0], sizes = [2, 2, 4], strides = [1, 1, 1]} : vector<2x8x4xf32> to vector<2x2x4xf32>
    %239 = vector.extract_strided_slice %6 {offsets = [37, 0], sizes = [1, 4], strides = [1, 1]} : vector<49x4xf32> to vector<1x4xf32>
    %240 = vector.shape_cast %239 : vector<1x4xf32> to vector<1x1x4xf32>
    %241 = vector.broadcast %240 : vector<1x1x4xf32> to vector<2x2x4xf32>
    %242 = arith.mulf %238, %241 : vector<2x2x4xf32>
    %243 = arith.addf %237, %242 : vector<2x2x4xf32>
    %244 = vector.extract_strided_slice %225 {offsets = [0, 3, 0], sizes = [2, 2, 4], strides = [1, 1, 1]} : vector<2x8x4xf32> to vector<2x2x4xf32>
    %245 = vector.extract_strided_slice %6 {offsets = [38, 0], sizes = [1, 4], strides = [1, 1]} : vector<49x4xf32> to vector<1x4xf32>
    %246 = vector.shape_cast %245 : vector<1x4xf32> to vector<1x1x4xf32>
    %247 = vector.broadcast %246 : vector<1x1x4xf32> to vector<2x2x4xf32>
    %248 = arith.mulf %244, %247 : vector<2x2x4xf32>
    %249 = arith.addf %243, %248 : vector<2x2x4xf32>
    %250 = vector.extract_strided_slice %225 {offsets = [0, 4, 0], sizes = [2, 2, 4], strides = [1, 1, 1]} : vector<2x8x4xf32> to vector<2x2x4xf32>
    %251 = vector.extract_strided_slice %6 {offsets = [39, 0], sizes = [1, 4], strides = [1, 1]} : vector<49x4xf32> to vector<1x4xf32>
    %252 = vector.shape_cast %251 : vector<1x4xf32> to vector<1x1x4xf32>
    %253 = vector.broadcast %252 : vector<1x1x4xf32> to vector<2x2x4xf32>
    %254 = arith.mulf %250, %253 : vector<2x2x4xf32>
    %255 = arith.addf %249, %254 : vector<2x2x4xf32>
    %256 = vector.extract_strided_slice %225 {offsets = [0, 5, 0], sizes = [2, 2, 4], strides = [1, 1, 1]} : vector<2x8x4xf32> to vector<2x2x4xf32>
    %257 = vector.extract_strided_slice %6 {offsets = [40, 0], sizes = [1, 4], strides = [1, 1]} : vector<49x4xf32> to vector<1x4xf32>
    %258 = vector.shape_cast %257 : vector<1x4xf32> to vector<1x1x4xf32>
    %259 = vector.broadcast %258 : vector<1x1x4xf32> to vector<2x2x4xf32>
    %260 = arith.mulf %256, %259 : vector<2x2x4xf32>
    %261 = arith.addf %255, %260 : vector<2x2x4xf32>
    %262 = vector.extract_strided_slice %225 {offsets = [0, 6, 0], sizes = [2, 2, 4], strides = [1, 1, 1]} : vector<2x8x4xf32> to vector<2x2x4xf32>
    %263 = vector.extract_strided_slice %6 {offsets = [41, 0], sizes = [1, 4], strides = [1, 1]} : vector<49x4xf32> to vector<1x4xf32>
    %264 = vector.shape_cast %263 : vector<1x4xf32> to vector<1x1x4xf32>
    %265 = vector.broadcast %264 : vector<1x1x4xf32> to vector<2x2x4xf32>
    %266 = arith.mulf %262, %265 : vector<2x2x4xf32>
    %267 = arith.addf %261, %266 : vector<2x2x4xf32>
    %c6 = arith.constant 6 : index
    %c0_25 = arith.constant 0 : index
    %c0_26 = arith.constant 0 : index
    %268 = vector.load %arg15[%c6, %c0_25, %c0_26] : memref<8x8x4xf32, #tpu.memory_space<vmem>>, vector<2x8x4xf32>
    %269 = vector.extract_strided_slice %268 {offsets = [0, 0, 0], sizes = [2, 2, 4], strides = [1, 1, 1]} : vector<2x8x4xf32> to vector<2x2x4xf32>
    %270 = vector.extract_strided_slice %6 {offsets = [42, 0], sizes = [1, 4], strides = [1, 1]} : vector<49x4xf32> to vector<1x4xf32>
    %271 = vector.shape_cast %270 : vector<1x4xf32> to vector<1x1x4xf32>
    %272 = vector.broadcast %271 : vector<1x1x4xf32> to vector<2x2x4xf32>
    %273 = arith.mulf %269, %272 : vector<2x2x4xf32>
    %274 = arith.addf %267, %273 : vector<2x2x4xf32>
    %275 = vector.extract_strided_slice %268 {offsets = [0, 1, 0], sizes = [2, 2, 4], strides = [1, 1, 1]} : vector<2x8x4xf32> to vector<2x2x4xf32>
    %276 = vector.extract_strided_slice %6 {offsets = [43, 0], sizes = [1, 4], strides = [1, 1]} : vector<49x4xf32> to vector<1x4xf32>
    %277 = vector.shape_cast %276 : vector<1x4xf32> to vector<1x1x4xf32>
    %278 = vector.broadcast %277 : vector<1x1x4xf32> to vector<2x2x4xf32>
    %279 = arith.mulf %275, %278 : vector<2x2x4xf32>
    %280 = arith.addf %274, %279 : vector<2x2x4xf32>
    %281 = vector.extract_strided_slice %268 {offsets = [0, 2, 0], sizes = [2, 2, 4], strides = [1, 1, 1]} : vector<2x8x4xf32> to vector<2x2x4xf32>
    %282 = vector.extract_strided_slice %6 {offsets = [44, 0], sizes = [1, 4], strides = [1, 1]} : vector<49x4xf32> to vector<1x4xf32>
    %283 = vector.shape_cast %282 : vector<1x4xf32> to vector<1x1x4xf32>
    %284 = vector.broadcast %283 : vector<1x1x4xf32> to vector<2x2x4xf32>
    %285 = arith.mulf %281, %284 : vector<2x2x4xf32>
    %286 = arith.addf %280, %285 : vector<2x2x4xf32>
    %287 = vector.extract_strided_slice %268 {offsets = [0, 3, 0], sizes = [2, 2, 4], strides = [1, 1, 1]} : vector<2x8x4xf32> to vector<2x2x4xf32>
    %288 = vector.extract_strided_slice %6 {offsets = [45, 0], sizes = [1, 4], strides = [1, 1]} : vector<49x4xf32> to vector<1x4xf32>
    %289 = vector.shape_cast %288 : vector<1x4xf32> to vector<1x1x4xf32>
    %290 = vector.broadcast %289 : vector<1x1x4xf32> to vector<2x2x4xf32>
    %291 = arith.mulf %287, %290 : vector<2x2x4xf32>
    %292 = arith.addf %286, %291 : vector<2x2x4xf32>
    %293 = vector.extract_strided_slice %268 {offsets = [0, 4, 0], sizes = [2, 2, 4], strides = [1, 1, 1]} : vector<2x8x4xf32> to vector<2x2x4xf32>
    %294 = vector.extract_strided_slice %6 {offsets = [46, 0], sizes = [1, 4], strides = [1, 1]} : vector<49x4xf32> to vector<1x4xf32>
    %295 = vector.shape_cast %294 : vector<1x4xf32> to vector<1x1x4xf32>
    %296 = vector.broadcast %295 : vector<1x1x4xf32> to vector<2x2x4xf32>
    %297 = arith.mulf %293, %296 : vector<2x2x4xf32>
    %298 = arith.addf %292, %297 : vector<2x2x4xf32>
    %299 = vector.extract_strided_slice %268 {offsets = [0, 5, 0], sizes = [2, 2, 4], strides = [1, 1, 1]} : vector<2x8x4xf32> to vector<2x2x4xf32>
    %300 = vector.extract_strided_slice %6 {offsets = [47, 0], sizes = [1, 4], strides = [1, 1]} : vector<49x4xf32> to vector<1x4xf32>
    %301 = vector.shape_cast %300 : vector<1x4xf32> to vector<1x1x4xf32>
    %302 = vector.broadcast %301 : vector<1x1x4xf32> to vector<2x2x4xf32>
    %303 = arith.mulf %299, %302 : vector<2x2x4xf32>
    %304 = arith.addf %298, %303 : vector<2x2x4xf32>
    %305 = vector.extract_strided_slice %268 {offsets = [0, 6, 0], sizes = [2, 2, 4], strides = [1, 1, 1]} : vector<2x8x4xf32> to vector<2x2x4xf32>
    %306 = vector.extract_strided_slice %6 {offsets = [48, 0], sizes = [1, 4], strides = [1, 1]} : vector<49x4xf32> to vector<1x4xf32>
    %307 = vector.shape_cast %306 : vector<1x4xf32> to vector<1x1x4xf32>
    %308 = vector.broadcast %307 : vector<1x1x4xf32> to vector<2x2x4xf32>
    %309 = arith.mulf %305, %308 : vector<2x2x4xf32>
    %310 = arith.addf %304, %309 : vector<2x2x4xf32>
    %311 = vector.extract_strided_slice %8 {offsets = [0, 0], sizes = [1, 4], strides = [1, 1]} : vector<5x4xf32> to vector<1x4xf32>
    %312 = vector.shape_cast %311 : vector<1x4xf32> to vector<1x1x4xf32>
    %313 = vector.broadcast %312 : vector<1x1x4xf32> to vector<2x2x4xf32>
    %314 = arith.addf %310, %313 : vector<2x2x4xf32>
    %315 = vector.shape_cast %314 : vector<2x2x4xf32> to vector<4x4xf32>
    %316 = vector.extract_strided_slice %8 {offsets = [1, 0], sizes = [1, 4], strides = [1, 1]} : vector<5x4xf32> to vector<1x4xf32>
    %317 = vector.extract_strided_slice %8 {offsets = [2, 0], sizes = [1, 4], strides = [1, 1]} : vector<5x4xf32> to vector<1x4xf32>
    %cst_27 = arith.constant dense<0.000000e+00> : vector<4xf32>
    %318 = vector.multi_reduction <add>, %315, %cst_27 [1] : vector<4x4xf32> to vector<4xf32>
    %319 = vector.shape_cast %318 : vector<4xf32> to vector<4x1xf32>
    %cst_28 = arith.constant 4.000000e+00 : f32
    %320 = vector.broadcast %cst_28 : f32 to vector<4x1xf32>
    %321 = arith.divf %319, %320 : vector<4x1xf32>
    %322 = vector.broadcast %321 : vector<4x1xf32> to vector<4x4xf32>
    %323 = arith.subf %315, %322 : vector<4x4xf32>
    %324 = arith.mulf %323, %323 : vector<4x4xf32>
    %cst_29 = arith.constant dense<0.000000e+00> : vector<4xf32>
    %325 = vector.multi_reduction <add>, %324, %cst_29 [1] : vector<4x4xf32> to vector<4xf32>
    %326 = vector.shape_cast %325 : vector<4xf32> to vector<4x1xf32>
    %cst_30 = arith.constant 4.000000e+00 : f32
    %327 = vector.broadcast %cst_30 : f32 to vector<4x1xf32>
    %328 = arith.divf %326, %327 : vector<4x1xf32>
    %329 = vector.broadcast %321 : vector<4x1xf32> to vector<4x4xf32>
    %330 = arith.subf %315, %329 : vector<4x4xf32>
    %cst_31 = arith.constant 9.99999997E-7 : f32
    %331 = vector.broadcast %cst_31 : f32 to vector<4x1xf32>
    %332 = arith.addf %328, %331 : vector<4x1xf32>
    %333 = math.rsqrt %332 : vector<4x1xf32>
    %334 = vector.broadcast %333 : vector<4x1xf32> to vector<4x4xf32>
    %335 = arith.mulf %330, %334 : vector<4x4xf32>
    %336 = vector.broadcast %316 : vector<1x4xf32> to vector<4x4xf32>
    %337 = arith.mulf %336, %335 : vector<4x4xf32>
    %338 = vector.broadcast %317 : vector<1x4xf32> to vector<4x4xf32>
    %339 = arith.addf %337, %338 : vector<4x4xf32>
    %c0_32 = arith.constant 0 : index
    %c0_33 = arith.constant 0 : index
    %c0_34 = arith.constant 0 : index
    %340 = vector.load %arg8[%c0_32, %c0_33, %c0_34] : memref<1x4x16xf32, #tpu.memory_space<vmem>>, vector<1x4x16xf32>
    %341 = vector.shape_cast %340 : vector<1x4x16xf32> to vector<4x16xf32>
    %cst_35 = arith.constant dense<0.000000e+00> : vector<4x16xf32>
    %342 = tpu.matmul %339, %341, %cst_35 {dimension_numbers = #tpu.dot_dimension_numbers<[1], [0], [0], [1], [0, 0, 1, 1], [], []>} : vector<4x4xf32>, vector<4x16xf32>, vector<4x16xf32> -> vector<4x16xf32>
    %c0_36 = arith.constant 0 : index
    %c0_37 = arith.constant 0 : index
    %c0_38 = arith.constant 0 : index
    %343 = vector.load %arg9[%c0_36, %c0_37, %c0_38] : memref<1x1x16xf32, #tpu.memory_space<vmem>>, vector<1x1x16xf32>
    %344 = vector.shape_cast %343 : vector<1x1x16xf32> to vector<1x16xf32>
    %345 = vector.broadcast %344 : vector<1x16xf32> to vector<4x16xf32>
    %346 = arith.addf %342, %345 : vector<4x16xf32>
    %cst_39 = arith.constant 5.000000e-01 : f32
    %347 = vector.broadcast %cst_39 : f32 to vector<4x16xf32>
    %348 = arith.mulf %347, %346 : vector<4x16xf32>
    %cst_40 = arith.constant 0.707106769 : f32
    %349 = vector.broadcast %cst_40 : f32 to vector<4x16xf32>
    %350 = arith.mulf %346, %349 : vector<4x16xf32>
    %351 = math.absf %350 : vector<4x16xf32>
    %cst_41 = arith.constant 0.327591091 : f32
    %352 = vector.broadcast %cst_41 : f32 to vector<4x16xf32>
    %353 = arith.mulf %352, %351 : vector<4x16xf32>
    %cst_42 = arith.constant 1.000000e+00 : f32
    %354 = vector.broadcast %cst_42 : f32 to vector<4x16xf32>
    %355 = arith.addf %354, %353 : vector<4x16xf32>
    %cst_43 = arith.constant 1.000000e+00 : f32
    %356 = vector.broadcast %cst_43 : f32 to vector<4x16xf32>
    %357 = arith.divf %356, %355 : vector<4x16xf32>
    %cst_44 = arith.constant 1.06140542 : f32
    %358 = vector.broadcast %cst_44 : f32 to vector<4x16xf32>
    %359 = arith.mulf %357, %358 : vector<4x16xf32>
    %cst_45 = arith.constant -1.45315206 : f32
    %360 = vector.broadcast %cst_45 : f32 to vector<4x16xf32>
    %361 = arith.addf %360, %359 : vector<4x16xf32>
    %362 = arith.mulf %357, %361 : vector<4x16xf32>
    %cst_46 = arith.constant 1.42141378 : f32
    %363 = vector.broadcast %cst_46 : f32 to vector<4x16xf32>
    %364 = arith.addf %363, %362 : vector<4x16xf32>
    %365 = arith.mulf %357, %364 : vector<4x16xf32>
    %cst_47 = arith.constant -0.284496725 : f32
    %366 = vector.broadcast %cst_47 : f32 to vector<4x16xf32>
    %367 = arith.addf %366, %365 : vector<4x16xf32>
    %368 = arith.mulf %357, %367 : vector<4x16xf32>
    %cst_48 = arith.constant 0.254829586 : f32
    %369 = vector.broadcast %cst_48 : f32 to vector<4x16xf32>
    %370 = arith.addf %369, %368 : vector<4x16xf32>
    %371 = arith.mulf %357, %370 : vector<4x16xf32>
    %cst_49 = arith.constant 0.000000e+00 : f32
    %372 = vector.broadcast %cst_49 : f32 to vector<4x16xf32>
    %373 = arith.subf %372, %351 : vector<4x16xf32>
    %374 = arith.mulf %373, %351 : vector<4x16xf32>
    %375 = math.exp %374 : vector<4x16xf32>
    %376 = arith.mulf %371, %375 : vector<4x16xf32>
    %cst_50 = arith.constant 1.000000e+00 : f32
    %377 = vector.broadcast %cst_50 : f32 to vector<4x16xf32>
    %378 = arith.subf %377, %376 : vector<4x16xf32>
    %cst_51 = arith.constant 0.000000e+00 : f32
    %379 = vector.broadcast %cst_51 : f32 to vector<4x16xf32>
    %380 = arith.cmpf olt, %350, %379 : vector<4x16xf32>
    %cst_52 = arith.constant 0.000000e+00 : f32
    %381 = vector.broadcast %cst_52 : f32 to vector<4x16xf32>
    %382 = arith.subf %381, %378 : vector<4x16xf32>
    %383 = arith.select %380, %382, %378 : vector<4x16xi1>, vector<4x16xf32>
    %cst_53 = arith.constant 1.000000e+00 : f32
    %384 = vector.broadcast %cst_53 : f32 to vector<4x16xf32>
    %385 = arith.addf %384, %383 : vector<4x16xf32>
    %386 = arith.mulf %348, %385 : vector<4x16xf32>
    %c0_54 = arith.constant 0 : index
    %c0_55 = arith.constant 0 : index
    %c0_56 = arith.constant 0 : index
    %387 = vector.load %arg10[%c0_54, %c0_55, %c0_56] : memref<1x16x4xf32, #tpu.memory_space<vmem>>, vector<1x16x4xf32>
    %388 = vector.shape_cast %387 : vector<1x16x4xf32> to vector<16x4xf32>
    %cst_57 = arith.constant dense<0.000000e+00> : vector<4x4xf32>
    %389 = tpu.matmul %386, %388, %cst_57 {dimension_numbers = #tpu.dot_dimension_numbers<[1], [0], [0], [1], [0, 0, 1, 1], [], []>} : vector<4x16xf32>, vector<16x4xf32>, vector<4x4xf32> -> vector<4x4xf32>
    %390 = vector.extract_strided_slice %8 {offsets = [3, 0], sizes = [1, 4], strides = [1, 1]} : vector<5x4xf32> to vector<1x4xf32>
    %391 = vector.broadcast %390 : vector<1x4xf32> to vector<4x4xf32>
    %392 = arith.addf %389, %391 : vector<4x4xf32>
    %393 = vector.shape_cast %3 : vector<2x2x4xf32> to vector<4x4xf32>
    %394 = vector.extract_strided_slice %8 {offsets = [4, 0], sizes = [1, 4], strides = [1, 1]} : vector<5x4xf32> to vector<1x4xf32>
    %395 = vector.broadcast %394 : vector<1x4xf32> to vector<4x4xf32>
    %396 = arith.mulf %395, %392 : vector<4x4xf32>
    %397 = arith.addf %393, %396 : vector<4x4xf32>
    %398 = vector.shape_cast %397 : vector<4x4xf32> to vector<2x2x4xf32>
    %c0_58 = arith.constant 0 : index
    %c0_59 = arith.constant 0 : index
    %c0_60 = arith.constant 0 : index
    %399 = vector.load %arg14[%c0_58, %c0_59, %c0_60] : memref<2x2x4xf32, #tpu.memory_space<vmem>>, vector<2x2x4xf32>
    tpu.vector_store %arg14[%c0_58, %c0_59, %c0_60], %398 {strides = array<i32>} : memref<2x2x4xf32, #tpu.memory_space<vmem>>, vector<2x2x4xf32>,
    %c0_i32_61 = arith.constant 0 : i32
    %400 = arith.cmpi eq, %arg1, %c0_i32_61 : i32
    %401 = arith.extui %400 : i1 to i32
    %c0_i32_62 = arith.constant 0 : i32
    %402 = arith.cmpi ne, %401, %c0_i32_62 : i32
    scf.if %402 {
      %cst_63 = arith.constant dense<0.000000e+00> : vector<4xf32>
      %403 = vector.multi_reduction <add>, %397, %cst_63 [0] : vector<4x4xf32> to vector<4xf32>
      %404 = vector.shape_cast %403 : vector<4xf32> to vector<1x4xf32>
      %cst_64 = arith.constant 2.500000e-01 : f32
      %405 = vector.broadcast %cst_64 : f32 to vector<1x4xf32>
      %406 = arith.mulf %404, %405 : vector<1x4xf32>
      %c0_65 = arith.constant 0 : index
      %c0_66 = arith.constant 0 : index
      %407 = vector.load %arg11[%c0_65, %c0_66] : memref<4x10xf32, #tpu.memory_space<vmem>>, vector<4x10xf32>
      %cst_67 = arith.constant dense<0.000000e+00> : vector<1x10xf32>
      %408 = tpu.matmul %406, %407, %cst_67 {dimension_numbers = #tpu.dot_dimension_numbers<[1], [0], [0], [1], [0, 0, 1, 1], [], []>} : vector<1x4xf32>, vector<4x10xf32>, vector<1x10xf32> -> vector<1x10xf32>
      %c0_68 = arith.constant 0 : index
      %c0_69 = arith.constant 0 : index
      %409 = vector.load %arg12[%c0_68, %c0_69] : memref<1x10xf32, #tpu.memory_space<vmem>>, vector<1x10xf32>
      %410 = arith.addf %408, %409 : vector<1x10xf32>
      %411 = vector.shape_cast %410 : vector<1x10xf32> to vector<1x1x10xf32>
      %c0_70 = arith.constant 0 : index
      %c0_71 = arith.constant 0 : index
      %c0_72 = arith.constant 0 : index
      %412 = vector.load %arg13[%c0_70, %c0_71, %c0_72] : memref<1x1x10xf32, #tpu.memory_space<vmem>>, vector<1x1x10xf32>
      tpu.vector_store %arg13[%c0_70, %c0_71, %c0_72], %411 {strides = array<i32>} : memref<1x1x10xf32, #tpu.memory_space<vmem>>, vector<1x1x10xf32>,
    } else {
    }
    return
  }
  func.func @transform_0(%arg0: i32, %arg1: i32) -> (i32, i32, i32, i32, i32) {
    %c0_i32 = arith.constant 0 : i32
    %c0_i32_0 = arith.constant 0 : i32
    %c0_i32_1 = arith.constant 0 : i32
    %c0_i32_2 = arith.constant 0 : i32
    %c0_i32_3 = arith.constant 0 : i32
    return %arg0, %c0_i32, %c0_i32_0, %c0_i32_1, %c0_i32_2 : i32, i32, i32, i32, i32
  }
  func.func @transform_1(%arg0: i32, %arg1: i32) -> (i32, i32, i32) {
    %c0_i32 = arith.constant 0 : i32
    %c0_i32_0 = arith.constant 0 : i32
    %c0_i32_1 = arith.constant 0 : i32
    %c0_i32_2 = arith.constant 0 : i32
    return %c0_i32, %c0_i32_0, %c0_i32_1 : i32, i32, i32
  }
  func.func @transform_2(%arg0: i32, %arg1: i32) -> (i32, i32) {
    %c0_i32 = arith.constant 0 : i32
    %c0_i32_0 = arith.constant 0 : i32
    %c0_i32_1 = arith.constant 0 : i32
    return %c0_i32, %c0_i32_0 : i32, i32
  }
  func.func @transform_3(%arg0: i32, %arg1: i32) -> (i32, i32) {
    %c0_i32 = arith.constant 0 : i32
    %c0_i32_0 = arith.constant 0 : i32
    %c0_i32_1 = arith.constant 0 : i32
    return %c0_i32, %c0_i32_0 : i32, i32
  }
  func.func @transform_4(%arg0: i32, %arg1: i32) -> (i32, i32, i32) {
    %c0_i32 = arith.constant 0 : i32
    %c0_i32_0 = arith.constant 0 : i32
    %c0_i32_1 = arith.constant 0 : i32
    return %arg1, %c0_i32, %c0_i32_0 : i32, i32, i32
  }
  func.func @transform_5(%arg0: i32, %arg1: i32) -> (i32, i32, i32) {
    %c0_i32 = arith.constant 0 : i32
    %c0_i32_0 = arith.constant 0 : i32
    %c0_i32_1 = arith.constant 0 : i32
    return %arg1, %c0_i32, %c0_i32_0 : i32, i32, i32
  }
  func.func @transform_6(%arg0: i32, %arg1: i32) -> (i32, i32, i32) {
    %c0_i32 = arith.constant 0 : i32
    %c0_i32_0 = arith.constant 0 : i32
    %c0_i32_1 = arith.constant 0 : i32
    return %arg1, %c0_i32, %c0_i32_0 : i32, i32, i32
  }
  func.func @transform_7(%arg0: i32, %arg1: i32) -> (i32, i32, i32) {
    %c0_i32 = arith.constant 0 : i32
    %c0_i32_0 = arith.constant 0 : i32
    %c0_i32_1 = arith.constant 0 : i32
    return %arg1, %c0_i32, %c0_i32_0 : i32, i32, i32
  }
  func.func @transform_8(%arg0: i32, %arg1: i32) -> (i32, i32, i32) {
    %c0_i32 = arith.constant 0 : i32
    %c0_i32_0 = arith.constant 0 : i32
    %c0_i32_1 = arith.constant 0 : i32
    return %arg1, %c0_i32, %c0_i32_0 : i32, i32, i32
  }
  func.func @transform_9(%arg0: i32, %arg1: i32) -> (i32, i32) {
    %c0_i32 = arith.constant 0 : i32
    %c0_i32_0 = arith.constant 0 : i32
    %c0_i32_1 = arith.constant 0 : i32
    return %c0_i32, %c0_i32_0 : i32, i32
  }
  func.func @transform_10(%arg0: i32, %arg1: i32) -> (i32, i32) {
    %c0_i32 = arith.constant 0 : i32
    %c0_i32_0 = arith.constant 0 : i32
    %c0_i32_1 = arith.constant 0 : i32
    return %c0_i32, %c0_i32_0 : i32, i32
  }
  func.func @transform_11(%arg0: i32, %arg1: i32) -> (i32, i32, i32) {
    %c0_i32 = arith.constant 0 : i32
    %c0_i32_0 = arith.constant 0 : i32
    %c0_i32_1 = arith.constant 0 : i32
    return %arg0, %c0_i32, %c0_i32_0 : i32, i32, i32
  }
}

</mosaic_0001>

<llo_original>
// kernel: convnext_forward.3
$region0: #{convnext_forward.3}
  #allocation0 [shape = 'u32[]', space=smem, size = 0x4, offset = 0x4, fixed_abs, tag = 'smem constant byte address 0x4 - core index']
  #allocation1 [shape = 'u32[144,128]{1,0:T(1,128)}', space=vmem, size = 0x12000, scoped, tag = 'internal scratch']
  #allocation2 [shape = 'f32[2,2,4]{2,1,0:T(2,128)}', space=vmem, size = 0x800, scoped, tag = 'scratch operand']
  #allocation3 [shape = 'f32[8,8,4]{2,1,0:T(8,128)}', space=vmem, size = 0x8000, scoped, tag = 'scratch operand']
  %s0 = inlined_call_operand.vmem [shape: f32[2,2,2,2,4], index: 0, kind: input, shape index: {}]
  %s1 = inlined_call_operand.vmem [shape: f32[4,2,4], index: 1, kind: input, shape index: {}]
  %s2 = inlined_call_operand.vmem [shape: f32[2,2], index: 2, kind: input, shape index: {}]
  %s3 = inlined_call_operand.vmem [shape: f32[1,4], index: 3, kind: input, shape index: {}]
  %s4 = inlined_call_operand.vmem [shape: f32[1,49,4], index: 4, kind: input, shape index: {}]
  %s5 = inlined_call_operand.vmem [shape: f32[1,5,4], index: 5, kind: input, shape index: {}]
  %s6 = inlined_call_operand.vmem [shape: f32[1,4,16], index: 6, kind: input, shape index: {}]
  %s7 = inlined_call_operand.vmem [shape: f32[1,1,16], index: 7, kind: input, shape index: {}]
  %s8 = inlined_call_operand.vmem [shape: f32[1,16,4], index: 8, kind: input, shape index: {}]
  %s9 = inlined_call_operand.vmem [shape: f32[4,10], index: 9, kind: input, shape index: {}]
  %s10 = inlined_call_operand.vmem [shape: f32[1,10], index: 10, kind: input, shape index: {}]
  %s11 = inlined_call_operand.hbm [shape: f32[2,1,10], index: 11, kind: output, shape index: {}]
  %s12 = sld [smem:[#allocation0]]
  $region85: #{convnext_forward.3} parent=0
    _
  %s14 = ssub.s32 1, %s12
  %s15 = scalar_select 0, %s14, %s12
  $region1: #{convnext_forward.3} parent=0
    #allocation4 [shape = 'u8[1024]{0}', space=vmem, size = 0x400, scoped, tag = 'output window, operand 0']
    #allocation5 [shape = 's32[2]{0}', space=sflag, size = 0x8, scoped, tag = 'scoped memory for convnext_forward.3']
    %16 = vsyncpa [#allocation5], 0
    %s17 = scalar_lea.sflag [#allocation5], 1
    %18 = vsyncpa %s17, 0
    loop: start=0, step=1, limit=4
    $region2: #{convnext_forward.3} parent=1 // loop_pre_header
      _
    $region3: #{convnext_forward.3} parent=1 // loop_header
      %s20 = sphi 0, %s24
      %p21 = scmp.ge.s32.totalorder %s20, 4
      %s27 = sphi 0, %s39
      %s28 = sphi 0, %s35
      %s29 = sphi 0, %s27
      %s30 = sphi 0, %s28
      %s31 = sphi 0, %s29
      %s32 = sphi 0, %s30
      %s42 = sphi 0, %s44
      %s45 = sphi 0, %s42
      %s46 = sphi 0, %s45
      %s62 = sphi 0, %s46
      %s66 = sphi 0, %s66
      %s68 = sphi 0, %s66
      %s69 = sphi 0, %s68
      %s83 = sphi 0, %s69
      %s87 = sphi 0, %s87
      %s89 = sphi 0, %s87
      %s90 = sphi 0, %s89
      %s104 = sphi 0, %s90
      %s108 = sphi 0, %s108
      %s110 = sphi 0, %s108
      %s111 = sphi 0, %s110
      %s125 = sphi 0, %s111
      %s131 = sphi 0, %s133
      %s134 = sphi 0, %s131
      %s135 = sphi 0, %s134
      %s151 = sphi 0, %s135
      %s157 = sphi 0, %s159
      %s160 = sphi 0, %s157
      %s161 = sphi 0, %s160
      %s177 = sphi 0, %s161
      %s183 = sphi 0, %s185
      %s186 = sphi 0, %s183
      %s187 = sphi 0, %s186
      %s203 = sphi 0, %s187
      %s209 = sphi 0, %s211
      %s212 = sphi 0, %s209
      %s213 = sphi 0, %s212
      %s229 = sphi 0, %s213
      %s235 = sphi 0, %s237
      %s238 = sphi 0, %s235
      %s239 = sphi 0, %s238
      %s255 = sphi 0, %s239
      %s259 = sphi 0, %s259
      %s261 = sphi 0, %s259
      %s262 = sphi 0, %s261
      %s276 = sphi 0, %s262
      %s280 = sphi 0, %s280
      %s282 = sphi 0, %s280
      %s283 = sphi 0, %s282
      %s297 = sphi 0, %s283
      %s303 = sphi 0, %s305
      %s306 = sphi 0, %s303
      %s307 = sphi 0, %s306
      %s323 = sphi 0, %s307
    $region4: #{convnext_forward.3} parent=1 // loop_header_branch
      %23 = sbr.rel (%p21) target = $region8
    $region5: #{convnext_forward.3} parent=1 // loop_body
      %s25 = ssub.s32 %s20, 1
      %s26 = ssub.s32 %s20, 2
      %s33 = sadd.s32 1, %s28
      %p34 = scmp.ge.s32.totalorder %s33, 1
      %s35 = scalar_select %p34, 0, %s33
      %s36 = sadd.s32 1, %s27
      %s37 = scalar_select %p34, %s36, %s27
      %p38 = scmp.ge.s32.totalorder %s37, 2
      %s39 = scalar_select %p38, 0, %s37
      %s40 = ssub.s32 %s27, %s39
      %p41 = scmp.eq.s32.totalorder %s40, 0
      %s43 = sadd.s32 %s42, 1
      %s44 = scalar_select %p41, %s42, %s43
      %p47 = pneg %p41
      %p48 = scmp.eq.s32.totalorder %s20, 1
      %p49 = por %p47, %p48
      %p50 = scmp.ne.s32.totalorder %s42, %s45
      %p51 = scmp.eq.s32.totalorder %s20, 0
      %p52 = por %p50, %p51
      %p53 = scmp.ne.s32.totalorder %s42, %s45
      %p54 = scmp.eq.s32.totalorder %s25, 1
      %p55 = por %p53, %p54
      %p56 = scmp.ne.s32.totalorder %s45, %s46
      %p57 = scmp.eq.s32.totalorder %s25, 0
      %p58 = por %p56, %p57
      %p59 = scmp.ne.s32.totalorder %s45, %s46
      %p60 = scmp.eq.s32.totalorder %s26, 1
      %p61 = por %p59, %p60
      %p63 = scmp.ne.s32.totalorder %s46, %s62
      %p64 = scmp.eq.s32.totalorder %s26, 0
      %p65 = por %p63, %p64
      %s67 = sadd.s32 %s66, 1
      %p70 = scmp.eq.s32.totalorder %s20, 1
      %p71 = scmp.ne.s32.totalorder %s66, %s68
      %p72 = scmp.eq.s32.totalorder %s20, 0
      %p73 = por %p71, %p72
      %p74 = scmp.ne.s32.totalorder %s66, %s68
      %p75 = scmp.eq.s32.totalorder %s25, 1
      %p76 = por %p74, %p75
      %p77 = scmp.ne.s32.totalorder %s68, %s69
      %p78 = scmp.eq.s32.totalorder %s25, 0
      %p79 = por %p77, %p78
      %p80 = scmp.ne.s32.totalorder %s68, %s69
      %p81 = scmp.eq.s32.totalorder %s26, 1
      %p82 = por %p80, %p81
      %p84 = scmp.ne.s32.totalorder %s69, %s83
      %p85 = scmp.eq.s32.totalorder %s26, 0
      %p86 = por %p84, %p85
      %s88 = sadd.s32 %s87, 1
      %p91 = scmp.eq.s32.totalorder %s20, 1
      %p92 = scmp.ne.s32.totalorder %s87, %s89
      %p93 = scmp.eq.s32.totalorder %s20, 0
      %p94 = por %p92, %p93
      %p95 = scmp.ne.s32.totalorder %s87, %s89
      %p96 = scmp.eq.s32.totalorder %s25, 1
      %p97 = por %p95, %p96
      %p98 = scmp.ne.s32.totalorder %s89, %s90
      %p99 = scmp.eq.s32.totalorder %s25, 0
      %p100 = por %p98, %p99
      %p101 = scmp.ne.s32.totalorder %s89, %s90
      %p102 = scmp.eq.s32.totalorder %s26, 1
      %p103 = por %p101, %p102
      %p105 = scmp.ne.s32.totalorder %s90, %s104
      %p106 = scmp.eq.s32.totalorder %s26, 0
      %p107 = por %p105, %p106
      %s109 = sadd.s32 %s108, 1
      %p112 = scmp.eq.s32.totalorder %s20, 1
      %p113 = scmp.ne.s32.totalorder %s108, %s110
      %p114 = scmp.eq.s32.totalorder %s20, 0
      %p115 = por %p113, %p114
      %p116 = scmp.ne.s32.totalorder %s108, %s110
      %p117 = scmp.eq.s32.totalorder %s25, 1
      %p118 = por %p116, %p117
      %p119 = scmp.ne.s32.totalorder %s110, %s111
      %p120 = scmp.eq.s32.totalorder %s25, 0
      %p121 = por %p119, %p120
      %p122 = scmp.ne.s32.totalorder %s110, %s111
      %p123 = scmp.eq.s32.totalorder %s26, 1
      %p124 = por %p122, %p123
      %p126 = scmp.ne.s32.totalorder %s111, %s125
      %p127 = scmp.eq.s32.totalorder %s26, 0
      %p128 = por %p126, %p127
      %s129 = ssub.s32 %s28, %s35
      %p130 = scmp.eq.s32.totalorder %s129, 0
      %s132 = sadd.s32 %s131, 1
      %s133 = scalar_select %p130, %s131, %s132
      %p136 = pneg %p130
      %p137 = scmp.eq.s32.totalorder %s20, 1
      %p138 = por %p136, %p137
      %p139 = scmp.ne.s32.totalorder %s131, %s134
      %p140 = scmp.eq.s32.totalorder %s20, 0
      %p141 = por %p139, %p140
      %p142 = scmp.ne.s32.totalorder %s131, %s134
      %p143 = scmp.eq.s32.totalorder %s25, 1
      %p144 = por %p142, %p143
      %p145 = scmp.ne.s32.totalorder %s134, %s135
      %p146 = scmp.eq.s32.totalorder %s25, 0
      %p147 = por %p145, %p146
      %p148 = scmp.ne.s32.totalorder %s134, %s135
      %p149 = scmp.eq.s32.totalorder %s26, 1
      %p150 = por %p148, %p149
      %p152 = scmp.ne.s32.totalorder %s135, %s151
      %p153 = scmp.eq.s32.totalorder %s26, 0
      %p154 = por %p152, %p153
      %s155 = ssub.s32 %s28, %s35
      %p156 = scmp.eq.s32.totalorder %s155, 0
      %s158 = sadd.s32 %s157, 1
      %s159 = scalar_select %p156, %s157, %s158
      %p162 = pneg %p156
      %p163 = scmp.eq.s32.totalorder %s20, 1
      %p164 = por %p162, %p163
      %p165 = scmp.ne.s32.totalorder %s157, %s160
      %p166 = scmp.eq.s32.totalorder %s20, 0
      %p167 = por %p165, %p166
      %p168 = scmp.ne.s32.totalorder %s157, %s160
      %p169 = scmp.eq.s32.totalorder %s25, 1
      %p170 = por %p168, %p169
      %p171 = scmp.ne.s32.totalorder %s160, %s161
      %p172 = scmp.eq.s32.totalorder %s25, 0
      %p173 = por %p171, %p172
      %p174 = scmp.ne.s32.totalorder %s160, %s161
      %p175 = scmp.eq.s32.totalorder %s26, 1
      %p176 = por %p174, %p175
      %p178 = scmp.ne.s32.totalorder %s161, %s177
      %p179 = scmp.eq.s32.totalorder %s26, 0
      %p180 = por %p178, %p179
      %s181 = ssub.s32 %s28, %s35
      %p182 = scmp.eq.s32.totalorder %s181, 0
      %s184 = sadd.s32 %s183, 1
      %s185 = scalar_select %p182, %s183, %s184
      %p188 = pneg %p182
      %p189 = scmp.eq.s32.totalorder %s20, 1
      %p190 = por %p188, %p189
      %p191 = scmp.ne.s32.totalorder %s183, %s186
      %p192 = scmp.eq.s32.totalorder %s20, 0
      %p193 = por %p191, %p192
      %p194 = scmp.ne.s32.totalorder %s183, %s186
      %p195 = scmp.eq.s32.totalorder %s25, 1
      %p196 = por %p194, %p195
      %p197 = scmp.ne.s32.totalorder %s186, %s187
      %p198 = scmp.eq.s32.totalorder %s25, 0
      %p199 = por %p197, %p198
      %p200 = scmp.ne.s32.totalorder %s186, %s187
      %p201 = scmp.eq.s32.totalorder %s26, 1
      %p202 = por %p200, %p201
      %p204 = scmp.ne.s32.totalorder %s187, %s203
      %p205 = scmp.eq.s32.totalorder %s26, 0
      %p206 = por %p204, %p205
      %s207 = ssub.s32 %s28, %s35
      %p208 = scmp.eq.s32.totalorder %s207, 0
      %s210 = sadd.s32 %s209, 1
      %s211 = scalar_select %p208, %s209, %s210
      %p214 = pneg %p208
      %p215 = scmp.eq.s32.totalorder %s20, 1
      %p216 = por %p214, %p215
      %p217 = scmp.ne.s32.totalorder %s209, %s212
      %p218 = scmp.eq.s32.totalorder %s20, 0
      %p219 = por %p217, %p218
      %p220 = scmp.ne.s32.totalorder %s209, %s212
      %p221 = scmp.eq.s32.totalorder %s25, 1
      %p222 = por %p220, %p221
      %p223 = scmp.ne.s32.totalorder %s212, %s213
      %p224 = scmp.eq.s32.totalorder %s25, 0
      %p225 = por %p223, %p224
      %p226 = scmp.ne.s32.totalorder %s212, %s213
      %p227 = scmp.eq.s32.totalorder %s26, 1
      %p228 = por %p226, %p227
      %p230 = scmp.ne.s32.totalorder %s213, %s229
      %p231 = scmp.eq.s32.totalorder %s26, 0
      %p232 = por %p230, %p231
      %s233 = ssub.s32 %s28, %s35
      %p234 = scmp.eq.s32.totalorder %s233, 0
      %s236 = sadd.s32 %s235, 1
      %s237 = scalar_select %p234, %s235, %s236
      %p240 = pneg %p234
      %p241 = scmp.eq.s32.totalorder %s20, 1
      %p242 = por %p240, %p241
      %p243 = scmp.ne.s32.totalorder %s235, %s238
      %p244 = scmp.eq.s32.totalorder %s20, 0
      %p245 = por %p243, %p244
      %p246 = scmp.ne.s32.totalorder %s235, %s238
      %p247 = scmp.eq.s32.totalorder %s25, 1
      %p248 = por %p246, %p247
      %p249 = scmp.ne.s32.totalorder %s238, %s239
      %p250 = scmp.eq.s32.totalorder %s25, 0
      %p251 = por %p249, %p250
      %p252 = scmp.ne.s32.totalorder %s238, %s239
      %p253 = scmp.eq.s32.totalorder %s26, 1
      %p254 = por %p252, %p253
      %p256 = scmp.ne.s32.totalorder %s239, %s255
      %p257 = scmp.eq.s32.totalorder %s26, 0
      %p258 = por %p256, %p257
      %s260 = sadd.s32 %s259, 1
      %p263 = scmp.eq.s32.totalorder %s20, 1
      %p264 = scmp.ne.s32.totalorder %s259, %s261
      %p265 = scmp.eq.s32.totalorder %s20, 0
      %p266 = por %p264, %p265
      %p267 = scmp.ne.s32.totalorder %s259, %s261
      %p268 = scmp.eq.s32.totalorder %s25, 1
      %p269 = por %p267, %p268
      %p270 = scmp.ne.s32.totalorder %s261, %s262
      %p271 = scmp.eq.s32.totalorder %s25, 0
      %p272 = por %p270, %p271
      %p273 = scmp.ne.s32.totalorder %s261, %s262
      %p274 = scmp.eq.s32.totalorder %s26, 1
      %p275 = por %p273, %p274
      %p277 = scmp.ne.s32.totalorder %s262, %s276
      %p278 = scmp.eq.s32.totalorder %s26, 0
      %p279 = por %p277, %p278
      %s281 = sadd.s32 %s280, 1
      %p284 = scmp.eq.s32.totalorder %s20, 1
      %p285 = scmp.ne.s32.totalorder %s280, %s282
      %p286 = scmp.eq.s32.totalorder %s20, 0
      %p287 = por %p285, %p286
      %p288 = scmp.ne.s32.totalorder %s280, %s282
      %p289 = scmp.eq.s32.totalorder %s25, 1
      %p290 = por %p288, %p289
      %p291 = scmp.ne.s32.totalorder %s282, %s283
      %p292 = scmp.eq.s32.totalorder %s25, 0
      %p293 = por %p291, %p292
      %p294 = scmp.ne.s32.totalorder %s282, %s283
      %p295 = scmp.eq.s32.totalorder %s26, 1
      %p296 = por %p294, %p295
      %p298 = scmp.ne.s32.totalorder %s283, %s297
      %p299 = scmp.eq.s32.totalorder %s26, 0
      %p300 = por %p298, %p299
      %s301 = ssub.s32 %s27, %s39
      %p302 = scmp.eq.s32.totalorder %s301, 0
      %s304 = sadd.s32 %s303, 1
      %s305 = scalar_select %p302, %s303, %s304
      %p308 = pneg %p302
      %p309 = scmp.eq.s32.totalorder %s20, 1
      %p310 = por %p308, %p309
      %p311 = scmp.ne.s32.totalorder %s303, %s306
      %p312 = scmp.eq.s32.totalorder %s20, 0
      %p313 = por %p311, %p312
      %p314 = scmp.ne.s32.totalorder %s303, %s306
      %p315 = scmp.eq.s32.totalorder %s25, 1
      %p316 = por %p314, %p315
      %p317 = scmp.ne.s32.totalorder %s306, %s307
      %p318 = scmp.eq.s32.totalorder %s25, 0
      %p319 = por %p317, %p318
      %p320 = scmp.ne.s32.totalorder %s306, %s307
      %p321 = scmp.eq.s32.totalorder %s26, 1
      %p322 = por %p320, %p321
      %p324 = scmp.ne.s32.totalorder %s307, %s323
      %p325 = scmp.eq.s32.totalorder %s26, 0
      %p326 = por %p324, %p325
      %p327 = scmp.le.s32.totalorder 1, %s20
      %p328 = scmp.lt.s32.totalorder %s20, 3
      %p329 = pnand %p327, %p328
      %p330 = pneg %p329
      // Predicated region
      $region9: #{convnext_forward.3} parent=5 // pred_check
        _
      $region10: #{convnext_forward.3} parent=5 // pred_check_branch
        %332 = sbr.rel (%p329) target = $region12
      $region11: #{convnext_forward.3} parent=5 // pred_region
        %s333 = ssub.s32 %s20, 1
        // Predicated region
        $region13: #{convnext_forward.3} parent=11 // pred_check
          %p334 = pneg %p79
        $region14: #{convnext_forward.3} parent=11 // pred_check_branch
          %336 = sbr.rel (%p334) target = $region16
        $region15: #{convnext_forward.3} parent=11 // pred_region
          _
        $region16: #{convnext_forward.3} parent=11 // pred_fallthru
          _
        // Predicated region
        $region17: #{convnext_forward.3} parent=11 // pred_check
          %p337 = pneg %p100
        $region18: #{convnext_forward.3} parent=11 // pred_check_branch
          %339 = sbr.rel (%p337) target = $region20
        $region19: #{convnext_forward.3} parent=11 // pred_region
          _
        $region20: #{convnext_forward.3} parent=11 // pred_fallthru
          _
        // Predicated region
        $region21: #{convnext_forward.3} parent=11 // pred_check
          %p340 = pneg %p121
        $region22: #{convnext_forward.3} parent=11 // pred_check_branch
          %342 = sbr.rel (%p340) target = $region24
        $region23: #{convnext_forward.3} parent=11 // pred_region
          _
        $region24: #{convnext_forward.3} parent=11 // pred_fallthru
          _
        // Predicated region
        $region25: #{convnext_forward.3} parent=11 // pred_check
          %p343 = pneg %p147
        $region26: #{convnext_forward.3} parent=11 // pred_check_branch
          %345 = sbr.rel (%p343) target = $region28
        $region27: #{convnext_forward.3} parent=11 // pred_region
          %p346 = scmp.lt.s32.totalorder %s30, 0
          %s347 = scalar_select %p346, %s30, 0
          %s348 = smul.addr %s347, 7
          %s349 = smul.addr %s348, 8
          %s350 = scalar_lea.vmem %s4, %s349
        $region28: #{convnext_forward.3} parent=11 // pred_fallthru
          _
        // Predicated region
        $region29: #{convnext_forward.3} parent=11 // pred_check
          %p351 = pneg %p173
        $region30: #{convnext_forward.3} parent=11 // pred_check_branch
          %353 = sbr.rel (%p351) target = $region32
        $region31: #{convnext_forward.3} parent=11 // pred_region
          %p354 = scmp.lt.s32.totalorder %s30, 0
          %s355 = scalar_select %p354, %s30, 0
          %s356 = smul.addr %s355, 8
          %s357 = scalar_lea.vmem %s5, %s356
        $region32: #{convnext_forward.3} parent=11 // pred_fallthru
          _
        // Predicated region
        $region33: #{convnext_forward.3} parent=11 // pred_check
          %p358 = pneg %p199
        $region34: #{convnext_forward.3} parent=11 // pred_check_branch
          %360 = sbr.rel (%p358) target = $region36
        $region35: #{convnext_forward.3} parent=11 // pred_region
          %p361 = scmp.lt.s32.totalorder %s30, 0
          %s362 = scalar_select %p361, %s30, 0
          %s363 = smul.addr %s362, 4
          %s364 = scalar_lea.vmem %s6, %s363
        $region36: #{convnext_forward.3} parent=11 // pred_fallthru
          _
        // Predicated region
        $region37: #{convnext_forward.3} parent=11 // pred_check
          %p365 = pneg %p225
        $region38: #{convnext_forward.3} parent=11 // pred_check_branch
          %367 = sbr.rel (%p365) target = $region40
        $region39: #{convnext_forward.3} parent=11 // pred_region
          %p368 = scmp.lt.s32.totalorder %s30, 0
          %s369 = scalar_select %p368, %s30, 0
          %s370 = scalar_lea.vmem %s7, %s369
        $region40: #{convnext_forward.3} parent=11 // pred_fallthru
          _
        // Predicated region
        $region41: #{convnext_forward.3} parent=11 // pred_check
          %p371 = pneg %p251
        $region42: #{convnext_forward.3} parent=11 // pred_check_branch
          %373 = sbr.rel (%p371) target = $region44
        $region43: #{convnext_forward.3} parent=11 // pred_region
          %p374 = scmp.lt.s32.totalorder %s30, 0
          %s375 = scalar_select %p374, %s30, 0
          %s376 = smul.addr %s375, 2
          %s377 = smul.addr %s376, 8
          %s378 = scalar_lea.vmem %s8, %s377
        $region44: #{convnext_forward.3} parent=11 // pred_fallthru
          _
        // Predicated region
        $region45: #{convnext_forward.3} parent=11 // pred_check
          %p379 = pneg %p272
        $region46: #{convnext_forward.3} parent=11 // pred_check_branch
          %381 = sbr.rel (%p379) target = $region48
        $region47: #{convnext_forward.3} parent=11 // pred_region
          _
        $region48: #{convnext_forward.3} parent=11 // pred_fallthru
          _
        // Predicated region
        $region49: #{convnext_forward.3} parent=11 // pred_check
          %p382 = pneg %p293
        $region50: #{convnext_forward.3} parent=11 // pred_check_branch
          %384 = sbr.rel (%p382) target = $region52
        $region51: #{convnext_forward.3} parent=11 // pred_region
          _
        $region52: #{convnext_forward.3} parent=11 // pred_fallthru
          _
      $region12: #{convnext_forward.3} parent=5 // pred_fallthru
        _
      %p385 = scmp.lt.s32.totalorder %s20, 2
      // Predicated region
      $region53: #{convnext_forward.3} parent=5 // pred_check
        %p386 = pneg %p385
      $region54: #{convnext_forward.3} parent=5 // pred_check_branch
        %388 = sbr.rel (%p386) target = $region56
      $region55: #{convnext_forward.3} parent=5 // pred_region
        // Predicated region
        $region57: #{convnext_forward.3} parent=55 // pred_check
          %p389 = pneg %p52
        $region58: #{convnext_forward.3} parent=55 // pred_check_branch
          %391 = sbr.rel (%p389) target = $region60
        $region59: #{convnext_forward.3} parent=55 // pred_region
          %p392 = scmp.lt.s32.totalorder %s27, 1
          %s393 = scalar_select %p392, %s27, 1
          %s394 = smul.addr %s393, 4
          %s395 = smul.addr %s394, 2
          %s396 = scalar_lea.vmem %s0, %s395
        $region60: #{convnext_forward.3} parent=55 // pred_fallthru
          _
      $region56: #{convnext_forward.3} parent=5 // pred_fallthru
        _
      %p397 = scmp.le.s32.totalorder 1, %s20
      %p398 = scmp.lt.s32.totalorder %s20, 3
      %p399 = pnand %p397, %p398
      %p400 = pneg %p399
      // Predicated region
      $region61: #{convnext_forward.3} parent=5 // pred_check
        _
      $region62: #{convnext_forward.3} parent=5 // pred_check_branch
        %402 = sbr.rel (%p399) target = $region64
      $region63: #{convnext_forward.3} parent=5 // pred_region
        %s403 = ssub.s32 %s20, 1
        %p404 = scmp.lt.s32.totalorder %s29, 1
        %s405 = scalar_select %p404, %s29, 1
        %s406 = smul.addr %s405, 4
        %s407 = smul.addr %s406, 2
        %s408 = scalar_lea.vmem %s0, %s407
        %p409 = pneg %p58
        %p410 = pneg %p55
        %p411 = pneg %p79
        %p412 = pneg %p76
        %p413 = pneg %p100
        %p414 = pneg %p97
        %p415 = pneg %p121
        %p416 = pneg %p118
        %p417 = scmp.lt.s32.totalorder %s30, 0
        %s418 = scalar_select %p417, %s30, 0
        %s419 = smul.addr %s418, 7
        %s420 = smul.addr %s419, 8
        %s421 = scalar_lea.vmem %s4, %s420
        %p422 = pneg %p147
        %p423 = pneg %p144
        %p424 = scmp.lt.s32.totalorder %s30, 0
        %s425 = scalar_select %p424, %s30, 0
        %s426 = smul.addr %s425, 8
        %s427 = scalar_lea.vmem %s5, %s426
        %p428 = pneg %p173
        %p429 = pneg %p170
        %p430 = scmp.lt.s32.totalorder %s30, 0
        %s431 = scalar_select %p430, %s30, 0
        %s432 = smul.addr %s431, 4
        %s433 = scalar_lea.vmem %s6, %s432
        %p434 = pneg %p199
        %p435 = pneg %p196
        %p436 = scmp.lt.s32.totalorder %s30, 0
        %s437 = scalar_select %p436, %s30, 0
        %s438 = scalar_lea.vmem %s7, %s437
        %p439 = pneg %p225
        %p440 = pneg %p222
        %p441 = scmp.lt.s32.totalorder %s30, 0
        %s442 = scalar_select %p441, %s30, 0
        %s443 = smul.addr %s442, 2
        %s444 = smul.addr %s443, 8
        %s445 = scalar_lea.vmem %s8, %s444
        %p446 = pneg %p251
        %p447 = pneg %p248
        %p448 = pneg %p272
        %p449 = pneg %p269
        %p450 = pneg %p293
        %p451 = pneg %p290
        %p452 = pneg %p319
        %p453 = pneg %p316
        %s454 = sand.u32 %s306, 1
        %s455 = scalar_lea.sflag [#allocation5], %s454
        %s456 = sand.u32 %s306, 1
        %s457 = scalar_lea.vmem [#allocation4], %s456
        %p458 = scmp.lt.s32.totalorder %s29, 1
        %s459 = scalar_select %p458, %s29, 1
        %s460 = smul.addr %s459, 4
        %s461 = smul.addr %s460, 2
        %s462 = scalar_lea.vmem %s0, %s461
        %p463 = scmp.lt.s32.totalorder %s30, 0
        %s464 = scalar_select %p463, %s30, 0
        %s465 = smul.addr %s464, 7
        %s466 = smul.addr %s465, 8
        %s467 = scalar_lea.vmem %s4, %s466
        %p468 = scmp.lt.s32.totalorder %s30, 0
        %s469 = scalar_select %p468, %s30, 0
        %s470 = smul.addr %s469, 8
        %s471 = scalar_lea.vmem %s5, %s470
        %p472 = scmp.lt.s32.totalorder %s30, 0
        %s473 = scalar_select %p472, %s30, 0
        %s474 = smul.addr %s473, 4
        %s475 = scalar_lea.vmem %s6, %s474
        %p476 = scmp.lt.s32.totalorder %s30, 0
        %s477 = scalar_select %p476, %s30, 0
        %s478 = scalar_lea.vmem %s7, %s477
        %p479 = scmp.lt.s32.totalorder %s30, 0
        %s480 = scalar_select %p479, %s30, 0
        %s481 = smul.addr %s480, 2
        %s482 = smul.addr %s481, 8
        %s483 = scalar_lea.vmem %s8, %s482
        %p484 = scmp.eq.s32.totalorder %s30, 0
        // Predicated region
        $region65: #{convnext_forward.3} parent=63 // pred_check
          %p485 = pneg %p484
        $region66: #{convnext_forward.3} parent=63 // pred_check_branch
          %487 = sbr.rel (%p485) target = $region68
        $region67: #{convnext_forward.3} parent=63 // pred_region
          %vm488 = vcmask 31744
          %489 = vst.msk [vmem:[#allocation3] sm:$0xff] %vm488, 0.0
          %490 = vst.msk [vmem:[#allocation3 + $0x8] sm:$0xff] %vm488, 0.0
          %491 = vst.msk [vmem:[#allocation3 + $0x10] sm:$0xff] %vm488, 0.0
          %s492 = scalar_lea.vmem [#allocation3], 40
          %493 = vst.msk [vmem:[%s492] sm:$0xff] %vm488, 0.0
          %494 = vst.msk [vmem:[%s492 + $0x8] sm:$0xff] %vm488, 0.0
          %495 = vst.msk [vmem:[%s492 + $0x10] sm:$0xff] %vm488, 0.0
          %vm496 = vcmask 26624
          %497 = vst.msk [vmem:[#allocation3] sm:$0x7] %vm496, 0.0
          %498 = vst.msk [vmem:[#allocation3 + $0x8] sm:$0x7] %vm496, 0.0
          %499 = vst.msk [vmem:[#allocation3 + $0x10] sm:$0x7] %vm496, 0.0
          %500 = vst.msk [vmem:[#allocation3 + $0x18] sm:$0x7] %vm496, 0.0
          %501 = vst.msk [vmem:[#allocation3 + $0x20] sm:$0x7] %vm496, 0.0
          %502 = vst.msk [vmem:[#allocation3 + $0x28] sm:$0x7] %vm496, 0.0
          %503 = vst.msk [vmem:[#allocation3 + $0x30] sm:$0x7] %vm496, 0.0
          %504 = vst.msk [vmem:[#allocation3 + $0x38] sm:$0x7] %vm496, 0.0
          %505 = vst.msk [vmem:[#allocation3 + $0x5] sm:$0x7] %vm496, 0.0
          %506 = vst.msk [vmem:[#allocation3 + $0xd] sm:$0x7] %vm496, 0.0
          %507 = vst.msk [vmem:[#allocation3 + $0x15] sm:$0x7] %vm496, 0.0
          %508 = vst.msk [vmem:[#allocation3 + $0x1d] sm:$0x7] %vm496, 0.0
          %509 = vst.msk [vmem:[#allocation3 + $0x25] sm:$0x7] %vm496, 0.0
          %510 = vst.msk [vmem:[#allocation3 + $0x2d] sm:$0x7] %vm496, 0.0
          %511 = vst.msk [vmem:[#allocation3 + $0x35] sm:$0x7] %vm496, 0.0
          %512 = vst.msk [vmem:[#allocation3 + $0x3d] sm:$0x7] %vm496, 0.0
          %v513 = vld [vmem:[%s462] sm:$0x3]
          %v514 = vld [vmem:[%s462 + $0x2] sm:$0x3]
          %v515 = vld [vmem:[%s462 + $0x4] sm:$0x3]
          %v516 = vld [vmem:[%s462 + $0x6] sm:$0x3]
          %v517 = vld [vmem:[%s2] sm:$0x3]
          %v520 = vcombine.low %v513, %v515
          %v522 = vunpack.c.l.s4 1983009808
          %v523 = vunpack.c.0.s8 %v522
          %v524 = vlaneseq
          %v525 = vshrl.u32 %v524, 7
          %v526 = vsub.s32 %v523, %v525
          %v527 = vrot.slane %v520, %v526
          %vm529 = vcmask 11264
          %v530 = vsel %vm529, %v527, 0.0
          %531 = vadd.xlane.f32.xlu0 %v530
          %v532 = vpop.xlane.xlu0 %531
          %v533 = vrcp.pop 2.0
          %v534 = vmul.f32 %v532, %v533
          %v537 = vunpack.c.l.s4 269488144
          %v538 = vunpack.c.0.s8 %v537
          %v539 = vlaneseq
          %v540 = vshrl.u32 %v539, 7
          %v541 = vsub.s32 %v538, %v540
          %v542 = vrot.slane %v534, %v541
          %v544 = vunpack.c.l.s4 842150450
          %v545 = vunpack.c.0.s8 %v544
          %v546 = vlaneseq
          %v547 = vshrl.u32 %v546, 7
          %v548 = vsub.s32 %v545, %v547
          %v549 = vrot.slane %v534, %v548
          %v552 = vsub.f32 %v513, %v542
          %v553 = vsub.f32 %v515, %v549
          %v554 = vmul.f32 %v552, %v552
          %v555 = vmul.f32 %v553, %v553
          %v558 = vcombine.low %v554, %v555
          %v560 = vunpack.c.l.s4 1983009808
          %v561 = vunpack.c.0.s8 %v560
          %v562 = vlaneseq
          %v563 = vshrl.u32 %v562, 7
          %v564 = vsub.s32 %v561, %v563
          %v565 = vrot.slane %v558, %v564
          %v567 = vsel %vm529, %v565, 0.0
          %568 = vadd.xlane.f32.xlu0 %v567
          %v569 = vpop.xlane.xlu0 %568
          %v570 = vmul.f32 %v569, %v533
          %v571 = vadd.f32 %v570, 1e-06
          %v572 = vrsqrt.pop %v571
          %v575 = vunpack.c.l.s4 269488144
          %v576 = vunpack.c.0.s8 %v575
          %v577 = vlaneseq
          %v578 = vshrl.u32 %v577, 7
          %v579 = vsub.s32 %v576, %v578
          %v580 = vrot.slane %v572, %v579
          %v582 = vunpack.c.l.s4 842150450
          %v583 = vunpack.c.0.s8 %v582
          %v584 = vlaneseq
          %v585 = vshrl.u32 %v584, 7
          %v586 = vsub.s32 %v583, %v585
          %v587 = vrot.slane %v572, %v586
          %v590 = vmul.f32 %v552, %v580
          %v591 = vmul.f32 %v553, %v587
          %v592 = vlaneseq
          %v593 = vshrl.u32 %v592, 7
          %v594 = vsub.s32 0, %v593
          %v595 = vrot.slane %v517, %v594
          %v598 = vcombine.low %v590, %v591
          %v600 = vunpack.c.l.s4 1983009808
          %v601 = vunpack.c.0.s8 %v600
          %v602 = vlaneseq
          %v603 = vshrl.u32 %v602, 7
          %v604 = vsub.s32 %v601, %v603
          %v605 = vrot.slane %v598, %v604
          %v607 = vmul.f32 %v595, %v605
          %v608 = vlaneseq
          %v609 = vshrl.u32 %v608, 7
          %v610 = vsub.s32 1, %v609
          %v611 = vrot.slane %v517, %v610
          %v612 = vadd.f32 %v607, %v611
          %v613 = vld [vmem:[%s1] sm:$0x3]
          %614 = vrot.lane.b32.xlu0 %v527, 126
          %v615 = vpop.permute.xlu0 %614
          %v617 = vsel %vm529, %v615, 0.0
          %618 = vadd.xlane.f32.xlu0 %v617
          %v619 = vpop.xlane.xlu0 %618
          %v620 = vmul.f32 %v619, %v533
          %v623 = vunpack.c.l.s4 269488144
          %v624 = vunpack.c.0.s8 %v623
          %v625 = vlaneseq
          %v626 = vshrl.u32 %v625, 7
          %v627 = vsub.s32 %v624, %v626
          %v628 = vrot.slane %v620, %v627
          %v630 = vunpack.c.l.s4 842150450
          %v631 = vunpack.c.0.s8 %v630
          %v632 = vlaneseq
          %v633 = vshrl.u32 %v632, 7
          %v634 = vsub.s32 %v631, %v633
          %v635 = vrot.slane %v620, %v634
          %v638 = vsub.f32 %v513, %v628
          %v639 = vsub.f32 %v515, %v635
          %v640 = vmul.f32 %v638, %v638
          %v641 = vmul.f32 %v639, %v639
          %v644 = vcombine.low %v640, %v641
          %v646 = vunpack.c.l.s4 1983009808
          %v647 = vunpack.c.0.s8 %v646
          %v648 = vlaneseq
          %v649 = vshrl.u32 %v648, 7
          %v650 = vsub.s32 %v647, %v649
          %v651 = vrot.slane %v644, %v650
          %652 = vrot.lane.b32.xlu0 %v651, 126
          %v653 = vpop.permute.xlu0 %652
          %v655 = vsel %vm529, %v653, 0.0
          %656 = vadd.xlane.f32.xlu0 %v655
          %v657 = vpop.xlane.xlu0 %656
          %v658 = vmul.f32 %v657, %v533
          %v659 = vadd.f32 %v658, 1e-06
          %v660 = vrsqrt.pop %v659
          %v663 = vunpack.c.l.s4 269488144
          %v664 = vunpack.c.0.s8 %v663
          %v665 = vlaneseq
          %v666 = vshrl.u32 %v665, 7
          %v667 = vsub.s32 %v664, %v666
          %v668 = vrot.slane %v660, %v667
          %v670 = vunpack.c.l.s4 842150450
          %v671 = vunpack.c.0.s8 %v670
          %v672 = vlaneseq
          %v673 = vshrl.u32 %v672, 7
          %v674 = vsub.s32 %v671, %v673
          %v675 = vrot.slane %v660, %v674
          %v678 = vmul.f32 %v638, %v668
          %v679 = vmul.f32 %v639, %v675
          %v682 = vcombine.low %v678, %v679
          %v684 = vunpack.c.l.s4 1983009808
          %v685 = vunpack.c.0.s8 %v684
          %v686 = vlaneseq
          %v687 = vshrl.u32 %v686, 7
          %v688 = vsub.s32 %v685, %v687
          %v689 = vrot.slane %v682, %v688
          %690 = vrot.lane.b32.xlu0 %v689, 126
          %v691 = vpop.permute.xlu0 %690
          %v693 = vmul.f32 %v595, %v691
          %v694 = vadd.f32 %v693, %v611
          %s695 = scalar_lea.vmem %s1, 2
          %v696 = vld [vmem:[%s695] sm:$0x3]
          %vm697 = vcmask 15360
          %v699 = vsel %vm697, %v694, 0
          %vm701 = vcmask 1041408
          %v703 = vsel %vm701, %v696, 0
          %705 = vmatprep.subr.mxu0 0.0
          %706 = vmatpush1.msra.mxu0 %v703
          %707 = vmatprep.subr.mxu0 0.0
          %708 = vmatpush1.msra.mxu0 0.0
          %709 = vmatprep.subr.mxu0 0.0
          %710 = vmatpush1.msra.mxu0 0.0
          %711 = vmatprep.subr.mxu0 0.0
          %712 = vmatpush1.msra.mxu0 0.0
          %713 = vmatprep.subr.mxu0 0.0
          %714 = vmatpush1.msra.mxu0 0.0
          %715 = vmatprep.subr.mxu0 0.0
          %716 = vmatpush1.msra.mxu0 0.0
          %717 = vmatprep.subr.mxu0 0.0
          %718 = vmatpush1.msra.mxu0 0.0
          %719 = vmatprep.subr.mxu0 0.0
          %720 = vmatpush1.msra.mxu0 0.0
          %721 = vmatprep.subr.mxu0 0.0
          %722 = vmatpush1.msra.mxu0 0.0
          %723 = vmatprep.subr.mxu0 0.0
          %724 = vmatpush1.msra.mxu0 0.0
          %725 = vmatprep.subr.mxu0 0.0
          %726 = vmatpush1.msra.mxu0 0.0
          %727 = vmatprep.subr.mxu0 0.0
          %728 = vmatpush1.msra.mxu0 0.0
          %729 = vmatprep.subr.mxu0 0.0
          %730 = vmatpush1.msra.mxu0 0.0
          %731 = vmatprep.subr.mxu0 0.0
          %732 = vmatpush1.msra.mxu0 0.0
          %733 = vmatprep.subr.mxu0 0.0
          %734 = vmatpush1.msra.mxu0 0.0
          %735 = vmatprep.subr.mxu0 0.0
          %736 = vmatpush1.msra.mxu0 0.0
          %737 = vmatprep.subr.mxu0 0.0
          %738 = vmatpush1.msra.mxu0 0.0
          %739 = vmatprep.subr.mxu0 0.0
          %740 = vmatpush1.msra.mxu0 0.0
          %741 = vmatprep.subr.mxu0 0.0
          %742 = vmatpush1.msra.mxu0 0.0
          %743 = vmatprep.subr.mxu0 0.0
          %744 = vmatpush1.msra.mxu0 0.0
          %745 = vmatprep.subr.mxu0 0.0
          %746 = vmatpush1.msra.mxu0 0.0
          %747 = vmatprep.subr.mxu0 0.0
          %748 = vmatpush1.msra.mxu0 0.0
          %749 = vmatprep.subr.mxu0 0.0
          %750 = vmatpush1.msra.mxu0 0.0
          %751 = vmatprep.subr.mxu0 0.0
          %752 = vmatpush1.msra.mxu0 0.0
          %753 = vmatprep.subr.mxu0 0.0
          %754 = vmatpush1.msra.mxu0 0.0
          %755 = vmatprep.subr.mxu0 0.0
          %756 = vmatpush1.msra.mxu0 0.0
          %757 = vmatprep.subr.mxu0 0.0
          %758 = vmatpush1.msra.mxu0 0.0
          %759 = vmatprep.subr.mxu0 0.0
          %760 = vmatpush1.msra.mxu0 0.0
          %761 = vmatprep.subr.mxu0 0.0
          %762 = vmatpush1.msra.mxu0 0.0
          %763 = vmatprep.subr.mxu0 0.0
          %764 = vmatpush1.msra.mxu0 0.0
          %765 = vmatprep.subr.mxu0 0.0
          %766 = vmatpush1.msra.mxu0 0.0
          %767 = vmatprep.subr.mxu0 0.0
          %768 = vmatpush1.msra.mxu0 0.0
          %769 = vmatprep.mubr.f32.mxu0 0.0
          %770 = vmatmul.mubr.f32.gmra.mrb[0].mxu0 %v699
          %v771 = vpop.f32.mrb[0].mxu0
          %v772 = vadd.f32 0.0, %v771
          %v773 = vpop.f32.mrb[0].mxu0
          %774 = vdwg.mxu0
          %v776 = vsel %vm697, %v612, 0
          %v779 = vsel %vm701, %v613, 0
          %781 = vmatprep.subr.mxu0 0.0
          %782 = vmatpush1.msra.mxu0 %v779
          %783 = vmatprep.subr.mxu0 0.0
          %784 = vmatpush1.msra.mxu0 0.0
          %785 = vmatprep.subr.mxu0 0.0
          %786 = vmatpush1.msra.mxu0 0.0
          %787 = vmatprep.subr.mxu0 0.0
          %788 = vmatpush1.msra.mxu0 0.0
          %789 = vmatprep.subr.mxu0 0.0
          %790 = vmatpush1.msra.mxu0 0.0
          %791 = vmatprep.subr.mxu0 0.0
          %792 = vmatpush1.msra.mxu0 0.0
          %793 = vmatprep.subr.mxu0 0.0
          %794 = vmatpush1.msra.mxu0 0.0
          %795 = vmatprep.subr.mxu0 0.0
          %796 = vmatpush1.msra.mxu0 0.0
          %797 = vmatprep.subr.mxu0 0.0
          %798 = vmatpush1.msra.mxu0 0.0
          %799 = vmatprep.subr.mxu0 0.0
          %800 = vmatpush1.msra.mxu0 0.0
          %801 = vmatprep.subr.mxu0 0.0
          %802 = vmatpush1.msra.mxu0 0.0
          %803 = vmatprep.subr.mxu0 0.0
          %804 = vmatpush1.msra.mxu0 0.0
          %805 = vmatprep.subr.mxu0 0.0
          %806 = vmatpush1.msra.mxu0 0.0
          %807 = vmatprep.subr.mxu0 0.0
          %808 = vmatpush1.msra.mxu0 0.0
          %809 = vmatprep.subr.mxu0 0.0
          %810 = vmatpush1.msra.mxu0 0.0
          %811 = vmatprep.subr.mxu0 0.0
          %812 = vmatpush1.msra.mxu0 0.0
          %813 = vmatprep.subr.mxu0 0.0
          %814 = vmatpush1.msra.mxu0 0.0
          %815 = vmatprep.subr.mxu0 0.0
          %816 = vmatpush1.msra.mxu0 0.0
          %817 = vmatprep.subr.mxu0 0.0
          %818 = vmatpush1.msra.mxu0 0.0
          %819 = vmatprep.subr.mxu0 0.0
          %820 = vmatpush1.msra.mxu0 0.0
          %821 = vmatprep.subr.mxu0 0.0
          %822 = vmatpush1.msra.mxu0 0.0
          %823 = vmatprep.subr.mxu0 0.0
          %824 = vmatpush1.msra.mxu0 0.0
          %825 = vmatprep.subr.mxu0 0.0
          %826 = vmatpush1.msra.mxu0 0.0
          %827 = vmatprep.subr.mxu0 0.0
          %828 = vmatpush1.msra.mxu0 0.0
          %829 = vmatprep.subr.mxu0 0.0
          %830 = vmatpush1.msra.mxu0 0.0
          %831 = vmatprep.subr.mxu0 0.0
          %832 = vmatpush1.msra.mxu0 0.0
          %833 = vmatprep.subr.mxu0 0.0
          %834 = vmatpush1.msra.mxu0 0.0
          %835 = vmatprep.subr.mxu0 0.0
          %836 = vmatpush1.msra.mxu0 0.0
          %837 = vmatprep.subr.mxu0 0.0
          %838 = vmatpush1.msra.mxu0 0.0
          %839 = vmatprep.subr.mxu0 0.0
          %840 = vmatpush1.msra.mxu0 0.0
          %841 = vmatprep.subr.mxu0 0.0
          %842 = vmatpush1.msra.mxu0 0.0
          %843 = vmatprep.subr.mxu0 0.0
          %844 = vmatpush1.msra.mxu0 0.0
          %845 = vmatprep.mubr.f32.mxu0 0.0
          %846 = vmatmul.mubr.f32.gmra.mrb[0].mxu0 %v776
          %v847 = vpop.f32.mrb[0].mxu0
          %v848 = vadd.f32 %v772, %v847
          %v849 = vpop.f32.mrb[0].mxu0
          %850 = vdwg.mxu0
          %v853 = vcombine.low %v514, %v516
          %v855 = vunpack.c.l.s4 1983009808
          %v856 = vunpack.c.0.s8 %v855
          %v857 = vlaneseq
          %v858 = vshrl.u32 %v857, 7
          %v859 = vsub.s32 %v856, %v858
          %v860 = vrot.slane %v853, %v859
          %v862 = vsel %vm529, %v860, 0.0
          %863 = vadd.xlane.f32.xlu0 %v862
          %v864 = vpop.xlane.xlu0 %863
          %v865 = vmul.f32 %v864, %v533
          %v868 = vunpack.c.l.s4 269488144
          %v869 = vunpack.c.0.s8 %v868
          %v870 = vlaneseq
          %v871 = vshrl.u32 %v870, 7
          %v872 = vsub.s32 %v869, %v871
          %v873 = vrot.slane %v865, %v872
          %v875 = vunpack.c.l.s4 842150450
          %v876 = vunpack.c.0.s8 %v875
          %v877 = vlaneseq
          %v878 = vshrl.u32 %v877, 7
          %v879 = vsub.s32 %v876, %v878
          %v880 = vrot.slane %v865, %v879
          %v883 = vsub.f32 %v514, %v873
          %v884 = vsub.f32 %v516, %v880
          %v885 = vmul.f32 %v883, %v883
          %v886 = vmul.f32 %v884, %v884
          %v889 = vcombine.low %v885, %v886
          %v891 = vunpack.c.l.s4 1983009808
          %v892 = vunpack.c.0.s8 %v891
          %v893 = vlaneseq
          %v894 = vshrl.u32 %v893, 7
          %v895 = vsub.s32 %v892, %v894
          %v896 = vrot.slane %v889, %v895
          %v898 = vsel %vm529, %v896, 0.0
          %899 = vadd.xlane.f32.xlu0 %v898
          %v900 = vpop.xlane.xlu0 %899
          %v901 = vmul.f32 %v900, %v533
          %v902 = vadd.f32 %v901, 1e-06
          %v903 = vrsqrt.pop %v902
          %v906 = vunpack.c.l.s4 269488144
          %v907 = vunpack.c.0.s8 %v906
          %v908 = vlaneseq
          %v909 = vshrl.u32 %v908, 7
          %v910 = vsub.s32 %v907, %v909
          %v911 = vrot.slane %v903, %v910
          %v913 = vunpack.c.l.s4 842150450
          %v914 = vunpack.c.0.s8 %v913
          %v915 = vlaneseq
          %v916 = vshrl.u32 %v915, 7
          %v917 = vsub.s32 %v914, %v916
          %v918 = vrot.slane %v903, %v917
          %v921 = vmul.f32 %v883, %v911
          %v922 = vmul.f32 %v884, %v918
          %v925 = vcombine.low %v921, %v922
          %v927 = vunpack.c.l.s4 1983009808
          %v928 = vunpack.c.0.s8 %v927
          %v929 = vlaneseq
          %v930 = vshrl.u32 %v929, 7
          %v931 = vsub.s32 %v928, %v930
          %v932 = vrot.slane %v925, %v931
          %v934 = vmul.f32 %v595, %v932
          %v935 = vadd.f32 %v934, %v611
          %s936 = scalar_lea.vmem %s1, 4
          %v937 = vld [vmem:[%s936] sm:$0x3]
          %v939 = vsel %vm697, %v935, 0
          %v942 = vsel %vm701, %v937, 0
          %944 = vmatprep.subr.mxu0 0.0
          %945 = vmatpush1.msra.mxu0 %v942
          %946 = vmatprep.subr.mxu0 0.0
          %947 = vmatpush1.msra.mxu0 0.0
          %948 = vmatprep.subr.mxu0 0.0
          %949 = vmatpush1.msra.mxu0 0.0
          %950 = vmatprep.subr.mxu0 0.0
          %951 = vmatpush1.msra.mxu0 0.0
          %952 = vmatprep.subr.mxu0 0.0
          %953 = vmatpush1.msra.mxu0 0.0
          %954 = vmatprep.subr.mxu0 0.0
          %955 = vmatpush1.msra.mxu0 0.0
          %956 = vmatprep.subr.mxu0 0.0
          %957 = vmatpush1.msra.mxu0 0.0
          %958 = vmatprep.subr.mxu0 0.0
          %959 = vmatpush1.msra.mxu0 0.0
          %960 = vmatprep.subr.mxu0 0.0
          %961 = vmatpush1.msra.mxu0 0.0
          %962 = vmatprep.subr.mxu0 0.0
          %963 = vmatpush1.msra.mxu0 0.0
          %964 = vmatprep.subr.mxu0 0.0
          %965 = vmatpush1.msra.mxu0 0.0
          %966 = vmatprep.subr.mxu0 0.0
          %967 = vmatpush1.msra.mxu0 0.0
          %968 = vmatprep.subr.mxu0 0.0
          %969 = vmatpush1.msra.mxu0 0.0
          %970 = vmatprep.subr.mxu0 0.0
          %971 = vmatpush1.msra.mxu0 0.0
          %972 = vmatprep.subr.mxu0 0.0
          %973 = vmatpush1.msra.mxu0 0.0
          %974 = vmatprep.subr.mxu0 0.0
          %975 = vmatpush1.msra.mxu0 0.0
          %976 = vmatprep.subr.mxu0 0.0
          %977 = vmatpush1.msra.mxu0 0.0
          %978 = vmatprep.subr.mxu0 0.0
          %979 = vmatpush1.msra.mxu0 0.0
          %980 = vmatprep.subr.mxu0 0.0
          %981 = vmatpush1.msra.mxu0 0.0
          %982 = vmatprep.subr.mxu0 0.0
          %983 = vmatpush1.msra.mxu0 0.0
          %984 = vmatprep.subr.mxu0 0.0
          %985 = vmatpush1.msra.mxu0 0.0
          %986 = vmatprep.subr.mxu0 0.0
          %987 = vmatpush1.msra.mxu0 0.0
          %988 = vmatprep.subr.mxu0 0.0
          %989 = vmatpush1.msra.mxu0 0.0
          %990 = vmatprep.subr.mxu0 0.0
          %991 = vmatpush1.msra.mxu0 0.0
          %992 = vmatprep.subr.mxu0 0.0
          %993 = vmatpush1.msra.mxu0 0.0
          %994 = vmatprep.subr.mxu0 0.0
          %995 = vmatpush1.msra.mxu0 0.0
          %996 = vmatprep.subr.mxu0 0.0
          %997 = vmatpush1.msra.mxu0 0.0
          %998 = vmatprep.subr.mxu0 0.0
          %999 = vmatpush1.msra.mxu0 0.0
          %1000 = vmatprep.subr.mxu0 0.0
          %1001 = vmatpush1.msra.mxu0 0.0
          %1002 = vmatprep.subr.mxu0 0.0
          %1003 = vmatpush1.msra.mxu0 0.0
          %1004 = vmatprep.subr.mxu0 0.0
          %1005 = vmatpush1.msra.mxu0 0.0
          %1006 = vmatprep.subr.mxu0 0.0
          %1007 = vmatpush1.msra.mxu0 0.0
          %1008 = vmatprep.mubr.f32.mxu0 0.0
          %1009 = vmatmul.mubr.f32.gmra.mrb[0].mxu0 %v939
          %v1010 = vpop.f32.mrb[0].mxu0
          %v1011 = vadd.f32 0.0, %v1010
          %v1012 = vpop.f32.mrb[0].mxu0
          %1013 = vdwg.mxu0
          %v1014 = vadd.f32 %v848, %v1011
          %1015 = vrot.lane.b32.xlu0 %v860, 126
          %v1016 = vpop.permute.xlu0 %1015
          %v1018 = vsel %vm529, %v1016, 0.0
          %1019 = vadd.xlane.f32.xlu0 %v1018
          %v1020 = vpop.xlane.xlu0 %1019
          %v1021 = vmul.f32 %v1020, %v533
          %v1024 = vunpack.c.l.s4 269488144
          %v1025 = vunpack.c.0.s8 %v1024
          %v1026 = vlaneseq
          %v1027 = vshrl.u32 %v1026, 7
          %v1028 = vsub.s32 %v1025, %v1027
          %v1029 = vrot.slane %v1021, %v1028
          %v1031 = vunpack.c.l.s4 842150450
          %v1032 = vunpack.c.0.s8 %v1031
          %v1033 = vlaneseq
          %v1034 = vshrl.u32 %v1033, 7
          %v1035 = vsub.s32 %v1032, %v1034
          %v1036 = vrot.slane %v1021, %v1035
          %v1039 = vsub.f32 %v514, %v1029
          %v1040 = vsub.f32 %v516, %v1036
          %v1041 = vmul.f32 %v1039, %v1039
          %v1042 = vmul.f32 %v1040, %v1040
          %v1045 = vcombine.low %v1041, %v1042
          %v1047 = vunpack.c.l.s4 1983009808
          %v1048 = vunpack.c.0.s8 %v1047
          %v1049 = vlaneseq
          %v1050 = vshrl.u32 %v1049, 7
          %v1051 = vsub.s32 %v1048, %v1050
          %v1052 = vrot.slane %v1045, %v1051
          %1053 = vrot.lane.b32.xlu0 %v1052, 126
          %v1054 = vpop.permute.xlu0 %1053
          %v1056 = vsel %vm529, %v1054, 0.0
          %1057 = vadd.xlane.f32.xlu0 %v1056
          %v1058 = vpop.xlane.xlu0 %1057
          %v1059 = vmul.f32 %v1058, %v533
          %v1060 = vadd.f32 %v1059, 1e-06
          %v1061 = vrsqrt.pop %v1060
          %v1064 = vunpack.c.l.s4 269488144
          %v1065 = vunpack.c.0.s8 %v1064
          %v1066 = vlaneseq
          %v1067 = vshrl.u32 %v1066, 7
          %v1068 = vsub.s32 %v1065, %v1067
          %v1069 = vrot.slane %v1061, %v1068
          %v1071 = vunpack.c.l.s4 842150450
          %v1072 = vunpack.c.0.s8 %v1071
          %v1073 = vlaneseq
          %v1074 = vshrl.u32 %v1073, 7
          %v1075 = vsub.s32 %v1072, %v1074
          %v1076 = vrot.slane %v1061, %v1075
          %v1079 = vmul.f32 %v1039, %v1069
          %v1080 = vmul.f32 %v1040, %v1076
          %v1083 = vcombine.low %v1079, %v1080
          %v1085 = vunpack.c.l.s4 1983009808
          %v1086 = vunpack.c.0.s8 %v1085
          %v1087 = vlaneseq
          %v1088 = vshrl.u32 %v1087, 7
          %v1089 = vsub.s32 %v1086, %v1088
          %v1090 = vrot.slane %v1083, %v1089
          %1091 = vrot.lane.b32.xlu0 %v1090, 126
          %v1092 = vpop.permute.xlu0 %1091
          %v1094 = vmul.f32 %v595, %v1092
          %v1095 = vadd.f32 %v1094, %v611
          %s1096 = scalar_lea.vmem %s1, 6
          %v1097 = vld [vmem:[%s1096] sm:$0x3]
          %v1099 = vsel %vm697, %v1095, 0
          %v1102 = vsel %vm701, %v1097, 0
          %1104 = vmatprep.subr.mxu0 0.0
          %1105 = vmatpush1.msra.mxu0 %v1102
          %1106 = vmatprep.subr.mxu0 0.0
          %1107 = vmatpush1.msra.mxu0 0.0
          %1108 = vmatprep.subr.mxu0 0.0
          %1109 = vmatpush1.msra.mxu0 0.0
          %1110 = vmatprep.subr.mxu0 0.0
          %1111 = vmatpush1.msra.mxu0 0.0
          %1112 = vmatprep.subr.mxu0 0.0
          %1113 = vmatpush1.msra.mxu0 0.0
          %1114 = vmatprep.subr.mxu0 0.0
          %1115 = vmatpush1.msra.mxu0 0.0
          %1116 = vmatprep.subr.mxu0 0.0
          %1117 = vmatpush1.msra.mxu0 0.0
          %1118 = vmatprep.subr.mxu0 0.0
          %1119 = vmatpush1.msra.mxu0 0.0
          %1120 = vmatprep.subr.mxu0 0.0
          %1121 = vmatpush1.msra.mxu0 0.0
          %1122 = vmatprep.subr.mxu0 0.0
          %1123 = vmatpush1.msra.mxu0 0.0
          %1124 = vmatprep.subr.mxu0 0.0
          %1125 = vmatpush1.msra.mxu0 0.0
          %1126 = vmatprep.subr.mxu0 0.0
          %1127 = vmatpush1.msra.mxu0 0.0
          %1128 = vmatprep.subr.mxu0 0.0
          %1129 = vmatpush1.msra.mxu0 0.0
          %1130 = vmatprep.subr.mxu0 0.0
          %1131 = vmatpush1.msra.mxu0 0.0
          %1132 = vmatprep.subr.mxu0 0.0
          %1133 = vmatpush1.msra.mxu0 0.0
          %1134 = vmatprep.subr.mxu0 0.0
          %1135 = vmatpush1.msra.mxu0 0.0
          %1136 = vmatprep.subr.mxu0 0.0
          %1137 = vmatpush1.msra.mxu0 0.0
          %1138 = vmatprep.subr.mxu0 0.0
          %1139 = vmatpush1.msra.mxu0 0.0
          %1140 = vmatprep.subr.mxu0 0.0
          %1141 = vmatpush1.msra.mxu0 0.0
          %1142 = vmatprep.subr.mxu0 0.0
          %1143 = vmatpush1.msra.mxu0 0.0
          %1144 = vmatprep.subr.mxu0 0.0
          %1145 = vmatpush1.msra.mxu0 0.0
          %1146 = vmatprep.subr.mxu0 0.0
          %1147 = vmatpush1.msra.mxu0 0.0
          %1148 = vmatprep.subr.mxu0 0.0
          %1149 = vmatpush1.msra.mxu0 0.0
          %1150 = vmatprep.subr.mxu0 0.0
          %1151 = vmatpush1.msra.mxu0 0.0
          %1152 = vmatprep.subr.mxu0 0.0
          %1153 = vmatpush1.msra.mxu0 0.0
          %1154 = vmatprep.subr.mxu0 0.0
          %1155 = vmatpush1.msra.mxu0 0.0
          %1156 = vmatprep.subr.mxu0 0.0
          %1157 = vmatpush1.msra.mxu0 0.0
          %1158 = vmatprep.subr.mxu0 0.0
          %1159 = vmatpush1.msra.mxu0 0.0
          %1160 = vmatprep.subr.mxu0 0.0
          %1161 = vmatpush1.msra.mxu0 0.0
          %1162 = vmatprep.subr.mxu0 0.0
          %1163 = vmatpush1.msra.mxu0 0.0
          %1164 = vmatprep.subr.mxu0 0.0
          %1165 = vmatpush1.msra.mxu0 0.0
          %1166 = vmatprep.subr.mxu0 0.0
          %1167 = vmatpush1.msra.mxu0 0.0
          %1168 = vmatprep.mubr.f32.mxu0 0.0
          %1169 = vmatmul.mubr.f32.gmra.mrb[0].mxu0 %v1099
          %v1170 = vpop.f32.mrb[0].mxu0
          %v1171 = vadd.f32 0.0, %v1170
          %v1172 = vpop.f32.mrb[0].mxu0
          %1173 = vdwg.mxu0
          %v1174 = vadd.f32 %v1014, %v1171
          %v1175 = vld [vmem:[%s3] sm:$0x1]
          %v1177 = vlaneseq
          %v1178 = vshrl.u32 %v1177, 7
          %v1179 = vsub.s32 0, %v1178
          %v1180 = vrot.slane %v1175, %v1179
          %v1182 = vadd.f32 %v1174, %v1180
          %v1185 = vunpack.c.l.s4 1983009808
          %v1186 = vunpack.c.0.s8 %v1185
          %v1187 = vlaneseq
          %v1188 = vshrl.u32 %v1187, 7
          %v1189 = vsub.s32 %v1186, %v1188
          %v1190 = vrot.slane %v1182, %v1189
          %v1191 = vcombine.high %v1190, %v1190
          %vm1194 = vcmask 25600
          %1195 = vst.msk [vmem:[#allocation2] sm:$0x3] %vm1194, %v1190
          %1196 = vst.msk [vmem:[#allocation2 + $0x2] sm:$0x3] %vm1194, %v1191
        $region68: #{convnext_forward.3} parent=63 // pred_fallthru
          _
        %v1197 = vld [vmem:[#allocation2] sm:$0x3]
        %v1198 = vld [vmem:[#allocation2 + $0x2] sm:$0x3]
        %s1199 = scalar_lea.vmem [#allocation3], 24
        %vm1200 = vcmask 25600
        %1201 = vst.msk [vmem:[%s1199 + $0x3] sm:$0x3] %vm1200, %v1197
        %1202 = vst.msk [vmem:[%s1199 + $0xb] sm:$0x3] %vm1200, %v1198
        %v1203 = vld [vmem:[%s467] sm:$0xff]
        %v1204 = vld [vmem:[%s467 + $0x8] sm:$0xff]
        %v1205 = vld [vmem:[%s467 + $0x10] sm:$0xff]
        %v1206 = vld [vmem:[%s467 + $0x18] sm:$0xff]
        %v1207 = vld [vmem:[%s467 + $0x20] sm:$0xff]
        %v1208 = vld [vmem:[%s467 + $0x28] sm:$0xff]
        %v1209 = vld [vmem:[%s467 + $0x30] sm:$0x1]
        %v1210 = vld [vmem:[%s471] sm:$0x1f]
        %v1211 = vld [vmem:[#allocation3] sm:$0xff]
        %v1212 = vld [vmem:[#allocation3 + $0x8] sm:$0xff]
        %v1213 = vlaneseq
        %v1214 = vshrl.u32 %v1213, 7
        %v1215 = vsub.s32 0, %v1214
        %v1216 = vrot.slane %v1203, %v1215
        %v1217 = vmul.f32 %v1211, %v1216
        %v1218 = vmul.f32 %v1212, %v1216
        %v1219 = vadd.f32 %v1217, 0.0
        %v1220 = vadd.f32 %v1218, 0.0
        %v1221 = vlaneseq
        %v1222 = vshrl.u32 %v1221, 7
        %v1223 = vsub.s32 1, %v1222
        %v1224 = vrot.slane %v1203, %v1223
        %v1225 = vmul.f32 %v1211, %v1224
        %v1226 = vmul.f32 %v1212, %v1224
        %v1229 = vrot.slane %v1225, 1
        %v1230 = vrot.slane %v1226, 1
        %v1233 = vadd.f32 %v1219, %v1229
        %v1234 = vadd.f32 %v1220, %v1230
        %v1235 = vlaneseq
        %v1236 = vshrl.u32 %v1235, 7
        %v1237 = vsub.s32 2, %v1236
        %v1238 = vrot.slane %v1203, %v1237
        %v1239 = vmul.f32 %v1211, %v1238
        %v1240 = vmul.f32 %v1212, %v1238
        %v1243 = vrot.slane %v1239, 2
        %v1244 = vrot.slane %v1240, 2
        %v1247 = vadd.f32 %v1233, %v1243
        %v1248 = vadd.f32 %v1234, %v1244
        %v1249 = vlaneseq
        %v1250 = vshrl.u32 %v1249, 7
        %v1251 = vsub.s32 3, %v1250
        %v1252 = vrot.slane %v1203, %v1251
        %v1253 = vmul.f32 %v1211, %v1252
        %v1254 = vmul.f32 %v1212, %v1252
        %v1257 = vrot.slane %v1253, 3
        %v1258 = vrot.slane %v1254, 3
        %v1261 = vadd.f32 %v1247, %v1257
        %v1262 = vadd.f32 %v1248, %v1258
        %v1263 = vlaneseq
        %v1264 = vshrl.u32 %v1263, 7
        %v1265 = vsub.s32 4, %v1264
        %v1266 = vrot.slane %v1203, %v1265
        %v1267 = vmul.f32 %v1211, %v1266
        %v1268 = vmul.f32 %v1212, %v1266
        %v1271 = vrot.slane %v1267, 4
        %v1272 = vrot.slane %v1268, 4
        %v1275 = vadd.f32 %v1261, %v1271
        %v1276 = vadd.f32 %v1262, %v1272
        %v1277 = vlaneseq
        %v1278 = vshrl.u32 %v1277, 7
        %v1279 = vsub.s32 5, %v1278
        %v1280 = vrot.slane %v1203, %v1279
        %v1281 = vmul.f32 %v1211, %v1280
        %v1282 = vmul.f32 %v1212, %v1280
        %v1285 = vrot.slane %v1281, 5
        %v1286 = vrot.slane %v1282, 5
        %v1289 = vadd.f32 %v1275, %v1285
        %v1290 = vadd.f32 %v1276, %v1286
        %v1291 = vlaneseq
        %v1292 = vshrl.u32 %v1291, 7
        %v1293 = vsub.s32 6, %v1292
        %v1294 = vrot.slane %v1203, %v1293
        %v1295 = vmul.f32 %v1211, %v1294
        %v1296 = vmul.f32 %v1212, %v1294
        %v1299 = vrot.slane %v1295, 6
        %v1300 = vrot.slane %v1296, 6
        %v1303 = vadd.f32 %v1289, %v1299
        %v1304 = vadd.f32 %v1290, %v1300
        %s1305 = scalar_lea.vmem [#allocation3], 8
        %v1306 = vld [vmem:[%s1305] sm:$0xff]
        %v1307 = vld [vmem:[%s1305 + $0x8] sm:$0xff]
        %v1308 = vlaneseq
        %v1309 = vshrl.u32 %v1308, 7
        %v1310 = vsub.s32 7, %v1309
        %v1311 = vrot.slane %v1203, %v1310
        %v1312 = vmul.f32 %v1306, %v1311
        %v1313 = vmul.f32 %v1307, %v1311
        %v1314 = vadd.f32 %v1303, %v1312
        %v1315 = vadd.f32 %v1304, %v1313
        %v1316 = vlaneseq
        %v1317 = vshrl.u32 %v1316, 7
        %v1318 = vsub.s32 0, %v1317
        %v1319 = vrot.slane %v1204, %v1318
        %v1320 = vmul.f32 %v1306, %v1319
        %v1321 = vmul.f32 %v1307, %v1319
        %v1324 = vrot.slane %v1320, 1
        %v1325 = vrot.slane %v1321, 1
        %v1328 = vadd.f32 %v1314, %v1324
        %v1329 = vadd.f32 %v1315, %v1325
        %v1330 = vlaneseq
        %v1331 = vshrl.u32 %v1330, 7
        %v1332 = vsub.s32 1, %v1331
        %v1333 = vrot.slane %v1204, %v1332
        %v1334 = vmul.f32 %v1306, %v1333
        %v1335 = vmul.f32 %v1307, %v1333
        %v1338 = vrot.slane %v1334, 2
        %v1339 = vrot.slane %v1335, 2
        %v1342 = vadd.f32 %v1328, %v1338
        %v1343 = vadd.f32 %v1329, %v1339
        %v1344 = vlaneseq
        %v1345 = vshrl.u32 %v1344, 7
        %v1346 = vsub.s32 2, %v1345
        %v1347 = vrot.slane %v1204, %v1346
        %v1348 = vmul.f32 %v1306, %v1347
        %v1349 = vmul.f32 %v1307, %v1347
        %v1352 = vrot.slane %v1348, 3
        %v1353 = vrot.slane %v1349, 3
        %v1356 = vadd.f32 %v1342, %v1352
        %v1357 = vadd.f32 %v1343, %v1353
        %v1358 = vlaneseq
        %v1359 = vshrl.u32 %v1358, 7
        %v1360 = vsub.s32 3, %v1359
        %v1361 = vrot.slane %v1204, %v1360
        %v1362 = vmul.f32 %v1306, %v1361
        %v1363 = vmul.f32 %v1307, %v1361
        %v1366 = vrot.slane %v1362, 4
        %v1367 = vrot.slane %v1363, 4
        %v1370 = vadd.f32 %v1356, %v1366
        %v1371 = vadd.f32 %v1357, %v1367
        %v1372 = vlaneseq
        %v1373 = vshrl.u32 %v1372, 7
        %v1374 = vsub.s32 4, %v1373
        %v1375 = vrot.slane %v1204, %v1374
        %v1376 = vmul.f32 %v1306, %v1375
        %v1377 = vmul.f32 %v1307, %v1375
        %v1380 = vrot.slane %v1376, 5
        %v1381 = vrot.slane %v1377, 5
        %v1384 = vadd.f32 %v1370, %v1380
        %v1385 = vadd.f32 %v1371, %v1381
        %v1386 = vlaneseq
        %v1387 = vshrl.u32 %v1386, 7
        %v1388 = vsub.s32 5, %v1387
        %v1389 = vrot.slane %v1204, %v1388
        %v1390 = vmul.f32 %v1306, %v1389
        %v1391 = vmul.f32 %v1307, %v1389
        %v1394 = vrot.slane %v1390, 6
        %v1395 = vrot.slane %v1391, 6
        %v1398 = vadd.f32 %v1384, %v1394
        %v1399 = vadd.f32 %v1385, %v1395
        %s1400 = scalar_lea.vmem [#allocation3], 16
        %v1401 = vld [vmem:[%s1400] sm:$0xff]
        %v1402 = vld [vmem:[%s1400 + $0x8] sm:$0xff]
        %v1403 = vlaneseq
        %v1404 = vshrl.u32 %v1403, 7
        %v1405 = vsub.s32 6, %v1404
        %v1406 = vrot.slane %v1204, %v1405
        %v1407 = vmul.f32 %v1401, %v1406
        %v1408 = vmul.f32 %v1402, %v1406
        %v1409 = vadd.f32 %v1398, %v1407
        %v1410 = vadd.f32 %v1399, %v1408
        %v1411 = vlaneseq
        %v1412 = vshrl.u32 %v1411, 7
        %v1413 = vsub.s32 7, %v1412
        %v1414 = vrot.slane %v1204, %v1413
        %v1415 = vmul.f32 %v1401, %v1414
        %v1416 = vmul.f32 %v1402, %v1414
        %v1419 = vrot.slane %v1415, 1
        %v1420 = vrot.slane %v1416, 1
        %v1423 = vadd.f32 %v1409, %v1419
        %v1424 = vadd.f32 %v1410, %v1420
        %v1425 = vlaneseq
        %v1426 = vshrl.u32 %v1425, 7
        %v1427 = vsub.s32 0, %v1426
        %v1428 = vrot.slane %v1205, %v1427
        %v1429 = vmul.f32 %v1401, %v1428
        %v1430 = vmul.f32 %v1402, %v1428
        %v1433 = vrot.slane %v1429, 2
        %v1434 = vrot.slane %v1430, 2
        %v1437 = vadd.f32 %v1423, %v1433
        %v1438 = vadd.f32 %v1424, %v1434
        %v1439 = vlaneseq
        %v1440 = vshrl.u32 %v1439, 7
        %v1441 = vsub.s32 1, %v1440
        %v1442 = vrot.slane %v1205, %v1441
        %v1443 = vmul.f32 %v1401, %v1442
        %v1444 = vmul.f32 %v1402, %v1442
        %v1447 = vrot.slane %v1443, 3
        %v1448 = vrot.slane %v1444, 3
        %v1451 = vadd.f32 %v1437, %v1447
        %v1452 = vadd.f32 %v1438, %v1448
        %v1453 = vlaneseq
        %v1454 = vshrl.u32 %v1453, 7
        %v1455 = vsub.s32 2, %v1454
        %v1456 = vrot.slane %v1205, %v1455
        %v1457 = vmul.f32 %v1401, %v1456
        %v1458 = vmul.f32 %v1402, %v1456
        %v1461 = vrot.slane %v1457, 4
        %v1462 = vrot.slane %v1458, 4
        %v1465 = vadd.f32 %v1451, %v1461
        %v1466 = vadd.f32 %v1452, %v1462
        %v1467 = vlaneseq
        %v1468 = vshrl.u32 %v1467, 7
        %v1469 = vsub.s32 3, %v1468
        %v1470 = vrot.slane %v1205, %v1469
        %v1471 = vmul.f32 %v1401, %v1470
        %v1472 = vmul.f32 %v1402, %v1470
        %v1475 = vrot.slane %v1471, 5
        %v1476 = vrot.slane %v1472, 5
        %v1479 = vadd.f32 %v1465, %v1475
        %v1480 = vadd.f32 %v1466, %v1476
        %v1481 = vlaneseq
        %v1482 = vshrl.u32 %v1481, 7
        %v1483 = vsub.s32 4, %v1482
        %v1484 = vrot.slane %v1205, %v1483
        %v1485 = vmul.f32 %v1401, %v1484
        %v1486 = vmul.f32 %v1402, %v1484
        %v1489 = vrot.slane %v1485, 6
        %v1490 = vrot.slane %v1486, 6
        %v1493 = vadd.f32 %v1479, %v1489
        %v1494 = vadd.f32 %v1480, %v1490
        %v1495 = vld [vmem:[%s1199] sm:$0xff]
        %v1496 = vld [vmem:[%s1199 + $0x8] sm:$0xff]
        %v1497 = vlaneseq
        %v1498 = vshrl.u32 %v1497, 7
        %v1499 = vsub.s32 5, %v1498
        %v1500 = vrot.slane %v1205, %v1499
        %v1501 = vmul.f32 %v1495, %v1500
        %v1502 = vmul.f32 %v1496, %v1500
        %v1503 = vadd.f32 %v1493, %v1501
        %v1504 = vadd.f32 %v1494, %v1502
        %v1505 = vlaneseq
        %v1506 = vshrl.u32 %v1505, 7
        %v1507 = vsub.s32 6, %v1506
        %v1508 = vrot.slane %v1205, %v1507
        %v1509 = vmul.f32 %v1495, %v1508
        %v1510 = vmul.f32 %v1496, %v1508
        %v1513 = vrot.slane %v1509, 1
        %v1514 = vrot.slane %v1510, 1
        %v1517 = vadd.f32 %v1503, %v1513
        %v1518 = vadd.f32 %v1504, %v1514
        %v1519 = vlaneseq
        %v1520 = vshrl.u32 %v1519, 7
        %v1521 = vsub.s32 7, %v1520
        %v1522 = vrot.slane %v1205, %v1521
        %v1523 = vmul.f32 %v1495, %v1522
        %v1524 = vmul.f32 %v1496, %v1522
        %v1527 = vrot.slane %v1523, 2
        %v1528 = vrot.slane %v1524, 2
        %v1531 = vadd.f32 %v1517, %v1527
        %v1532 = vadd.f32 %v1518, %v1528
        %v1533 = vlaneseq
        %v1534 = vshrl.u32 %v1533, 7
        %v1535 = vsub.s32 0, %v1534
        %v1536 = vrot.slane %v1206, %v1535
        %v1537 = vmul.f32 %v1495, %v1536
        %v1538 = vmul.f32 %v1496, %v1536
        %v1541 = vrot.slane %v1537, 3
        %v1542 = vrot.slane %v1538, 3
        %v1545 = vadd.f32 %v1531, %v1541
        %v1546 = vadd.f32 %v1532, %v1542
        %v1547 = vlaneseq
        %v1548 = vshrl.u32 %v1547, 7
        %v1549 = vsub.s32 1, %v1548
        %v1550 = vrot.slane %v1206, %v1549
        %v1551 = vmul.f32 %v1495, %v1550
        %v1552 = vmul.f32 %v1496, %v1550
        %v1555 = vrot.slane %v1551, 4
        %v1556 = vrot.slane %v1552, 4
        %v1559 = vadd.f32 %v1545, %v1555
        %v1560 = vadd.f32 %v1546, %v1556
        %v1561 = vlaneseq
        %v1562 = vshrl.u32 %v1561, 7
        %v1563 = vsub.s32 2, %v1562
        %v1564 = vrot.slane %v1206, %v1563
        %v1565 = vmul.f32 %v1495, %v1564
        %v1566 = vmul.f32 %v1496, %v1564
        %v1569 = vrot.slane %v1565, 5
        %v1570 = vrot.slane %v1566, 5
        %v1573 = vadd.f32 %v1559, %v1569
        %v1574 = vadd.f32 %v1560, %v1570
        %v1575 = vlaneseq
        %v1576 = vshrl.u32 %v1575, 7
        %v1577 = vsub.s32 3, %v1576
        %v1578 = vrot.slane %v1206, %v1577
        %v1579 = vmul.f32 %v1495, %v1578
        %v1580 = vmul.f32 %v1496, %v1578
        %v1583 = vrot.slane %v1579, 6
        %v1584 = vrot.slane %v1580, 6
        %v1587 = vadd.f32 %v1573, %v1583
        %v1588 = vadd.f32 %v1574, %v1584
        %s1589 = scalar_lea.vmem [#allocation3], 32
        %v1590 = vld [vmem:[%s1589] sm:$0xff]
        %v1591 = vld [vmem:[%s1589 + $0x8] sm:$0xff]
        %v1592 = vlaneseq
        %v1593 = vshrl.u32 %v1592, 7
        %v1594 = vsub.s32 4, %v1593
        %v1595 = vrot.slane %v1206, %v1594
        %v1596 = vmul.f32 %v1590, %v1595
        %v1597 = vmul.f32 %v1591, %v1595
        %v1598 = vadd.f32 %v1587, %v1596
        %v1599 = vadd.f32 %v1588, %v1597
        %v1600 = vlaneseq
        %v1601 = vshrl.u32 %v1600, 7
        %v1602 = vsub.s32 5, %v1601
        %v1603 = vrot.slane %v1206, %v1602
        %v1604 = vmul.f32 %v1590, %v1603
        %v1605 = vmul.f32 %v1591, %v1603
        %v1608 = vrot.slane %v1604, 1
        %v1609 = vrot.slane %v1605, 1
        %v1612 = vadd.f32 %v1598, %v1608
        %v1613 = vadd.f32 %v1599, %v1609
        %v1614 = vlaneseq
        %v1615 = vshrl.u32 %v1614, 7
        %v1616 = vsub.s32 6, %v1615
        %v1617 = vrot.slane %v1206, %v1616
        %v1618 = vmul.f32 %v1590, %v1617
        %v1619 = vmul.f32 %v1591, %v1617
        %v1622 = vrot.slane %v1618, 2
        %v1623 = vrot.slane %v1619, 2
        %v1626 = vadd.f32 %v1612, %v1622
        %v1627 = vadd.f32 %v1613, %v1623
        %v1628 = vlaneseq
        %v1629 = vshrl.u32 %v1628, 7
        %v1630 = vsub.s32 7, %v1629
        %v1631 = vrot.slane %v1206, %v1630
        %v1632 = vmul.f32 %v1590, %v1631
        %v1633 = vmul.f32 %v1591, %v1631
        %v1636 = vrot.slane %v1632, 3
        %v1637 = vrot.slane %v1633, 3
        %v1640 = vadd.f32 %v1626, %v1636
        %v1641 = vadd.f32 %v1627, %v1637
        %v1642 = vlaneseq
        %v1643 = vshrl.u32 %v1642, 7
        %v1644 = vsub.s32 0, %v1643
        %v1645 = vrot.slane %v1207, %v1644
        %v1646 = vmul.f32 %v1590, %v1645
        %v1647 = vmul.f32 %v1591, %v1645
        %v1650 = vrot.slane %v1646, 4
        %v1651 = vrot.slane %v1647, 4
        %v1654 = vadd.f32 %v1640, %v1650
        %v1655 = vadd.f32 %v1641, %v1651
        %v1656 = vlaneseq
        %v1657 = vshrl.u32 %v1656, 7
        %v1658 = vsub.s32 1, %v1657
        %v1659 = vrot.slane %v1207, %v1658
        %v1660 = vmul.f32 %v1590, %v1659
        %v1661 = vmul.f32 %v1591, %v1659
        %v1664 = vrot.slane %v1660, 5
        %v1665 = vrot.slane %v1661, 5
        %v1668 = vadd.f32 %v1654, %v1664
        %v1669 = vadd.f32 %v1655, %v1665
        %v1670 = vlaneseq
        %v1671 = vshrl.u32 %v1670, 7
        %v1672 = vsub.s32 2, %v1671
        %v1673 = vrot.slane %v1207, %v1672
        %v1674 = vmul.f32 %v1590, %v1673
        %v1675 = vmul.f32 %v1591, %v1673
        %v1678 = vrot.slane %v1674, 6
        %v1679 = vrot.slane %v1675, 6
        %v1682 = vadd.f32 %v1668, %v1678
        %v1683 = vadd.f32 %v1669, %v1679
        %s1684 = scalar_lea.vmem [#allocation3], 40
        %v1685 = vld [vmem:[%s1684] sm:$0xff]
        %v1686 = vld [vmem:[%s1684 + $0x8] sm:$0xff]
        %v1687 = vlaneseq
        %v1688 = vshrl.u32 %v1687, 7
        %v1689 = vsub.s32 3, %v1688
        %v1690 = vrot.slane %v1207, %v1689
        %v1691 = vmul.f32 %v1685, %v1690
        %v1692 = vmul.f32 %v1686, %v1690
        %v1693 = vadd.f32 %v1682, %v1691
        %v1694 = vadd.f32 %v1683, %v1692
        %v1695 = vlaneseq
        %v1696 = vshrl.u32 %v1695, 7
        %v1697 = vsub.s32 4, %v1696
        %v1698 = vrot.slane %v1207, %v1697
        %v1699 = vmul.f32 %v1685, %v1698
        %v1700 = vmul.f32 %v1686, %v1698
        %v1703 = vrot.slane %v1699, 1
        %v1704 = vrot.slane %v1700, 1
        %v1707 = vadd.f32 %v1693, %v1703
        %v1708 = vadd.f32 %v1694, %v1704
        %v1709 = vlaneseq
        %v1710 = vshrl.u32 %v1709, 7
        %v1711 = vsub.s32 5, %v1710
        %v1712 = vrot.slane %v1207, %v1711
        %v1713 = vmul.f32 %v1685, %v1712
        %v1714 = vmul.f32 %v1686, %v1712
        %v1717 = vrot.slane %v1713, 2
        %v1718 = vrot.slane %v1714, 2
        %v1721 = vadd.f32 %v1707, %v1717
        %v1722 = vadd.f32 %v1708, %v1718
        %v1723 = vlaneseq
        %v1724 = vshrl.u32 %v1723, 7
        %v1725 = vsub.s32 6, %v1724
        %v1726 = vrot.slane %v1207, %v1725
        %v1727 = vmul.f32 %v1685, %v1726
        %v1728 = vmul.f32 %v1686, %v1726
        %v1731 = vrot.slane %v1727, 3
        %v1732 = vrot.slane %v1728, 3
        %v1735 = vadd.f32 %v1721, %v1731
        %v1736 = vadd.f32 %v1722, %v1732
        %v1737 = vlaneseq
        %v1738 = vshrl.u32 %v1737, 7
        %v1739 = vsub.s32 7, %v1738
        %v1740 = vrot.slane %v1207, %v1739
        %v1741 = vmul.f32 %v1685, %v1740
        %v1742 = vmul.f32 %v1686, %v1740
        %v1745 = vrot.slane %v1741, 4
        %v1746 = vrot.slane %v1742, 4
        %v1749 = vadd.f32 %v1735, %v1745
        %v1750 = vadd.f32 %v1736, %v1746
        %v1751 = vlaneseq
        %v1752 = vshrl.u32 %v1751, 7
        %v1753 = vsub.s32 0, %v1752
        %v1754 = vrot.slane %v1208, %v1753
        %v1755 = vmul.f32 %v1685, %v1754
        %v1756 = vmul.f32 %v1686, %v1754
        %v1759 = vrot.slane %v1755, 5
        %v1760 = vrot.slane %v1756, 5
        %v1763 = vadd.f32 %v1749, %v1759
        %v1764 = vadd.f32 %v1750, %v1760
        %v1765 = vlaneseq
        %v1766 = vshrl.u32 %v1765, 7
        %v1767 = vsub.s32 1, %v1766
        %v1768 = vrot.slane %v1208, %v1767
        %v1769 = vmul.f32 %v1685, %v1768
        %v1770 = vmul.f32 %v1686, %v1768
        %v1773 = vrot.slane %v1769, 6
        %v1774 = vrot.slane %v1770, 6
        %v1777 = vadd.f32 %v1763, %v1773
        %v1778 = vadd.f32 %v1764, %v1774
        %s1779 = scalar_lea.vmem [#allocation3], 48
        %v1780 = vld [vmem:[%s1779] sm:$0xff]
        %v1781 = vld [vmem:[%s1779 + $0x8] sm:$0xff]
        %v1782 = vlaneseq
        %v1783 = vshrl.u32 %v1782, 7
        %v1784 = vsub.s32 2, %v1783
        %v1785 = vrot.slane %v1208, %v1784
        %v1786 = vmul.f32 %v1780, %v1785
        %v1787 = vmul.f32 %v1781, %v1785
        %v1788 = vadd.f32 %v1777, %v1786
        %v1789 = vadd.f32 %v1778, %v1787
        %v1790 = vlaneseq
        %v1791 = vshrl.u32 %v1790, 7
        %v1792 = vsub.s32 3, %v1791
        %v1793 = vrot.slane %v1208, %v1792
        %v1794 = vmul.f32 %v1780, %v1793
        %v1795 = vmul.f32 %v1781, %v1793
        %v1798 = vrot.slane %v1794, 1
        %v1799 = vrot.slane %v1795, 1
        %v1802 = vadd.f32 %v1788, %v1798
        %v1803 = vadd.f32 %v1789, %v1799
        %v1804 = vlaneseq
        %v1805 = vshrl.u32 %v1804, 7
        %v1806 = vsub.s32 4, %v1805
        %v1807 = vrot.slane %v1208, %v1806
        %v1808 = vmul.f32 %v1780, %v1807
        %v1809 = vmul.f32 %v1781, %v1807
        %v1812 = vrot.slane %v1808, 2
        %v1813 = vrot.slane %v1809, 2
        %v1816 = vadd.f32 %v1802, %v1812
        %v1817 = vadd.f32 %v1803, %v1813
        %v1818 = vlaneseq
        %v1819 = vshrl.u32 %v1818, 7
        %v1820 = vsub.s32 5, %v1819
        %v1821 = vrot.slane %v1208, %v1820
        %v1822 = vmul.f32 %v1780, %v1821
        %v1823 = vmul.f32 %v1781, %v1821
        %v1826 = vrot.slane %v1822, 3
        %v1827 = vrot.slane %v1823, 3
        %v1830 = vadd.f32 %v1816, %v1826
        %v1831 = vadd.f32 %v1817, %v1827
        %v1832 = vlaneseq
        %v1833 = vshrl.u32 %v1832, 7
        %v1834 = vsub.s32 6, %v1833
        %v1835 = vrot.slane %v1208, %v1834
        %v1836 = vmul.f32 %v1780, %v1835
        %v1837 = vmul.f32 %v1781, %v1835
        %v1840 = vrot.slane %v1836, 4
        %v1841 = vrot.slane %v1837, 4
        %v1844 = vadd.f32 %v1830, %v1840
        %v1845 = vadd.f32 %v1831, %v1841
        %v1846 = vlaneseq
        %v1847 = vshrl.u32 %v1846, 7
        %v1848 = vsub.s32 7, %v1847
        %v1849 = vrot.slane %v1208, %v1848
        %v1850 = vmul.f32 %v1780, %v1849
        %v1851 = vmul.f32 %v1781, %v1849
        %v1854 = vrot.slane %v1850, 5
        %v1855 = vrot.slane %v1851, 5
        %v1858 = vadd.f32 %v1844, %v1854
        %v1859 = vadd.f32 %v1845, %v1855
        %v1860 = vlaneseq
        %v1861 = vshrl.u32 %v1860, 7
        %v1862 = vsub.s32 0, %v1861
        %v1863 = vrot.slane %v1209, %v1862
        %v1864 = vmul.f32 %v1780, %v1863
        %v1865 = vmul.f32 %v1781, %v1863
        %v1868 = vrot.slane %v1864, 6
        %v1869 = vrot.slane %v1865, 6
        %v1872 = vadd.f32 %v1858, %v1868
        %v1873 = vadd.f32 %v1859, %v1869
        %v1874 = vlaneseq
        %v1875 = vshrl.u32 %v1874, 7
        %v1876 = vsub.s32 0, %v1875
        %v1877 = vrot.slane %v1210, %v1876
        %v1878 = vadd.f32 %v1872, %v1877
        %v1879 = vadd.f32 %v1873, %v1877
        %v1882 = vcombine.low %v1878, %v1879
        %v1884 = vunpack.c.l.s4 1983009808
        %v1885 = vunpack.c.0.s8 %v1884
        %v1886 = vlaneseq
        %v1887 = vshrl.u32 %v1886, 7
        %v1888 = vsub.s32 %v1885, %v1887
        %v1889 = vrot.slane %v1882, %v1888
        %vm1891 = vcmask 27648
        %v1892 = vsel %vm1891, %v1889, 0.0
        %1893 = vadd.xlane.f32.xlu0 %v1892
        %v1894 = vpop.xlane.xlu0 %1893
        %v1895 = vrcp.pop 4.0
        %v1896 = vmul.f32 %v1894, %v1895
        %v1899 = vunpack.c.l.s4 269488144
        %v1900 = vunpack.c.0.s8 %v1899
        %v1901 = vlaneseq
        %v1902 = vshrl.u32 %v1901, 7
        %v1903 = vsub.s32 %v1900, %v1902
        %v1904 = vrot.slane %v1896, %v1903
        %v1906 = vunpack.c.l.s4 842150450
        %v1907 = vunpack.c.0.s8 %v1906
        %v1908 = vlaneseq
        %v1909 = vshrl.u32 %v1908, 7
        %v1910 = vsub.s32 %v1907, %v1909
        %v1911 = vrot.slane %v1896, %v1910
        %v1914 = vsub.f32 %v1878, %v1904
        %v1915 = vsub.f32 %v1879, %v1911
        %v1916 = vmul.f32 %v1914, %v1914
        %v1917 = vmul.f32 %v1915, %v1915
        %v1920 = vcombine.low %v1916, %v1917
        %v1922 = vunpack.c.l.s4 1983009808
        %v1923 = vunpack.c.0.s8 %v1922
        %v1924 = vlaneseq
        %v1925 = vshrl.u32 %v1924, 7
        %v1926 = vsub.s32 %v1923, %v1925
        %v1927 = vrot.slane %v1920, %v1926
        %v1929 = vsel %vm1891, %v1927, 0.0
        %1930 = vadd.xlane.f32.xlu0 %v1929
        %v1931 = vpop.xlane.xlu0 %1930
        %v1932 = vmul.f32 %v1931, %v1895
        %v1933 = vadd.f32 %v1932, 1e-06
        %v1934 = vrsqrt.pop %v1933
        %v1937 = vunpack.c.l.s4 269488144
        %v1938 = vunpack.c.0.s8 %v1937
        %v1939 = vlaneseq
        %v1940 = vshrl.u32 %v1939, 7
        %v1941 = vsub.s32 %v1938, %v1940
        %v1942 = vrot.slane %v1934, %v1941
        %v1944 = vunpack.c.l.s4 842150450
        %v1945 = vunpack.c.0.s8 %v1944
        %v1946 = vlaneseq
        %v1947 = vshrl.u32 %v1946, 7
        %v1948 = vsub.s32 %v1945, %v1947
        %v1949 = vrot.slane %v1934, %v1948
        %v1952 = vmul.f32 %v1914, %v1942
        %v1953 = vmul.f32 %v1915, %v1949
        %v1954 = vlaneseq
        %v1955 = vshrl.u32 %v1954, 7
        %v1956 = vsub.s32 1, %v1955
        %v1957 = vrot.slane %v1210, %v1956
        %v1960 = vcombine.low %v1952, %v1953
        %v1962 = vunpack.c.l.s4 1983009808
        %v1963 = vunpack.c.0.s8 %v1962
        %v1964 = vlaneseq
        %v1965 = vshrl.u32 %v1964, 7
        %v1966 = vsub.s32 %v1963, %v1965
        %v1967 = vrot.slane %v1960, %v1966
        %v1969 = vmul.f32 %v1957, %v1967
        %v1970 = vlaneseq
        %v1971 = vshrl.u32 %v1970, 7
        %v1972 = vsub.s32 2, %v1971
        %v1973 = vrot.slane %v1210, %v1972
        %v1974 = vadd.f32 %v1969, %v1973
        %v1975 = vld [vmem:[%s475] sm:$0xf]
        %v1976 = vld [vmem:[%s478] sm:$0x1]
        %v1978 = vlaneseq
        %v1979 = vshrl.u32 %v1978, 7
        %v1980 = vsub.s32 0, %v1979
        %v1981 = vrot.slane %v1976, %v1980
        %vm1983 = vcmask 31744
        %v1985 = vsel %vm1983, %v1974, 0
        %vm1987 = vcmask 1043456
        %v1989 = vsel %vm1987, %v1975, 0
        %1991 = vmatprep.subr.mxu0 0.0
        %1992 = vmatpush1.msra.mxu0 %v1989
        %1993 = vmatprep.subr.mxu0 0.0
        %1994 = vmatpush1.msra.mxu0 0.0
        %1995 = vmatprep.subr.mxu0 0.0
        %1996 = vmatpush1.msra.mxu0 0.0
        %1997 = vmatprep.subr.mxu0 0.0
        %1998 = vmatpush1.msra.mxu0 0.0
        %1999 = vmatprep.subr.mxu0 0.0
        %2000 = vmatpush1.msra.mxu0 0.0
        %2001 = vmatprep.subr.mxu0 0.0
        %2002 = vmatpush1.msra.mxu0 0.0
        %2003 = vmatprep.subr.mxu0 0.0
        %2004 = vmatpush1.msra.mxu0 0.0
        %2005 = vmatprep.subr.mxu0 0.0
        %2006 = vmatpush1.msra.mxu0 0.0
        %2007 = vmatprep.subr.mxu0 0.0
        %2008 = vmatpush1.msra.mxu0 0.0
        %2009 = vmatprep.subr.mxu0 0.0
        %2010 = vmatpush1.msra.mxu0 0.0
        %2011 = vmatprep.subr.mxu0 0.0
        %2012 = vmatpush1.msra.mxu0 0.0
        %2013 = vmatprep.subr.mxu0 0.0
        %2014 = vmatpush1.msra.mxu0 0.0
        %2015 = vmatprep.subr.mxu0 0.0
        %2016 = vmatpush1.msra.mxu0 0.0
        %2017 = vmatprep.subr.mxu0 0.0
        %2018 = vmatpush1.msra.mxu0 0.0
        %2019 = vmatprep.subr.mxu0 0.0
        %2020 = vmatpush1.msra.mxu0 0.0
        %2021 = vmatprep.subr.mxu0 0.0
        %2022 = vmatpush1.msra.mxu0 0.0
        %2023 = vmatprep.subr.mxu0 0.0
        %2024 = vmatpush1.msra.mxu0 0.0
        %2025 = vmatprep.subr.mxu0 0.0
        %2026 = vmatpush1.msra.mxu0 0.0
        %2027 = vmatprep.subr.mxu0 0.0
        %2028 = vmatpush1.msra.mxu0 0.0
        %2029 = vmatprep.subr.mxu0 0.0
        %2030 = vmatpush1.msra.mxu0 0.0
        %2031 = vmatprep.subr.mxu0 0.0
        %2032 = vmatpush1.msra.mxu0 0.0
        %2033 = vmatprep.subr.mxu0 0.0
        %2034 = vmatpush1.msra.mxu0 0.0
        %2035 = vmatprep.subr.mxu0 0.0
        %2036 = vmatpush1.msra.mxu0 0.0
        %2037 = vmatprep.subr.mxu0 0.0
        %2038 = vmatpush1.msra.mxu0 0.0
        %2039 = vmatprep.subr.mxu0 0.0
        %2040 = vmatpush1.msra.mxu0 0.0
        %2041 = vmatprep.subr.mxu0 0.0
        %2042 = vmatpush1.msra.mxu0 0.0
        %2043 = vmatprep.subr.mxu0 0.0
        %2044 = vmatpush1.msra.mxu0 0.0
        %2045 = vmatprep.subr.mxu0 0.0
        %2046 = vmatpush1.msra.mxu0 0.0
        %2047 = vmatprep.subr.mxu0 0.0
        %2048 = vmatpush1.msra.mxu0 0.0
        %2049 = vmatprep.subr.mxu0 0.0
        %2050 = vmatpush1.msra.mxu0 0.0
        %2051 = vmatprep.subr.mxu0 0.0
        %2052 = vmatpush1.msra.mxu0 0.0
        %2053 = vmatprep.subr.mxu0 0.0
        %2054 = vmatpush1.msra.mxu0 0.0
        %2055 = vmatprep.mubr.f32.mxu0 0.0
        %2056 = vmatmul.mubr.f32.gmra.mrb[0].mxu0 %v1985
        %v2057 = vpop.f32.mrb[0].mxu0
        %v2058 = vadd.f32 %v1981, %v2057
        %v2059 = vpop.f32.mrb[0].mxu0
        %2060 = vdwg.mxu0
        %v2061 = vmul.f32 %v2058, 0.5
        %v2062 = vmul.f32 %v2058, 0.70710677
        %v2063 = vand.u32 2147483647, %v2062
        %v2064 = vmul.f32 %v2063, 0.3275911
        %v2065 = vadd.f32 %v2064, 1.0
        %v2066 = vrcp.pop %v2065
        %v2067 = vmul.f32 1.0, %v2066
        %v2068 = vmul.f32 %v2067, 1.0614054
        %v2069 = vadd.f32 %v2068, -1.4531521
        %v2070 = vmul.f32 %v2067, %v2069
        %v2071 = vadd.f32 %v2070, 1.4214138
        %v2072 = vmul.f32 %v2067, %v2071
        %v2073 = vadd.f32 %v2072, -0.28449672
        %v2074 = vmul.f32 %v2067, %v2073
        %v2075 = vadd.f32 %v2074, 0.2548296
        %v2076 = vmul.f32 %v2067, %v2075
        %v2077 = vsub.f32 0.0, %v2063
        %v2078 = vmul.f32 %v2077, %v2063
        %v2079 = vmul.f32 %v2078, 1.442695
        %v2080 = vpow.pop %v2079
        %v2081 = vmul.f32 %v2076, %v2080
        %v2082 = vsub.f32 1.0, %v2081
        %vm2083 = vcmp.lt.f32.partialorder %v2062, 0.0
        %v2084 = vsub.f32 0.0, %v2082
        %v2085 = vsel %vm2083, %v2084, %v2082
        %v2086 = vadd.f32 %v2085, 1.0
        %v2087 = vmul.f32 %v2061, %v2086
        %v2088 = vld [vmem:[%s483] sm:$0xff]
        %v2089 = vld [vmem:[%s483 + $0x8] sm:$0xff]
        %v2090 = vlaneseq
        %v2091 = vshrl.u32 %v2090, 7
        %v2092 = vsub.s32 3, %v2091
        %v2093 = vrot.slane %v1210, %v2092
        %vm2094 = vcmask 130048
        %v2096 = vsel %vm2094, %v2087, 0
        %2098 = vmatprep.subr.mxu0 0.0
        %2099 = vmatpush1.msra.mxu0 %v2088
        %2100 = vmatprep.subr.mxu0 0.0
        %2101 = vmatpush1.msra.mxu0 %v2089
        %2102 = vmatprep.subr.mxu0 0.0
        %2103 = vmatpush1.msra.mxu0 0.0
        %2104 = vmatprep.subr.mxu0 0.0
        %2105 = vmatpush1.msra.mxu0 0.0
        %2106 = vmatprep.subr.mxu0 0.0
        %2107 = vmatpush1.msra.mxu0 0.0
        %2108 = vmatprep.subr.mxu0 0.0
        %2109 = vmatpush1.msra.mxu0 0.0
        %2110 = vmatprep.subr.mxu0 0.0
        %2111 = vmatpush1.msra.mxu0 0.0
        %2112 = vmatprep.subr.mxu0 0.0
        %2113 = vmatpush1.msra.mxu0 0.0
        %2114 = vmatprep.subr.mxu0 0.0
        %2115 = vmatpush1.msra.mxu0 0.0
        %2116 = vmatprep.subr.mxu0 0.0
        %2117 = vmatpush1.msra.mxu0 0.0
        %2118 = vmatprep.subr.mxu0 0.0
        %2119 = vmatpush1.msra.mxu0 0.0
        %2120 = vmatprep.subr.mxu0 0.0
        %2121 = vmatpush1.msra.mxu0 0.0
        %2122 = vmatprep.subr.mxu0 0.0
        %2123 = vmatpush1.msra.mxu0 0.0
        %2124 = vmatprep.subr.mxu0 0.0
        %2125 = vmatpush1.msra.mxu0 0.0
        %2126 = vmatprep.subr.mxu0 0.0
        %2127 = vmatpush1.msra.mxu0 0.0
        %2128 = vmatprep.subr.mxu0 0.0
        %2129 = vmatpush1.msra.mxu0 0.0
        %2130 = vmatprep.subr.mxu0 0.0
        %2131 = vmatpush1.msra.mxu0 0.0
        %2132 = vmatprep.subr.mxu0 0.0
        %2133 = vmatpush1.msra.mxu0 0.0
        %2134 = vmatprep.subr.mxu0 0.0
        %2135 = vmatpush1.msra.mxu0 0.0
        %2136 = vmatprep.subr.mxu0 0.0
        %2137 = vmatpush1.msra.mxu0 0.0
        %2138 = vmatprep.subr.mxu0 0.0
        %2139 = vmatpush1.msra.mxu0 0.0
        %2140 = vmatprep.subr.mxu0 0.0
        %2141 = vmatpush1.msra.mxu0 0.0
        %2142 = vmatprep.subr.mxu0 0.0
        %2143 = vmatpush1.msra.mxu0 0.0
        %2144 = vmatprep.subr.mxu0 0.0
        %2145 = vmatpush1.msra.mxu0 0.0
        %2146 = vmatprep.subr.mxu0 0.0
        %2147 = vmatpush1.msra.mxu0 0.0
        %2148 = vmatprep.subr.mxu0 0.0
        %2149 = vmatpush1.msra.mxu0 0.0
        %2150 = vmatprep.subr.mxu0 0.0
        %2151 = vmatpush1.msra.mxu0 0.0
        %2152 = vmatprep.subr.mxu0 0.0
        %2153 = vmatpush1.msra.mxu0 0.0
        %2154 = vmatprep.subr.mxu0 0.0
        %2155 = vmatpush1.msra.mxu0 0.0
        %2156 = vmatprep.subr.mxu0 0.0
        %2157 = vmatpush1.msra.mxu0 0.0
        %2158 = vmatprep.subr.mxu0 0.0
        %2159 = vmatpush1.msra.mxu0 0.0
        %2160 = vmatprep.subr.mxu0 0.0
        %2161 = vmatpush1.msra.mxu0 0.0
        %2162 = vmatprep.mubr.f32.mxu0 0.0
        %2163 = vmatmul.mubr.f32.gmra.mrb[0].mxu0 %v2096
        %v2164 = vpop.f32.mrb[0].mxu0
        %v2165 = vadd.f32 %v2093, %v2164
        %v2166 = vpop.f32.mrb[0].mxu0
        %2167 = vdwg.mxu0
        %v2168 = vlaneseq
        %v2169 = vshrl.u32 %v2168, 7
        %v2170 = vsub.s32 4, %v2169
        %v2171 = vrot.slane %v1210, %v2170
        %v2172 = vmul.f32 %v2171, %v2165
        %v2175 = vunpack.c.l.s4 1983009808
        %v2176 = vunpack.c.0.s8 %v2175
        %v2177 = vlaneseq
        %v2178 = vshrl.u32 %v2177, 7
        %v2179 = vsub.s32 %v2176, %v2178
        %v2180 = vrot.slane %v2172, %v2179
        %v2181 = vcombine.high %v2180, %v2180
        %v2184 = vadd.f32 %v1197, %v2180
        %v2185 = vadd.f32 %v1198, %v2181
        %2186 = vst.msk [vmem:[#allocation2] sm:$0x3] %vm1200, %v2184
        %2187 = vst.msk [vmem:[#allocation2 + $0x2] sm:$0x3] %vm1200, %v2185
        // Predicated region
        $region69: #{convnext_forward.3} parent=63 // pred_check
          %p2188 = pneg %p484
        $region70: #{convnext_forward.3} parent=63 // pred_check_branch
          %2190 = sbr.rel (%p2188) target = $region72
        $region71: #{convnext_forward.3} parent=63 // pred_region
          %v2193 = vcombine.low %v2184, %v2185
          %v2195 = vunpack.c.l.s4 1983009808
          %v2196 = vunpack.c.0.s8 %v2195
          %v2197 = vlaneseq
          %v2198 = vshrl.u32 %v2197, 7
          %v2199 = vsub.s32 %v2196, %v2198
          %v2200 = vrot.slane %v2193, %v2199
          %v2202 = vsel %vm1891, %v2200, 0.0
          %v2203 = vrot.slane %v2202, 4
          %v2204 = vadd.f32 %v2202, %v2203
          %v2205 = vrot.slane %v2204, 2
          %v2206 = vadd.f32 %v2204, %v2205
          %v2207 = vrot.slane %v2206, 1
          %v2208 = vadd.f32 %v2206, %v2207
          %v2209 = vmul.f32 %v2208, 0.25
          %v2210 = vld [vmem:[%s9] sm:$0xf]
          %v2211 = vld [vmem:[%s10] sm:$0x1]
          %v2213 = vsel %vm1983, %v2209, 0
          %v2216 = vsel %vm1987, %v2210, 0
          %2218 = vmatprep.subr.mxu0 0.0
          %2219 = vmatpush1.msra.mxu0 %v2216
          %2220 = vmatprep.subr.mxu0 0.0
          %2221 = vmatpush1.msra.mxu0 0.0
          %2222 = vmatprep.subr.mxu0 0.0
          %2223 = vmatpush1.msra.mxu0 0.0
          %2224 = vmatprep.subr.mxu0 0.0
          %2225 = vmatpush1.msra.mxu0 0.0
          %2226 = vmatprep.subr.mxu0 0.0
          %2227 = vmatpush1.msra.mxu0 0.0
          %2228 = vmatprep.subr.mxu0 0.0
          %2229 = vmatpush1.msra.mxu0 0.0
          %2230 = vmatprep.subr.mxu0 0.0
          %2231 = vmatpush1.msra.mxu0 0.0
          %2232 = vmatprep.subr.mxu0 0.0
          %2233 = vmatpush1.msra.mxu0 0.0
          %2234 = vmatprep.subr.mxu0 0.0
          %2235 = vmatpush1.msra.mxu0 0.0
          %2236 = vmatprep.subr.mxu0 0.0
          %2237 = vmatpush1.msra.mxu0 0.0
          %2238 = vmatprep.subr.mxu0 0.0
          %2239 = vmatpush1.msra.mxu0 0.0
          %2240 = vmatprep.subr.mxu0 0.0
          %2241 = vmatpush1.msra.mxu0 0.0
          %2242 = vmatprep.subr.mxu0 0.0
          %2243 = vmatpush1.msra.mxu0 0.0
          %2244 = vmatprep.subr.mxu0 0.0
          %2245 = vmatpush1.msra.mxu0 0.0
          %2246 = vmatprep.subr.mxu0 0.0
          %2247 = vmatpush1.msra.mxu0 0.0
          %2248 = vmatprep.subr.mxu0 0.0
          %2249 = vmatpush1.msra.mxu0 0.0
          %2250 = vmatprep.subr.mxu0 0.0
          %2251 = vmatpush1.msra.mxu0 0.0
          %2252 = vmatprep.subr.mxu0 0.0
          %2253 = vmatpush1.msra.mxu0 0.0
          %2254 = vmatprep.subr.mxu0 0.0
          %2255 = vmatpush1.msra.mxu0 0.0
          %2256 = vmatprep.subr.mxu0 0.0
          %2257 = vmatpush1.msra.mxu0 0.0
          %2258 = vmatprep.subr.mxu0 0.0
          %2259 = vmatpush1.msra.mxu0 0.0
          %2260 = vmatprep.subr.mxu0 0.0
          %2261 = vmatpush1.msra.mxu0 0.0
          %2262 = vmatprep.subr.mxu0 0.0
          %2263 = vmatpush1.msra.mxu0 0.0
          %2264 = vmatprep.subr.mxu0 0.0
          %2265 = vmatpush1.msra.mxu0 0.0
          %2266 = vmatprep.subr.mxu0 0.0
          %2267 = vmatpush1.msra.mxu0 0.0
          %2268 = vmatprep.subr.mxu0 0.0
          %2269 = vmatpush1.msra.mxu0 0.0
          %2270 = vmatprep.subr.mxu0 0.0
          %2271 = vmatpush1.msra.mxu0 0.0
          %2272 = vmatprep.subr.mxu0 0.0
          %2273 = vmatpush1.msra.mxu0 0.0
          %2274 = vmatprep.subr.mxu0 0.0
          %2275 = vmatpush1.msra.mxu0 0.0
          %2276 = vmatprep.subr.mxu0 0.0
          %2277 = vmatpush1.msra.mxu0 0.0
          %2278 = vmatprep.subr.mxu0 0.0
          %2279 = vmatpush1.msra.mxu0 0.0
          %2280 = vmatprep.subr.mxu0 0.0
          %2281 = vmatpush1.msra.mxu0 0.0
          %2282 = vmatprep.mubr.f32.mxu0 0.0
          %2283 = vmatmul.mubr.f32.gmra.mrb[0].mxu0 %v2213
          %v2284 = vpop.f32.mrb[0].mxu0
          %v2285 = vadd.f32 %v2211, %v2284
          %v2286 = vpop.f32.mrb[0].mxu0
          %2287 = vdwg.mxu0
          %vm2288 = vcmask 73728
          %2289 = vst.msk [vmem:[%s457] sm:$0x1] %vm2288, %v2285
        $region72: #{convnext_forward.3} parent=63 // pred_fallthru
          _
        %s2290 = sand.u32 %s306, 1
        %s2291 = scalar_lea.sflag [#allocation5], %s2290
        %s2292 = sand.u32 %s306, 1
        %s2293 = scalar_lea.vmem [#allocation4], %s2292
        // Predicated region
        $region73: #{convnext_forward.3} parent=63 // pred_check
          %p2294 = pneg %p316
        $region74: #{convnext_forward.3} parent=63 // pred_check_branch
          %2296 = sbr.rel (%p2294) target = $region76
        $region75: #{convnext_forward.3} parent=63 // pred_region
          %s2298 = ssub.s32 16, 16
          %2299 = vsyncadd %s2291, %s2298
          %s2300 = smul.addr %s29, 16
          %s2301 = scalar_lea.hbm %s11, %s2300
          %s2303 = sshll.u32 %s2293, 4
          %s2304 = int_to_ptr.vmem [resolvable:$true] %s2303
          %2306 = dma.vmem_to_hbm [thread:$0]  %s2304, 16, %s2301, %s2291
        $region76: #{convnext_forward.3} parent=63 // pred_fallthru
          _
      $region64: #{convnext_forward.3} parent=5 // pred_fallthru
        _
      %p2307 = scmp.le.s32.totalorder 2, %s20
      // Predicated region
      $region77: #{convnext_forward.3} parent=5 // pred_check
        %p2308 = pneg %p2307
      $region78: #{convnext_forward.3} parent=5 // pred_check_branch
        %2310 = sbr.rel (%p2308) target = $region80
      $region79: #{convnext_forward.3} parent=5 // pred_region
        %s2311 = ssub.s32 %s20, 2
        // Predicated region
        $region81: #{convnext_forward.3} parent=79 // pred_check
          %p2312 = pneg %p322
        $region82: #{convnext_forward.3} parent=79 // pred_check_branch
          %2314 = sbr.rel (%p2312) target = $region84
        $region83: #{convnext_forward.3} parent=79 // pred_region
          %s2315 = sand.u32 %s307, 1
          %s2316 = scalar_lea.sflag [#allocation5], %s2315
          %s2317 = sand.u32 %s307, 1
          %s2318 = scalar_lea.vmem [#allocation4], %s2317
          %2319 = dma.done %s2316, 16
        $region84: #{convnext_forward.3} parent=79 // pred_fallthru
          _
      $region80: #{convnext_forward.3} parent=5 // pred_fallthru
        _
    $region6: #{convnext_forward.3} parent=1 // loop_footer
      %s24 = sadd.s32 1, %s20
    $region7: #{convnext_forward.3} parent=1 // loop_footer_branch
      %19 = sbr.rel target = $region3
    $region8: #{convnext_forward.3} parent=1 // loop_exit
      _
    %2320 = vsyncpa [#allocation5], 1
    %s2321 = scalar_lea.sflag [#allocation5], 1
    %2322 = vsyncpa %s2321, 1

// kernel: convnext_forward.2
$region0: #{convnext_forward.2}
  #allocation0 [shape = 'u32[]', space=smem, size = 0x4, offset = 0x4, fixed_abs, tag = 'smem constant byte address 0x4 - core index']
  #allocation1 [shape = 'u32[144,128]{1,0:T(1,128)}', space=vmem, size = 0x12000, scoped, tag = 'internal scratch']
  #allocation2 [shape = 'f32[4,4,2]{2,1,0:T(4,128)}', space=vmem, size = 0x2000, scoped, tag = 'scratch operand']
  #allocation3 [shape = 'f32[10,10,2]{2,1,0:T(8,128)}', space=vmem, size = 0x14000, scoped, tag = 'scratch operand']
  %s0 = inlined_call_operand.vmem [shape: f32[2,4,4,4,12], index: 0, kind: input, shape index: {}]
  %s1 = inlined_call_operand.vmem [shape: f32[4,12,2], index: 1, kind: input, shape index: {}]
  %s2 = inlined_call_operand.vmem [shape: f32[3,2], index: 2, kind: input, shape index: {}]
  %s3 = inlined_call_operand.vmem [shape: f32[1,49,2], index: 3, kind: input, shape index: {}]
  %s4 = inlined_call_operand.vmem [shape: f32[1,5,2], index: 4, kind: input, shape index: {}]
  %s5 = inlined_call_operand.vmem [shape: f32[1,2,8], index: 5, kind: input, shape index: {}]
  %s6 = inlined_call_operand.vmem [shape: f32[1,1,8], index: 6, kind: input, shape index: {}]
  %s7 = inlined_call_operand.vmem [shape: f32[1,8,2], index: 7, kind: input, shape index: {}]
  %s8 = inlined_call_operand.vmem [shape: f32[2,4,4,2], index: 8, kind: output, shape index: {}]
  %s9 = sld [smem:[#allocation0]]
  $region73: #{convnext_forward.2} parent=0
    _
  %s11 = ssub.s32 1, %s9
  %s12 = scalar_select 0, %s11, %s9
  loop: start=0, step=1, limit=4
  $region2: #{convnext_forward.2} parent=0 // loop_pre_header
    _
  $region3: #{convnext_forward.2} parent=0 // loop_header
    %s14 = sphi 0, %s18
    %p15 = scmp.ge.s32.totalorder %s14, 4
    %s21 = sphi 0, %s33
    %s22 = sphi 0, %s29
    %s23 = sphi 0, %s21
    %s24 = sphi 0, %s22
    %s25 = sphi 0, %s23
    %s26 = sphi 0, %s24
    %s36 = sphi 0, %s38
    %s39 = sphi 0, %s36
    %s40 = sphi 0, %s39
    %s56 = sphi 0, %s40
    %s60 = sphi 0, %s60
    %s62 = sphi 0, %s60
    %s63 = sphi 0, %s62
    %s77 = sphi 0, %s63
    %s81 = sphi 0, %s81
    %s83 = sphi 0, %s81
    %s84 = sphi 0, %s83
    %s98 = sphi 0, %s84
    %s104 = sphi 0, %s106
    %s107 = sphi 0, %s104
    %s108 = sphi 0, %s107
    %s124 = sphi 0, %s108
    %s130 = sphi 0, %s132
    %s133 = sphi 0, %s130
    %s134 = sphi 0, %s133
    %s150 = sphi 0, %s134
    %s156 = sphi 0, %s158
    %s159 = sphi 0, %s156
    %s160 = sphi 0, %s159
    %s176 = sphi 0, %s160
    %s182 = sphi 0, %s184
    %s185 = sphi 0, %s182
    %s186 = sphi 0, %s185
    %s202 = sphi 0, %s186
    %s208 = sphi 0, %s210
    %s211 = sphi 0, %s208
    %s212 = sphi 0, %s211
    %s228 = sphi 0, %s212
    %s234 = sphi 0, %s236
    %s237 = sphi 0, %s234
    %s238 = sphi 0, %s237
    %s254 = sphi 0, %s238
  $region4: #{convnext_forward.2} parent=0 // loop_header_branch
    %17 = sbr.rel (%p15) target = $region8
  $region5: #{convnext_forward.2} parent=0 // loop_body
    %s19 = ssub.s32 %s14, 1
    %s20 = ssub.s32 %s14, 2
    %s27 = sadd.s32 1, %s22
    %p28 = scmp.ge.s32.totalorder %s27, 1
    %s29 = scalar_select %p28, 0, %s27
    %s30 = sadd.s32 1, %s21
    %s31 = scalar_select %p28, %s30, %s21
    %p32 = scmp.ge.s32.totalorder %s31, 2
    %s33 = scalar_select %p32, 0, %s31
    %s34 = ssub.s32 %s21, %s33
    %p35 = scmp.eq.s32.totalorder %s34, 0
    %s37 = sadd.s32 %s36, 1
    %s38 = scalar_select %p35, %s36, %s37
    %p41 = pneg %p35
    %p42 = scmp.eq.s32.totalorder %s14, 1
    %p43 = por %p41, %p42
    %p44 = scmp.ne.s32.totalorder %s36, %s39
    %p45 = scmp.eq.s32.totalorder %s14, 0
    %p46 = por %p44, %p45
    %p47 = scmp.ne.s32.totalorder %s36, %s39
    %p48 = scmp.eq.s32.totalorder %s19, 1
    %p49 = por %p47, %p48
    %p50 = scmp.ne.s32.totalorder %s39, %s40
    %p51 = scmp.eq.s32.totalorder %s19, 0
    %p52 = por %p50, %p51
    %p53 = scmp.ne.s32.totalorder %s39, %s40
    %p54 = scmp.eq.s32.totalorder %s20, 1
    %p55 = por %p53, %p54
    %p57 = scmp.ne.s32.totalorder %s40, %s56
    %p58 = scmp.eq.s32.totalorder %s20, 0
    %p59 = por %p57, %p58
    %s61 = sadd.s32 %s60, 1
    %p64 = scmp.eq.s32.totalorder %s14, 1
    %p65 = scmp.ne.s32.totalorder %s60, %s62
    %p66 = scmp.eq.s32.totalorder %s14, 0
    %p67 = por %p65, %p66
    %p68 = scmp.ne.s32.totalorder %s60, %s62
    %p69 = scmp.eq.s32.totalorder %s19, 1
    %p70 = por %p68, %p69
    %p71 = scmp.ne.s32.totalorder %s62, %s63
    %p72 = scmp.eq.s32.totalorder %s19, 0
    %p73 = por %p71, %p72
    %p74 = scmp.ne.s32.totalorder %s62, %s63
    %p75 = scmp.eq.s32.totalorder %s20, 1
    %p76 = por %p74, %p75
    %p78 = scmp.ne.s32.totalorder %s63, %s77
    %p79 = scmp.eq.s32.totalorder %s20, 0
    %p80 = por %p78, %p79
    %s82 = sadd.s32 %s81, 1
    %p85 = scmp.eq.s32.totalorder %s14, 1
    %p86 = scmp.ne.s32.totalorder %s81, %s83
    %p87 = scmp.eq.s32.totalorder %s14, 0
    %p88 = por %p86, %p87
    %p89 = scmp.ne.s32.totalorder %s81, %s83
    %p90 = scmp.eq.s32.totalorder %s19, 1
    %p91 = por %p89, %p90
    %p92 = scmp.ne.s32.totalorder %s83, %s84
    %p93 = scmp.eq.s32.totalorder %s19, 0
    %p94 = por %p92, %p93
    %p95 = scmp.ne.s32.totalorder %s83, %s84
    %p96 = scmp.eq.s32.totalorder %s20, 1
    %p97 = por %p95, %p96
    %p99 = scmp.ne.s32.totalorder %s84, %s98
    %p100 = scmp.eq.s32.totalorder %s20, 0
    %p101 = por %p99, %p100
    %s102 = ssub.s32 %s22, %s29
    %p103 = scmp.eq.s32.totalorder %s102, 0
    %s105 = sadd.s32 %s104, 1
    %s106 = scalar_select %p103, %s104, %s105
    %p109 = pneg %p103
    %p110 = scmp.eq.s32.totalorder %s14, 1
    %p111 = por %p109, %p110
    %p112 = scmp.ne.s32.totalorder %s104, %s107
    %p113 = scmp.eq.s32.totalorder %s14, 0
    %p114 = por %p112, %p113
    %p115 = scmp.ne.s32.totalorder %s104, %s107
    %p116 = scmp.eq.s32.totalorder %s19, 1
    %p117 = por %p115, %p116
    %p118 = scmp.ne.s32.totalorder %s107, %s108
    %p119 = scmp.eq.s32.totalorder %s19, 0
    %p120 = por %p118, %p119
    %p121 = scmp.ne.s32.totalorder %s107, %s108
    %p122 = scmp.eq.s32.totalorder %s20, 1
    %p123 = por %p121, %p122
    %p125 = scmp.ne.s32.totalorder %s108, %s124
    %p126 = scmp.eq.s32.totalorder %s20, 0
    %p127 = por %p125, %p126
    %s128 = ssub.s32 %s22, %s29
    %p129 = scmp.eq.s32.totalorder %s128, 0
    %s131 = sadd.s32 %s130, 1
    %s132 = scalar_select %p129, %s130, %s131
    %p135 = pneg %p129
    %p136 = scmp.eq.s32.totalorder %s14, 1
    %p137 = por %p135, %p136
    %p138 = scmp.ne.s32.totalorder %s130, %s133
    %p139 = scmp.eq.s32.totalorder %s14, 0
    %p140 = por %p138, %p139
    %p141 = scmp.ne.s32.totalorder %s130, %s133
    %p142 = scmp.eq.s32.totalorder %s19, 1
    %p143 = por %p141, %p142
    %p144 = scmp.ne.s32.totalorder %s133, %s134
    %p145 = scmp.eq.s32.totalorder %s19, 0
    %p146 = por %p144, %p145
    %p147 = scmp.ne.s32.totalorder %s133, %s134
    %p148 = scmp.eq.s32.totalorder %s20, 1
    %p149 = por %p147, %p148
    %p151 = scmp.ne.s32.totalorder %s134, %s150
    %p152 = scmp.eq.s32.totalorder %s20, 0
    %p153 = por %p151, %p152
    %s154 = ssub.s32 %s22, %s29
    %p155 = scmp.eq.s32.totalorder %s154, 0
    %s157 = sadd.s32 %s156, 1
    %s158 = scalar_select %p155, %s156, %s157
    %p161 = pneg %p155
    %p162 = scmp.eq.s32.totalorder %s14, 1
    %p163 = por %p161, %p162
    %p164 = scmp.ne.s32.totalorder %s156, %s159
    %p165 = scmp.eq.s32.totalorder %s14, 0
    %p166 = por %p164, %p165
    %p167 = scmp.ne.s32.totalorder %s156, %s159
    %p168 = scmp.eq.s32.totalorder %s19, 1
    %p169 = por %p167, %p168
    %p170 = scmp.ne.s32.totalorder %s159, %s160
    %p171 = scmp.eq.s32.totalorder %s19, 0
    %p172 = por %p170, %p171
    %p173 = scmp.ne.s32.totalorder %s159, %s160
    %p174 = scmp.eq.s32.totalorder %s20, 1
    %p175 = por %p173, %p174
    %p177 = scmp.ne.s32.totalorder %s160, %s176
    %p178 = scmp.eq.s32.totalorder %s20, 0
    %p179 = por %p177, %p178
    %s180 = ssub.s32 %s22, %s29
    %p181 = scmp.eq.s32.totalorder %s180, 0
    %s183 = sadd.s32 %s182, 1
    %s184 = scalar_select %p181, %s182, %s183
    %p187 = pneg %p181
    %p188 = scmp.eq.s32.totalorder %s14, 1
    %p189 = por %p187, %p188
    %p190 = scmp.ne.s32.totalorder %s182, %s185
    %p191 = scmp.eq.s32.totalorder %s14, 0
    %p192 = por %p190, %p191
    %p193 = scmp.ne.s32.totalorder %s182, %s185
    %p194 = scmp.eq.s32.totalorder %s19, 1
    %p195 = por %p193, %p194
    %p196 = scmp.ne.s32.totalorder %s185, %s186
    %p197 = scmp.eq.s32.totalorder %s19, 0
    %p198 = por %p196, %p197
    %p199 = scmp.ne.s32.totalorder %s185, %s186
    %p200 = scmp.eq.s32.totalorder %s20, 1
    %p201 = por %p199, %p200
    %p203 = scmp.ne.s32.totalorder %s186, %s202
    %p204 = scmp.eq.s32.totalorder %s20, 0
    %p205 = por %p203, %p204
    %s206 = ssub.s32 %s22, %s29
    %p207 = scmp.eq.s32.totalorder %s206, 0
    %s209 = sadd.s32 %s208, 1
    %s210 = scalar_select %p207, %s208, %s209
    %p213 = pneg %p207
    %p214 = scmp.eq.s32.totalorder %s14, 1
    %p215 = por %p213, %p214
    %p216 = scmp.ne.s32.totalorder %s208, %s211
    %p217 = scmp.eq.s32.totalorder %s14, 0
    %p218 = por %p216, %p217
    %p219 = scmp.ne.s32.totalorder %s208, %s211
    %p220 = scmp.eq.s32.totalorder %s19, 1
    %p221 = por %p219, %p220
    %p222 = scmp.ne.s32.totalorder %s211, %s212
    %p223 = scmp.eq.s32.totalorder %s19, 0
    %p224 = por %p222, %p223
    %p225 = scmp.ne.s32.totalorder %s211, %s212
    %p226 = scmp.eq.s32.totalorder %s20, 1
    %p227 = por %p225, %p226
    %p229 = scmp.ne.s32.totalorder %s212, %s228
    %p230 = scmp.eq.s32.totalorder %s20, 0
    %p231 = por %p229, %p230
    %s232 = ssub.s32 %s21, %s33
    %p233 = scmp.eq.s32.totalorder %s232, 0
    %s235 = sadd.s32 %s234, 1
    %s236 = scalar_select %p233, %s234, %s235
    %p239 = pneg %p233
    %p240 = scmp.eq.s32.totalorder %s14, 1
    %p241 = por %p239, %p240
    %p242 = scmp.ne.s32.totalorder %s234, %s237
    %p243 = scmp.eq.s32.totalorder %s14, 0
    %p244 = por %p242, %p243
    %p245 = scmp.ne.s32.totalorder %s234, %s237
    %p246 = scmp.eq.s32.totalorder %s19, 1
    %p247 = por %p245, %p246
    %p248 = scmp.ne.s32.totalorder %s237, %s238
    %p249 = scmp.eq.s32.totalorder %s19, 0
    %p250 = por %p248, %p249
    %p251 = scmp.ne.s32.totalorder %s237, %s238
    %p252 = scmp.eq.s32.totalorder %s20, 1
    %p253 = por %p251, %p252
    %p255 = scmp.ne.s32.totalorder %s238, %s254
    %p256 = scmp.eq.s32.totalorder %s20, 0
    %p257 = por %p255, %p256
    %p258 = scmp.le.s32.totalorder 1, %s14
    %p259 = scmp.lt.s32.totalorder %s14, 3
    %p260 = pnand %p258, %p259
    %p261 = pneg %p260
    // Predicated region
    $region9: #{convnext_forward.2} parent=5 // pred_check
      _
    $region10: #{convnext_forward.2} parent=5 // pred_check_branch
      %263 = sbr.rel (%p260) target = $region12
    $region11: #{convnext_forward.2} parent=5 // pred_region
      %s264 = ssub.s32 %s14, 1
      // Predicated region
      $region13: #{convnext_forward.2} parent=11 // pred_check
        %p265 = pneg %p73
      $region14: #{convnext_forward.2} parent=11 // pred_check_branch
        %267 = sbr.rel (%p265) target = $region16
      $region15: #{convnext_forward.2} parent=11 // pred_region
        _
      $region16: #{convnext_forward.2} parent=11 // pred_fallthru
        _
      // Predicated region
      $region17: #{convnext_forward.2} parent=11 // pred_check
        %p268 = pneg %p94
      $region18: #{convnext_forward.2} parent=11 // pred_check_branch
        %270 = sbr.rel (%p268) target = $region20
      $region19: #{convnext_forward.2} parent=11 // pred_region
        _
      $region20: #{convnext_forward.2} parent=11 // pred_fallthru
        _
      // Predicated region
      $region21: #{convnext_forward.2} parent=11 // pred_check
        %p271 = pneg %p120
      $region22: #{convnext_forward.2} parent=11 // pred_check_branch
        %273 = sbr.rel (%p271) target = $region24
      $region23: #{convnext_forward.2} parent=11 // pred_region
        %p274 = scmp.lt.s32.totalorder %s24, 0
        %s275 = scalar_select %p274, %s24, 0
        %s276 = smul.addr %s275, 7
        %s277 = smul.addr %s276, 8
        %s278 = scalar_lea.vmem %s3, %s277
      $region24: #{convnext_forward.2} parent=11 // pred_fallthru
        _
      // Predicated region
      $region25: #{convnext_forward.2} parent=11 // pred_check
        %p279 = pneg %p146
      $region26: #{convnext_forward.2} parent=11 // pred_check_branch
        %281 = sbr.rel (%p279) target = $region28
      $region27: #{convnext_forward.2} parent=11 // pred_region
        %p282 = scmp.lt.s32.totalorder %s24, 0
        %s283 = scalar_select %p282, %s24, 0
        %s284 = smul.addr %s283, 8
        %s285 = scalar_lea.vmem %s4, %s284
      $region28: #{convnext_forward.2} parent=11 // pred_fallthru
        _
      // Predicated region
      $region29: #{convnext_forward.2} parent=11 // pred_check
        %p286 = pneg %p172
      $region30: #{convnext_forward.2} parent=11 // pred_check_branch
        %288 = sbr.rel (%p286) target = $region32
      $region31: #{convnext_forward.2} parent=11 // pred_region
        %p289 = scmp.lt.s32.totalorder %s24, 0
        %s290 = scalar_select %p289, %s24, 0
        %s291 = smul.addr %s290, 2
        %s292 = scalar_lea.vmem %s5, %s291
      $region32: #{convnext_forward.2} parent=11 // pred_fallthru
        _
      // Predicated region
      $region33: #{convnext_forward.2} parent=11 // pred_check
        %p293 = pneg %p198
      $region34: #{convnext_forward.2} parent=11 // pred_check_branch
        %295 = sbr.rel (%p293) target = $region36
      $region35: #{convnext_forward.2} parent=11 // pred_region
        %p296 = scmp.lt.s32.totalorder %s24, 0
        %s297 = scalar_select %p296, %s24, 0
        %s298 = scalar_lea.vmem %s6, %s297
      $region36: #{convnext_forward.2} parent=11 // pred_fallthru
        _
      // Predicated region
      $region37: #{convnext_forward.2} parent=11 // pred_check
        %p299 = pneg %p224
      $region38: #{convnext_forward.2} parent=11 // pred_check_branch
        %301 = sbr.rel (%p299) target = $region40
      $region39: #{convnext_forward.2} parent=11 // pred_region
        %p302 = scmp.lt.s32.totalorder %s24, 0
        %s303 = scalar_select %p302, %s24, 0
        %s304 = smul.addr %s303, 8
        %s305 = scalar_lea.vmem %s7, %s304
      $region40: #{convnext_forward.2} parent=11 // pred_fallthru
        _
    $region12: #{convnext_forward.2} parent=5 // pred_fallthru
      _
    %p306 = scmp.lt.s32.totalorder %s14, 2
    // Predicated region
    $region41: #{convnext_forward.2} parent=5 // pred_check
      %p307 = pneg %p306
    $region42: #{convnext_forward.2} parent=5 // pred_check_branch
      %309 = sbr.rel (%p307) target = $region44
    $region43: #{convnext_forward.2} parent=5 // pred_region
      // Predicated region
      $region45: #{convnext_forward.2} parent=43 // pred_check
        %p310 = pneg %p46
      $region46: #{convnext_forward.2} parent=43 // pred_check_branch
        %312 = sbr.rel (%p310) target = $region48
      $region47: #{convnext_forward.2} parent=43 // pred_region
        %p313 = scmp.lt.s32.totalorder %s21, 1
        %s314 = scalar_select %p313, %s21, 1
        %s315 = smul.addr %s314, 16
        %s316 = smul.addr %s315, 4
        %s317 = scalar_lea.vmem %s0, %s316
      $region48: #{convnext_forward.2} parent=43 // pred_fallthru
        _
    $region44: #{convnext_forward.2} parent=5 // pred_fallthru
      _
    %p318 = scmp.le.s32.totalorder 1, %s14
    %p319 = scmp.lt.s32.totalorder %s14, 3
    %p320 = pnand %p318, %p319
    %p321 = pneg %p320
    // Predicated region
    $region49: #{convnext_forward.2} parent=5 // pred_check
      _
    $region50: #{convnext_forward.2} parent=5 // pred_check_branch
      %323 = sbr.rel (%p320) target = $region52
    $region51: #{convnext_forward.2} parent=5 // pred_region
      %s324 = ssub.s32 %s14, 1
      %p325 = scmp.lt.s32.totalorder %s23, 1
      %s326 = scalar_select %p325, %s23, 1
      %s327 = smul.addr %s326, 16
      %s328 = smul.addr %s327, 4
      %s329 = scalar_lea.vmem %s0, %s328
      %p330 = pneg %p52
      %p331 = pneg %p49
      %p332 = pneg %p73
      %p333 = pneg %p70
      %p334 = pneg %p94
      %p335 = pneg %p91
      %p336 = scmp.lt.s32.totalorder %s24, 0
      %s337 = scalar_select %p336, %s24, 0
      %s338 = smul.addr %s337, 7
      %s339 = smul.addr %s338, 8
      %s340 = scalar_lea.vmem %s3, %s339
      %p341 = pneg %p120
      %p342 = pneg %p117
      %p343 = scmp.lt.s32.totalorder %s24, 0
      %s344 = scalar_select %p343, %s24, 0
      %s345 = smul.addr %s344, 8
      %s346 = scalar_lea.vmem %s4, %s345
      %p347 = pneg %p146
      %p348 = pneg %p143
      %p349 = scmp.lt.s32.totalorder %s24, 0
      %s350 = scalar_select %p349, %s24, 0
      %s351 = smul.addr %s350, 2
      %s352 = scalar_lea.vmem %s5, %s351
      %p353 = pneg %p172
      %p354 = pneg %p169
      %p355 = scmp.lt.s32.totalorder %s24, 0
      %s356 = scalar_select %p355, %s24, 0
      %s357 = scalar_lea.vmem %s6, %s356
      %p358 = pneg %p198
      %p359 = pneg %p195
      %p360 = scmp.lt.s32.totalorder %s24, 0
      %s361 = scalar_select %p360, %s24, 0
      %s362 = smul.addr %s361, 8
      %s363 = scalar_lea.vmem %s7, %s362
      %p364 = pneg %p224
      %p365 = pneg %p221
      %p366 = pneg %p250
      %p367 = pneg %p247
      %p368 = scmp.lt.s32.totalorder %s23, 1
      %s369 = scalar_select %p368, %s23, 1
      %s370 = smul.addr %s369, 4
      %s371 = smul.addr %s370, 4
      %s372 = scalar_lea.vmem %s8, %s371
      %p373 = scmp.lt.s32.totalorder %s23, 1
      %s374 = scalar_select %p373, %s23, 1
      %s375 = smul.addr %s374, 16
      %s376 = smul.addr %s375, 4
      %s377 = scalar_lea.vmem %s0, %s376
      %p378 = scmp.lt.s32.totalorder %s24, 0
      %s379 = scalar_select %p378, %s24, 0
      %s380 = smul.addr %s379, 7
      %s381 = smul.addr %s380, 8
      %s382 = scalar_lea.vmem %s3, %s381
      %p383 = scmp.lt.s32.totalorder %s24, 0
      %s384 = scalar_select %p383, %s24, 0
      %s385 = smul.addr %s384, 8
      %s386 = scalar_lea.vmem %s4, %s385
      %p387 = scmp.lt.s32.totalorder %s24, 0
      %s388 = scalar_select %p387, %s24, 0
      %s389 = smul.addr %s388, 2
      %s390 = scalar_lea.vmem %s5, %s389
      %p391 = scmp.lt.s32.totalorder %s24, 0
      %s392 = scalar_select %p391, %s24, 0
      %s393 = scalar_lea.vmem %s6, %s392
      %p394 = scmp.lt.s32.totalorder %s24, 0
      %s395 = scalar_select %p394, %s24, 0
      %s396 = smul.addr %s395, 8
      %s397 = scalar_lea.vmem %s7, %s396
      %p398 = scmp.lt.s32.totalorder %s23, 1
      %s399 = scalar_select %p398, %s23, 1
      %s400 = smul.addr %s399, 4
      %s401 = smul.addr %s400, 4
      %s402 = scalar_lea.vmem %s8, %s401
      %p403 = scmp.eq.s32.totalorder %s24, 0
      // Predicated region
      $region53: #{convnext_forward.2} parent=51 // pred_check
        %p404 = pneg %p403
      $region54: #{convnext_forward.2} parent=51 // pred_check_branch
        %406 = sbr.rel (%p404) target = $region56
      $region55: #{convnext_forward.2} parent=51 // pred_region
        %vm407 = vcmask 15360
        %408 = vst.msk [vmem:[#allocation3] sm:$0xff] %vm407, 0.0
        %vm409 = vcmask 9216
        %410 = vst.msk [vmem:[#allocation3 + $0x8] sm:$0x3] %vm409, 0.0
        %411 = vst.msk [vmem:[#allocation3 + $0x10] sm:$0xff] %vm407, 0.0
        %412 = vst.msk [vmem:[#allocation3 + $0x18] sm:$0x3] %vm409, 0.0
        %413 = vst.msk [vmem:[#allocation3 + $0x20] sm:$0xff] %vm407, 0.0
        %414 = vst.msk [vmem:[#allocation3 + $0x28] sm:$0x3] %vm409, 0.0
        %s415 = scalar_lea.vmem [#allocation3], 112
        %416 = vst.msk [vmem:[%s415] sm:$0xff] %vm407, 0.0
        %417 = vst.msk [vmem:[%s415 + $0x8] sm:$0x3] %vm409, 0.0
        %418 = vst.msk [vmem:[%s415 + $0x10] sm:$0xff] %vm407, 0.0
        %419 = vst.msk [vmem:[%s415 + $0x18] sm:$0x3] %vm409, 0.0
        %420 = vst.msk [vmem:[%s415 + $0x20] sm:$0xff] %vm407, 0.0
        %421 = vst.msk [vmem:[%s415 + $0x28] sm:$0x3] %vm409, 0.0
        %vm422 = vcmask 10240
        %423 = vst.msk [vmem:[#allocation3] sm:$0x7] %vm422, 0.0
        %424 = vst.msk [vmem:[#allocation3 + $0x10] sm:$0x7] %vm422, 0.0
        %425 = vst.msk [vmem:[#allocation3 + $0x20] sm:$0x7] %vm422, 0.0
        %426 = vst.msk [vmem:[#allocation3 + $0x30] sm:$0x7] %vm422, 0.0
        %427 = vst.msk [vmem:[#allocation3 + $0x40] sm:$0x7] %vm422, 0.0
        %428 = vst.msk [vmem:[#allocation3 + $0x50] sm:$0x7] %vm422, 0.0
        %429 = vst.msk [vmem:[#allocation3 + $0x60] sm:$0x7] %vm422, 0.0
        %430 = vst.msk [vmem:[#allocation3 + $0x70] sm:$0x7] %vm422, 0.0
        %431 = vst.msk [vmem:[#allocation3 + $0x80] sm:$0x7] %vm422, 0.0
        %432 = vst.msk [vmem:[#allocation3 + $0x90] sm:$0x7] %vm422, 0.0
        %433 = vst.msk [vmem:[#allocation3 + $0x7] sm:$0x7] %vm422, 0.0
        %434 = vst.msk [vmem:[#allocation3 + $0x17] sm:$0x7] %vm422, 0.0
        %435 = vst.msk [vmem:[#allocation3 + $0x27] sm:$0x7] %vm422, 0.0
        %436 = vst.msk [vmem:[#allocation3 + $0x37] sm:$0x7] %vm422, 0.0
        %437 = vst.msk [vmem:[#allocation3 + $0x47] sm:$0x7] %vm422, 0.0
        %438 = vst.msk [vmem:[#allocation3 + $0x57] sm:$0x7] %vm422, 0.0
        %439 = vst.msk [vmem:[#allocation3 + $0x67] sm:$0x7] %vm422, 0.0
        %440 = vst.msk [vmem:[#allocation3 + $0x77] sm:$0x7] %vm422, 0.0
        %441 = vst.msk [vmem:[#allocation3 + $0x87] sm:$0x7] %vm422, 0.0
        %442 = vst.msk [vmem:[#allocation3 + $0x97] sm:$0x7] %vm422, 0.0
        %v443 = vld [vmem:[%s377] sm:$0xf]
        %v444 = vld [vmem:[%s377 + $0x4] sm:$0xf]
        %v445 = vld [vmem:[%s377 + $0x8] sm:$0xf]
        %v446 = vld [vmem:[%s377 + $0xc] sm:$0xf]
        %v447 = vld [vmem:[%s377 + $0x10] sm:$0xf]
        %v448 = vld [vmem:[%s377 + $0x14] sm:$0xf]
        %v449 = vld [vmem:[%s377 + $0x18] sm:$0xf]
        %v450 = vld [vmem:[%s377 + $0x1c] sm:$0xf]
        %v451 = vld [vmem:[%s377 + $0x20] sm:$0xf]
        %v452 = vld [vmem:[%s377 + $0x24] sm:$0xf]
        %v453 = vld [vmem:[%s377 + $0x28] sm:$0xf]
        %v454 = vld [vmem:[%s377 + $0x2c] sm:$0xf]
        %v455 = vld [vmem:[%s377 + $0x30] sm:$0xf]
        %v456 = vld [vmem:[%s377 + $0x34] sm:$0xf]
        %v457 = vld [vmem:[%s377 + $0x38] sm:$0xf]
        %v458 = vld [vmem:[%s377 + $0x3c] sm:$0xf]
        %v459 = vld [vmem:[%s2] sm:$0x7]
        %v460 = vld [vmem:[%s1] sm:$0xff]
        %v461 = vld [vmem:[%s1 + $0x8] sm:$0xf]
        %s462 = scalar_lea.vmem %s1, 16
        %v463 = vld [vmem:[%s462] sm:$0xff]
        %v464 = vld [vmem:[%s462 + $0x8] sm:$0xf]
        %v469 = vcombine.low %v444, %v448
        %v470 = vcombine.low %v452, %v456
        %vm471 = vcmask 97280
        %v472 = vsel %vm471, %v469, 0
        %v474 = vsel %vm471, %v470, 0
        %vm476 = vcmask 1043456
        %v478 = vsel %vm476, %v464, 0
        %480 = vmatprep.subr.mxu0 0.0
        %481 = vmatpush1.msra.mxu0 %v463
        %482 = vmatprep.subr.mxu0 0.0
        %483 = vmatpush1.msra.mxu0 %v478
        %484 = vmatprep.subr.mxu0 0.0
        %485 = vmatpush1.msra.mxu0 0.0
        %486 = vmatprep.subr.mxu0 0.0
        %487 = vmatpush1.msra.mxu0 0.0
        %488 = vmatprep.subr.mxu0 0.0
        %489 = vmatpush1.msra.mxu0 0.0
        %490 = vmatprep.subr.mxu0 0.0
        %491 = vmatpush1.msra.mxu0 0.0
        %492 = vmatprep.subr.mxu0 0.0
        %493 = vmatpush1.msra.mxu0 0.0
        %494 = vmatprep.subr.mxu0 0.0
        %495 = vmatpush1.msra.mxu0 0.0
        %496 = vmatprep.subr.mxu0 0.0
        %497 = vmatpush1.msra.mxu0 0.0
        %498 = vmatprep.subr.mxu0 0.0
        %499 = vmatpush1.msra.mxu0 0.0
        %500 = vmatprep.subr.mxu0 0.0
        %501 = vmatpush1.msra.mxu0 0.0
        %502 = vmatprep.subr.mxu0 0.0
        %503 = vmatpush1.msra.mxu0 0.0
        %504 = vmatprep.subr.mxu0 0.0
        %505 = vmatpush1.msra.mxu0 0.0
        %506 = vmatprep.subr.mxu0 0.0
        %507 = vmatpush1.msra.mxu0 0.0
        %508 = vmatprep.subr.mxu0 0.0
        %509 = vmatpush1.msra.mxu0 0.0
        %510 = vmatprep.subr.mxu0 0.0
        %511 = vmatpush1.msra.mxu0 0.0
        %512 = vmatprep.subr.mxu0 0.0
        %513 = vmatpush1.msra.mxu0 0.0
        %514 = vmatprep.subr.mxu0 0.0
        %515 = vmatpush1.msra.mxu0 0.0
        %516 = vmatprep.subr.mxu0 0.0
        %517 = vmatpush1.msra.mxu0 0.0
        %518 = vmatprep.subr.mxu0 0.0
        %519 = vmatpush1.msra.mxu0 0.0
        %520 = vmatprep.subr.mxu0 0.0
        %521 = vmatpush1.msra.mxu0 0.0
        %522 = vmatprep.subr.mxu0 0.0
        %523 = vmatpush1.msra.mxu0 0.0
        %524 = vmatprep.subr.mxu0 0.0
        %525 = vmatpush1.msra.mxu0 0.0
        %526 = vmatprep.subr.mxu0 0.0
        %527 = vmatpush1.msra.mxu0 0.0
        %528 = vmatprep.subr.mxu0 0.0
        %529 = vmatpush1.msra.mxu0 0.0
        %530 = vmatprep.subr.mxu0 0.0
        %531 = vmatpush1.msra.mxu0 0.0
        %532 = vmatprep.subr.mxu0 0.0
        %533 = vmatpush1.msra.mxu0 0.0
        %534 = vmatprep.subr.mxu0 0.0
        %535 = vmatpush1.msra.mxu0 0.0
        %536 = vmatprep.subr.mxu0 0.0
        %537 = vmatpush1.msra.mxu0 0.0
        %538 = vmatprep.subr.mxu0 0.0
        %539 = vmatpush1.msra.mxu0 0.0
        %540 = vmatprep.subr.mxu0 0.0
        %541 = vmatpush1.msra.mxu0 0.0
        %542 = vmatprep.subr.mxu0 0.0
        %543 = vmatpush1.msra.mxu0 0.0
        %544 = vmatprep.mubr.f32.mxu0 0.0
        %545 = vmatmul.mubr.f32.gmra.mrb[0].mxu0 %v472
        %v546 = vpop.f32.mrb[0].mxu0
        %v547 = vadd.f32 0.0, %v546
        %v548 = vpop.f32.mrb[0].mxu0
        %549 = vmatprep.mubr.f32.mxu0 0.0
        %550 = vmatmul.mubr.f32.gmra.mrb[0].mxu0 %v474
        %v551 = vpop.f32.mrb[0].mxu0
        %v552 = vadd.f32 0.0, %v551
        %v553 = vpop.f32.mrb[0].mxu0
        %554 = vdwg.mxu0
        %v559 = vcombine.low %v443, %v447
        %v560 = vcombine.low %v451, %v455
        %v561 = vsel %vm471, %v559, 0
        %v563 = vsel %vm471, %v560, 0
        %v566 = vsel %vm476, %v461, 0
        %568 = vmatprep.subr.mxu0 0.0
        %569 = vmatpush1.msra.mxu0 %v460
        %570 = vmatprep.subr.mxu0 0.0
        %571 = vmatpush1.msra.mxu0 %v566
        %572 = vmatprep.subr.mxu0 0.0
        %573 = vmatpush1.msra.mxu0 0.0
        %574 = vmatprep.subr.mxu0 0.0
        %575 = vmatpush1.msra.mxu0 0.0
        %576 = vmatprep.subr.mxu0 0.0
        %577 = vmatpush1.msra.mxu0 0.0
        %578 = vmatprep.subr.mxu0 0.0
        %579 = vmatpush1.msra.mxu0 0.0
        %580 = vmatprep.subr.mxu0 0.0
        %581 = vmatpush1.msra.mxu0 0.0
        %582 = vmatprep.subr.mxu0 0.0
        %583 = vmatpush1.msra.mxu0 0.0
        %584 = vmatprep.subr.mxu0 0.0
        %585 = vmatpush1.msra.mxu0 0.0
        %586 = vmatprep.subr.mxu0 0.0
        %587 = vmatpush1.msra.mxu0 0.0
        %588 = vmatprep.subr.mxu0 0.0
        %589 = vmatpush1.msra.mxu0 0.0
        %590 = vmatprep.subr.mxu0 0.0
        %591 = vmatpush1.msra.mxu0 0.0
        %592 = vmatprep.subr.mxu0 0.0
        %593 = vmatpush1.msra.mxu0 0.0
        %594 = vmatprep.subr.mxu0 0.0
        %595 = vmatpush1.msra.mxu0 0.0
        %596 = vmatprep.subr.mxu0 0.0
        %597 = vmatpush1.msra.mxu0 0.0
        %598 = vmatprep.subr.mxu0 0.0
        %599 = vmatpush1.msra.mxu0 0.0
        %600 = vmatprep.subr.mxu0 0.0
        %601 = vmatpush1.msra.mxu0 0.0
        %602 = vmatprep.subr.mxu0 0.0
        %603 = vmatpush1.msra.mxu0 0.0
        %604 = vmatprep.subr.mxu0 0.0
        %605 = vmatpush1.msra.mxu0 0.0
        %606 = vmatprep.subr.mxu0 0.0
        %607 = vmatpush1.msra.mxu0 0.0
        %608 = vmatprep.subr.mxu0 0.0
        %609 = vmatpush1.msra.mxu0 0.0
        %610 = vmatprep.subr.mxu0 0.0
        %611 = vmatpush1.msra.mxu0 0.0
        %612 = vmatprep.subr.mxu0 0.0
        %613 = vmatpush1.msra.mxu0 0.0
        %614 = vmatprep.subr.mxu0 0.0
        %615 = vmatpush1.msra.mxu0 0.0
        %616 = vmatprep.subr.mxu0 0.0
        %617 = vmatpush1.msra.mxu0 0.0
        %618 = vmatprep.subr.mxu0 0.0
        %619 = vmatpush1.msra.mxu0 0.0
        %620 = vmatprep.subr.mxu0 0.0
        %621 = vmatpush1.msra.mxu0 0.0
        %622 = vmatprep.subr.mxu0 0.0
        %623 = vmatpush1.msra.mxu0 0.0
        %624 = vmatprep.subr.mxu0 0.0
        %625 = vmatpush1.msra.mxu0 0.0
        %626 = vmatprep.subr.mxu0 0.0
        %627 = vmatpush1.msra.mxu0 0.0
        %628 = vmatprep.subr.mxu0 0.0
        %629 = vmatpush1.msra.mxu0 0.0
        %630 = vmatprep.subr.mxu0 0.0
        %631 = vmatpush1.msra.mxu0 0.0
        %632 = vmatprep.mubr.f32.mxu0 0.0
        %633 = vmatmul.mubr.f32.gmra.mrb[0].mxu0 %v561
        %v634 = vpop.f32.mrb[0].mxu0
        %v635 = vadd.f32 %v547, %v634
        %v636 = vpop.f32.mrb[0].mxu0
        %637 = vmatprep.mubr.f32.mxu0 0.0
        %638 = vmatmul.mubr.f32.gmra.mrb[0].mxu0 %v563
        %v639 = vpop.f32.mrb[0].mxu0
        %v640 = vadd.f32 %v552, %v639
        %v641 = vpop.f32.mrb[0].mxu0
        %642 = vdwg.mxu0
        %s643 = scalar_lea.vmem %s1, 32
        %v644 = vld [vmem:[%s643] sm:$0xff]
        %v645 = vld [vmem:[%s643 + $0x8] sm:$0xf]
        %v650 = vcombine.low %v445, %v449
        %v651 = vcombine.low %v453, %v457
        %v652 = vsel %vm471, %v650, 0
        %v654 = vsel %vm471, %v651, 0
        %v657 = vsel %vm476, %v645, 0
        %659 = vmatprep.subr.mxu0 0.0
        %660 = vmatpush1.msra.mxu0 %v644
        %661 = vmatprep.subr.mxu0 0.0
        %662 = vmatpush1.msra.mxu0 %v657
        %663 = vmatprep.subr.mxu0 0.0
        %664 = vmatpush1.msra.mxu0 0.0
        %665 = vmatprep.subr.mxu0 0.0
        %666 = vmatpush1.msra.mxu0 0.0
        %667 = vmatprep.subr.mxu0 0.0
        %668 = vmatpush1.msra.mxu0 0.0
        %669 = vmatprep.subr.mxu0 0.0
        %670 = vmatpush1.msra.mxu0 0.0
        %671 = vmatprep.subr.mxu0 0.0
        %672 = vmatpush1.msra.mxu0 0.0
        %673 = vmatprep.subr.mxu0 0.0
        %674 = vmatpush1.msra.mxu0 0.0
        %675 = vmatprep.subr.mxu0 0.0
        %676 = vmatpush1.msra.mxu0 0.0
        %677 = vmatprep.subr.mxu0 0.0
        %678 = vmatpush1.msra.mxu0 0.0
        %679 = vmatprep.subr.mxu0 0.0
        %680 = vmatpush1.msra.mxu0 0.0
        %681 = vmatprep.subr.mxu0 0.0
        %682 = vmatpush1.msra.mxu0 0.0
        %683 = vmatprep.subr.mxu0 0.0
        %684 = vmatpush1.msra.mxu0 0.0
        %685 = vmatprep.subr.mxu0 0.0
        %686 = vmatpush1.msra.mxu0 0.0
        %687 = vmatprep.subr.mxu0 0.0
        %688 = vmatpush1.msra.mxu0 0.0
        %689 = vmatprep.subr.mxu0 0.0
        %690 = vmatpush1.msra.mxu0 0.0
        %691 = vmatprep.subr.mxu0 0.0
        %692 = vmatpush1.msra.mxu0 0.0
        %693 = vmatprep.subr.mxu0 0.0
        %694 = vmatpush1.msra.mxu0 0.0
        %695 = vmatprep.subr.mxu0 0.0
        %696 = vmatpush1.msra.mxu0 0.0
        %697 = vmatprep.subr.mxu0 0.0
        %698 = vmatpush1.msra.mxu0 0.0
        %699 = vmatprep.subr.mxu0 0.0
        %700 = vmatpush1.msra.mxu0 0.0
        %701 = vmatprep.subr.mxu0 0.0
        %702 = vmatpush1.msra.mxu0 0.0
        %703 = vmatprep.subr.mxu0 0.0
        %704 = vmatpush1.msra.mxu0 0.0
        %705 = vmatprep.subr.mxu0 0.0
        %706 = vmatpush1.msra.mxu0 0.0
        %707 = vmatprep.subr.mxu0 0.0
        %708 = vmatpush1.msra.mxu0 0.0
        %709 = vmatprep.subr.mxu0 0.0
        %710 = vmatpush1.msra.mxu0 0.0
        %711 = vmatprep.subr.mxu0 0.0
        %712 = vmatpush1.msra.mxu0 0.0
        %713 = vmatprep.subr.mxu0 0.0
        %714 = vmatpush1.msra.mxu0 0.0
        %715 = vmatprep.subr.mxu0 0.0
        %716 = vmatpush1.msra.mxu0 0.0
        %717 = vmatprep.subr.mxu0 0.0
        %718 = vmatpush1.msra.mxu0 0.0
        %719 = vmatprep.subr.mxu0 0.0
        %720 = vmatpush1.msra.mxu0 0.0
        %721 = vmatprep.subr.mxu0 0.0
        %722 = vmatpush1.msra.mxu0 0.0
        %723 = vmatprep.mubr.f32.mxu0 0.0
        %724 = vmatmul.mubr.f32.gmra.mrb[0].mxu0 %v652
        %v725 = vpop.f32.mrb[0].mxu0
        %v726 = vadd.f32 0.0, %v725
        %v727 = vpop.f32.mrb[0].mxu0
        %728 = vmatprep.mubr.f32.mxu0 0.0
        %729 = vmatmul.mubr.f32.gmra.mrb[0].mxu0 %v654
        %v730 = vpop.f32.mrb[0].mxu0
        %v731 = vadd.f32 0.0, %v730
        %v732 = vpop.f32.mrb[0].mxu0
        %733 = vdwg.mxu0
        %v734 = vadd.f32 %v635, %v726
        %v735 = vadd.f32 %v640, %v731
        %s736 = scalar_lea.vmem %s1, 48
        %v737 = vld [vmem:[%s736] sm:$0xff]
        %v738 = vld [vmem:[%s736 + $0x8] sm:$0xf]
        %v743 = vcombine.low %v446, %v450
        %v744 = vcombine.low %v454, %v458
        %v745 = vsel %vm471, %v743, 0
        %v747 = vsel %vm471, %v744, 0
        %v750 = vsel %vm476, %v738, 0
        %752 = vmatprep.subr.mxu0 0.0
        %753 = vmatpush1.msra.mxu0 %v737
        %754 = vmatprep.subr.mxu0 0.0
        %755 = vmatpush1.msra.mxu0 %v750
        %756 = vmatprep.subr.mxu0 0.0
        %757 = vmatpush1.msra.mxu0 0.0
        %758 = vmatprep.subr.mxu0 0.0
        %759 = vmatpush1.msra.mxu0 0.0
        %760 = vmatprep.subr.mxu0 0.0
        %761 = vmatpush1.msra.mxu0 0.0
        %762 = vmatprep.subr.mxu0 0.0
        %763 = vmatpush1.msra.mxu0 0.0
        %764 = vmatprep.subr.mxu0 0.0
        %765 = vmatpush1.msra.mxu0 0.0
        %766 = vmatprep.subr.mxu0 0.0
        %767 = vmatpush1.msra.mxu0 0.0
        %768 = vmatprep.subr.mxu0 0.0
        %769 = vmatpush1.msra.mxu0 0.0
        %770 = vmatprep.subr.mxu0 0.0
        %771 = vmatpush1.msra.mxu0 0.0
        %772 = vmatprep.subr.mxu0 0.0
        %773 = vmatpush1.msra.mxu0 0.0
        %774 = vmatprep.subr.mxu0 0.0
        %775 = vmatpush1.msra.mxu0 0.0
        %776 = vmatprep.subr.mxu0 0.0
        %777 = vmatpush1.msra.mxu0 0.0
        %778 = vmatprep.subr.mxu0 0.0
        %779 = vmatpush1.msra.mxu0 0.0
        %780 = vmatprep.subr.mxu0 0.0
        %781 = vmatpush1.msra.mxu0 0.0
        %782 = vmatprep.subr.mxu0 0.0
        %783 = vmatpush1.msra.mxu0 0.0
        %784 = vmatprep.subr.mxu0 0.0
        %785 = vmatpush1.msra.mxu0 0.0
        %786 = vmatprep.subr.mxu0 0.0
        %787 = vmatpush1.msra.mxu0 0.0
        %788 = vmatprep.subr.mxu0 0.0
        %789 = vmatpush1.msra.mxu0 0.0
        %790 = vmatprep.subr.mxu0 0.0
        %791 = vmatpush1.msra.mxu0 0.0
        %792 = vmatprep.subr.mxu0 0.0
        %793 = vmatpush1.msra.mxu0 0.0
        %794 = vmatprep.subr.mxu0 0.0
        %795 = vmatpush1.msra.mxu0 0.0
        %796 = vmatprep.subr.mxu0 0.0
        %797 = vmatpush1.msra.mxu0 0.0
        %798 = vmatprep.subr.mxu0 0.0
        %799 = vmatpush1.msra.mxu0 0.0
        %800 = vmatprep.subr.mxu0 0.0
        %801 = vmatpush1.msra.mxu0 0.0
        %802 = vmatprep.subr.mxu0 0.0
        %803 = vmatpush1.msra.mxu0 0.0
        %804 = vmatprep.subr.mxu0 0.0
        %805 = vmatpush1.msra.mxu0 0.0
        %806 = vmatprep.subr.mxu0 0.0
        %807 = vmatpush1.msra.mxu0 0.0
        %808 = vmatprep.subr.mxu0 0.0
        %809 = vmatpush1.msra.mxu0 0.0
        %810 = vmatprep.subr.mxu0 0.0
        %811 = vmatpush1.msra.mxu0 0.0
        %812 = vmatprep.subr.mxu0 0.0
        %813 = vmatpush1.msra.mxu0 0.0
        %814 = vmatprep.subr.mxu0 0.0
        %815 = vmatpush1.msra.mxu0 0.0
        %816 = vmatprep.mubr.f32.mxu0 0.0
        %817 = vmatmul.mubr.f32.gmra.mrb[0].mxu0 %v745
        %v818 = vpop.f32.mrb[0].mxu0
        %v819 = vadd.f32 0.0, %v818
        %v820 = vpop.f32.mrb[0].mxu0
        %821 = vmatprep.mubr.f32.mxu0 0.0
        %822 = vmatmul.mubr.f32.gmra.mrb[0].mxu0 %v747
        %v823 = vpop.f32.mrb[0].mxu0
        %v824 = vadd.f32 0.0, %v823
        %v825 = vpop.f32.mrb[0].mxu0
        %826 = vdwg.mxu0
        %v827 = vadd.f32 %v734, %v819
        %v828 = vadd.f32 %v735, %v824
        %v829 = vlaneseq
        %v830 = vshrl.u32 %v829, 7
        %v831 = vsub.s32 0, %v830
        %v832 = vrot.slane %v459, %v831
        %v833 = vadd.f32 %v827, %v832
        %v834 = vadd.f32 %v828, %v832
        %v835 = vsel %vm407, %v833, 0.0
        %836 = vadd.xlane.f32.xlu0 %v835
        %v837 = vpop.xlane.xlu0 %836
        %v838 = vsel %vm407, %v834, 0.0
        %839 = vadd.xlane.f32.xlu0 %v838
        %v840 = vpop.xlane.xlu0 %839
        %v841 = vrcp.pop 2.0
        %v842 = vmul.f32 %v837, %v841
        %v843 = vmul.f32 %v840, %v841
        %v844 = vsub.f32 %v833, %v842
        %v845 = vsub.f32 %v834, %v843
        %v846 = vmul.f32 %v844, %v844
        %v847 = vmul.f32 %v845, %v845
        %v848 = vsel %vm407, %v846, 0.0
        %849 = vadd.xlane.f32.xlu0 %v848
        %v850 = vpop.xlane.xlu0 %849
        %v851 = vsel %vm407, %v847, 0.0
        %852 = vadd.xlane.f32.xlu0 %v851
        %v853 = vpop.xlane.xlu0 %852
        %v854 = vmul.f32 %v850, %v841
        %v855 = vmul.f32 %v853, %v841
        %v856 = vadd.f32 %v854, 1e-06
        %v857 = vadd.f32 %v855, 1e-06
        %v858 = vrsqrt.pop %v856
        %v859 = vrsqrt.pop %v857
        %v860 = vmul.f32 %v844, %v858
        %v861 = vmul.f32 %v845, %v859
        %v862 = vlaneseq
        %v863 = vshrl.u32 %v862, 7
        %v864 = vsub.s32 1, %v863
        %v865 = vrot.slane %v459, %v864
        %v866 = vmul.f32 %v865, %v860
        %v867 = vmul.f32 %v865, %v861
        %v868 = vlaneseq
        %v869 = vshrl.u32 %v868, 7
        %v870 = vsub.s32 2, %v869
        %v871 = vrot.slane %v459, %v870
        %v872 = vadd.f32 %v866, %v871
        %v873 = vadd.f32 %v867, %v871
        %v876 = vcombine.high %v872, %v872
        %v877 = vcombine.high %v873, %v873
        %vm880 = vcmask 11264
        %881 = vst.msk [vmem:[#allocation2] sm:$0xf] %vm880, %v872
        %882 = vst.msk [vmem:[#allocation2 + $0x4] sm:$0xf] %vm880, %v876
        %883 = vst.msk [vmem:[#allocation2 + $0x8] sm:$0xf] %vm880, %v873
        %884 = vst.msk [vmem:[#allocation2 + $0xc] sm:$0xf] %vm880, %v877
      $region56: #{convnext_forward.2} parent=51 // pred_fallthru
        _
      %v885 = vld [vmem:[#allocation2] sm:$0xf]
      %v886 = vld [vmem:[#allocation2 + $0x4] sm:$0xf]
      %v887 = vld [vmem:[#allocation2 + $0x8] sm:$0xf]
      %v888 = vld [vmem:[#allocation2 + $0xc] sm:$0xf]
      %s889 = scalar_lea.vmem [#allocation3], 48
      %vm890 = vcmask 11264
      %891 = vst.msk [vmem:[%s889 + $0x3] sm:$0xf] %vm890, %v885
      %892 = vst.msk [vmem:[%s889 + $0x13] sm:$0xf] %vm890, %v886
      %893 = vst.msk [vmem:[%s889 + $0x23] sm:$0xf] %vm890, %v887
      %894 = vst.msk [vmem:[%s889 + $0x33] sm:$0xf] %vm890, %v888
      %v895 = vld [vmem:[%s382] sm:$0xff]
      %v896 = vld [vmem:[%s382 + $0x8] sm:$0xff]
      %v897 = vld [vmem:[%s382 + $0x10] sm:$0xff]
      %v898 = vld [vmem:[%s382 + $0x18] sm:$0xff]
      %v899 = vld [vmem:[%s382 + $0x20] sm:$0xff]
      %v900 = vld [vmem:[%s382 + $0x28] sm:$0xff]
      %v901 = vld [vmem:[%s382 + $0x30] sm:$0x1]
      %v902 = vld [vmem:[%s386] sm:$0x1f]
      %v903 = vld [vmem:[#allocation3] sm:$0xff]
      %v904 = vld [vmem:[#allocation3 + $0x8] sm:$0x3]
      %v905 = vld [vmem:[#allocation3 + $0x10] sm:$0xff]
      %v906 = vld [vmem:[#allocation3 + $0x18] sm:$0x3]
      %v907 = vld [vmem:[#allocation3 + $0x20] sm:$0xff]
      %v908 = vld [vmem:[#allocation3 + $0x28] sm:$0x3]
      %v909 = vld [vmem:[#allocation3 + $0x30] sm:$0xff]
      %v910 = vld [vmem:[#allocation3 + $0x38] sm:$0x3]
      %v911 = vlaneseq
      %v912 = vshrl.u32 %v911, 7
      %v913 = vsub.s32 0, %v912
      %v914 = vrot.slane %v895, %v913
      %v915 = vmul.f32 %v903, %v914
      %v916 = vmul.f32 %v905, %v914
      %v917 = vmul.f32 %v907, %v914
      %v918 = vmul.f32 %v909, %v914
      %v919 = vadd.f32 %v915, 0.0
      %v920 = vadd.f32 %v916, 0.0
      %v921 = vadd.f32 %v917, 0.0
      %v922 = vadd.f32 %v918, 0.0
      %v923 = vlaneseq
      %v924 = vshrl.u32 %v923, 7
      %v925 = vsub.s32 1, %v924
      %v926 = vrot.slane %v895, %v925
      %v927 = vmul.f32 %v903, %v926
      %v928 = vmul.f32 %v905, %v926
      %v929 = vmul.f32 %v907, %v926
      %v930 = vmul.f32 %v909, %v926
      %v935 = vrot.slane %v927, 1
      %v936 = vrot.slane %v928, 1
      %v937 = vrot.slane %v929, 1
      %v938 = vrot.slane %v930, 1
      %v943 = vadd.f32 %v919, %v935
      %v944 = vadd.f32 %v920, %v936
      %v945 = vadd.f32 %v921, %v937
      %v946 = vadd.f32 %v922, %v938
      %v947 = vlaneseq
      %v948 = vshrl.u32 %v947, 7
      %v949 = vsub.s32 2, %v948
      %v950 = vrot.slane %v895, %v949
      %v951 = vmul.f32 %v903, %v950
      %v952 = vmul.f32 %v905, %v950
      %v953 = vmul.f32 %v907, %v950
      %v954 = vmul.f32 %v909, %v950
      %v959 = vrot.slane %v951, 2
      %v960 = vrot.slane %v952, 2
      %v961 = vrot.slane %v953, 2
      %v962 = vrot.slane %v954, 2
      %v967 = vadd.f32 %v943, %v959
      %v968 = vadd.f32 %v944, %v960
      %v969 = vadd.f32 %v945, %v961
      %v970 = vadd.f32 %v946, %v962
      %v971 = vlaneseq
      %v972 = vshrl.u32 %v971, 7
      %v973 = vsub.s32 3, %v972
      %v974 = vrot.slane %v895, %v973
      %v975 = vmul.f32 %v903, %v974
      %v976 = vmul.f32 %v905, %v974
      %v977 = vmul.f32 %v907, %v974
      %v978 = vmul.f32 %v909, %v974
      %v983 = vrot.slane %v975, 3
      %v984 = vrot.slane %v976, 3
      %v985 = vrot.slane %v977, 3
      %v986 = vrot.slane %v978, 3
      %v991 = vadd.f32 %v967, %v983
      %v992 = vadd.f32 %v968, %v984
      %v993 = vadd.f32 %v969, %v985
      %v994 = vadd.f32 %v970, %v986
      %v995 = vlaneseq
      %v996 = vshrl.u32 %v995, 7
      %v997 = vsub.s32 4, %v996
      %v998 = vrot.slane %v895, %v997
      %v999 = vmul.f32 %v903, %v998
      %v1000 = vmul.f32 %v905, %v998
      %v1001 = vmul.f32 %v907, %v998
      %v1002 = vmul.f32 %v909, %v998
      %v1007 = vrot.slane %v999, 4
      %v1008 = vrot.slane %v1000, 4
      %v1009 = vrot.slane %v1001, 4
      %v1010 = vrot.slane %v1002, 4
      %v1015 = vadd.f32 %v991, %v1007
      %v1016 = vadd.f32 %v992, %v1008
      %v1017 = vadd.f32 %v993, %v1009
      %v1018 = vadd.f32 %v994, %v1010
      %v1019 = vlaneseq
      %v1020 = vshrl.u32 %v1019, 7
      %v1021 = vsub.s32 5, %v1020
      %v1022 = vrot.slane %v895, %v1021
      %v1023 = vmul.f32 %v903, %v1022
      %v1024 = vmul.f32 %v904, %v1022
      %v1025 = vmul.f32 %v905, %v1022
      %v1026 = vmul.f32 %v906, %v1022
      %v1027 = vmul.f32 %v907, %v1022
      %v1028 = vmul.f32 %v908, %v1022
      %v1029 = vmul.f32 %v909, %v1022
      %v1030 = vmul.f32 %v910, %v1022
      %vm1039 = vcmask 1042432
      %v1040 = vrot.slane %v1023, 5
      %v1041 = vrot.slane %v1024, 5
      %v1042 = vsel %vm1039, %v1040, %v1041
      %v1043 = vrot.slane %v1025, 5
      %v1044 = vrot.slane %v1026, 5
      %v1045 = vsel %vm1039, %v1043, %v1044
      %v1046 = vrot.slane %v1027, 5
      %v1047 = vrot.slane %v1028, 5
      %v1048 = vsel %vm1039, %v1046, %v1047
      %v1049 = vrot.slane %v1029, 5
      %v1050 = vrot.slane %v1030, 5
      %v1051 = vsel %vm1039, %v1049, %v1050
      %v1056 = vadd.f32 %v1015, %v1042
      %v1057 = vadd.f32 %v1016, %v1045
      %v1058 = vadd.f32 %v1017, %v1048
      %v1059 = vadd.f32 %v1018, %v1051
      %v1060 = vlaneseq
      %v1061 = vshrl.u32 %v1060, 7
      %v1062 = vsub.s32 6, %v1061
      %v1063 = vrot.slane %v895, %v1062
      %v1064 = vmul.f32 %v903, %v1063
      %v1065 = vmul.f32 %v904, %v1063
      %v1066 = vmul.f32 %v905, %v1063
      %v1067 = vmul.f32 %v906, %v1063
      %v1068 = vmul.f32 %v907, %v1063
      %v1069 = vmul.f32 %v908, %v1063
      %v1070 = vmul.f32 %v909, %v1063
      %v1071 = vmul.f32 %v910, %v1063
      %vm1080 = vcmask 1041408
      %v1081 = vrot.slane %v1064, 6
      %v1082 = vrot.slane %v1065, 6
      %v1083 = vsel %vm1080, %v1081, %v1082
      %v1084 = vrot.slane %v1066, 6
      %v1085 = vrot.slane %v1067, 6
      %v1086 = vsel %vm1080, %v1084, %v1085
      %v1087 = vrot.slane %v1068, 6
      %v1088 = vrot.slane %v1069, 6
      %v1089 = vsel %vm1080, %v1087, %v1088
      %v1090 = vrot.slane %v1070, 6
      %v1091 = vrot.slane %v1071, 6
      %v1092 = vsel %vm1080, %v1090, %v1091
      %v1097 = vadd.f32 %v1056, %v1083
      %v1098 = vadd.f32 %v1057, %v1086
      %v1099 = vadd.f32 %v1058, %v1089
      %v1100 = vadd.f32 %v1059, %v1092
      %s1101 = scalar_lea.vmem [#allocation3], 16
      %v1102 = vld [vmem:[%s1101] sm:$0xff]
      %v1103 = vld [vmem:[%s1101 + $0x8] sm:$0x3]
      %v1104 = vld [vmem:[%s1101 + $0x10] sm:$0xff]
      %v1105 = vld [vmem:[%s1101 + $0x18] sm:$0x3]
      %v1106 = vld [vmem:[%s1101 + $0x20] sm:$0xff]
      %v1107 = vld [vmem:[%s1101 + $0x28] sm:$0x3]
      %v1108 = vld [vmem:[%s1101 + $0x30] sm:$0xff]
      %v1109 = vld [vmem:[%s1101 + $0x38] sm:$0x3]
      %v1110 = vlaneseq
      %v1111 = vshrl.u32 %v1110, 7
      %v1112 = vsub.s32 7, %v1111
      %v1113 = vrot.slane %v895, %v1112
      %v1114 = vmul.f32 %v1102, %v1113
      %v1115 = vmul.f32 %v1104, %v1113
      %v1116 = vmul.f32 %v1106, %v1113
      %v1117 = vmul.f32 %v1108, %v1113
      %v1118 = vadd.f32 %v1097, %v1114
      %v1119 = vadd.f32 %v1098, %v1115
      %v1120 = vadd.f32 %v1099, %v1116
      %v1121 = vadd.f32 %v1100, %v1117
      %v1122 = vlaneseq
      %v1123 = vshrl.u32 %v1122, 7
      %v1124 = vsub.s32 0, %v1123
      %v1125 = vrot.slane %v896, %v1124
      %v1126 = vmul.f32 %v1102, %v1125
      %v1127 = vmul.f32 %v1104, %v1125
      %v1128 = vmul.f32 %v1106, %v1125
      %v1129 = vmul.f32 %v1108, %v1125
      %v1134 = vrot.slane %v1126, 1
      %v1135 = vrot.slane %v1127, 1
      %v1136 = vrot.slane %v1128, 1
      %v1137 = vrot.slane %v1129, 1
      %v1142 = vadd.f32 %v1118, %v1134
      %v1143 = vadd.f32 %v1119, %v1135
      %v1144 = vadd.f32 %v1120, %v1136
      %v1145 = vadd.f32 %v1121, %v1137
      %v1146 = vlaneseq
      %v1147 = vshrl.u32 %v1146, 7
      %v1148 = vsub.s32 1, %v1147
      %v1149 = vrot.slane %v896, %v1148
      %v1150 = vmul.f32 %v1102, %v1149
      %v1151 = vmul.f32 %v1104, %v1149
      %v1152 = vmul.f32 %v1106, %v1149
      %v1153 = vmul.f32 %v1108, %v1149
      %v1158 = vrot.slane %v1150, 2
      %v1159 = vrot.slane %v1151, 2
      %v1160 = vrot.slane %v1152, 2
      %v1161 = vrot.slane %v1153, 2
      %v1166 = vadd.f32 %v1142, %v1158
      %v1167 = vadd.f32 %v1143, %v1159
      %v1168 = vadd.f32 %v1144, %v1160
      %v1169 = vadd.f32 %v1145, %v1161
      %v1170 = vlaneseq
      %v1171 = vshrl.u32 %v1170, 7
      %v1172 = vsub.s32 2, %v1171
      %v1173 = vrot.slane %v896, %v1172
      %v1174 = vmul.f32 %v1102, %v1173
      %v1175 = vmul.f32 %v1104, %v1173
      %v1176 = vmul.f32 %v1106, %v1173
      %v1177 = vmul.f32 %v1108, %v1173
      %v1182 = vrot.slane %v1174, 3
      %v1183 = vrot.slane %v1175, 3
      %v1184 = vrot.slane %v1176, 3
      %v1185 = vrot.slane %v1177, 3
      %v1190 = vadd.f32 %v1166, %v1182
      %v1191 = vadd.f32 %v1167, %v1183
      %v1192 = vadd.f32 %v1168, %v1184
      %v1193 = vadd.f32 %v1169, %v1185
      %v1194 = vlaneseq
      %v1195 = vshrl.u32 %v1194, 7
      %v1196 = vsub.s32 3, %v1195
      %v1197 = vrot.slane %v896, %v1196
      %v1198 = vmul.f32 %v1102, %v1197
      %v1199 = vmul.f32 %v1104, %v1197
      %v1200 = vmul.f32 %v1106, %v1197
      %v1201 = vmul.f32 %v1108, %v1197
      %v1206 = vrot.slane %v1198, 4
      %v1207 = vrot.slane %v1199, 4
      %v1208 = vrot.slane %v1200, 4
      %v1209 = vrot.slane %v1201, 4
      %v1214 = vadd.f32 %v1190, %v1206
      %v1215 = vadd.f32 %v1191, %v1207
      %v1216 = vadd.f32 %v1192, %v1208
      %v1217 = vadd.f32 %v1193, %v1209
      %v1218 = vlaneseq
      %v1219 = vshrl.u32 %v1218, 7
      %v1220 = vsub.s32 4, %v1219
      %v1221 = vrot.slane %v896, %v1220
      %v1222 = vmul.f32 %v1102, %v1221
      %v1223 = vmul.f32 %v1103, %v1221
      %v1224 = vmul.f32 %v1104, %v1221
      %v1225 = vmul.f32 %v1105, %v1221
      %v1226 = vmul.f32 %v1106, %v1221
      %v1227 = vmul.f32 %v1107, %v1221
      %v1228 = vmul.f32 %v1108, %v1221
      %v1229 = vmul.f32 %v1109, %v1221
      %v1238 = vrot.slane %v1222, 5
      %v1239 = vrot.slane %v1223, 5
      %v1240 = vsel %vm1039, %v1238, %v1239
      %v1241 = vrot.slane %v1224, 5
      %v1242 = vrot.slane %v1225, 5
      %v1243 = vsel %vm1039, %v1241, %v1242
      %v1244 = vrot.slane %v1226, 5
      %v1245 = vrot.slane %v1227, 5
      %v1246 = vsel %vm1039, %v1244, %v1245
      %v1247 = vrot.slane %v1228, 5
      %v1248 = vrot.slane %v1229, 5
      %v1249 = vsel %vm1039, %v1247, %v1248
      %v1254 = vadd.f32 %v1214, %v1240
      %v1255 = vadd.f32 %v1215, %v1243
      %v1256 = vadd.f32 %v1216, %v1246
      %v1257 = vadd.f32 %v1217, %v1249
      %v1258 = vlaneseq
      %v1259 = vshrl.u32 %v1258, 7
      %v1260 = vsub.s32 5, %v1259
      %v1261 = vrot.slane %v896, %v1260
      %v1262 = vmul.f32 %v1102, %v1261
      %v1263 = vmul.f32 %v1103, %v1261
      %v1264 = vmul.f32 %v1104, %v1261
      %v1265 = vmul.f32 %v1105, %v1261
      %v1266 = vmul.f32 %v1106, %v1261
      %v1267 = vmul.f32 %v1107, %v1261
      %v1268 = vmul.f32 %v1108, %v1261
      %v1269 = vmul.f32 %v1109, %v1261
      %v1278 = vrot.slane %v1262, 6
      %v1279 = vrot.slane %v1263, 6
      %v1280 = vsel %vm1080, %v1278, %v1279
      %v1281 = vrot.slane %v1264, 6
      %v1282 = vrot.slane %v1265, 6
      %v1283 = vsel %vm1080, %v1281, %v1282
      %v1284 = vrot.slane %v1266, 6
      %v1285 = vrot.slane %v1267, 6
      %v1286 = vsel %vm1080, %v1284, %v1285
      %v1287 = vrot.slane %v1268, 6
      %v1288 = vrot.slane %v1269, 6
      %v1289 = vsel %vm1080, %v1287, %v1288
      %v1294 = vadd.f32 %v1254, %v1280
      %v1295 = vadd.f32 %v1255, %v1283
      %v1296 = vadd.f32 %v1256, %v1286
      %v1297 = vadd.f32 %v1257, %v1289
      %s1298 = scalar_lea.vmem [#allocation3], 32
      %v1299 = vld [vmem:[%s1298] sm:$0xff]
      %v1300 = vld [vmem:[%s1298 + $0x8] sm:$0x3]
      %v1301 = vld [vmem:[%s1298 + $0x10] sm:$0xff]
      %v1302 = vld [vmem:[%s1298 + $0x18] sm:$0x3]
      %v1303 = vld [vmem:[%s1298 + $0x20] sm:$0xff]
      %v1304 = vld [vmem:[%s1298 + $0x28] sm:$0x3]
      %v1305 = vld [vmem:[%s1298 + $0x30] sm:$0xff]
      %v1306 = vld [vmem:[%s1298 + $0x38] sm:$0x3]
      %v1307 = vlaneseq
      %v1308 = vshrl.u32 %v1307, 7
      %v1309 = vsub.s32 6, %v1308
      %v1310 = vrot.slane %v896, %v1309
      %v1311 = vmul.f32 %v1299, %v1310
      %v1312 = vmul.f32 %v1301, %v1310
      %v1313 = vmul.f32 %v1303, %v1310
      %v1314 = vmul.f32 %v1305, %v1310
      %v1315 = vadd.f32 %v1294, %v1311
      %v1316 = vadd.f32 %v1295, %v1312
      %v1317 = vadd.f32 %v1296, %v1313
      %v1318 = vadd.f32 %v1297, %v1314
      %v1319 = vlaneseq
      %v1320 = vshrl.u32 %v1319, 7
      %v1321 = vsub.s32 7, %v1320
      %v1322 = vrot.slane %v896, %v1321
      %v1323 = vmul.f32 %v1299, %v1322
      %v1324 = vmul.f32 %v1301, %v1322
      %v1325 = vmul.f32 %v1303, %v1322
      %v1326 = vmul.f32 %v1305, %v1322
      %v1331 = vrot.slane %v1323, 1
      %v1332 = vrot.slane %v1324, 1
      %v1333 = vrot.slane %v1325, 1
      %v1334 = vrot.slane %v1326, 1
      %v1339 = vadd.f32 %v1315, %v1331
      %v1340 = vadd.f32 %v1316, %v1332
      %v1341 = vadd.f32 %v1317, %v1333
      %v1342 = vadd.f32 %v1318, %v1334
      %v1343 = vlaneseq
      %v1344 = vshrl.u32 %v1343, 7
      %v1345 = vsub.s32 0, %v1344
      %v1346 = vrot.slane %v897, %v1345
      %v1347 = vmul.f32 %v1299, %v1346
      %v1348 = vmul.f32 %v1301, %v1346
      %v1349 = vmul.f32 %v1303, %v1346
      %v1350 = vmul.f32 %v1305, %v1346
      %v1355 = vrot.slane %v1347, 2
      %v1356 = vrot.slane %v1348, 2
      %v1357 = vrot.slane %v1349, 2
      %v1358 = vrot.slane %v1350, 2
      %v1363 = vadd.f32 %v1339, %v1355
      %v1364 = vadd.f32 %v1340, %v1356
      %v1365 = vadd.f32 %v1341, %v1357
      %v1366 = vadd.f32 %v1342, %v1358
      %v1367 = vlaneseq
      %v1368 = vshrl.u32 %v1367, 7
      %v1369 = vsub.s32 1, %v1368
      %v1370 = vrot.slane %v897, %v1369
      %v1371 = vmul.f32 %v1299, %v1370
      %v1372 = vmul.f32 %v1301, %v1370
      %v1373 = vmul.f32 %v1303, %v1370
      %v1374 = vmul.f32 %v1305, %v1370
      %v1379 = vrot.slane %v1371, 3
      %v1380 = vrot.slane %v1372, 3
      %v1381 = vrot.slane %v1373, 3
      %v1382 = vrot.slane %v1374, 3
      %v1387 = vadd.f32 %v1363, %v1379
      %v1388 = vadd.f32 %v1364, %v1380
      %v1389 = vadd.f32 %v1365, %v1381
      %v1390 = vadd.f32 %v1366, %v1382
      %v1391 = vlaneseq
      %v1392 = vshrl.u32 %v1391, 7
      %v1393 = vsub.s32 2, %v1392
      %v1394 = vrot.slane %v897, %v1393
      %v1395 = vmul.f32 %v1299, %v1394
      %v1396 = vmul.f32 %v1301, %v1394
      %v1397 = vmul.f32 %v1303, %v1394
      %v1398 = vmul.f32 %v1305, %v1394
      %v1403 = vrot.slane %v1395, 4
      %v1404 = vrot.slane %v1396, 4
      %v1405 = vrot.slane %v1397, 4
      %v1406 = vrot.slane %v1398, 4
      %v1411 = vadd.f32 %v1387, %v1403
      %v1412 = vadd.f32 %v1388, %v1404
      %v1413 = vadd.f32 %v1389, %v1405
      %v1414 = vadd.f32 %v1390, %v1406
      %v1415 = vlaneseq
      %v1416 = vshrl.u32 %v1415, 7
      %v1417 = vsub.s32 3, %v1416
      %v1418 = vrot.slane %v897, %v1417
      %v1419 = vmul.f32 %v1299, %v1418
      %v1420 = vmul.f32 %v1300, %v1418
      %v1421 = vmul.f32 %v1301, %v1418
      %v1422 = vmul.f32 %v1302, %v1418
      %v1423 = vmul.f32 %v1303, %v1418
      %v1424 = vmul.f32 %v1304, %v1418
      %v1425 = vmul.f32 %v1305, %v1418
      %v1426 = vmul.f32 %v1306, %v1418
      %v1435 = vrot.slane %v1419, 5
      %v1436 = vrot.slane %v1420, 5
      %v1437 = vsel %vm1039, %v1435, %v1436
      %v1438 = vrot.slane %v1421, 5
      %v1439 = vrot.slane %v1422, 5
      %v1440 = vsel %vm1039, %v1438, %v1439
      %v1441 = vrot.slane %v1423, 5
      %v1442 = vrot.slane %v1424, 5
      %v1443 = vsel %vm1039, %v1441, %v1442
      %v1444 = vrot.slane %v1425, 5
      %v1445 = vrot.slane %v1426, 5
      %v1446 = vsel %vm1039, %v1444, %v1445
      %v1451 = vadd.f32 %v1411, %v1437
      %v1452 = vadd.f32 %v1412, %v1440
      %v1453 = vadd.f32 %v1413, %v1443
      %v1454 = vadd.f32 %v1414, %v1446
      %v1455 = vlaneseq
      %v1456 = vshrl.u32 %v1455, 7
      %v1457 = vsub.s32 4, %v1456
      %v1458 = vrot.slane %v897, %v1457
      %v1459 = vmul.f32 %v1299, %v1458
      %v1460 = vmul.f32 %v1300, %v1458
      %v1461 = vmul.f32 %v1301, %v1458
      %v1462 = vmul.f32 %v1302, %v1458
      %v1463 = vmul.f32 %v1303, %v1458
      %v1464 = vmul.f32 %v1304, %v1458
      %v1465 = vmul.f32 %v1305, %v1458
      %v1466 = vmul.f32 %v1306, %v1458
      %v1475 = vrot.slane %v1459, 6
      %v1476 = vrot.slane %v1460, 6
      %v1477 = vsel %vm1080, %v1475, %v1476
      %v1478 = vrot.slane %v1461, 6
      %v1479 = vrot.slane %v1462, 6
      %v1480 = vsel %vm1080, %v1478, %v1479
      %v1481 = vrot.slane %v1463, 6
      %v1482 = vrot.slane %v1464, 6
      %v1483 = vsel %vm1080, %v1481, %v1482
      %v1484 = vrot.slane %v1465, 6
      %v1485 = vrot.slane %v1466, 6
      %v1486 = vsel %vm1080, %v1484, %v1485
      %v1491 = vadd.f32 %v1451, %v1477
      %v1492 = vadd.f32 %v1452, %v1480
      %v1493 = vadd.f32 %v1453, %v1483
      %v1494 = vadd.f32 %v1454, %v1486
      %v1495 = vld [vmem:[%s889] sm:$0xff]
      %v1496 = vld [vmem:[%s889 + $0x8] sm:$0x3]
      %v1497 = vld [vmem:[%s889 + $0x10] sm:$0xff]
      %v1498 = vld [vmem:[%s889 + $0x18] sm:$0x3]
      %v1499 = vld [vmem:[%s889 + $0x20] sm:$0xff]
      %v1500 = vld [vmem:[%s889 + $0x28] sm:$0x3]
      %v1501 = vld [vmem:[%s889 + $0x30] sm:$0xff]
      %v1502 = vld [vmem:[%s889 + $0x38] sm:$0x3]
      %v1503 = vlaneseq
      %v1504 = vshrl.u32 %v1503, 7
      %v1505 = vsub.s32 5, %v1504
      %v1506 = vrot.slane %v897, %v1505
      %v1507 = vmul.f32 %v1495, %v1506
      %v1508 = vmul.f32 %v1497, %v1506
      %v1509 = vmul.f32 %v1499, %v1506
      %v1510 = vmul.f32 %v1501, %v1506
      %v1511 = vadd.f32 %v1491, %v1507
      %v1512 = vadd.f32 %v1492, %v1508
      %v1513 = vadd.f32 %v1493, %v1509
      %v1514 = vadd.f32 %v1494, %v1510
      %v1515 = vlaneseq
      %v1516 = vshrl.u32 %v1515, 7
      %v1517 = vsub.s32 6, %v1516
      %v1518 = vrot.slane %v897, %v1517
      %v1519 = vmul.f32 %v1495, %v1518
      %v1520 = vmul.f32 %v1497, %v1518
      %v1521 = vmul.f32 %v1499, %v1518
      %v1522 = vmul.f32 %v1501, %v1518
      %v1527 = vrot.slane %v1519, 1
      %v1528 = vrot.slane %v1520, 1
      %v1529 = vrot.slane %v1521, 1
      %v1530 = vrot.slane %v1522, 1
      %v1535 = vadd.f32 %v1511, %v1527
      %v1536 = vadd.f32 %v1512, %v1528
      %v1537 = vadd.f32 %v1513, %v1529
      %v1538 = vadd.f32 %v1514, %v1530
      %v1539 = vlaneseq
      %v1540 = vshrl.u32 %v1539, 7
      %v1541 = vsub.s32 7, %v1540
      %v1542 = vrot.slane %v897, %v1541
      %v1543 = vmul.f32 %v1495, %v1542
      %v1544 = vmul.f32 %v1497, %v1542
      %v1545 = vmul.f32 %v1499, %v1542
      %v1546 = vmul.f32 %v1501, %v1542
      %v1551 = vrot.slane %v1543, 2
      %v1552 = vrot.slane %v1544, 2
      %v1553 = vrot.slane %v1545, 2
      %v1554 = vrot.slane %v1546, 2
      %v1559 = vadd.f32 %v1535, %v1551
      %v1560 = vadd.f32 %v1536, %v1552
      %v1561 = vadd.f32 %v1537, %v1553
      %v1562 = vadd.f32 %v1538, %v1554
      %v1563 = vlaneseq
      %v1564 = vshrl.u32 %v1563, 7
      %v1565 = vsub.s32 0, %v1564
      %v1566 = vrot.slane %v898, %v1565
      %v1567 = vmul.f32 %v1495, %v1566
      %v1568 = vmul.f32 %v1497, %v1566
      %v1569 = vmul.f32 %v1499, %v1566
      %v1570 = vmul.f32 %v1501, %v1566
      %v1575 = vrot.slane %v1567, 3
      %v1576 = vrot.slane %v1568, 3
      %v1577 = vrot.slane %v1569, 3
      %v1578 = vrot.slane %v1570, 3
      %v1583 = vadd.f32 %v1559, %v1575
      %v1584 = vadd.f32 %v1560, %v1576
      %v1585 = vadd.f32 %v1561, %v1577
      %v1586 = vadd.f32 %v1562, %v1578
      %v1587 = vlaneseq
      %v1588 = vshrl.u32 %v1587, 7
      %v1589 = vsub.s32 1, %v1588
      %v1590 = vrot.slane %v898, %v1589
      %v1591 = vmul.f32 %v1495, %v1590
      %v1592 = vmul.f32 %v1497, %v1590
      %v1593 = vmul.f32 %v1499, %v1590
      %v1594 = vmul.f32 %v1501, %v1590
      %v1599 = vrot.slane %v1591, 4
      %v1600 = vrot.slane %v1592, 4
      %v1601 = vrot.slane %v1593, 4
      %v1602 = vrot.slane %v1594, 4
      %v1607 = vadd.f32 %v1583, %v1599
      %v1608 = vadd.f32 %v1584, %v1600
      %v1609 = vadd.f32 %v1585, %v1601
      %v1610 = vadd.f32 %v1586, %v1602
      %v1611 = vlaneseq
      %v1612 = vshrl.u32 %v1611, 7
      %v1613 = vsub.s32 2, %v1612
      %v1614 = vrot.slane %v898, %v1613
      %v1615 = vmul.f32 %v1495, %v1614
      %v1616 = vmul.f32 %v1496, %v1614
      %v1617 = vmul.f32 %v1497, %v1614
      %v1618 = vmul.f32 %v1498, %v1614
      %v1619 = vmul.f32 %v1499, %v1614
      %v1620 = vmul.f32 %v1500, %v1614
      %v1621 = vmul.f32 %v1501, %v1614
      %v1622 = vmul.f32 %v1502, %v1614
      %v1631 = vrot.slane %v1615, 5
      %v1632 = vrot.slane %v1616, 5
      %v1633 = vsel %vm1039, %v1631, %v1632
      %v1634 = vrot.slane %v1617, 5
      %v1635 = vrot.slane %v1618, 5
      %v1636 = vsel %vm1039, %v1634, %v1635
      %v1637 = vrot.slane %v1619, 5
      %v1638 = vrot.slane %v1620, 5
      %v1639 = vsel %vm1039, %v1637, %v1638
      %v1640 = vrot.slane %v1621, 5
      %v1641 = vrot.slane %v1622, 5
      %v1642 = vsel %vm1039, %v1640, %v1641
      %v1647 = vadd.f32 %v1607, %v1633
      %v1648 = vadd.f32 %v1608, %v1636
      %v1649 = vadd.f32 %v1609, %v1639
      %v1650 = vadd.f32 %v1610, %v1642
      %v1651 = vlaneseq
      %v1652 = vshrl.u32 %v1651, 7
      %v1653 = vsub.s32 3, %v1652
      %v1654 = vrot.slane %v898, %v1653
      %v1655 = vmul.f32 %v1495, %v1654
      %v1656 = vmul.f32 %v1496, %v1654
      %v1657 = vmul.f32 %v1497, %v1654
      %v1658 = vmul.f32 %v1498, %v1654
      %v1659 = vmul.f32 %v1499, %v1654
      %v1660 = vmul.f32 %v1500, %v1654
      %v1661 = vmul.f32 %v1501, %v1654
      %v1662 = vmul.f32 %v1502, %v1654
      %v1671 = vrot.slane %v1655, 6
      %v1672 = vrot.slane %v1656, 6
      %v1673 = vsel %vm1080, %v1671, %v1672
      %v1674 = vrot.slane %v1657, 6
      %v1675 = vrot.slane %v1658, 6
      %v1676 = vsel %vm1080, %v1674, %v1675
      %v1677 = vrot.slane %v1659, 6
      %v1678 = vrot.slane %v1660, 6
      %v1679 = vsel %vm1080, %v1677, %v1678
      %v1680 = vrot.slane %v1661, 6
      %v1681 = vrot.slane %v1662, 6
      %v1682 = vsel %vm1080, %v1680, %v1681
      %v1687 = vadd.f32 %v1647, %v1673
      %v1688 = vadd.f32 %v1648, %v1676
      %v1689 = vadd.f32 %v1649, %v1679
      %v1690 = vadd.f32 %v1650, %v1682
      %s1691 = scalar_lea.vmem [#allocation3], 64
      %v1692 = vld [vmem:[%s1691] sm:$0xff]
      %v1693 = vld [vmem:[%s1691 + $0x8] sm:$0x3]
      %v1694 = vld [vmem:[%s1691 + $0x10] sm:$0xff]
      %v1695 = vld [vmem:[%s1691 + $0x18] sm:$0x3]
      %v1696 = vld [vmem:[%s1691 + $0x20] sm:$0xff]
      %v1697 = vld [vmem:[%s1691 + $0x28] sm:$0x3]
      %v1698 = vld [vmem:[%s1691 + $0x30] sm:$0xff]
      %v1699 = vld [vmem:[%s1691 + $0x38] sm:$0x3]
      %v1700 = vlaneseq
      %v1701 = vshrl.u32 %v1700, 7
      %v1702 = vsub.s32 4, %v1701
      %v1703 = vrot.slane %v898, %v1702
      %v1704 = vmul.f32 %v1692, %v1703
      %v1705 = vmul.f32 %v1694, %v1703
      %v1706 = vmul.f32 %v1696, %v1703
      %v1707 = vmul.f32 %v1698, %v1703
      %v1708 = vadd.f32 %v1687, %v1704
      %v1709 = vadd.f32 %v1688, %v1705
      %v1710 = vadd.f32 %v1689, %v1706
      %v1711 = vadd.f32 %v1690, %v1707
      %v1712 = vlaneseq
      %v1713 = vshrl.u32 %v1712, 7
      %v1714 = vsub.s32 5, %v1713
      %v1715 = vrot.slane %v898, %v1714
      %v1716 = vmul.f32 %v1692, %v1715
      %v1717 = vmul.f32 %v1694, %v1715
      %v1718 = vmul.f32 %v1696, %v1715
      %v1719 = vmul.f32 %v1698, %v1715
      %v1724 = vrot.slane %v1716, 1
      %v1725 = vrot.slane %v1717, 1
      %v1726 = vrot.slane %v1718, 1
      %v1727 = vrot.slane %v1719, 1
      %v1732 = vadd.f32 %v1708, %v1724
      %v1733 = vadd.f32 %v1709, %v1725
      %v1734 = vadd.f32 %v1710, %v1726
      %v1735 = vadd.f32 %v1711, %v1727
      %v1736 = vlaneseq
      %v1737 = vshrl.u32 %v1736, 7
      %v1738 = vsub.s32 6, %v1737
      %v1739 = vrot.slane %v898, %v1738
      %v1740 = vmul.f32 %v1692, %v1739
      %v1741 = vmul.f32 %v1694, %v1739
      %v1742 = vmul.f32 %v1696, %v1739
      %v1743 = vmul.f32 %v1698, %v1739
      %v1748 = vrot.slane %v1740, 2
      %v1749 = vrot.slane %v1741, 2
      %v1750 = vrot.slane %v1742, 2
      %v1751 = vrot.slane %v1743, 2
      %v1756 = vadd.f32 %v1732, %v1748
      %v1757 = vadd.f32 %v1733, %v1749
      %v1758 = vadd.f32 %v1734, %v1750
      %v1759 = vadd.f32 %v1735, %v1751
      %v1760 = vlaneseq
      %v1761 = vshrl.u32 %v1760, 7
      %v1762 = vsub.s32 7, %v1761
      %v1763 = vrot.slane %v898, %v1762
      %v1764 = vmul.f32 %v1692, %v1763
      %v1765 = vmul.f32 %v1694, %v1763
      %v1766 = vmul.f32 %v1696, %v1763
      %v1767 = vmul.f32 %v1698, %v1763
      %v1772 = vrot.slane %v1764, 3
      %v1773 = vrot.slane %v1765, 3
      %v1774 = vrot.slane %v1766, 3
      %v1775 = vrot.slane %v1767, 3
      %v1780 = vadd.f32 %v1756, %v1772
      %v1781 = vadd.f32 %v1757, %v1773
      %v1782 = vadd.f32 %v1758, %v1774
      %v1783 = vadd.f32 %v1759, %v1775
      %v1784 = vlaneseq
      %v1785 = vshrl.u32 %v1784, 7
      %v1786 = vsub.s32 0, %v1785
      %v1787 = vrot.slane %v899, %v1786
      %v1788 = vmul.f32 %v1692, %v1787
      %v1789 = vmul.f32 %v1694, %v1787
      %v1790 = vmul.f32 %v1696, %v1787
      %v1791 = vmul.f32 %v1698, %v1787
      %v1796 = vrot.slane %v1788, 4
      %v1797 = vrot.slane %v1789, 4
      %v1798 = vrot.slane %v1790, 4
      %v1799 = vrot.slane %v1791, 4
      %v1804 = vadd.f32 %v1780, %v1796
      %v1805 = vadd.f32 %v1781, %v1797
      %v1806 = vadd.f32 %v1782, %v1798
      %v1807 = vadd.f32 %v1783, %v1799
      %v1808 = vlaneseq
      %v1809 = vshrl.u32 %v1808, 7
      %v1810 = vsub.s32 1, %v1809
      %v1811 = vrot.slane %v899, %v1810
      %v1812 = vmul.f32 %v1692, %v1811
      %v1813 = vmul.f32 %v1693, %v1811
      %v1814 = vmul.f32 %v1694, %v1811
      %v1815 = vmul.f32 %v1695, %v1811
      %v1816 = vmul.f32 %v1696, %v1811
      %v1817 = vmul.f32 %v1697, %v1811
      %v1818 = vmul.f32 %v1698, %v1811
      %v1819 = vmul.f32 %v1699, %v1811
      %v1828 = vrot.slane %v1812, 5
      %v1829 = vrot.slane %v1813, 5
      %v1830 = vsel %vm1039, %v1828, %v1829
      %v1831 = vrot.slane %v1814, 5
      %v1832 = vrot.slane %v1815, 5
      %v1833 = vsel %vm1039, %v1831, %v1832
      %v1834 = vrot.slane %v1816, 5
      %v1835 = vrot.slane %v1817, 5
      %v1836 = vsel %vm1039, %v1834, %v1835
      %v1837 = vrot.slane %v1818, 5
      %v1838 = vrot.slane %v1819, 5
      %v1839 = vsel %vm1039, %v1837, %v1838
      %v1844 = vadd.f32 %v1804, %v1830
      %v1845 = vadd.f32 %v1805, %v1833
      %v1846 = vadd.f32 %v1806, %v1836
      %v1847 = vadd.f32 %v1807, %v1839
      %v1848 = vlaneseq
      %v1849 = vshrl.u32 %v1848, 7
      %v1850 = vsub.s32 2, %v1849
      %v1851 = vrot.slane %v899, %v1850
      %v1852 = vmul.f32 %v1692, %v1851
      %v1853 = vmul.f32 %v1693, %v1851
      %v1854 = vmul.f32 %v1694, %v1851
      %v1855 = vmul.f32 %v1695, %v1851
      %v1856 = vmul.f32 %v1696, %v1851
      %v1857 = vmul.f32 %v1697, %v1851
      %v1858 = vmul.f32 %v1698, %v1851
      %v1859 = vmul.f32 %v1699, %v1851
      %v1868 = vrot.slane %v1852, 6
      %v1869 = vrot.slane %v1853, 6
      %v1870 = vsel %vm1080, %v1868, %v1869
      %v1871 = vrot.slane %v1854, 6
      %v1872 = vrot.slane %v1855, 6
      %v1873 = vsel %vm1080, %v1871, %v1872
      %v1874 = vrot.slane %v1856, 6
      %v1875 = vrot.slane %v1857, 6
      %v1876 = vsel %vm1080, %v1874, %v1875
      %v1877 = vrot.slane %v1858, 6
      %v1878 = vrot.slane %v1859, 6
      %v1879 = vsel %vm1080, %v1877, %v1878
      %v1884 = vadd.f32 %v1844, %v1870
      %v1885 = vadd.f32 %v1845, %v1873
      %v1886 = vadd.f32 %v1846, %v1876
      %v1887 = vadd.f32 %v1847, %v1879
      %s1888 = scalar_lea.vmem [#allocation3], 80
      %v1889 = vld [vmem:[%s1888] sm:$0xff]
      %v1890 = vld [vmem:[%s1888 + $0x8] sm:$0x3]
      %v1891 = vld [vmem:[%s1888 + $0x10] sm:$0xff]
      %v1892 = vld [vmem:[%s1888 + $0x18] sm:$0x3]
      %v1893 = vld [vmem:[%s1888 + $0x20] sm:$0xff]
      %v1894 = vld [vmem:[%s1888 + $0x28] sm:$0x3]
      %v1895 = vld [vmem:[%s1888 + $0x30] sm:$0xff]
      %v1896 = vld [vmem:[%s1888 + $0x38] sm:$0x3]
      %v1897 = vlaneseq
      %v1898 = vshrl.u32 %v1897, 7
      %v1899 = vsub.s32 3, %v1898
      %v1900 = vrot.slane %v899, %v1899
      %v1901 = vmul.f32 %v1889, %v1900
      %v1902 = vmul.f32 %v1891, %v1900
      %v1903 = vmul.f32 %v1893, %v1900
      %v1904 = vmul.f32 %v1895, %v1900
      %v1905 = vadd.f32 %v1884, %v1901
      %v1906 = vadd.f32 %v1885, %v1902
      %v1907 = vadd.f32 %v1886, %v1903
      %v1908 = vadd.f32 %v1887, %v1904
      %v1909 = vlaneseq
      %v1910 = vshrl.u32 %v1909, 7
      %v1911 = vsub.s32 4, %v1910
      %v1912 = vrot.slane %v899, %v1911
      %v1913 = vmul.f32 %v1889, %v1912
      %v1914 = vmul.f32 %v1891, %v1912
      %v1915 = vmul.f32 %v1893, %v1912
      %v1916 = vmul.f32 %v1895, %v1912
      %v1921 = vrot.slane %v1913, 1
      %v1922 = vrot.slane %v1914, 1
      %v1923 = vrot.slane %v1915, 1
      %v1924 = vrot.slane %v1916, 1
      %v1929 = vadd.f32 %v1905, %v1921
      %v1930 = vadd.f32 %v1906, %v1922
      %v1931 = vadd.f32 %v1907, %v1923
      %v1932 = vadd.f32 %v1908, %v1924
      %v1933 = vlaneseq
      %v1934 = vshrl.u32 %v1933, 7
      %v1935 = vsub.s32 5, %v1934
      %v1936 = vrot.slane %v899, %v1935
      %v1937 = vmul.f32 %v1889, %v1936
      %v1938 = vmul.f32 %v1891, %v1936
      %v1939 = vmul.f32 %v1893, %v1936
      %v1940 = vmul.f32 %v1895, %v1936
      %v1945 = vrot.slane %v1937, 2
      %v1946 = vrot.slane %v1938, 2
      %v1947 = vrot.slane %v1939, 2
      %v1948 = vrot.slane %v1940, 2
      %v1953 = vadd.f32 %v1929, %v1945
      %v1954 = vadd.f32 %v1930, %v1946
      %v1955 = vadd.f32 %v1931, %v1947
      %v1956 = vadd.f32 %v1932, %v1948
      %v1957 = vlaneseq
      %v1958 = vshrl.u32 %v1957, 7
      %v1959 = vsub.s32 6, %v1958
      %v1960 = vrot.slane %v899, %v1959
      %v1961 = vmul.f32 %v1889, %v1960
      %v1962 = vmul.f32 %v1891, %v1960
      %v1963 = vmul.f32 %v1893, %v1960
      %v1964 = vmul.f32 %v1895, %v1960
      %v1969 = vrot.slane %v1961, 3
      %v1970 = vrot.slane %v1962, 3
      %v1971 = vrot.slane %v1963, 3
      %v1972 = vrot.slane %v1964, 3
      %v1977 = vadd.f32 %v1953, %v1969
      %v1978 = vadd.f32 %v1954, %v1970
      %v1979 = vadd.f32 %v1955, %v1971
      %v1980 = vadd.f32 %v1956, %v1972
      %v1981 = vlaneseq
      %v1982 = vshrl.u32 %v1981, 7
      %v1983 = vsub.s32 7, %v1982
      %v1984 = vrot.slane %v899, %v1983
      %v1985 = vmul.f32 %v1889, %v1984
      %v1986 = vmul.f32 %v1891, %v1984
      %v1987 = vmul.f32 %v1893, %v1984
      %v1988 = vmul.f32 %v1895, %v1984
      %v1993 = vrot.slane %v1985, 4
      %v1994 = vrot.slane %v1986, 4
      %v1995 = vrot.slane %v1987, 4
      %v1996 = vrot.slane %v1988, 4
      %v2001 = vadd.f32 %v1977, %v1993
      %v2002 = vadd.f32 %v1978, %v1994
      %v2003 = vadd.f32 %v1979, %v1995
      %v2004 = vadd.f32 %v1980, %v1996
      %v2005 = vlaneseq
      %v2006 = vshrl.u32 %v2005, 7
      %v2007 = vsub.s32 0, %v2006
      %v2008 = vrot.slane %v900, %v2007
      %v2009 = vmul.f32 %v1889, %v2008
      %v2010 = vmul.f32 %v1890, %v2008
      %v2011 = vmul.f32 %v1891, %v2008
      %v2012 = vmul.f32 %v1892, %v2008
      %v2013 = vmul.f32 %v1893, %v2008
      %v2014 = vmul.f32 %v1894, %v2008
      %v2015 = vmul.f32 %v1895, %v2008
      %v2016 = vmul.f32 %v1896, %v2008
      %v2025 = vrot.slane %v2009, 5
      %v2026 = vrot.slane %v2010, 5
      %v2027 = vsel %vm1039, %v2025, %v2026
      %v2028 = vrot.slane %v2011, 5
      %v2029 = vrot.slane %v2012, 5
      %v2030 = vsel %vm1039, %v2028, %v2029
      %v2031 = vrot.slane %v2013, 5
      %v2032 = vrot.slane %v2014, 5
      %v2033 = vsel %vm1039, %v2031, %v2032
      %v2034 = vrot.slane %v2015, 5
      %v2035 = vrot.slane %v2016, 5
      %v2036 = vsel %vm1039, %v2034, %v2035
      %v2041 = vadd.f32 %v2001, %v2027
      %v2042 = vadd.f32 %v2002, %v2030
      %v2043 = vadd.f32 %v2003, %v2033
      %v2044 = vadd.f32 %v2004, %v2036
      %v2045 = vlaneseq
      %v2046 = vshrl.u32 %v2045, 7
      %v2047 = vsub.s32 1, %v2046
      %v2048 = vrot.slane %v900, %v2047
      %v2049 = vmul.f32 %v1889, %v2048
      %v2050 = vmul.f32 %v1890, %v2048
      %v2051 = vmul.f32 %v1891, %v2048
      %v2052 = vmul.f32 %v1892, %v2048
      %v2053 = vmul.f32 %v1893, %v2048
      %v2054 = vmul.f32 %v1894, %v2048
      %v2055 = vmul.f32 %v1895, %v2048
      %v2056 = vmul.f32 %v1896, %v2048
      %v2065 = vrot.slane %v2049, 6
      %v2066 = vrot.slane %v2050, 6
      %v2067 = vsel %vm1080, %v2065, %v2066
      %v2068 = vrot.slane %v2051, 6
      %v2069 = vrot.slane %v2052, 6
      %v2070 = vsel %vm1080, %v2068, %v2069
      %v2071 = vrot.slane %v2053, 6
      %v2072 = vrot.slane %v2054, 6
      %v2073 = vsel %vm1080, %v2071, %v2072
      %v2074 = vrot.slane %v2055, 6
      %v2075 = vrot.slane %v2056, 6
      %v2076 = vsel %vm1080, %v2074, %v2075
      %v2081 = vadd.f32 %v2041, %v2067
      %v2082 = vadd.f32 %v2042, %v2070
      %v2083 = vadd.f32 %v2043, %v2073
      %v2084 = vadd.f32 %v2044, %v2076
      %s2085 = scalar_lea.vmem [#allocation3], 96
      %v2086 = vld [vmem:[%s2085] sm:$0xff]
      %v2087 = vld [vmem:[%s2085 + $0x8] sm:$0x3]
      %v2088 = vld [vmem:[%s2085 + $0x10] sm:$0xff]
      %v2089 = vld [vmem:[%s2085 + $0x18] sm:$0x3]
      %v2090 = vld [vmem:[%s2085 + $0x20] sm:$0xff]
      %v2091 = vld [vmem:[%s2085 + $0x28] sm:$0x3]
      %v2092 = vld [vmem:[%s2085 + $0x30] sm:$0xff]
      %v2093 = vld [vmem:[%s2085 + $0x38] sm:$0x3]
      %v2094 = vlaneseq
      %v2095 = vshrl.u32 %v2094, 7
      %v2096 = vsub.s32 2, %v2095
      %v2097 = vrot.slane %v900, %v2096
      %v2098 = vmul.f32 %v2086, %v2097
      %v2099 = vmul.f32 %v2088, %v2097
      %v2100 = vmul.f32 %v2090, %v2097
      %v2101 = vmul.f32 %v2092, %v2097
      %v2102 = vadd.f32 %v2081, %v2098
      %v2103 = vadd.f32 %v2082, %v2099
      %v2104 = vadd.f32 %v2083, %v2100
      %v2105 = vadd.f32 %v2084, %v2101
      %v2106 = vlaneseq
      %v2107 = vshrl.u32 %v2106, 7
      %v2108 = vsub.s32 3, %v2107
      %v2109 = vrot.slane %v900, %v2108
      %v2110 = vmul.f32 %v2086, %v2109
      %v2111 = vmul.f32 %v2088, %v2109
      %v2112 = vmul.f32 %v2090, %v2109
      %v2113 = vmul.f32 %v2092, %v2109
      %v2118 = vrot.slane %v2110, 1
      %v2119 = vrot.slane %v2111, 1
      %v2120 = vrot.slane %v2112, 1
      %v2121 = vrot.slane %v2113, 1
      %v2126 = vadd.f32 %v2102, %v2118
      %v2127 = vadd.f32 %v2103, %v2119
      %v2128 = vadd.f32 %v2104, %v2120
      %v2129 = vadd.f32 %v2105, %v2121
      %v2130 = vlaneseq
      %v2131 = vshrl.u32 %v2130, 7
      %v2132 = vsub.s32 4, %v2131
      %v2133 = vrot.slane %v900, %v2132
      %v2134 = vmul.f32 %v2086, %v2133
      %v2135 = vmul.f32 %v2088, %v2133
      %v2136 = vmul.f32 %v2090, %v2133
      %v2137 = vmul.f32 %v2092, %v2133
      %v2142 = vrot.slane %v2134, 2
      %v2143 = vrot.slane %v2135, 2
      %v2144 = vrot.slane %v2136, 2
      %v2145 = vrot.slane %v2137, 2
      %v2150 = vadd.f32 %v2126, %v2142
      %v2151 = vadd.f32 %v2127, %v2143
      %v2152 = vadd.f32 %v2128, %v2144
      %v2153 = vadd.f32 %v2129, %v2145
      %v2154 = vlaneseq
      %v2155 = vshrl.u32 %v2154, 7
      %v2156 = vsub.s32 5, %v2155
      %v2157 = vrot.slane %v900, %v2156
      %v2158 = vmul.f32 %v2086, %v2157
      %v2159 = vmul.f32 %v2088, %v2157
      %v2160 = vmul.f32 %v2090, %v2157
      %v2161 = vmul.f32 %v2092, %v2157
      %v2166 = vrot.slane %v2158, 3
      %v2167 = vrot.slane %v2159, 3
      %v2168 = vrot.slane %v2160, 3
      %v2169 = vrot.slane %v2161, 3
      %v2174 = vadd.f32 %v2150, %v2166
      %v2175 = vadd.f32 %v2151, %v2167
      %v2176 = vadd.f32 %v2152, %v2168
      %v2177 = vadd.f32 %v2153, %v2169
      %v2178 = vlaneseq
      %v2179 = vshrl.u32 %v2178, 7
      %v2180 = vsub.s32 6, %v2179
      %v2181 = vrot.slane %v900, %v2180
      %v2182 = vmul.f32 %v2086, %v2181
      %v2183 = vmul.f32 %v2088, %v2181
      %v2184 = vmul.f32 %v2090, %v2181
      %v2185 = vmul.f32 %v2092, %v2181
      %v2190 = vrot.slane %v2182, 4
      %v2191 = vrot.slane %v2183, 4
      %v2192 = vrot.slane %v2184, 4
      %v2193 = vrot.slane %v2185, 4
      %v2198 = vadd.f32 %v2174, %v2190
      %v2199 = vadd.f32 %v2175, %v2191
      %v2200 = vadd.f32 %v2176, %v2192
      %v2201 = vadd.f32 %v2177, %v2193
      %v2202 = vlaneseq
      %v2203 = vshrl.u32 %v2202, 7
      %v2204 = vsub.s32 7, %v2203
      %v2205 = vrot.slane %v900, %v2204
      %v2206 = vmul.f32 %v2086, %v2205
      %v2207 = vmul.f32 %v2087, %v2205
      %v2208 = vmul.f32 %v2088, %v2205
      %v2209 = vmul.f32 %v2089, %v2205
      %v2210 = vmul.f32 %v2090, %v2205
      %v2211 = vmul.f32 %v2091, %v2205
      %v2212 = vmul.f32 %v2092, %v2205
      %v2213 = vmul.f32 %v2093, %v2205
      %v2222 = vrot.slane %v2206, 5
      %v2223 = vrot.slane %v2207, 5
      %v2224 = vsel %vm1039, %v2222, %v2223
      %v2225 = vrot.slane %v2208, 5
      %v2226 = vrot.slane %v2209, 5
      %v2227 = vsel %vm1039, %v2225, %v2226
      %v2228 = vrot.slane %v2210, 5
      %v2229 = vrot.slane %v2211, 5
      %v2230 = vsel %vm1039, %v2228, %v2229
      %v2231 = vrot.slane %v2212, 5
      %v2232 = vrot.slane %v2213, 5
      %v2233 = vsel %vm1039, %v2231, %v2232
      %v2238 = vadd.f32 %v2198, %v2224
      %v2239 = vadd.f32 %v2199, %v2227
      %v2240 = vadd.f32 %v2200, %v2230
      %v2241 = vadd.f32 %v2201, %v2233
      %v2242 = vlaneseq
      %v2243 = vshrl.u32 %v2242, 7
      %v2244 = vsub.s32 0, %v2243
      %v2245 = vrot.slane %v901, %v2244
      %v2246 = vmul.f32 %v2086, %v2245
      %v2247 = vmul.f32 %v2087, %v2245
      %v2248 = vmul.f32 %v2088, %v2245
      %v2249 = vmul.f32 %v2089, %v2245
      %v2250 = vmul.f32 %v2090, %v2245
      %v2251 = vmul.f32 %v2091, %v2245
      %v2252 = vmul.f32 %v2092, %v2245
      %v2253 = vmul.f32 %v2093, %v2245
      %v2262 = vrot.slane %v2246, 6
      %v2263 = vrot.slane %v2247, 6
      %v2264 = vsel %vm1080, %v2262, %v2263
      %v2265 = vrot.slane %v2248, 6
      %v2266 = vrot.slane %v2249, 6
      %v2267 = vsel %vm1080, %v2265, %v2266
      %v2268 = vrot.slane %v2250, 6
      %v2269 = vrot.slane %v2251, 6
      %v2270 = vsel %vm1080, %v2268, %v2269
      %v2271 = vrot.slane %v2252, 6
      %v2272 = vrot.slane %v2253, 6
      %v2273 = vsel %vm1080, %v2271, %v2272
      %v2278 = vadd.f32 %v2238, %v2264
      %v2279 = vadd.f32 %v2239, %v2267
      %v2280 = vadd.f32 %v2240, %v2270
      %v2281 = vadd.f32 %v2241, %v2273
      %v2282 = vlaneseq
      %v2283 = vshrl.u32 %v2282, 7
      %v2284 = vsub.s32 0, %v2283
      %v2285 = vrot.slane %v902, %v2284
      %v2286 = vadd.f32 %v2278, %v2285
      %v2287 = vadd.f32 %v2279, %v2285
      %v2288 = vadd.f32 %v2280, %v2285
      %v2289 = vadd.f32 %v2281, %v2285
      %v2294 = vcombine.low %v2286, %v2287
      %v2295 = vcombine.low %v2288, %v2289
      %vm2298 = vcmask 15360
      %v2299 = vsel %vm2298, %v2294, 0.0
      %2300 = vadd.xlane.f32.xlu0 %v2299
      %v2301 = vpop.xlane.xlu0 %2300
      %v2302 = vsel %vm2298, %v2295, 0.0
      %2303 = vadd.xlane.f32.xlu0 %v2302
      %v2304 = vpop.xlane.xlu0 %2303
      %v2305 = vrcp.pop 2.0
      %v2306 = vmul.f32 %v2301, %v2305
      %v2307 = vmul.f32 %v2304, %v2305
      %v2311 = vunpack.c.l.s4 839922192
      %v2312 = vunpack.c.0.s8 %v2311
      %v2313 = vlaneseq
      %v2314 = vshrl.u32 %v2313, 7
      %v2315 = vsub.s32 %v2312, %v2314
      %v2316 = vrot.slane %v2306, %v2315
      %v2318 = vunpack.c.l.s4 1985246804
      %v2319 = vunpack.c.0.s8 %v2318
      %v2320 = vlaneseq
      %v2321 = vshrl.u32 %v2320, 7
      %v2322 = vsub.s32 %v2319, %v2321
      %v2323 = vrot.slane %v2306, %v2322
      %v2325 = vunpack.c.l.s4 839922192
      %v2326 = vunpack.c.0.s8 %v2325
      %v2327 = vlaneseq
      %v2328 = vshrl.u32 %v2327, 7
      %v2329 = vsub.s32 %v2326, %v2328
      %v2330 = vrot.slane %v2307, %v2329
      %v2332 = vunpack.c.l.s4 1985246804
      %v2333 = vunpack.c.0.s8 %v2332
      %v2334 = vlaneseq
      %v2335 = vshrl.u32 %v2334, 7
      %v2336 = vsub.s32 %v2333, %v2335
      %v2337 = vrot.slane %v2307, %v2336
      %v2342 = vsub.f32 %v2286, %v2316
      %v2343 = vsub.f32 %v2287, %v2323
      %v2344 = vsub.f32 %v2288, %v2330
      %v2345 = vsub.f32 %v2289, %v2337
      %v2346 = vmul.f32 %v2342, %v2342
      %v2347 = vmul.f32 %v2343, %v2343
      %v2348 = vmul.f32 %v2344, %v2344
      %v2349 = vmul.f32 %v2345, %v2345
      %v2354 = vcombine.low %v2346, %v2347
      %v2355 = vcombine.low %v2348, %v2349
      %v2358 = vsel %vm2298, %v2354, 0.0
      %2359 = vadd.xlane.f32.xlu0 %v2358
      %v2360 = vpop.xlane.xlu0 %2359
      %v2361 = vsel %vm2298, %v2355, 0.0
      %2362 = vadd.xlane.f32.xlu0 %v2361
      %v2363 = vpop.xlane.xlu0 %2362
      %v2364 = vmul.f32 %v2360, %v2305
      %v2365 = vmul.f32 %v2363, %v2305
      %v2366 = vadd.f32 %v2364, 1e-06
      %v2367 = vadd.f32 %v2365, 1e-06
      %v2368 = vrsqrt.pop %v2366
      %v2369 = vrsqrt.pop %v2367
      %v2373 = vunpack.c.l.s4 839922192
      %v2374 = vunpack.c.0.s8 %v2373
      %v2375 = vlaneseq
      %v2376 = vshrl.u32 %v2375, 7
      %v2377 = vsub.s32 %v2374, %v2376
      %v2378 = vrot.slane %v2368, %v2377
      %v2380 = vunpack.c.l.s4 1985246804
      %v2381 = vunpack.c.0.s8 %v2380
      %v2382 = vlaneseq
      %v2383 = vshrl.u32 %v2382, 7
      %v2384 = vsub.s32 %v2381, %v2383
      %v2385 = vrot.slane %v2368, %v2384
      %v2387 = vunpack.c.l.s4 839922192
      %v2388 = vunpack.c.0.s8 %v2387
      %v2389 = vlaneseq
      %v2390 = vshrl.u32 %v2389, 7
      %v2391 = vsub.s32 %v2388, %v2390
      %v2392 = vrot.slane %v2369, %v2391
      %v2394 = vunpack.c.l.s4 1985246804
      %v2395 = vunpack.c.0.s8 %v2394
      %v2396 = vlaneseq
      %v2397 = vshrl.u32 %v2396, 7
      %v2398 = vsub.s32 %v2395, %v2397
      %v2399 = vrot.slane %v2369, %v2398
      %v2404 = vmul.f32 %v2342, %v2378
      %v2405 = vmul.f32 %v2343, %v2385
      %v2406 = vmul.f32 %v2344, %v2392
      %v2407 = vmul.f32 %v2345, %v2399
      %v2408 = vlaneseq
      %v2409 = vshrl.u32 %v2408, 7
      %v2410 = vsub.s32 1, %v2409
      %v2411 = vrot.slane %v902, %v2410
      %v2416 = vcombine.low %v2404, %v2405
      %v2417 = vcombine.low %v2406, %v2407
      %v2420 = vmul.f32 %v2411, %v2416
      %v2421 = vmul.f32 %v2411, %v2417
      %v2422 = vlaneseq
      %v2423 = vshrl.u32 %v2422, 7
      %v2424 = vsub.s32 2, %v2423
      %v2425 = vrot.slane %v902, %v2424
      %v2426 = vadd.f32 %v2420, %v2425
      %v2427 = vadd.f32 %v2421, %v2425
      %v2428 = vld [vmem:[%s390] sm:$0x3]
      %v2429 = vld [vmem:[%s393] sm:$0x1]
      %v2431 = vlaneseq
      %v2432 = vshrl.u32 %v2431, 7
      %v2433 = vsub.s32 0, %v2432
      %v2434 = vrot.slane %v2429, %v2433
      %v2437 = vsel %vm2298, %v2426, 0
      %v2440 = vsel %vm2298, %v2427, 0
      %v2443 = vsel %vm1080, %v2428, 0
      %2445 = vmatprep.subr.mxu0 0.0
      %2446 = vmatpush1.msra.mxu0 %v2443
      %2447 = vmatprep.subr.mxu0 0.0
      %2448 = vmatpush1.msra.mxu0 0.0
      %2449 = vmatprep.subr.mxu0 0.0
      %2450 = vmatpush1.msra.mxu0 0.0
      %2451 = vmatprep.subr.mxu0 0.0
      %2452 = vmatpush1.msra.mxu0 0.0
      %2453 = vmatprep.subr.mxu0 0.0
      %2454 = vmatpush1.msra.mxu0 0.0
      %2455 = vmatprep.subr.mxu0 0.0
      %2456 = vmatpush1.msra.mxu0 0.0
      %2457 = vmatprep.subr.mxu0 0.0
      %2458 = vmatpush1.msra.mxu0 0.0
      %2459 = vmatprep.subr.mxu0 0.0
      %2460 = vmatpush1.msra.mxu0 0.0
      %2461 = vmatprep.subr.mxu0 0.0
      %2462 = vmatpush1.msra.mxu0 0.0
      %2463 = vmatprep.subr.mxu0 0.0
      %2464 = vmatpush1.msra.mxu0 0.0
      %2465 = vmatprep.subr.mxu0 0.0
      %2466 = vmatpush1.msra.mxu0 0.0
      %2467 = vmatprep.subr.mxu0 0.0
      %2468 = vmatpush1.msra.mxu0 0.0
      %2469 = vmatprep.subr.mxu0 0.0
      %2470 = vmatpush1.msra.mxu0 0.0
      %2471 = vmatprep.subr.mxu0 0.0
      %2472 = vmatpush1.msra.mxu0 0.0
      %2473 = vmatprep.subr.mxu0 0.0
      %2474 = vmatpush1.msra.mxu0 0.0
      %2475 = vmatprep.subr.mxu0 0.0
      %2476 = vmatpush1.msra.mxu0 0.0
      %2477 = vmatprep.subr.mxu0 0.0
      %2478 = vmatpush1.msra.mxu0 0.0
      %2479 = vmatprep.subr.mxu0 0.0
      %2480 = vmatpush1.msra.mxu0 0.0
      %2481 = vmatprep.subr.mxu0 0.0
      %2482 = vmatpush1.msra.mxu0 0.0
      %2483 = vmatprep.subr.mxu0 0.0
      %2484 = vmatpush1.msra.mxu0 0.0
      %2485 = vmatprep.subr.mxu0 0.0
      %2486 = vmatpush1.msra.mxu0 0.0
      %2487 = vmatprep.subr.mxu0 0.0
      %2488 = vmatpush1.msra.mxu0 0.0
      %2489 = vmatprep.subr.mxu0 0.0
      %2490 = vmatpush1.msra.mxu0 0.0
      %2491 = vmatprep.subr.mxu0 0.0
      %2492 = vmatpush1.msra.mxu0 0.0
      %2493 = vmatprep.subr.mxu0 0.0
      %2494 = vmatpush1.msra.mxu0 0.0
      %2495 = vmatprep.subr.mxu0 0.0
      %2496 = vmatpush1.msra.mxu0 0.0
      %2497 = vmatprep.subr.mxu0 0.0
      %2498 = vmatpush1.msra.mxu0 0.0
      %2499 = vmatprep.subr.mxu0 0.0
      %2500 = vmatpush1.msra.mxu0 0.0
      %2501 = vmatprep.subr.mxu0 0.0
      %2502 = vmatpush1.msra.mxu0 0.0
      %2503 = vmatprep.subr.mxu0 0.0
      %2504 = vmatpush1.msra.mxu0 0.0
      %2505 = vmatprep.subr.mxu0 0.0
      %2506 = vmatpush1.msra.mxu0 0.0
      %2507 = vmatprep.subr.mxu0 0.0
      %2508 = vmatpush1.msra.mxu0 0.0
      %2509 = vmatprep.mubr.f32.mxu0 0.0
      %2510 = vmatmul.mubr.f32.gmra.mrb[0].mxu0 %v2437
      %v2511 = vpop.f32.mrb[0].mxu0
      %v2512 = vadd.f32 %v2434, %v2511
      %v2513 = vpop.f32.mrb[0].mxu0
      %2514 = vmatprep.mubr.f32.mxu0 0.0
      %2515 = vmatmul.mubr.f32.gmra.mrb[0].mxu0 %v2440
      %v2516 = vpop.f32.mrb[0].mxu0
      %v2517 = vadd.f32 %v2434, %v2516
      %v2518 = vpop.f32.mrb[0].mxu0
      %2519 = vdwg.mxu0
      %v2520 = vmul.f32 %v2512, 0.5
      %v2521 = vmul.f32 %v2517, 0.5
      %v2522 = vmul.f32 %v2512, 0.70710677
      %v2523 = vmul.f32 %v2517, 0.70710677
      %v2524 = vand.u32 2147483647, %v2522
      %v2525 = vand.u32 2147483647, %v2523
      %v2526 = vmul.f32 %v2524, 0.3275911
      %v2527 = vmul.f32 %v2525, 0.3275911
      %v2528 = vadd.f32 %v2526, 1.0
      %v2529 = vadd.f32 %v2527, 1.0
      %v2530 = vrcp.pop %v2528
      %v2531 = vmul.f32 1.0, %v2530
      %v2532 = vrcp.pop %v2529
      %v2533 = vmul.f32 1.0, %v2532
      %v2534 = vmul.f32 %v2531, 1.0614054
      %v2535 = vmul.f32 %v2533, 1.0614054
      %v2536 = vadd.f32 %v2534, -1.4531521
      %v2537 = vadd.f32 %v2535, -1.4531521
      %v2538 = vmul.f32 %v2531, %v2536
      %v2539 = vmul.f32 %v2533, %v2537
      %v2540 = vadd.f32 %v2538, 1.4214138
      %v2541 = vadd.f32 %v2539, 1.4214138
      %v2542 = vmul.f32 %v2531, %v2540
      %v2543 = vmul.f32 %v2533, %v2541
      %v2544 = vadd.f32 %v2542, -0.28449672
      %v2545 = vadd.f32 %v2543, -0.28449672
      %v2546 = vmul.f32 %v2531, %v2544
      %v2547 = vmul.f32 %v2533, %v2545
      %v2548 = vadd.f32 %v2546, 0.2548296
      %v2549 = vadd.f32 %v2547, 0.2548296
      %v2550 = vmul.f32 %v2531, %v2548
      %v2551 = vmul.f32 %v2533, %v2549
      %v2552 = vsub.f32 0.0, %v2524
      %v2553 = vsub.f32 0.0, %v2525
      %v2554 = vmul.f32 %v2552, %v2524
      %v2555 = vmul.f32 %v2553, %v2525
      %v2556 = vmul.f32 %v2554, 1.442695
      %v2557 = vpow.pop %v2556
      %v2558 = vmul.f32 %v2555, 1.442695
      %v2559 = vpow.pop %v2558
      %v2560 = vmul.f32 %v2550, %v2557
      %v2561 = vmul.f32 %v2551, %v2559
      %v2562 = vsub.f32 1.0, %v2560
      %v2563 = vsub.f32 1.0, %v2561
      %vm2564 = vcmp.lt.f32.partialorder %v2522, 0.0
      %vm2565 = vcmp.lt.f32.partialorder %v2523, 0.0
      %v2566 = vsub.f32 0.0, %v2562
      %v2567 = vsub.f32 0.0, %v2563
      %v2568 = vsel %vm2564, %v2566, %v2562
      %v2569 = vsel %vm2565, %v2567, %v2563
      %v2570 = vadd.f32 %v2568, 1.0
      %v2571 = vadd.f32 %v2569, 1.0
      %v2572 = vmul.f32 %v2520, %v2570
      %v2573 = vmul.f32 %v2521, %v2571
      %v2574 = vld [vmem:[%s397] sm:$0xff]
      %v2575 = vlaneseq
      %v2576 = vshrl.u32 %v2575, 7
      %v2577 = vsub.s32 3, %v2576
      %v2578 = vrot.slane %v902, %v2577
      %vm2579 = vcmask 64512
      %v2581 = vsel %vm2579, %v2572, 0
      %v2584 = vsel %vm2579, %v2573, 0
      %2586 = vmatprep.subr.mxu0 0.0
      %2587 = vmatpush1.msra.mxu0 %v2574
      %2588 = vmatprep.subr.mxu0 0.0
      %2589 = vmatpush1.msra.mxu0 0.0
      %2590 = vmatprep.subr.mxu0 0.0
      %2591 = vmatpush1.msra.mxu0 0.0
      %2592 = vmatprep.subr.mxu0 0.0
      %2593 = vmatpush1.msra.mxu0 0.0
      %2594 = vmatprep.subr.mxu0 0.0
      %2595 = vmatpush1.msra.mxu0 0.0
      %2596 = vmatprep.subr.mxu0 0.0
      %2597 = vmatpush1.msra.mxu0 0.0
      %2598 = vmatprep.subr.mxu0 0.0
      %2599 = vmatpush1.msra.mxu0 0.0
      %2600 = vmatprep.subr.mxu0 0.0
      %2601 = vmatpush1.msra.mxu0 0.0
      %2602 = vmatprep.subr.mxu0 0.0
      %2603 = vmatpush1.msra.mxu0 0.0
      %2604 = vmatprep.subr.mxu0 0.0
      %2605 = vmatpush1.msra.mxu0 0.0
      %2606 = vmatprep.subr.mxu0 0.0
      %2607 = vmatpush1.msra.mxu0 0.0
      %2608 = vmatprep.subr.mxu0 0.0
      %2609 = vmatpush1.msra.mxu0 0.0
      %2610 = vmatprep.subr.mxu0 0.0
      %2611 = vmatpush1.msra.mxu0 0.0
      %2612 = vmatprep.subr.mxu0 0.0
      %2613 = vmatpush1.msra.mxu0 0.0
      %2614 = vmatprep.subr.mxu0 0.0
      %2615 = vmatpush1.msra.mxu0 0.0
      %2616 = vmatprep.subr.mxu0 0.0
      %2617 = vmatpush1.msra.mxu0 0.0
      %2618 = vmatprep.subr.mxu0 0.0
      %2619 = vmatpush1.msra.mxu0 0.0
      %2620 = vmatprep.subr.mxu0 0.0
      %2621 = vmatpush1.msra.mxu0 0.0
      %2622 = vmatprep.subr.mxu0 0.0
      %2623 = vmatpush1.msra.mxu0 0.0
      %2624 = vmatprep.subr.mxu0 0.0
      %2625 = vmatpush1.msra.mxu0 0.0
      %2626 = vmatprep.subr.mxu0 0.0
      %2627 = vmatpush1.msra.mxu0 0.0
      %2628 = vmatprep.subr.mxu0 0.0
      %2629 = vmatpush1.msra.mxu0 0.0
      %2630 = vmatprep.subr.mxu0 0.0
      %2631 = vmatpush1.msra.mxu0 0.0
      %2632 = vmatprep.subr.mxu0 0.0
      %2633 = vmatpush1.msra.mxu0 0.0
      %2634 = vmatprep.subr.mxu0 0.0
      %2635 = vmatpush1.msra.mxu0 0.0
      %2636 = vmatprep.subr.mxu0 0.0
      %2637 = vmatpush1.msra.mxu0 0.0
      %2638 = vmatprep.subr.mxu0 0.0
      %2639 = vmatpush1.msra.mxu0 0.0
      %2640 = vmatprep.subr.mxu0 0.0
      %2641 = vmatpush1.msra.mxu0 0.0
      %2642 = vmatprep.subr.mxu0 0.0
      %2643 = vmatpush1.msra.mxu0 0.0
      %2644 = vmatprep.subr.mxu0 0.0
      %2645 = vmatpush1.msra.mxu0 0.0
      %2646 = vmatprep.subr.mxu0 0.0
      %2647 = vmatpush1.msra.mxu0 0.0
      %2648 = vmatprep.subr.mxu0 0.0
      %2649 = vmatpush1.msra.mxu0 0.0
      %2650 = vmatprep.mubr.f32.mxu0 0.0
      %2651 = vmatmul.mubr.f32.gmra.mrb[0].mxu0 %v2581
      %v2652 = vpop.f32.mrb[0].mxu0
      %v2653 = vadd.f32 %v2578, %v2652
      %v2654 = vpop.f32.mrb[0].mxu0
      %2655 = vmatprep.mubr.f32.mxu0 0.0
      %2656 = vmatmul.mubr.f32.gmra.mrb[0].mxu0 %v2584
      %v2657 = vpop.f32.mrb[0].mxu0
      %v2658 = vadd.f32 %v2578, %v2657
      %v2659 = vpop.f32.mrb[0].mxu0
      %2660 = vdwg.mxu0
      %v2661 = vlaneseq
      %v2662 = vshrl.u32 %v2661, 7
      %v2663 = vsub.s32 4, %v2662
      %v2664 = vrot.slane %v902, %v2663
      %v2665 = vmul.f32 %v2664, %v2653
      %v2666 = vmul.f32 %v2664, %v2658
      %v2669 = vcombine.high %v2665, %v2665
      %v2670 = vcombine.high %v2666, %v2666
      %v2673 = vadd.f32 %v885, %v2665
      %v2674 = vadd.f32 %v886, %v2669
      %v2675 = vadd.f32 %v887, %v2666
      %v2676 = vadd.f32 %v888, %v2670
      %2677 = vst.msk [vmem:[#allocation2] sm:$0xf] %vm890, %v2673
      %2678 = vst.msk [vmem:[#allocation2 + $0x4] sm:$0xf] %vm890, %v2674
      %2679 = vst.msk [vmem:[#allocation2 + $0x8] sm:$0xf] %vm890, %v2675
      %2680 = vst.msk [vmem:[#allocation2 + $0xc] sm:$0xf] %vm890, %v2676
      // Predicated region
      $region57: #{convnext_forward.2} parent=51 // pred_check
        %p2681 = pneg %p403
      $region58: #{convnext_forward.2} parent=51 // pred_check_branch
        %2683 = sbr.rel (%p2681) target = $region60
      $region59: #{convnext_forward.2} parent=51 // pred_region
        %2684 = vst.msk [vmem:[%s402] sm:$0xf] %vm890, %v2673
        %2685 = vst.msk [vmem:[%s402 + $0x4] sm:$0xf] %vm890, %v2674
        %2686 = vst.msk [vmem:[%s402 + $0x8] sm:$0xf] %vm890, %v2675
        %2687 = vst.msk [vmem:[%s402 + $0xc] sm:$0xf] %vm890, %v2676
      $region60: #{convnext_forward.2} parent=51 // pred_fallthru
        _
      %p2688 = scmp.lt.s32.totalorder %s23, 1
      %s2689 = scalar_select %p2688, %s23, 1
      %s2690 = smul.addr %s2689, 4
      %s2691 = smul.addr %s2690, 4
      %s2692 = scalar_lea.vmem %s8, %s2691
      // Predicated region
      $region61: #{convnext_forward.2} parent=51 // pred_check
        %p2693 = pneg %p247
      $region62: #{convnext_forward.2} parent=51 // pred_check_branch
        %2695 = sbr.rel (%p2693) target = $region64
      $region63: #{convnext_forward.2} parent=51 // pred_region
        _
      $region64: #{convnext_forward.2} parent=51 // pred_fallthru
        _
    $region52: #{convnext_forward.2} parent=5 // pred_fallthru
      _
    %p2696 = scmp.le.s32.totalorder 2, %s14
    // Predicated region
    $region65: #{convnext_forward.2} parent=5 // pred_check
      %p2697 = pneg %p2696
    $region66: #{convnext_forward.2} parent=5 // pred_check_branch
      %2699 = sbr.rel (%p2697) target = $region68
    $region67: #{convnext_forward.2} parent=5 // pred_region
      %s2700 = ssub.s32 %s14, 2
      // Predicated region
      $region69: #{convnext_forward.2} parent=67 // pred_check
        %p2701 = pneg %p253
      $region70: #{convnext_forward.2} parent=67 // pred_check_branch
        %2703 = sbr.rel (%p2701) target = $region72
      $region71: #{convnext_forward.2} parent=67 // pred_region
        %p2704 = scmp.lt.s32.totalorder %s25, 1
        %s2705 = scalar_select %p2704, %s25, 1
        %s2706 = smul.addr %s2705, 4
        %s2707 = smul.addr %s2706, 4
        %s2708 = scalar_lea.vmem %s8, %s2707
      $region72: #{convnext_forward.2} parent=67 // pred_fallthru
        _
    $region68: #{convnext_forward.2} parent=5 // pred_fallthru
      _
  $region6: #{convnext_forward.2} parent=0 // loop_footer
    %s18 = sadd.s32 1, %s14
  $region7: #{convnext_forward.2} parent=0 // loop_footer_branch
    %13 = sbr.rel target = $region3
  $region8: #{convnext_forward.2} parent=0 // loop_exit
    _

</llo_original>
